<compile_context>
chip_gen: v7x
topology: tpu7x:2x2x1
jax: 0.10.0
libtpu: 0.0.40
codegen_flags: <defaults>
</compile_context>

<pallas_src>
import functools

import numpy as np
import jax
import jax.numpy as jnp
from jax.experimental import pallas as pl
from jax.experimental.pallas import tpu as pltpu


NCONV = 7
NKERNELS = 16
DILATION = (2, 3, 4, 3, 2)              # middle-layer dilations (PyTorch default)
BN_EPS = 1e-5
_LAYER_DIL = (1,) + DILATION + (1,)     # dilation (== padding) of every conv layer


# ------------------------- Pallas kernel -------------------------------------

def _dncnn_kernel(x_ref, w_ref, sc_ref, sh_ref, mask_ref, o_ref,
                  act_a, act_b, patch_ref,
                  *, cin, C, Wp, Spad, margin, dilations):
    """Fused forward pass of the whole network for one batch element.

    x_ref    : (cin, Spad)       zero-halo padded, spatially-flattened input (NCHW)
    w_ref    : (L, C, 9*C)       per-layer weights, axis 2 ordered [tap, cin]
    sc_ref   : (L, C, 1)         per-channel epilogue scale (eval-mode BN)
    sh_ref   : (L, C, 1)         per-channel epilogue shift (bias + BN)
    mask_ref : (C, Spad)         1.0 inside the HxW interior, 0.0 on the halo
    o_ref    : (cin, Spad)       output = input + residual (padded-flat layout)
    act_a/b  : (C, margin+Spad+margin)  VMEM ping-pong activation slabs
    patch_ref: (9*C, Spad)       VMEM im2col patch matrix
    """
    n_layers = len(dilations)

    # Init: zero the slabs (halo & unused channels must be 0), then drop the
    # padded input into slab A's first `cin` channels.
    act_a[...] = jnp.zeros_like(act_a)
    act_b[...] = jnp.zeros_like(act_b)
    act_a[0:cin, margin:margin + Spad] = x_ref[...]

    interior = mask_ref[...] != 0.0          # (C, Spad) bool, reused every layer

    bufs = (act_a, act_b)
    for l in range(n_layers):
        src = bufs[l % 2]
        dst = bufs[(l + 1) % 2]
        d = dilations[l]

        # im2col: each dilated 3x3 tap is a pure lane-offset slice of the slab.
        t = 0
        for dy in (-d, 0, d):
            for dx in (-d, 0, d):
                s = dy * Wp + dx
                patch_ref[t * C:(t + 1) * C, :] = \
                    src[:, margin + s:margin + s + Spad]
                t += 1

        # One MXU matmul per layer: (C, 9C) @ (9C, Spad).
        out = jnp.dot(w_ref[l], patch_ref[...],
                      preferred_element_type=jnp.float32)
        out = out * sc_ref[l] + sh_ref[l]     # bias + eval-mode BN affine

        if l < n_layers - 1:
            out = jnp.maximum(out, 0.0)       # ReLU on all but the last layer
            # Re-zero the halo so the next layer sees "same" zero padding.
            dst[:, margin:margin + Spad] = jnp.where(interior, out, 0.0)
        else:
            # Final layer: y = inputs + residual.  Only the first `cin` output
            # channels are real; the halo is sliced off by the wrapper.
            o_ref[...] = x_ref[...] + out[0:cin, :]


# ------------------------- wrapper --------------------------------------------

def _fold_params(params, n_layers, C):
    """Stack per-layer weights / epilogue vectors into kernel-friendly arrays."""
    w_all, sc_all, sh_all = [], [], []
    for l in range(n_layers):
        w = params[f"w{l}"].astype(jnp.float32)      # (cout, cin, 3, 3)  OIHW
        b = params[f"b{l}"].astype(jnp.float32)      # (cout,)
        cout, cin = w.shape[0], w.shape[1]
        if f"bn{l}_gamma" in params:                 # eval-mode BN -> affine
            s = params[f"bn{l}_gamma"] / jnp.sqrt(params[f"bn{l}_var"] + BN_EPS)
            t = params[f"bn{l}_beta"] - params[f"bn{l}_mean"] * s
        else:
            s = jnp.ones((cout,), jnp.float32)
            t = jnp.zeros((cout,), jnp.float32)
        # (cout, cin, ky, kx) -> (cout, tap, cin), zero-pad channels to C.
        wm = jnp.transpose(w, (0, 2, 3, 1)).reshape(cout, 9, cin)
        wm = jnp.pad(wm, ((0, C - cout), (0, 0), (0, C - cin))).reshape(C, 9 * C)
        sc_all.append(jnp.pad(s, (0, C - cout)))
        sh_all.append(jnp.pad(b * s + t, (0, C - cout)))   # y = conv*s + (b*s+t)
        w_all.append(wm)
    return (jnp.stack(w_all),                      # (L, C, 9C)
            jnp.stack(sc_all)[..., None],          # (L, C, 1)
            jnp.stack(sh_all)[..., None])          # (L, C, 1)


@jax.jit
def dncnn_dilated_forward(x_nchw, params):
    """Pallas forward of DnCNN_dilated:  y = x + layers(x)   (NCHW in / NCHW out)."""
    N, cin, H, W = x_nchw.shape
    assert cin == 2, "DnCNN_dilated takes 2-channel (real/imag) images"
    C = NKERNELS
    dil = _LAYER_DIL
    n_layers = len(dil)
    P = max(dil)                         # uniform zero halo (padding == dilation)
    Hp, Wp = H + 2 * P, W + 2 * P
    Spad = Hp * Wp
    margin = 128                         # lane margin: every tap slice stays in-bounds
    assert margin >= P * Wp + P

    # One-time boundary prep on the tiny 2-channel tensor (not per layer).
    x_pad = jnp.pad(x_nchw.astype(jnp.float32),
                    ((0, 0), (0, 0), (P, P), (P, P))).reshape(N, cin, Spad)

    w_all, sc_all, sh_all = _fold_params(params, n_layers, C)

    # Interior (non-halo) mask in the padded-flat layout, built host-side.
    yy, xx = np.meshgrid(np.arange(Hp), np.arange(Wp), indexing="ij")
    interior = ((yy >= P) & (yy < P + H) & (xx >= P) & (xx < P + W)).reshape(-1)
    mask = jnp.asarray(np.broadcast_to(interior, (C, Spad)).astype(np.float32))

    kernel = functools.partial(_dncnn_kernel, cin=cin, C=C, Wp=Wp, Spad=Spad,
                               margin=margin, dilations=dil)

    out_pad = pl.pallas_call(
        kernel,
        out_shape=jax.ShapeDtypeStruct((N, cin, Spad), jnp.float32),
        grid=(N,),
        in_specs=[
            pl.BlockSpec((None, cin, Spad), lambda n: (n, 0, 0)),
            pl.BlockSpec((n_layers, C, 9 * C), lambda n: (0, 0, 0)),
            pl.BlockSpec((n_layers, C, 1), lambda n: (0, 0, 0)),
            pl.BlockSpec((n_layers, C, 1), lambda n: (0, 0, 0)),
            pl.BlockSpec((C, Spad), lambda n: (0, 0)),
        ],
        out_specs=pl.BlockSpec((None, cin, Spad), lambda n: (n, 0, 0)),
        scratch_shapes=[
            pltpu.VMEM((C, margin + Spad + margin), jnp.float32),   # slab A
            pltpu.VMEM((C, margin + Spad + margin), jnp.float32),   # slab B
            pltpu.VMEM((9 * C, Spad), jnp.float32),                 # im2col patch
        ],
        compiler_params=pltpu.CompilerParams(
            dimension_semantics=("parallel",)),
    )(x_pad, w_all, sc_all, sh_all, mask)

    # Drop the halo; (N, 2, Spad) -> (N, 2, H, W).  Tiny (~9 KB) boundary op.
    return out_pad.reshape(N, cin, Hp, Wp)[:, :, P:P + H, P:P + W]


# ------------------------- parameters -----------------------------------------

def init_params(key, nconv=NCONV, nkernels=NKERNELS):
    chans = [2] + [nkernels] * (nconv - 1) + [2]
    params = {}
    for i in range(nconv):
        key, kw, kb = jax.random.split(key, 3)
        cin, cout = chans[i], chans[i + 1]
        params[f"w{i}"] = 0.1 * jax.random.normal(kw, (cout, cin, 3, 3), jnp.float32)
        params[f"b{i}"] = 0.05 * jax.random.normal(kb, (cout,), jnp.float32)
    # Eval-mode BatchNorm running stats for the Nconv-2 middle layers
    # (deterministic, nontrivial).
    for i in range(1, nconv - 1):
        c = nkernels
        params[f"bn{i}_gamma"] = 1.0 + 0.05 * jnp.arange(c, dtype=jnp.float32)
        params[f"bn{i}_beta"] = 0.02 * jnp.arange(c, dtype=jnp.float32)
        params[f"bn{i}_mean"] = 0.01 * jnp.arange(c, dtype=jnp.float32)
        params[f"bn{i}_var"] = 1.0 + 0.03 * jnp.arange(c, dtype=jnp.float32)
    return params


# ------------------------- pure-JAX reference ----------------------------------

def _ref_conv(x, w, b, dilation):
    y = jax.lax.conv_general_dilated(
        x, w, window_strides=(1, 1),
        padding=[(dilation, dilation), (dilation, dilation)],
        rhs_dilation=(dilation, dilation),
        dimension_numbers=("NCHW", "OIHW", "NCHW"))
    return y + b[None, :, None, None]


@jax.jit
def dncnn_dilated_reference(x_nchw, params):
    x = x_nchw.astype(jnp.float32)
    dil = _LAYER_DIL
    n_layers = len(dil)
    h = jnp.maximum(_ref_conv(x, params["w0"], params["b0"], dil[0]), 0.0)
    for i in range(1, n_layers - 1):
        s = params[f"bn{i}_gamma"] / jnp.sqrt(params[f"bn{i}_var"] + BN_EPS)
        t = params[f"bn{i}_beta"] - params[f"bn{i}_mean"] * s
        h = _ref_conv(h, params[f"w{i}"], params[f"b{i}"], dil[i])
        h = jnp.maximum(h * s[None, :, None, None] + t[None, :, None, None], 0.0)
    residual = _ref_conv(h, params[f"w{n_layers - 1}"], params[f"b{n_layers - 1}"],
                         dil[n_layers - 1])
    return x + residual       # forward(): y = inputs; y += layers(inputs)


# ------------------------- main -------------------------------------------------

if __name__ == "__main__":
    key = jax.random.PRNGKey(0)
    key, kx = jax.random.split(key)

    # DnCNN_dilated takes 2-channel (complex real/imag) images; NCHW like PyTorch.
    x = jax.random.normal(kx, (2, 2, 16, 16), jnp.float32)
    params = init_params(key)

    out = jax.block_until_ready(dncnn_dilated_forward(x, params))
    ref = jax.block_until_ready(dncnn_dilated_reference(x, params))

    assert out.shape == x.shape
    err = float(jnp.max(jnp.abs(out - ref)))
    # Tolerance allows for MXU accumulation-order differences across 7 stacked convs.
    assert jnp.allclose(out, ref, rtol=5e-4, atol=5e-4), f"max abs err = {err}"

    print("KERNEL_OK")
</pallas_src>

<mosaic_0001>
module attributes {stable_mosaic.version = 11 : i64} {
  func.func @_dncnn_kernel(%arg0: i32, %arg1: memref<1x2x576xf32, #tpu.memory_space<vmem>>, %arg2: memref<7x16x144xf32, #tpu.memory_space<vmem>>, %arg3: memref<7x16x1xf32, #tpu.memory_space<vmem>>, %arg4: memref<7x16x1xf32, #tpu.memory_space<vmem>>, %arg5: memref<16x576xf32, #tpu.memory_space<vmem>>, %arg6: memref<1x2x576xf32, #tpu.memory_space<vmem>>, %arg7: memref<16x832xf32, #tpu.memory_space<vmem>>, %arg8: memref<16x832xf32, #tpu.memory_space<vmem>>, %arg9: memref<144x576xf32, #tpu.memory_space<vmem>>) attributes {dimension_semantics = [#tpu.dimension_semantics<parallel>], iteration_bounds = array<i64: 2>, scalar_prefetch = 0 : i64, scratch_operands = 3 : i64, tpu.core_type = #tpu.core_type<tc>, window_params = [{transform_indices = @transform_0, window_bounds = array<i64: 1, 2, 576>}, {pipeline_mode = #tpu.pipeline_mode<synchronous>, transform_indices = @transform_1, window_bounds = array<i64: 7, 16, 144>}, {pipeline_mode = #tpu.pipeline_mode<synchronous>, transform_indices = @transform_2, window_bounds = array<i64: 7, 16, 1>}, {pipeline_mode = #tpu.pipeline_mode<synchronous>, transform_indices = @transform_3, window_bounds = array<i64: 7, 16, 1>}, {pipeline_mode = #tpu.pipeline_mode<synchronous>, transform_indices = @transform_4, window_bounds = array<i64: 16, 576>}, {transform_indices = @transform_5, window_bounds = array<i64: 1, 2, 576>}]} {
    %cst = arith.constant 0.000000e+00 : f32
    %0 = vector.broadcast %cst : f32 to vector<16x832xf32>
    %c0 = arith.constant 0 : index
    %c0_0 = arith.constant 0 : index
    %1 = vector.load %arg7[%c0, %c0_0] : memref<16x832xf32, #tpu.memory_space<vmem>>, vector<16x832xf32>
    tpu.vector_store %arg7[%c0, %c0_0], %0 {strides = array<i32>} : memref<16x832xf32, #tpu.memory_space<vmem>>, vector<16x832xf32>,
    %cst_1 = arith.constant 0.000000e+00 : f32
    %2 = vector.broadcast %cst_1 : f32 to vector<16x832xf32>
    %c0_2 = arith.constant 0 : index
    %c0_3 = arith.constant 0 : index
    %3 = vector.load %arg8[%c0_2, %c0_3] : memref<16x832xf32, #tpu.memory_space<vmem>>, vector<16x832xf32>
    tpu.vector_store %arg8[%c0_2, %c0_3], %2 {strides = array<i32>} : memref<16x832xf32, #tpu.memory_space<vmem>>, vector<16x832xf32>,
    %c0_4 = arith.constant 0 : index
    %c0_5 = arith.constant 0 : index
    %c0_6 = arith.constant 0 : index
    %4 = vector.load %arg1[%c0_4, %c0_5, %c0_6] : memref<1x2x576xf32, #tpu.memory_space<vmem>>, vector<1x2x576xf32>
    %5 = vector.shape_cast %4 : vector<1x2x576xf32> to vector<2x576xf32>
    %c0_7 = arith.constant 0 : index
    %c128 = arith.constant 128 : index
    %6 = vector.load %arg7[%c0_7, %c128] : memref<16x832xf32, #tpu.memory_space<vmem>>, vector<2x576xf32>
    tpu.vector_store %arg7[%c0_7, %c128], %5 {strides = array<i32>} : memref<16x832xf32, #tpu.memory_space<vmem>>, vector<2x576xf32>,
    %c0_8 = arith.constant 0 : index
    %c0_9 = arith.constant 0 : index
    %7 = vector.load %arg5[%c0_8, %c0_9] : memref<16x576xf32, #tpu.memory_space<vmem>>, vector<16x576xf32>
    %cst_10 = arith.constant 0.000000e+00 : f32
    %8 = vector.broadcast %cst_10 : f32 to vector<16x576xf32>
    %9 = arith.cmpf one, %7, %8 : vector<16x576xf32>
    %c0_11 = arith.constant 0 : index
    %c103 = arith.constant 103 : index
    %10 = vector.load %arg7[%c0_11, %c103] : memref<16x832xf32, #tpu.memory_space<vmem>>, vector<16x576xf32>
    %c0_12 = arith.constant 0 : index
    %c0_13 = arith.constant 0 : index
    %11 = vector.load %arg9[%c0_12, %c0_13] : memref<144x576xf32, #tpu.memory_space<vmem>>, vector<16x576xf32>
    tpu.vector_store %arg9[%c0_12, %c0_13], %10 {strides = array<i32>} : memref<144x576xf32, #tpu.memory_space<vmem>>, vector<16x576xf32>,
    %c0_14 = arith.constant 0 : index
    %c104 = arith.constant 104 : index
    %12 = vector.load %arg7[%c0_14, %c104] : memref<16x832xf32, #tpu.memory_space<vmem>>, vector<16x576xf32>
    %c16 = arith.constant 16 : index
    %c0_15 = arith.constant 0 : index
    %13 = vector.load %arg9[%c16, %c0_15] : memref<144x576xf32, #tpu.memory_space<vmem>>, vector<16x576xf32>
    tpu.vector_store %arg9[%c16, %c0_15], %12 {strides = array<i32>} : memref<144x576xf32, #tpu.memory_space<vmem>>, vector<16x576xf32>,
    %c0_16 = arith.constant 0 : index
    %c105 = arith.constant 105 : index
    %14 = vector.load %arg7[%c0_16, %c105] : memref<16x832xf32, #tpu.memory_space<vmem>>, vector<16x576xf32>
    %c32 = arith.constant 32 : index
    %c0_17 = arith.constant 0 : index
    %15 = vector.load %arg9[%c32, %c0_17] : memref<144x576xf32, #tpu.memory_space<vmem>>, vector<16x576xf32>
    tpu.vector_store %arg9[%c32, %c0_17], %14 {strides = array<i32>} : memref<144x576xf32, #tpu.memory_space<vmem>>, vector<16x576xf32>,
    %c0_18 = arith.constant 0 : index
    %c127 = arith.constant 127 : index
    %16 = vector.load %arg7[%c0_18, %c127] : memref<16x832xf32, #tpu.memory_space<vmem>>, vector<16x576xf32>
    %c48 = arith.constant 48 : index
    %c0_19 = arith.constant 0 : index
    %17 = vector.load %arg9[%c48, %c0_19] : memref<144x576xf32, #tpu.memory_space<vmem>>, vector<16x576xf32>
    tpu.vector_store %arg9[%c48, %c0_19], %16 {strides = array<i32>} : memref<144x576xf32, #tpu.memory_space<vmem>>, vector<16x576xf32>,
    %c0_20 = arith.constant 0 : index
    %c128_21 = arith.constant 128 : index
    %18 = vector.load %arg7[%c0_20, %c128_21] : memref<16x832xf32, #tpu.memory_space<vmem>>, vector<16x576xf32>
    %c64 = arith.constant 64 : index
    %c0_22 = arith.constant 0 : index
    %19 = vector.load %arg9[%c64, %c0_22] : memref<144x576xf32, #tpu.memory_space<vmem>>, vector<16x576xf32>
    tpu.vector_store %arg9[%c64, %c0_22], %18 {strides = array<i32>} : memref<144x576xf32, #tpu.memory_space<vmem>>, vector<16x576xf32>,
    %c0_23 = arith.constant 0 : index
    %c129 = arith.constant 129 : index
    %20 = vector.load %arg7[%c0_23, %c129] : memref<16x832xf32, #tpu.memory_space<vmem>>, vector<16x576xf32>
    %c80 = arith.constant 80 : index
    %c0_24 = arith.constant 0 : index
    %21 = vector.load %arg9[%c80, %c0_24] : memref<144x576xf32, #tpu.memory_space<vmem>>, vector<16x576xf32>
    tpu.vector_store %arg9[%c80, %c0_24], %20 {strides = array<i32>} : memref<144x576xf32, #tpu.memory_space<vmem>>, vector<16x576xf32>,
    %c0_25 = arith.constant 0 : index
    %c151 = arith.constant 151 : index
    %22 = vector.load %arg7[%c0_25, %c151] : memref<16x832xf32, #tpu.memory_space<vmem>>, vector<16x576xf32>
    %c96 = arith.constant 96 : index
    %c0_26 = arith.constant 0 : index
    %23 = vector.load %arg9[%c96, %c0_26] : memref<144x576xf32, #tpu.memory_space<vmem>>, vector<16x576xf32>
    tpu.vector_store %arg9[%c96, %c0_26], %22 {strides = array<i32>} : memref<144x576xf32, #tpu.memory_space<vmem>>, vector<16x576xf32>,
    %c0_27 = arith.constant 0 : index
    %c152 = arith.constant 152 : index
    %24 = vector.load %arg7[%c0_27, %c152] : memref<16x832xf32, #tpu.memory_space<vmem>>, vector<16x576xf32>
    %c112 = arith.constant 112 : index
    %c0_28 = arith.constant 0 : index
    %25 = vector.load %arg9[%c112, %c0_28] : memref<144x576xf32, #tpu.memory_space<vmem>>, vector<16x576xf32>
    tpu.vector_store %arg9[%c112, %c0_28], %24 {strides = array<i32>} : memref<144x576xf32, #tpu.memory_space<vmem>>, vector<16x576xf32>,
    %c0_29 = arith.constant 0 : index
    %c153 = arith.constant 153 : index
    %26 = vector.load %arg7[%c0_29, %c153] : memref<16x832xf32, #tpu.memory_space<vmem>>, vector<16x576xf32>
    %c128_30 = arith.constant 128 : index
    %c0_31 = arith.constant 0 : index
    %27 = vector.load %arg9[%c128_30, %c0_31] : memref<144x576xf32, #tpu.memory_space<vmem>>, vector<16x576xf32>
    tpu.vector_store %arg9[%c128_30, %c0_31], %26 {strides = array<i32>} : memref<144x576xf32, #tpu.memory_space<vmem>>, vector<16x576xf32>,
    %c0_32 = arith.constant 0 : index
    %c0_33 = arith.constant 0 : index
    %c0_34 = arith.constant 0 : index
    %28 = vector.load %arg2[%c0_32, %c0_33, %c0_34] : memref<7x16x144xf32, #tpu.memory_space<vmem>>, vector<1x16x144xf32>
    %29 = vector.shape_cast %28 : vector<1x16x144xf32> to vector<16x144xf32>
    %c0_35 = arith.constant 0 : index
    %c0_36 = arith.constant 0 : index
    %30 = vector.load %arg9[%c0_35, %c0_36] : memref<144x576xf32, #tpu.memory_space<vmem>>, vector<144x576xf32>
    %cst_37 = arith.constant dense<0.000000e+00> : vector<16x576xf32>
    %31 = tpu.matmul %29, %30, %cst_37 {dimension_numbers = #tpu.dot_dimension_numbers<[1], [0], [0], [1], [0, 0, 1, 1], [], []>} : vector<16x144xf32>, vector<144x576xf32>, vector<16x576xf32> -> vector<16x576xf32>
    %c0_38 = arith.constant 0 : index
    %c0_39 = arith.constant 0 : index
    %c0_40 = arith.constant 0 : index
    %32 = vector.load %arg3[%c0_38, %c0_39, %c0_40] : memref<7x16x1xf32, #tpu.memory_space<vmem>>, vector<1x16x1xf32>
    %33 = vector.shape_cast %32 : vector<1x16x1xf32> to vector<16x1xf32>
    %34 = vector.broadcast %33 : vector<16x1xf32> to vector<16x576xf32>
    %35 = arith.mulf %31, %34 : vector<16x576xf32>
    %c0_41 = arith.constant 0 : index
    %c0_42 = arith.constant 0 : index
    %c0_43 = arith.constant 0 : index
    %36 = vector.load %arg4[%c0_41, %c0_42, %c0_43] : memref<7x16x1xf32, #tpu.memory_space<vmem>>, vector<1x16x1xf32>
    %37 = vector.shape_cast %36 : vector<1x16x1xf32> to vector<16x1xf32>
    %38 = vector.broadcast %37 : vector<16x1xf32> to vector<16x576xf32>
    %39 = arith.addf %35, %38 : vector<16x576xf32>
    %cst_44 = arith.constant 0.000000e+00 : f32
    %40 = vector.broadcast %cst_44 : f32 to vector<16x576xf32>
    %41 = arith.maximumf %39, %40 : vector<16x576xf32>
    %cst_45 = arith.constant 0.000000e+00 : f32
    %42 = vector.broadcast %cst_45 : f32 to vector<16x576xf32>
    %43 = arith.select %9, %41, %42 : vector<16x576xi1>, vector<16x576xf32>
    %c0_46 = arith.constant 0 : index
    %c128_47 = arith.constant 128 : index
    %44 = vector.load %arg8[%c0_46, %c128_47] : memref<16x832xf32, #tpu.memory_space<vmem>>, vector<16x576xf32>
    tpu.vector_store %arg8[%c0_46, %c128_47], %43 {strides = array<i32>} : memref<16x832xf32, #tpu.memory_space<vmem>>, vector<16x576xf32>,
    %c0_48 = arith.constant 0 : index
    %c78 = arith.constant 78 : index
    %45 = vector.load %arg8[%c0_48, %c78] : memref<16x832xf32, #tpu.memory_space<vmem>>, vector<16x576xf32>
    %c0_49 = arith.constant 0 : index
    %c0_50 = arith.constant 0 : index
    %46 = vector.load %arg9[%c0_49, %c0_50] : memref<144x576xf32, #tpu.memory_space<vmem>>, vector<16x576xf32>
    tpu.vector_store %arg9[%c0_49, %c0_50], %45 {strides = array<i32>} : memref<144x576xf32, #tpu.memory_space<vmem>>, vector<16x576xf32>,
    %c0_51 = arith.constant 0 : index
    %c80_52 = arith.constant 80 : index
    %47 = vector.load %arg8[%c0_51, %c80_52] : memref<16x832xf32, #tpu.memory_space<vmem>>, vector<16x576xf32>
    %c16_53 = arith.constant 16 : index
    %c0_54 = arith.constant 0 : index
    %48 = vector.load %arg9[%c16_53, %c0_54] : memref<144x576xf32, #tpu.memory_space<vmem>>, vector<16x576xf32>
    tpu.vector_store %arg9[%c16_53, %c0_54], %47 {strides = array<i32>} : memref<144x576xf32, #tpu.memory_space<vmem>>, vector<16x576xf32>,
    %c0_55 = arith.constant 0 : index
    %c82 = arith.constant 82 : index
    %49 = vector.load %arg8[%c0_55, %c82] : memref<16x832xf32, #tpu.memory_space<vmem>>, vector<16x576xf32>
    %c32_56 = arith.constant 32 : index
    %c0_57 = arith.constant 0 : index
    %50 = vector.load %arg9[%c32_56, %c0_57] : memref<144x576xf32, #tpu.memory_space<vmem>>, vector<16x576xf32>
    tpu.vector_store %arg9[%c32_56, %c0_57], %49 {strides = array<i32>} : memref<144x576xf32, #tpu.memory_space<vmem>>, vector<16x576xf32>,
    %c0_58 = arith.constant 0 : index
    %c126 = arith.constant 126 : index
    %51 = vector.load %arg8[%c0_58, %c126] : memref<16x832xf32, #tpu.memory_space<vmem>>, vector<16x576xf32>
    %c48_59 = arith.constant 48 : index
    %c0_60 = arith.constant 0 : index
    %52 = vector.load %arg9[%c48_59, %c0_60] : memref<144x576xf32, #tpu.memory_space<vmem>>, vector<16x576xf32>
    tpu.vector_store %arg9[%c48_59, %c0_60], %51 {strides = array<i32>} : memref<144x576xf32, #tpu.memory_space<vmem>>, vector<16x576xf32>,
    %c0_61 = arith.constant 0 : index
    %c128_62 = arith.constant 128 : index
    %53 = vector.load %arg8[%c0_61, %c128_62] : memref<16x832xf32, #tpu.memory_space<vmem>>, vector<16x576xf32>
    %c64_63 = arith.constant 64 : index
    %c0_64 = arith.constant 0 : index
    %54 = vector.load %arg9[%c64_63, %c0_64] : memref<144x576xf32, #tpu.memory_space<vmem>>, vector<16x576xf32>
    tpu.vector_store %arg9[%c64_63, %c0_64], %53 {strides = array<i32>} : memref<144x576xf32, #tpu.memory_space<vmem>>, vector<16x576xf32>,
    %c0_65 = arith.constant 0 : index
    %c130 = arith.constant 130 : index
    %55 = vector.load %arg8[%c0_65, %c130] : memref<16x832xf32, #tpu.memory_space<vmem>>, vector<16x576xf32>
    %c80_66 = arith.constant 80 : index
    %c0_67 = arith.constant 0 : index
    %56 = vector.load %arg9[%c80_66, %c0_67] : memref<144x576xf32, #tpu.memory_space<vmem>>, vector<16x576xf32>
    tpu.vector_store %arg9[%c80_66, %c0_67], %55 {strides = array<i32>} : memref<144x576xf32, #tpu.memory_space<vmem>>, vector<16x576xf32>,
    %c0_68 = arith.constant 0 : index
    %c174 = arith.constant 174 : index
    %57 = vector.load %arg8[%c0_68, %c174] : memref<16x832xf32, #tpu.memory_space<vmem>>, vector<16x576xf32>
    %c96_69 = arith.constant 96 : index
    %c0_70 = arith.constant 0 : index
    %58 = vector.load %arg9[%c96_69, %c0_70] : memref<144x576xf32, #tpu.memory_space<vmem>>, vector<16x576xf32>
    tpu.vector_store %arg9[%c96_69, %c0_70], %57 {strides = array<i32>} : memref<144x576xf32, #tpu.memory_space<vmem>>, vector<16x576xf32>,
    %c0_71 = arith.constant 0 : index
    %c176 = arith.constant 176 : index
    %59 = vector.load %arg8[%c0_71, %c176] : memref<16x832xf32, #tpu.memory_space<vmem>>, vector<16x576xf32>
    %c112_72 = arith.constant 112 : index
    %c0_73 = arith.constant 0 : index
    %60 = vector.load %arg9[%c112_72, %c0_73] : memref<144x576xf32, #tpu.memory_space<vmem>>, vector<16x576xf32>
    tpu.vector_store %arg9[%c112_72, %c0_73], %59 {strides = array<i32>} : memref<144x576xf32, #tpu.memory_space<vmem>>, vector<16x576xf32>,
    %c0_74 = arith.constant 0 : index
    %c178 = arith.constant 178 : index
    %61 = vector.load %arg8[%c0_74, %c178] : memref<16x832xf32, #tpu.memory_space<vmem>>, vector<16x576xf32>
    %c128_75 = arith.constant 128 : index
    %c0_76 = arith.constant 0 : index
    %62 = vector.load %arg9[%c128_75, %c0_76] : memref<144x576xf32, #tpu.memory_space<vmem>>, vector<16x576xf32>
    tpu.vector_store %arg9[%c128_75, %c0_76], %61 {strides = array<i32>} : memref<144x576xf32, #tpu.memory_space<vmem>>, vector<16x576xf32>,
    %c1 = arith.constant 1 : index
    %c0_77 = arith.constant 0 : index
    %c0_78 = arith.constant 0 : index
    %63 = vector.load %arg2[%c1, %c0_77, %c0_78] : memref<7x16x144xf32, #tpu.memory_space<vmem>>, vector<1x16x144xf32>
    %64 = vector.shape_cast %63 : vector<1x16x144xf32> to vector<16x144xf32>
    %c0_79 = arith.constant 0 : index
    %c0_80 = arith.constant 0 : index
    %65 = vector.load %arg9[%c0_79, %c0_80] : memref<144x576xf32, #tpu.memory_space<vmem>>, vector<144x576xf32>
    %cst_81 = arith.constant dense<0.000000e+00> : vector<16x576xf32>
    %66 = tpu.matmul %64, %65, %cst_81 {dimension_numbers = #tpu.dot_dimension_numbers<[1], [0], [0], [1], [0, 0, 1, 1], [], []>} : vector<16x144xf32>, vector<144x576xf32>, vector<16x576xf32> -> vector<16x576xf32>
    %c1_82 = arith.constant 1 : index
    %c0_83 = arith.constant 0 : index
    %c0_84 = arith.constant 0 : index
    %67 = vector.load %arg3[%c1_82, %c0_83, %c0_84] : memref<7x16x1xf32, #tpu.memory_space<vmem>>, vector<1x16x1xf32>
    %68 = vector.shape_cast %67 : vector<1x16x1xf32> to vector<16x1xf32>
    %69 = vector.broadcast %68 : vector<16x1xf32> to vector<16x576xf32>
    %70 = arith.mulf %66, %69 : vector<16x576xf32>
    %c1_85 = arith.constant 1 : index
    %c0_86 = arith.constant 0 : index
    %c0_87 = arith.constant 0 : index
    %71 = vector.load %arg4[%c1_85, %c0_86, %c0_87] : memref<7x16x1xf32, #tpu.memory_space<vmem>>, vector<1x16x1xf32>
    %72 = vector.shape_cast %71 : vector<1x16x1xf32> to vector<16x1xf32>
    %73 = vector.broadcast %72 : vector<16x1xf32> to vector<16x576xf32>
    %74 = arith.addf %70, %73 : vector<16x576xf32>
    %cst_88 = arith.constant 0.000000e+00 : f32
    %75 = vector.broadcast %cst_88 : f32 to vector<16x576xf32>
    %76 = arith.maximumf %74, %75 : vector<16x576xf32>
    %cst_89 = arith.constant 0.000000e+00 : f32
    %77 = vector.broadcast %cst_89 : f32 to vector<16x576xf32>
    %78 = arith.select %9, %76, %77 : vector<16x576xi1>, vector<16x576xf32>
    %c0_90 = arith.constant 0 : index
    %c128_91 = arith.constant 128 : index
    %79 = vector.load %arg7[%c0_90, %c128_91] : memref<16x832xf32, #tpu.memory_space<vmem>>, vector<16x576xf32>
    tpu.vector_store %arg7[%c0_90, %c128_91], %78 {strides = array<i32>} : memref<16x832xf32, #tpu.memory_space<vmem>>, vector<16x576xf32>,
    %c0_92 = arith.constant 0 : index
    %c53 = arith.constant 53 : index
    %80 = vector.load %arg7[%c0_92, %c53] : memref<16x832xf32, #tpu.memory_space<vmem>>, vector<16x576xf32>
    %c0_93 = arith.constant 0 : index
    %c0_94 = arith.constant 0 : index
    %81 = vector.load %arg9[%c0_93, %c0_94] : memref<144x576xf32, #tpu.memory_space<vmem>>, vector<16x576xf32>
    tpu.vector_store %arg9[%c0_93, %c0_94], %80 {strides = array<i32>} : memref<144x576xf32, #tpu.memory_space<vmem>>, vector<16x576xf32>,
    %c0_95 = arith.constant 0 : index
    %c56 = arith.constant 56 : index
    %82 = vector.load %arg7[%c0_95, %c56] : memref<16x832xf32, #tpu.memory_space<vmem>>, vector<16x576xf32>
    %c16_96 = arith.constant 16 : index
    %c0_97 = arith.constant 0 : index
    %83 = vector.load %arg9[%c16_96, %c0_97] : memref<144x576xf32, #tpu.memory_space<vmem>>, vector<16x576xf32>
    tpu.vector_store %arg9[%c16_96, %c0_97], %82 {strides = array<i32>} : memref<144x576xf32, #tpu.memory_space<vmem>>, vector<16x576xf32>,
    %c0_98 = arith.constant 0 : index
    %c59 = arith.constant 59 : index
    %84 = vector.load %arg7[%c0_98, %c59] : memref<16x832xf32, #tpu.memory_space<vmem>>, vector<16x576xf32>
    %c32_99 = arith.constant 32 : index
    %c0_100 = arith.constant 0 : index
    %85 = vector.load %arg9[%c32_99, %c0_100] : memref<144x576xf32, #tpu.memory_space<vmem>>, vector<16x576xf32>
    tpu.vector_store %arg9[%c32_99, %c0_100], %84 {strides = array<i32>} : memref<144x576xf32, #tpu.memory_space<vmem>>, vector<16x576xf32>,
    %c0_101 = arith.constant 0 : index
    %c125 = arith.constant 125 : index
    %86 = vector.load %arg7[%c0_101, %c125] : memref<16x832xf32, #tpu.memory_space<vmem>>, vector<16x576xf32>
    %c48_102 = arith.constant 48 : index
    %c0_103 = arith.constant 0 : index
    %87 = vector.load %arg9[%c48_102, %c0_103] : memref<144x576xf32, #tpu.memory_space<vmem>>, vector<16x576xf32>
    tpu.vector_store %arg9[%c48_102, %c0_103], %86 {strides = array<i32>} : memref<144x576xf32, #tpu.memory_space<vmem>>, vector<16x576xf32>,
    %c0_104 = arith.constant 0 : index
    %c128_105 = arith.constant 128 : index
    %88 = vector.load %arg7[%c0_104, %c128_105] : memref<16x832xf32, #tpu.memory_space<vmem>>, vector<16x576xf32>
    %c64_106 = arith.constant 64 : index
    %c0_107 = arith.constant 0 : index
    %89 = vector.load %arg9[%c64_106, %c0_107] : memref<144x576xf32, #tpu.memory_space<vmem>>, vector<16x576xf32>
    tpu.vector_store %arg9[%c64_106, %c0_107], %88 {strides = array<i32>} : memref<144x576xf32, #tpu.memory_space<vmem>>, vector<16x576xf32>,
    %c0_108 = arith.constant 0 : index
    %c131 = arith.constant 131 : index
    %90 = vector.load %arg7[%c0_108, %c131] : memref<16x832xf32, #tpu.memory_space<vmem>>, vector<16x576xf32>
    %c80_109 = arith.constant 80 : index
    %c0_110 = arith.constant 0 : index
    %91 = vector.load %arg9[%c80_109, %c0_110] : memref<144x576xf32, #tpu.memory_space<vmem>>, vector<16x576xf32>
    tpu.vector_store %arg9[%c80_109, %c0_110], %90 {strides = array<i32>} : memref<144x576xf32, #tpu.memory_space<vmem>>, vector<16x576xf32>,
    %c0_111 = arith.constant 0 : index
    %c197 = arith.constant 197 : index
    %92 = vector.load %arg7[%c0_111, %c197] : memref<16x832xf32, #tpu.memory_space<vmem>>, vector<16x576xf32>
    %c96_112 = arith.constant 96 : index
    %c0_113 = arith.constant 0 : index
    %93 = vector.load %arg9[%c96_112, %c0_113] : memref<144x576xf32, #tpu.memory_space<vmem>>, vector<16x576xf32>
    tpu.vector_store %arg9[%c96_112, %c0_113], %92 {strides = array<i32>} : memref<144x576xf32, #tpu.memory_space<vmem>>, vector<16x576xf32>,
    %c0_114 = arith.constant 0 : index
    %c200 = arith.constant 200 : index
    %94 = vector.load %arg7[%c0_114, %c200] : memref<16x832xf32, #tpu.memory_space<vmem>>, vector<16x576xf32>
    %c112_115 = arith.constant 112 : index
    %c0_116 = arith.constant 0 : index
    %95 = vector.load %arg9[%c112_115, %c0_116] : memref<144x576xf32, #tpu.memory_space<vmem>>, vector<16x576xf32>
    tpu.vector_store %arg9[%c112_115, %c0_116], %94 {strides = array<i32>} : memref<144x576xf32, #tpu.memory_space<vmem>>, vector<16x576xf32>,
    %c0_117 = arith.constant 0 : index
    %c203 = arith.constant 203 : index
    %96 = vector.load %arg7[%c0_117, %c203] : memref<16x832xf32, #tpu.memory_space<vmem>>, vector<16x576xf32>
    %c128_118 = arith.constant 128 : index
    %c0_119 = arith.constant 0 : index
    %97 = vector.load %arg9[%c128_118, %c0_119] : memref<144x576xf32, #tpu.memory_space<vmem>>, vector<16x576xf32>
    tpu.vector_store %arg9[%c128_118, %c0_119], %96 {strides = array<i32>} : memref<144x576xf32, #tpu.memory_space<vmem>>, vector<16x576xf32>,
    %c2 = arith.constant 2 : index
    %c0_120 = arith.constant 0 : index
    %c0_121 = arith.constant 0 : index
    %98 = vector.load %arg2[%c2, %c0_120, %c0_121] : memref<7x16x144xf32, #tpu.memory_space<vmem>>, vector<1x16x144xf32>
    %99 = vector.shape_cast %98 : vector<1x16x144xf32> to vector<16x144xf32>
    %c0_122 = arith.constant 0 : index
    %c0_123 = arith.constant 0 : index
    %100 = vector.load %arg9[%c0_122, %c0_123] : memref<144x576xf32, #tpu.memory_space<vmem>>, vector<144x576xf32>
    %cst_124 = arith.constant dense<0.000000e+00> : vector<16x576xf32>
    %101 = tpu.matmul %99, %100, %cst_124 {dimension_numbers = #tpu.dot_dimension_numbers<[1], [0], [0], [1], [0, 0, 1, 1], [], []>} : vector<16x144xf32>, vector<144x576xf32>, vector<16x576xf32> -> vector<16x576xf32>
    %c2_125 = arith.constant 2 : index
    %c0_126 = arith.constant 0 : index
    %c0_127 = arith.constant 0 : index
    %102 = vector.load %arg3[%c2_125, %c0_126, %c0_127] : memref<7x16x1xf32, #tpu.memory_space<vmem>>, vector<1x16x1xf32>
    %103 = vector.shape_cast %102 : vector<1x16x1xf32> to vector<16x1xf32>
    %104 = vector.broadcast %103 : vector<16x1xf32> to vector<16x576xf32>
    %105 = arith.mulf %101, %104 : vector<16x576xf32>
    %c2_128 = arith.constant 2 : index
    %c0_129 = arith.constant 0 : index
    %c0_130 = arith.constant 0 : index
    %106 = vector.load %arg4[%c2_128, %c0_129, %c0_130] : memref<7x16x1xf32, #tpu.memory_space<vmem>>, vector<1x16x1xf32>
    %107 = vector.shape_cast %106 : vector<1x16x1xf32> to vector<16x1xf32>
    %108 = vector.broadcast %107 : vector<16x1xf32> to vector<16x576xf32>
    %109 = arith.addf %105, %108 : vector<16x576xf32>
    %cst_131 = arith.constant 0.000000e+00 : f32
    %110 = vector.broadcast %cst_131 : f32 to vector<16x576xf32>
    %111 = arith.maximumf %109, %110 : vector<16x576xf32>
    %cst_132 = arith.constant 0.000000e+00 : f32
    %112 = vector.broadcast %cst_132 : f32 to vector<16x576xf32>
    %113 = arith.select %9, %111, %112 : vector<16x576xi1>, vector<16x576xf32>
    %c0_133 = arith.constant 0 : index
    %c128_134 = arith.constant 128 : index
    %114 = vector.load %arg8[%c0_133, %c128_134] : memref<16x832xf32, #tpu.memory_space<vmem>>, vector<16x576xf32>
    tpu.vector_store %arg8[%c0_133, %c128_134], %113 {strides = array<i32>} : memref<16x832xf32, #tpu.memory_space<vmem>>, vector<16x576xf32>,
    %c0_135 = arith.constant 0 : index
    %c28 = arith.constant 28 : index
    %115 = vector.load %arg8[%c0_135, %c28] : memref<16x832xf32, #tpu.memory_space<vmem>>, vector<16x576xf32>
    %c0_136 = arith.constant 0 : index
    %c0_137 = arith.constant 0 : index
    %116 = vector.load %arg9[%c0_136, %c0_137] : memref<144x576xf32, #tpu.memory_space<vmem>>, vector<16x576xf32>
    tpu.vector_store %arg9[%c0_136, %c0_137], %115 {strides = array<i32>} : memref<144x576xf32, #tpu.memory_space<vmem>>, vector<16x576xf32>,
    %c0_138 = arith.constant 0 : index
    %c32_139 = arith.constant 32 : index
    %117 = vector.load %arg8[%c0_138, %c32_139] : memref<16x832xf32, #tpu.memory_space<vmem>>, vector<16x576xf32>
    %c16_140 = arith.constant 16 : index
    %c0_141 = arith.constant 0 : index
    %118 = vector.load %arg9[%c16_140, %c0_141] : memref<144x576xf32, #tpu.memory_space<vmem>>, vector<16x576xf32>
    tpu.vector_store %arg9[%c16_140, %c0_141], %117 {strides = array<i32>} : memref<144x576xf32, #tpu.memory_space<vmem>>, vector<16x576xf32>,
    %c0_142 = arith.constant 0 : index
    %c36 = arith.constant 36 : index
    %119 = vector.load %arg8[%c0_142, %c36] : memref<16x832xf32, #tpu.memory_space<vmem>>, vector<16x576xf32>
    %c32_143 = arith.constant 32 : index
    %c0_144 = arith.constant 0 : index
    %120 = vector.load %arg9[%c32_143, %c0_144] : memref<144x576xf32, #tpu.memory_space<vmem>>, vector<16x576xf32>
    tpu.vector_store %arg9[%c32_143, %c0_144], %119 {strides = array<i32>} : memref<144x576xf32, #tpu.memory_space<vmem>>, vector<16x576xf32>,
    %c0_145 = arith.constant 0 : index
    %c124 = arith.constant 124 : index
    %121 = vector.load %arg8[%c0_145, %c124] : memref<16x832xf32, #tpu.memory_space<vmem>>, vector<16x576xf32>
    %c48_146 = arith.constant 48 : index
    %c0_147 = arith.constant 0 : index
    %122 = vector.load %arg9[%c48_146, %c0_147] : memref<144x576xf32, #tpu.memory_space<vmem>>, vector<16x576xf32>
    tpu.vector_store %arg9[%c48_146, %c0_147], %121 {strides = array<i32>} : memref<144x576xf32, #tpu.memory_space<vmem>>, vector<16x576xf32>,
    %c0_148 = arith.constant 0 : index
    %c128_149 = arith.constant 128 : index
    %123 = vector.load %arg8[%c0_148, %c128_149] : memref<16x832xf32, #tpu.memory_space<vmem>>, vector<16x576xf32>
    %c64_150 = arith.constant 64 : index
    %c0_151 = arith.constant 0 : index
    %124 = vector.load %arg9[%c64_150, %c0_151] : memref<144x576xf32, #tpu.memory_space<vmem>>, vector<16x576xf32>
    tpu.vector_store %arg9[%c64_150, %c0_151], %123 {strides = array<i32>} : memref<144x576xf32, #tpu.memory_space<vmem>>, vector<16x576xf32>,
    %c0_152 = arith.constant 0 : index
    %c132 = arith.constant 132 : index
    %125 = vector.load %arg8[%c0_152, %c132] : memref<16x832xf32, #tpu.memory_space<vmem>>, vector<16x576xf32>
    %c80_153 = arith.constant 80 : index
    %c0_154 = arith.constant 0 : index
    %126 = vector.load %arg9[%c80_153, %c0_154] : memref<144x576xf32, #tpu.memory_space<vmem>>, vector<16x576xf32>
    tpu.vector_store %arg9[%c80_153, %c0_154], %125 {strides = array<i32>} : memref<144x576xf32, #tpu.memory_space<vmem>>, vector<16x576xf32>,
    %c0_155 = arith.constant 0 : index
    %c220 = arith.constant 220 : index
    %127 = vector.load %arg8[%c0_155, %c220] : memref<16x832xf32, #tpu.memory_space<vmem>>, vector<16x576xf32>
    %c96_156 = arith.constant 96 : index
    %c0_157 = arith.constant 0 : index
    %128 = vector.load %arg9[%c96_156, %c0_157] : memref<144x576xf32, #tpu.memory_space<vmem>>, vector<16x576xf32>
    tpu.vector_store %arg9[%c96_156, %c0_157], %127 {strides = array<i32>} : memref<144x576xf32, #tpu.memory_space<vmem>>, vector<16x576xf32>,
    %c0_158 = arith.constant 0 : index
    %c224 = arith.constant 224 : index
    %129 = vector.load %arg8[%c0_158, %c224] : memref<16x832xf32, #tpu.memory_space<vmem>>, vector<16x576xf32>
    %c112_159 = arith.constant 112 : index
    %c0_160 = arith.constant 0 : index
    %130 = vector.load %arg9[%c112_159, %c0_160] : memref<144x576xf32, #tpu.memory_space<vmem>>, vector<16x576xf32>
    tpu.vector_store %arg9[%c112_159, %c0_160], %129 {strides = array<i32>} : memref<144x576xf32, #tpu.memory_space<vmem>>, vector<16x576xf32>,
    %c0_161 = arith.constant 0 : index
    %c228 = arith.constant 228 : index
    %131 = vector.load %arg8[%c0_161, %c228] : memref<16x832xf32, #tpu.memory_space<vmem>>, vector<16x576xf32>
    %c128_162 = arith.constant 128 : index
    %c0_163 = arith.constant 0 : index
    %132 = vector.load %arg9[%c128_162, %c0_163] : memref<144x576xf32, #tpu.memory_space<vmem>>, vector<16x576xf32>
    tpu.vector_store %arg9[%c128_162, %c0_163], %131 {strides = array<i32>} : memref<144x576xf32, #tpu.memory_space<vmem>>, vector<16x576xf32>,
    %c3 = arith.constant 3 : index
    %c0_164 = arith.constant 0 : index
    %c0_165 = arith.constant 0 : index
    %133 = vector.load %arg2[%c3, %c0_164, %c0_165] : memref<7x16x144xf32, #tpu.memory_space<vmem>>, vector<1x16x144xf32>
    %134 = vector.shape_cast %133 : vector<1x16x144xf32> to vector<16x144xf32>
    %c0_166 = arith.constant 0 : index
    %c0_167 = arith.constant 0 : index
    %135 = vector.load %arg9[%c0_166, %c0_167] : memref<144x576xf32, #tpu.memory_space<vmem>>, vector<144x576xf32>
    %cst_168 = arith.constant dense<0.000000e+00> : vector<16x576xf32>
    %136 = tpu.matmul %134, %135, %cst_168 {dimension_numbers = #tpu.dot_dimension_numbers<[1], [0], [0], [1], [0, 0, 1, 1], [], []>} : vector<16x144xf32>, vector<144x576xf32>, vector<16x576xf32> -> vector<16x576xf32>
    %c3_169 = arith.constant 3 : index
    %c0_170 = arith.constant 0 : index
    %c0_171 = arith.constant 0 : index
    %137 = vector.load %arg3[%c3_169, %c0_170, %c0_171] : memref<7x16x1xf32, #tpu.memory_space<vmem>>, vector<1x16x1xf32>
    %138 = vector.shape_cast %137 : vector<1x16x1xf32> to vector<16x1xf32>
    %139 = vector.broadcast %138 : vector<16x1xf32> to vector<16x576xf32>
    %140 = arith.mulf %136, %139 : vector<16x576xf32>
    %c3_172 = arith.constant 3 : index
    %c0_173 = arith.constant 0 : index
    %c0_174 = arith.constant 0 : index
    %141 = vector.load %arg4[%c3_172, %c0_173, %c0_174] : memref<7x16x1xf32, #tpu.memory_space<vmem>>, vector<1x16x1xf32>
    %142 = vector.shape_cast %141 : vector<1x16x1xf32> to vector<16x1xf32>
    %143 = vector.broadcast %142 : vector<16x1xf32> to vector<16x576xf32>
    %144 = arith.addf %140, %143 : vector<16x576xf32>
    %cst_175 = arith.constant 0.000000e+00 : f32
    %145 = vector.broadcast %cst_175 : f32 to vector<16x576xf32>
    %146 = arith.maximumf %144, %145 : vector<16x576xf32>
    %cst_176 = arith.constant 0.000000e+00 : f32
    %147 = vector.broadcast %cst_176 : f32 to vector<16x576xf32>
    %148 = arith.select %9, %146, %147 : vector<16x576xi1>, vector<16x576xf32>
    %c0_177 = arith.constant 0 : index
    %c128_178 = arith.constant 128 : index
    %149 = vector.load %arg7[%c0_177, %c128_178] : memref<16x832xf32, #tpu.memory_space<vmem>>, vector<16x576xf32>
    tpu.vector_store %arg7[%c0_177, %c128_178], %148 {strides = array<i32>} : memref<16x832xf32, #tpu.memory_space<vmem>>, vector<16x576xf32>,
    %c0_179 = arith.constant 0 : index
    %c53_180 = arith.constant 53 : index
    %150 = vector.load %arg7[%c0_179, %c53_180] : memref<16x832xf32, #tpu.memory_space<vmem>>, vector<16x576xf32>
    %c0_181 = arith.constant 0 : index
    %c0_182 = arith.constant 0 : index
    %151 = vector.load %arg9[%c0_181, %c0_182] : memref<144x576xf32, #tpu.memory_space<vmem>>, vector<16x576xf32>
    tpu.vector_store %arg9[%c0_181, %c0_182], %150 {strides = array<i32>} : memref<144x576xf32, #tpu.memory_space<vmem>>, vector<16x576xf32>,
    %c0_183 = arith.constant 0 : index
    %c56_184 = arith.constant 56 : index
    %152 = vector.load %arg7[%c0_183, %c56_184] : memref<16x832xf32, #tpu.memory_space<vmem>>, vector<16x576xf32>
    %c16_185 = arith.constant 16 : index
    %c0_186 = arith.constant 0 : index
    %153 = vector.load %arg9[%c16_185, %c0_186] : memref<144x576xf32, #tpu.memory_space<vmem>>, vector<16x576xf32>
    tpu.vector_store %arg9[%c16_185, %c0_186], %152 {strides = array<i32>} : memref<144x576xf32, #tpu.memory_space<vmem>>, vector<16x576xf32>,
    %c0_187 = arith.constant 0 : index
    %c59_188 = arith.constant 59 : index
    %154 = vector.load %arg7[%c0_187, %c59_188] : memref<16x832xf32, #tpu.memory_space<vmem>>, vector<16x576xf32>
    %c32_189 = arith.constant 32 : index
    %c0_190 = arith.constant 0 : index
    %155 = vector.load %arg9[%c32_189, %c0_190] : memref<144x576xf32, #tpu.memory_space<vmem>>, vector<16x576xf32>
    tpu.vector_store %arg9[%c32_189, %c0_190], %154 {strides = array<i32>} : memref<144x576xf32, #tpu.memory_space<vmem>>, vector<16x576xf32>,
    %c0_191 = arith.constant 0 : index
    %c125_192 = arith.constant 125 : index
    %156 = vector.load %arg7[%c0_191, %c125_192] : memref<16x832xf32, #tpu.memory_space<vmem>>, vector<16x576xf32>
    %c48_193 = arith.constant 48 : index
    %c0_194 = arith.constant 0 : index
    %157 = vector.load %arg9[%c48_193, %c0_194] : memref<144x576xf32, #tpu.memory_space<vmem>>, vector<16x576xf32>
    tpu.vector_store %arg9[%c48_193, %c0_194], %156 {strides = array<i32>} : memref<144x576xf32, #tpu.memory_space<vmem>>, vector<16x576xf32>,
    %c0_195 = arith.constant 0 : index
    %c128_196 = arith.constant 128 : index
    %158 = vector.load %arg7[%c0_195, %c128_196] : memref<16x832xf32, #tpu.memory_space<vmem>>, vector<16x576xf32>
    %c64_197 = arith.constant 64 : index
    %c0_198 = arith.constant 0 : index
    %159 = vector.load %arg9[%c64_197, %c0_198] : memref<144x576xf32, #tpu.memory_space<vmem>>, vector<16x576xf32>
    tpu.vector_store %arg9[%c64_197, %c0_198], %158 {strides = array<i32>} : memref<144x576xf32, #tpu.memory_space<vmem>>, vector<16x576xf32>,
    %c0_199 = arith.constant 0 : index
    %c131_200 = arith.constant 131 : index
    %160 = vector.load %arg7[%c0_199, %c131_200] : memref<16x832xf32, #tpu.memory_space<vmem>>, vector<16x576xf32>
    %c80_201 = arith.constant 80 : index
    %c0_202 = arith.constant 0 : index
    %161 = vector.load %arg9[%c80_201, %c0_202] : memref<144x576xf32, #tpu.memory_space<vmem>>, vector<16x576xf32>
    tpu.vector_store %arg9[%c80_201, %c0_202], %160 {strides = array<i32>} : memref<144x576xf32, #tpu.memory_space<vmem>>, vector<16x576xf32>,
    %c0_203 = arith.constant 0 : index
    %c197_204 = arith.constant 197 : index
    %162 = vector.load %arg7[%c0_203, %c197_204] : memref<16x832xf32, #tpu.memory_space<vmem>>, vector<16x576xf32>
    %c96_205 = arith.constant 96 : index
    %c0_206 = arith.constant 0 : index
    %163 = vector.load %arg9[%c96_205, %c0_206] : memref<144x576xf32, #tpu.memory_space<vmem>>, vector<16x576xf32>
    tpu.vector_store %arg9[%c96_205, %c0_206], %162 {strides = array<i32>} : memref<144x576xf32, #tpu.memory_space<vmem>>, vector<16x576xf32>,
    %c0_207 = arith.constant 0 : index
    %c200_208 = arith.constant 200 : index
    %164 = vector.load %arg7[%c0_207, %c200_208] : memref<16x832xf32, #tpu.memory_space<vmem>>, vector<16x576xf32>
    %c112_209 = arith.constant 112 : index
    %c0_210 = arith.constant 0 : index
    %165 = vector.load %arg9[%c112_209, %c0_210] : memref<144x576xf32, #tpu.memory_space<vmem>>, vector<16x576xf32>
    tpu.vector_store %arg9[%c112_209, %c0_210], %164 {strides = array<i32>} : memref<144x576xf32, #tpu.memory_space<vmem>>, vector<16x576xf32>,
    %c0_211 = arith.constant 0 : index
    %c203_212 = arith.constant 203 : index
    %166 = vector.load %arg7[%c0_211, %c203_212] : memref<16x832xf32, #tpu.memory_space<vmem>>, vector<16x576xf32>
    %c128_213 = arith.constant 128 : index
    %c0_214 = arith.constant 0 : index
    %167 = vector.load %arg9[%c128_213, %c0_214] : memref<144x576xf32, #tpu.memory_space<vmem>>, vector<16x576xf32>
    tpu.vector_store %arg9[%c128_213, %c0_214], %166 {strides = array<i32>} : memref<144x576xf32, #tpu.memory_space<vmem>>, vector<16x576xf32>,
    %c4 = arith.constant 4 : index
    %c0_215 = arith.constant 0 : index
    %c0_216 = arith.constant 0 : index
    %168 = vector.load %arg2[%c4, %c0_215, %c0_216] : memref<7x16x144xf32, #tpu.memory_space<vmem>>, vector<1x16x144xf32>
    %169 = vector.shape_cast %168 : vector<1x16x144xf32> to vector<16x144xf32>
    %c0_217 = arith.constant 0 : index
    %c0_218 = arith.constant 0 : index
    %170 = vector.load %arg9[%c0_217, %c0_218] : memref<144x576xf32, #tpu.memory_space<vmem>>, vector<144x576xf32>
    %cst_219 = arith.constant dense<0.000000e+00> : vector<16x576xf32>
    %171 = tpu.matmul %169, %170, %cst_219 {dimension_numbers = #tpu.dot_dimension_numbers<[1], [0], [0], [1], [0, 0, 1, 1], [], []>} : vector<16x144xf32>, vector<144x576xf32>, vector<16x576xf32> -> vector<16x576xf32>
    %c4_220 = arith.constant 4 : index
    %c0_221 = arith.constant 0 : index
    %c0_222 = arith.constant 0 : index
    %172 = vector.load %arg3[%c4_220, %c0_221, %c0_222] : memref<7x16x1xf32, #tpu.memory_space<vmem>>, vector<1x16x1xf32>
    %173 = vector.shape_cast %172 : vector<1x16x1xf32> to vector<16x1xf32>
    %174 = vector.broadcast %173 : vector<16x1xf32> to vector<16x576xf32>
    %175 = arith.mulf %171, %174 : vector<16x576xf32>
    %c4_223 = arith.constant 4 : index
    %c0_224 = arith.constant 0 : index
    %c0_225 = arith.constant 0 : index
    %176 = vector.load %arg4[%c4_223, %c0_224, %c0_225] : memref<7x16x1xf32, #tpu.memory_space<vmem>>, vector<1x16x1xf32>
    %177 = vector.shape_cast %176 : vector<1x16x1xf32> to vector<16x1xf32>
    %178 = vector.broadcast %177 : vector<16x1xf32> to vector<16x576xf32>
    %179 = arith.addf %175, %178 : vector<16x576xf32>
    %cst_226 = arith.constant 0.000000e+00 : f32
    %180 = vector.broadcast %cst_226 : f32 to vector<16x576xf32>
    %181 = arith.maximumf %179, %180 : vector<16x576xf32>
    %cst_227 = arith.constant 0.000000e+00 : f32
    %182 = vector.broadcast %cst_227 : f32 to vector<16x576xf32>
    %183 = arith.select %9, %181, %182 : vector<16x576xi1>, vector<16x576xf32>
    %c0_228 = arith.constant 0 : index
    %c128_229 = arith.constant 128 : index
    %184 = vector.load %arg8[%c0_228, %c128_229] : memref<16x832xf32, #tpu.memory_space<vmem>>, vector<16x576xf32>
    tpu.vector_store %arg8[%c0_228, %c128_229], %183 {strides = array<i32>} : memref<16x832xf32, #tpu.memory_space<vmem>>, vector<16x576xf32>,
    %c0_230 = arith.constant 0 : index
    %c78_231 = arith.constant 78 : index
    %185 = vector.load %arg8[%c0_230, %c78_231] : memref<16x832xf32, #tpu.memory_space<vmem>>, vector<16x576xf32>
    %c0_232 = arith.constant 0 : index
    %c0_233 = arith.constant 0 : index
    %186 = vector.load %arg9[%c0_232, %c0_233] : memref<144x576xf32, #tpu.memory_space<vmem>>, vector<16x576xf32>
    tpu.vector_store %arg9[%c0_232, %c0_233], %185 {strides = array<i32>} : memref<144x576xf32, #tpu.memory_space<vmem>>, vector<16x576xf32>,
    %c0_234 = arith.constant 0 : index
    %c80_235 = arith.constant 80 : index
    %187 = vector.load %arg8[%c0_234, %c80_235] : memref<16x832xf32, #tpu.memory_space<vmem>>, vector<16x576xf32>
    %c16_236 = arith.constant 16 : index
    %c0_237 = arith.constant 0 : index
    %188 = vector.load %arg9[%c16_236, %c0_237] : memref<144x576xf32, #tpu.memory_space<vmem>>, vector<16x576xf32>
    tpu.vector_store %arg9[%c16_236, %c0_237], %187 {strides = array<i32>} : memref<144x576xf32, #tpu.memory_space<vmem>>, vector<16x576xf32>,
    %c0_238 = arith.constant 0 : index
    %c82_239 = arith.constant 82 : index
    %189 = vector.load %arg8[%c0_238, %c82_239] : memref<16x832xf32, #tpu.memory_space<vmem>>, vector<16x576xf32>
    %c32_240 = arith.constant 32 : index
    %c0_241 = arith.constant 0 : index
    %190 = vector.load %arg9[%c32_240, %c0_241] : memref<144x576xf32, #tpu.memory_space<vmem>>, vector<16x576xf32>
    tpu.vector_store %arg9[%c32_240, %c0_241], %189 {strides = array<i32>} : memref<144x576xf32, #tpu.memory_space<vmem>>, vector<16x576xf32>,
    %c0_242 = arith.constant 0 : index
    %c126_243 = arith.constant 126 : index
    %191 = vector.load %arg8[%c0_242, %c126_243] : memref<16x832xf32, #tpu.memory_space<vmem>>, vector<16x576xf32>
    %c48_244 = arith.constant 48 : index
    %c0_245 = arith.constant 0 : index
    %192 = vector.load %arg9[%c48_244, %c0_245] : memref<144x576xf32, #tpu.memory_space<vmem>>, vector<16x576xf32>
    tpu.vector_store %arg9[%c48_244, %c0_245], %191 {strides = array<i32>} : memref<144x576xf32, #tpu.memory_space<vmem>>, vector<16x576xf32>,
    %c0_246 = arith.constant 0 : index
    %c128_247 = arith.constant 128 : index
    %193 = vector.load %arg8[%c0_246, %c128_247] : memref<16x832xf32, #tpu.memory_space<vmem>>, vector<16x576xf32>
    %c64_248 = arith.constant 64 : index
    %c0_249 = arith.constant 0 : index
    %194 = vector.load %arg9[%c64_248, %c0_249] : memref<144x576xf32, #tpu.memory_space<vmem>>, vector<16x576xf32>
    tpu.vector_store %arg9[%c64_248, %c0_249], %193 {strides = array<i32>} : memref<144x576xf32, #tpu.memory_space<vmem>>, vector<16x576xf32>,
    %c0_250 = arith.constant 0 : index
    %c130_251 = arith.constant 130 : index
    %195 = vector.load %arg8[%c0_250, %c130_251] : memref<16x832xf32, #tpu.memory_space<vmem>>, vector<16x576xf32>
    %c80_252 = arith.constant 80 : index
    %c0_253 = arith.constant 0 : index
    %196 = vector.load %arg9[%c80_252, %c0_253] : memref<144x576xf32, #tpu.memory_space<vmem>>, vector<16x576xf32>
    tpu.vector_store %arg9[%c80_252, %c0_253], %195 {strides = array<i32>} : memref<144x576xf32, #tpu.memory_space<vmem>>, vector<16x576xf32>,
    %c0_254 = arith.constant 0 : index
    %c174_255 = arith.constant 174 : index
    %197 = vector.load %arg8[%c0_254, %c174_255] : memref<16x832xf32, #tpu.memory_space<vmem>>, vector<16x576xf32>
    %c96_256 = arith.constant 96 : index
    %c0_257 = arith.constant 0 : index
    %198 = vector.load %arg9[%c96_256, %c0_257] : memref<144x576xf32, #tpu.memory_space<vmem>>, vector<16x576xf32>
    tpu.vector_store %arg9[%c96_256, %c0_257], %197 {strides = array<i32>} : memref<144x576xf32, #tpu.memory_space<vmem>>, vector<16x576xf32>,
    %c0_258 = arith.constant 0 : index
    %c176_259 = arith.constant 176 : index
    %199 = vector.load %arg8[%c0_258, %c176_259] : memref<16x832xf32, #tpu.memory_space<vmem>>, vector<16x576xf32>
    %c112_260 = arith.constant 112 : index
    %c0_261 = arith.constant 0 : index
    %200 = vector.load %arg9[%c112_260, %c0_261] : memref<144x576xf32, #tpu.memory_space<vmem>>, vector<16x576xf32>
    tpu.vector_store %arg9[%c112_260, %c0_261], %199 {strides = array<i32>} : memref<144x576xf32, #tpu.memory_space<vmem>>, vector<16x576xf32>,
    %c0_262 = arith.constant 0 : index
    %c178_263 = arith.constant 178 : index
    %201 = vector.load %arg8[%c0_262, %c178_263] : memref<16x832xf32, #tpu.memory_space<vmem>>, vector<16x576xf32>
    %c128_264 = arith.constant 128 : index
    %c0_265 = arith.constant 0 : index
    %202 = vector.load %arg9[%c128_264, %c0_265] : memref<144x576xf32, #tpu.memory_space<vmem>>, vector<16x576xf32>
    tpu.vector_store %arg9[%c128_264, %c0_265], %201 {strides = array<i32>} : memref<144x576xf32, #tpu.memory_space<vmem>>, vector<16x576xf32>,
    %c5 = arith.constant 5 : index
    %c0_266 = arith.constant 0 : index
    %c0_267 = arith.constant 0 : index
    %203 = vector.load %arg2[%c5, %c0_266, %c0_267] : memref<7x16x144xf32, #tpu.memory_space<vmem>>, vector<1x16x144xf32>
    %204 = vector.shape_cast %203 : vector<1x16x144xf32> to vector<16x144xf32>
    %c0_268 = arith.constant 0 : index
    %c0_269 = arith.constant 0 : index
    %205 = vector.load %arg9[%c0_268, %c0_269] : memref<144x576xf32, #tpu.memory_space<vmem>>, vector<144x576xf32>
    %cst_270 = arith.constant dense<0.000000e+00> : vector<16x576xf32>
    %206 = tpu.matmul %204, %205, %cst_270 {dimension_numbers = #tpu.dot_dimension_numbers<[1], [0], [0], [1], [0, 0, 1, 1], [], []>} : vector<16x144xf32>, vector<144x576xf32>, vector<16x576xf32> -> vector<16x576xf32>
    %c5_271 = arith.constant 5 : index
    %c0_272 = arith.constant 0 : index
    %c0_273 = arith.constant 0 : index
    %207 = vector.load %arg3[%c5_271, %c0_272, %c0_273] : memref<7x16x1xf32, #tpu.memory_space<vmem>>, vector<1x16x1xf32>
    %208 = vector.shape_cast %207 : vector<1x16x1xf32> to vector<16x1xf32>
    %209 = vector.broadcast %208 : vector<16x1xf32> to vector<16x576xf32>
    %210 = arith.mulf %206, %209 : vector<16x576xf32>
    %c5_274 = arith.constant 5 : index
    %c0_275 = arith.constant 0 : index
    %c0_276 = arith.constant 0 : index
    %211 = vector.load %arg4[%c5_274, %c0_275, %c0_276] : memref<7x16x1xf32, #tpu.memory_space<vmem>>, vector<1x16x1xf32>
    %212 = vector.shape_cast %211 : vector<1x16x1xf32> to vector<16x1xf32>
    %213 = vector.broadcast %212 : vector<16x1xf32> to vector<16x576xf32>
    %214 = arith.addf %210, %213 : vector<16x576xf32>
    %cst_277 = arith.constant 0.000000e+00 : f32
    %215 = vector.broadcast %cst_277 : f32 to vector<16x576xf32>
    %216 = arith.maximumf %214, %215 : vector<16x576xf32>
    %cst_278 = arith.constant 0.000000e+00 : f32
    %217 = vector.broadcast %cst_278 : f32 to vector<16x576xf32>
    %218 = arith.select %9, %216, %217 : vector<16x576xi1>, vector<16x576xf32>
    %c0_279 = arith.constant 0 : index
    %c128_280 = arith.constant 128 : index
    %219 = vector.load %arg7[%c0_279, %c128_280] : memref<16x832xf32, #tpu.memory_space<vmem>>, vector<16x576xf32>
    tpu.vector_store %arg7[%c0_279, %c128_280], %218 {strides = array<i32>} : memref<16x832xf32, #tpu.memory_space<vmem>>, vector<16x576xf32>,
    %c0_281 = arith.constant 0 : index
    %c103_282 = arith.constant 103 : index
    %220 = vector.load %arg7[%c0_281, %c103_282] : memref<16x832xf32, #tpu.memory_space<vmem>>, vector<16x576xf32>
    %c0_283 = arith.constant 0 : index
    %c0_284 = arith.constant 0 : index
    %221 = vector.load %arg9[%c0_283, %c0_284] : memref<144x576xf32, #tpu.memory_space<vmem>>, vector<16x576xf32>
    tpu.vector_store %arg9[%c0_283, %c0_284], %220 {strides = array<i32>} : memref<144x576xf32, #tpu.memory_space<vmem>>, vector<16x576xf32>,
    %c0_285 = arith.constant 0 : index
    %c104_286 = arith.constant 104 : index
    %222 = vector.load %arg7[%c0_285, %c104_286] : memref<16x832xf32, #tpu.memory_space<vmem>>, vector<16x576xf32>
    %c16_287 = arith.constant 16 : index
    %c0_288 = arith.constant 0 : index
    %223 = vector.load %arg9[%c16_287, %c0_288] : memref<144x576xf32, #tpu.memory_space<vmem>>, vector<16x576xf32>
    tpu.vector_store %arg9[%c16_287, %c0_288], %222 {strides = array<i32>} : memref<144x576xf32, #tpu.memory_space<vmem>>, vector<16x576xf32>,
    %c0_289 = arith.constant 0 : index
    %c105_290 = arith.constant 105 : index
    %224 = vector.load %arg7[%c0_289, %c105_290] : memref<16x832xf32, #tpu.memory_space<vmem>>, vector<16x576xf32>
    %c32_291 = arith.constant 32 : index
    %c0_292 = arith.constant 0 : index
    %225 = vector.load %arg9[%c32_291, %c0_292] : memref<144x576xf32, #tpu.memory_space<vmem>>, vector<16x576xf32>
    tpu.vector_store %arg9[%c32_291, %c0_292], %224 {strides = array<i32>} : memref<144x576xf32, #tpu.memory_space<vmem>>, vector<16x576xf32>,
    %c0_293 = arith.constant 0 : index
    %c127_294 = arith.constant 127 : index
    %226 = vector.load %arg7[%c0_293, %c127_294] : memref<16x832xf32, #tpu.memory_space<vmem>>, vector<16x576xf32>
    %c48_295 = arith.constant 48 : index
    %c0_296 = arith.constant 0 : index
    %227 = vector.load %arg9[%c48_295, %c0_296] : memref<144x576xf32, #tpu.memory_space<vmem>>, vector<16x576xf32>
    tpu.vector_store %arg9[%c48_295, %c0_296], %226 {strides = array<i32>} : memref<144x576xf32, #tpu.memory_space<vmem>>, vector<16x576xf32>,
    %c0_297 = arith.constant 0 : index
    %c128_298 = arith.constant 128 : index
    %228 = vector.load %arg7[%c0_297, %c128_298] : memref<16x832xf32, #tpu.memory_space<vmem>>, vector<16x576xf32>
    %c64_299 = arith.constant 64 : index
    %c0_300 = arith.constant 0 : index
    %229 = vector.load %arg9[%c64_299, %c0_300] : memref<144x576xf32, #tpu.memory_space<vmem>>, vector<16x576xf32>
    tpu.vector_store %arg9[%c64_299, %c0_300], %228 {strides = array<i32>} : memref<144x576xf32, #tpu.memory_space<vmem>>, vector<16x576xf32>,
    %c0_301 = arith.constant 0 : index
    %c129_302 = arith.constant 129 : index
    %230 = vector.load %arg7[%c0_301, %c129_302] : memref<16x832xf32, #tpu.memory_space<vmem>>, vector<16x576xf32>
    %c80_303 = arith.constant 80 : index
    %c0_304 = arith.constant 0 : index
    %231 = vector.load %arg9[%c80_303, %c0_304] : memref<144x576xf32, #tpu.memory_space<vmem>>, vector<16x576xf32>
    tpu.vector_store %arg9[%c80_303, %c0_304], %230 {strides = array<i32>} : memref<144x576xf32, #tpu.memory_space<vmem>>, vector<16x576xf32>,
    %c0_305 = arith.constant 0 : index
    %c151_306 = arith.constant 151 : index
    %232 = vector.load %arg7[%c0_305, %c151_306] : memref<16x832xf32, #tpu.memory_space<vmem>>, vector<16x576xf32>
    %c96_307 = arith.constant 96 : index
    %c0_308 = arith.constant 0 : index
    %233 = vector.load %arg9[%c96_307, %c0_308] : memref<144x576xf32, #tpu.memory_space<vmem>>, vector<16x576xf32>
    tpu.vector_store %arg9[%c96_307, %c0_308], %232 {strides = array<i32>} : memref<144x576xf32, #tpu.memory_space<vmem>>, vector<16x576xf32>,
    %c0_309 = arith.constant 0 : index
    %c152_310 = arith.constant 152 : index
    %234 = vector.load %arg7[%c0_309, %c152_310] : memref<16x832xf32, #tpu.memory_space<vmem>>, vector<16x576xf32>
    %c112_311 = arith.constant 112 : index
    %c0_312 = arith.constant 0 : index
    %235 = vector.load %arg9[%c112_311, %c0_312] : memref<144x576xf32, #tpu.memory_space<vmem>>, vector<16x576xf32>
    tpu.vector_store %arg9[%c112_311, %c0_312], %234 {strides = array<i32>} : memref<144x576xf32, #tpu.memory_space<vmem>>, vector<16x576xf32>,
    %c0_313 = arith.constant 0 : index
    %c153_314 = arith.constant 153 : index
    %236 = vector.load %arg7[%c0_313, %c153_314] : memref<16x832xf32, #tpu.memory_space<vmem>>, vector<16x576xf32>
    %c128_315 = arith.constant 128 : index
    %c0_316 = arith.constant 0 : index
    %237 = vector.load %arg9[%c128_315, %c0_316] : memref<144x576xf32, #tpu.memory_space<vmem>>, vector<16x576xf32>
    tpu.vector_store %arg9[%c128_315, %c0_316], %236 {strides = array<i32>} : memref<144x576xf32, #tpu.memory_space<vmem>>, vector<16x576xf32>,
    %c6 = arith.constant 6 : index
    %c0_317 = arith.constant 0 : index
    %c0_318 = arith.constant 0 : index
    %238 = vector.load %arg2[%c6, %c0_317, %c0_318] : memref<7x16x144xf32, #tpu.memory_space<vmem>>, vector<1x16x144xf32>
    %239 = vector.shape_cast %238 : vector<1x16x144xf32> to vector<16x144xf32>
    %c0_319 = arith.constant 0 : index
    %c0_320 = arith.constant 0 : index
    %240 = vector.load %arg9[%c0_319, %c0_320] : memref<144x576xf32, #tpu.memory_space<vmem>>, vector<144x576xf32>
    %cst_321 = arith.constant dense<0.000000e+00> : vector<16x576xf32>
    %241 = tpu.matmul %239, %240, %cst_321 {dimension_numbers = #tpu.dot_dimension_numbers<[1], [0], [0], [1], [0, 0, 1, 1], [], []>} : vector<16x144xf32>, vector<144x576xf32>, vector<16x576xf32> -> vector<16x576xf32>
    %c6_322 = arith.constant 6 : index
    %c0_323 = arith.constant 0 : index
    %c0_324 = arith.constant 0 : index
    %242 = vector.load %arg3[%c6_322, %c0_323, %c0_324] : memref<7x16x1xf32, #tpu.memory_space<vmem>>, vector<1x16x1xf32>
    %243 = vector.shape_cast %242 : vector<1x16x1xf32> to vector<16x1xf32>
    %244 = vector.broadcast %243 : vector<16x1xf32> to vector<16x576xf32>
    %245 = arith.mulf %241, %244 : vector<16x576xf32>
    %c6_325 = arith.constant 6 : index
    %c0_326 = arith.constant 0 : index
    %c0_327 = arith.constant 0 : index
    %246 = vector.load %arg4[%c6_325, %c0_326, %c0_327] : memref<7x16x1xf32, #tpu.memory_space<vmem>>, vector<1x16x1xf32>
    %247 = vector.shape_cast %246 : vector<1x16x1xf32> to vector<16x1xf32>
    %248 = vector.broadcast %247 : vector<16x1xf32> to vector<16x576xf32>
    %249 = arith.addf %245, %248 : vector<16x576xf32>
    %c0_328 = arith.constant 0 : index
    %c0_329 = arith.constant 0 : index
    %c0_330 = arith.constant 0 : index
    %250 = vector.load %arg1[%c0_328, %c0_329, %c0_330] : memref<1x2x576xf32, #tpu.memory_space<vmem>>, vector<1x2x576xf32>
    %251 = vector.shape_cast %250 : vector<1x2x576xf32> to vector<2x576xf32>
    %252 = vector.extract_strided_slice %249 {offsets = [0, 0], sizes = [2, 576], strides = [1, 1]} : vector<16x576xf32> to vector<2x576xf32>
    %253 = arith.addf %251, %252 : vector<2x576xf32>
    %c0_331 = arith.constant 0 : index
    %c0_332 = arith.constant 0 : index
    %c0_333 = arith.constant 0 : index
    %254 = vector.load %arg6[%c0_331, %c0_332, %c0_333] : memref<1x2x576xf32, #tpu.memory_space<vmem>>, vector<1x2x576xf32>
    %255 = vector.shape_cast %254 : vector<1x2x576xf32> to vector<2x576xf32>
    %256 = vector.shape_cast %253 : vector<2x576xf32> to vector<1x2x576xf32>
    tpu.vector_store %arg6[%c0_331, %c0_332, %c0_333], %256 {strides = array<i32>} : memref<1x2x576xf32, #tpu.memory_space<vmem>>, vector<1x2x576xf32>,
    return
  }
  func.func @transform_0(%arg0: i32) -> (i32, i32, i32) {
    %c0_i32 = arith.constant 0 : i32
    %c0_i32_0 = arith.constant 0 : i32
    %c0_i32_1 = arith.constant 0 : i32
    return %arg0, %c0_i32, %c0_i32_0 : i32, i32, i32
  }
  func.func @transform_1(%arg0: i32) -> (i32, i32, i32) {
    %c0_i32 = arith.constant 0 : i32
    %c0_i32_0 = arith.constant 0 : i32
    %c0_i32_1 = arith.constant 0 : i32
    %c0_i32_2 = arith.constant 0 : i32
    return %c0_i32, %c0_i32_0, %c0_i32_1 : i32, i32, i32
  }
  func.func @transform_2(%arg0: i32) -> (i32, i32, i32) {
    %c0_i32 = arith.constant 0 : i32
    %c0_i32_0 = arith.constant 0 : i32
    %c0_i32_1 = arith.constant 0 : i32
    %c0_i32_2 = arith.constant 0 : i32
    return %c0_i32, %c0_i32_0, %c0_i32_1 : i32, i32, i32
  }
  func.func @transform_3(%arg0: i32) -> (i32, i32, i32) {
    %c0_i32 = arith.constant 0 : i32
    %c0_i32_0 = arith.constant 0 : i32
    %c0_i32_1 = arith.constant 0 : i32
    %c0_i32_2 = arith.constant 0 : i32
    return %c0_i32, %c0_i32_0, %c0_i32_1 : i32, i32, i32
  }
  func.func @transform_4(%arg0: i32) -> (i32, i32) {
    %c0_i32 = arith.constant 0 : i32
    %c0_i32_0 = arith.constant 0 : i32
    %c0_i32_1 = arith.constant 0 : i32
    return %c0_i32, %c0_i32_0 : i32, i32
  }
  func.func @transform_5(%arg0: i32) -> (i32, i32, i32) {
    %c0_i32 = arith.constant 0 : i32
    %c0_i32_0 = arith.constant 0 : i32
    %c0_i32_1 = arith.constant 0 : i32
    return %arg0, %c0_i32, %c0_i32_0 : i32, i32, i32
  }
}

</mosaic_0001>

<llo_original>
// kernel: dncnn_dilated_forward.1
$region0: #{dncnn_dilated_forward.1}
  #allocation0 [shape = 'u32[]', space=smem, size = 0x4, offset = 0x4, fixed_abs, tag = 'smem constant byte address 0x4 - core index']
  #allocation1 [shape = 'u32[144,128]{1,0:T(1,128)}', space=vmem, size = 0x12000, scoped, tag = 'internal scratch']
  #allocation2 [shape = 'f32[16,832]{1,0:T(8,128)}', space=vmem, size = 0xe000, scoped, tag = 'scratch operand']
  #allocation3 [shape = 'f32[16,832]{1,0:T(8,128)}', space=vmem, size = 0xe000, scoped, tag = 'scratch operand']
  #allocation4 [shape = 'f32[144,576]{1,0:T(8,128)}', space=vmem, size = 0x5a000, scoped, tag = 'scratch operand']
  %s0 = inlined_call_operand.vmem [shape: f32[2,2,576], index: 0, kind: input, shape index: {}]
  %s1 = inlined_call_operand.vmem [shape: f32[7,16,144], index: 1, kind: input, shape index: {}]
  %s2 = inlined_call_operand.vmem [shape: f32[7,16,1], index: 2, kind: input, shape index: {}]
  %s3 = inlined_call_operand.vmem [shape: f32[7,16,1], index: 3, kind: input, shape index: {}]
  %s4 = inlined_call_operand.vmem [shape: f32[16,576], index: 4, kind: input, shape index: {}]
  %s5 = inlined_call_operand.vmem [shape: f32[2,2,576], index: 5, kind: output, shape index: {}]
  %s6 = sld [smem:[#allocation0]]
  $region53: #{dncnn_dilated_forward.1} parent=0
    _
  %s8 = ssub.s32 1, %s6
  %s9 = scalar_select 0, %s8, %s6
  loop: start=0, step=1, limit=4
  $region2: #{dncnn_dilated_forward.1} parent=0 // loop_pre_header
    _
  $region3: #{dncnn_dilated_forward.1} parent=0 // loop_header
    %s11 = sphi 0, %s15
    %p12 = scmp.ge.s32.totalorder %s11, 4
    %s21 = sphi 0, %s23
    %s24 = sphi 0, %s21
    %s25 = sphi 0, %s24
    %s41 = sphi 0, %s25
    %s45 = sphi 0, %s45
    %s47 = sphi 0, %s45
    %s48 = sphi 0, %s47
    %s62 = sphi 0, %s48
    %s66 = sphi 0, %s66
    %s68 = sphi 0, %s66
    %s69 = sphi 0, %s68
    %s83 = sphi 0, %s69
    %s87 = sphi 0, %s87
    %s89 = sphi 0, %s87
    %s90 = sphi 0, %s89
    %s104 = sphi 0, %s90
    %s108 = sphi 0, %s108
    %s110 = sphi 0, %s108
    %s111 = sphi 0, %s110
    %s125 = sphi 0, %s111
    %s131 = sphi 0, %s133
    %s134 = sphi 0, %s131
    %s135 = sphi 0, %s134
    %s151 = sphi 0, %s135
  $region4: #{dncnn_dilated_forward.1} parent=0 // loop_header_branch
    %14 = sbr.rel (%p12) target = $region8
  $region5: #{dncnn_dilated_forward.1} parent=0 // loop_body
    %s16 = ssub.s32 %s11, 1
    %s17 = ssub.s32 %s11, 2
    %s18 = sadd.s32 %s11, 1
    %s19 = ssub.s32 %s11, %s18
    %p20 = scmp.eq.s32.totalorder %s19, 0
    %s22 = sadd.s32 %s21, 1
    %s23 = scalar_select %p20, %s21, %s22
    %p26 = pneg %p20
    %p27 = scmp.eq.s32.totalorder %s11, 1
    %p28 = por %p26, %p27
    %p29 = scmp.ne.s32.totalorder %s21, %s24
    %p30 = scmp.eq.s32.totalorder %s11, 0
    %p31 = por %p29, %p30
    %p32 = scmp.ne.s32.totalorder %s21, %s24
    %p33 = scmp.eq.s32.totalorder %s16, 1
    %p34 = por %p32, %p33
    %p35 = scmp.ne.s32.totalorder %s24, %s25
    %p36 = scmp.eq.s32.totalorder %s16, 0
    %p37 = por %p35, %p36
    %p38 = scmp.ne.s32.totalorder %s24, %s25
    %p39 = scmp.eq.s32.totalorder %s17, 1
    %p40 = por %p38, %p39
    %p42 = scmp.ne.s32.totalorder %s25, %s41
    %p43 = scmp.eq.s32.totalorder %s17, 0
    %p44 = por %p42, %p43
    %s46 = sadd.s32 %s45, 1
    %p49 = scmp.eq.s32.totalorder %s11, 1
    %p50 = scmp.ne.s32.totalorder %s45, %s47
    %p51 = scmp.eq.s32.totalorder %s11, 0
    %p52 = por %p50, %p51
    %p53 = scmp.ne.s32.totalorder %s45, %s47
    %p54 = scmp.eq.s32.totalorder %s16, 1
    %p55 = por %p53, %p54
    %p56 = scmp.ne.s32.totalorder %s47, %s48
    %p57 = scmp.eq.s32.totalorder %s16, 0
    %p58 = por %p56, %p57
    %p59 = scmp.ne.s32.totalorder %s47, %s48
    %p60 = scmp.eq.s32.totalorder %s17, 1
    %p61 = por %p59, %p60
    %p63 = scmp.ne.s32.totalorder %s48, %s62
    %p64 = scmp.eq.s32.totalorder %s17, 0
    %p65 = por %p63, %p64
    %s67 = sadd.s32 %s66, 1
    %p70 = scmp.eq.s32.totalorder %s11, 1
    %p71 = scmp.ne.s32.totalorder %s66, %s68
    %p72 = scmp.eq.s32.totalorder %s11, 0
    %p73 = por %p71, %p72
    %p74 = scmp.ne.s32.totalorder %s66, %s68
    %p75 = scmp.eq.s32.totalorder %s16, 1
    %p76 = por %p74, %p75
    %p77 = scmp.ne.s32.totalorder %s68, %s69
    %p78 = scmp.eq.s32.totalorder %s16, 0
    %p79 = por %p77, %p78
    %p80 = scmp.ne.s32.totalorder %s68, %s69
    %p81 = scmp.eq.s32.totalorder %s17, 1
    %p82 = por %p80, %p81
    %p84 = scmp.ne.s32.totalorder %s69, %s83
    %p85 = scmp.eq.s32.totalorder %s17, 0
    %p86 = por %p84, %p85
    %s88 = sadd.s32 %s87, 1
    %p91 = scmp.eq.s32.totalorder %s11, 1
    %p92 = scmp.ne.s32.totalorder %s87, %s89
    %p93 = scmp.eq.s32.totalorder %s11, 0
    %p94 = por %p92, %p93
    %p95 = scmp.ne.s32.totalorder %s87, %s89
    %p96 = scmp.eq.s32.totalorder %s16, 1
    %p97 = por %p95, %p96
    %p98 = scmp.ne.s32.totalorder %s89, %s90
    %p99 = scmp.eq.s32.totalorder %s16, 0
    %p100 = por %p98, %p99
    %p101 = scmp.ne.s32.totalorder %s89, %s90
    %p102 = scmp.eq.s32.totalorder %s17, 1
    %p103 = por %p101, %p102
    %p105 = scmp.ne.s32.totalorder %s90, %s104
    %p106 = scmp.eq.s32.totalorder %s17, 0
    %p107 = por %p105, %p106
    %s109 = sadd.s32 %s108, 1
    %p112 = scmp.eq.s32.totalorder %s11, 1
    %p113 = scmp.ne.s32.totalorder %s108, %s110
    %p114 = scmp.eq.s32.totalorder %s11, 0
    %p115 = por %p113, %p114
    %p116 = scmp.ne.s32.totalorder %s108, %s110
    %p117 = scmp.eq.s32.totalorder %s16, 1
    %p118 = por %p116, %p117
    %p119 = scmp.ne.s32.totalorder %s110, %s111
    %p120 = scmp.eq.s32.totalorder %s16, 0
    %p121 = por %p119, %p120
    %p122 = scmp.ne.s32.totalorder %s110, %s111
    %p123 = scmp.eq.s32.totalorder %s17, 1
    %p124 = por %p122, %p123
    %p126 = scmp.ne.s32.totalorder %s111, %s125
    %p127 = scmp.eq.s32.totalorder %s17, 0
    %p128 = por %p126, %p127
    %s129 = ssub.s32 %s11, %s18
    %p130 = scmp.eq.s32.totalorder %s129, 0
    %s132 = sadd.s32 %s131, 1
    %s133 = scalar_select %p130, %s131, %s132
    %p136 = pneg %p130
    %p137 = scmp.eq.s32.totalorder %s11, 1
    %p138 = por %p136, %p137
    %p139 = scmp.ne.s32.totalorder %s131, %s134
    %p140 = scmp.eq.s32.totalorder %s11, 0
    %p141 = por %p139, %p140
    %p142 = scmp.ne.s32.totalorder %s131, %s134
    %p143 = scmp.eq.s32.totalorder %s16, 1
    %p144 = por %p142, %p143
    %p145 = scmp.ne.s32.totalorder %s134, %s135
    %p146 = scmp.eq.s32.totalorder %s16, 0
    %p147 = por %p145, %p146
    %p148 = scmp.ne.s32.totalorder %s134, %s135
    %p149 = scmp.eq.s32.totalorder %s17, 1
    %p150 = por %p148, %p149
    %p152 = scmp.ne.s32.totalorder %s135, %s151
    %p153 = scmp.eq.s32.totalorder %s17, 0
    %p154 = por %p152, %p153
    %p155 = scmp.le.s32.totalorder 1, %s11
    %p156 = scmp.lt.s32.totalorder %s11, 3
    %p157 = pnand %p155, %p156
    %p158 = pneg %p157
    // Predicated region
    $region9: #{dncnn_dilated_forward.1} parent=5 // pred_check
      _
    $region10: #{dncnn_dilated_forward.1} parent=5 // pred_check_branch
      %160 = sbr.rel (%p157) target = $region12
    $region11: #{dncnn_dilated_forward.1} parent=5 // pred_region
      %s161 = ssub.s32 %s11, 1
      // Predicated region
      $region13: #{dncnn_dilated_forward.1} parent=11 // pred_check
        %p162 = pneg %p58
      $region14: #{dncnn_dilated_forward.1} parent=11 // pred_check_branch
        %164 = sbr.rel (%p162) target = $region16
      $region15: #{dncnn_dilated_forward.1} parent=11 // pred_region
        _
      $region16: #{dncnn_dilated_forward.1} parent=11 // pred_fallthru
        _
      // Predicated region
      $region17: #{dncnn_dilated_forward.1} parent=11 // pred_check
        %p165 = pneg %p79
      $region18: #{dncnn_dilated_forward.1} parent=11 // pred_check_branch
        %167 = sbr.rel (%p165) target = $region20
      $region19: #{dncnn_dilated_forward.1} parent=11 // pred_region
        _
      $region20: #{dncnn_dilated_forward.1} parent=11 // pred_fallthru
        _
      // Predicated region
      $region21: #{dncnn_dilated_forward.1} parent=11 // pred_check
        %p168 = pneg %p100
      $region22: #{dncnn_dilated_forward.1} parent=11 // pred_check_branch
        %170 = sbr.rel (%p168) target = $region24
      $region23: #{dncnn_dilated_forward.1} parent=11 // pred_region
        _
      $region24: #{dncnn_dilated_forward.1} parent=11 // pred_fallthru
        _
      // Predicated region
      $region25: #{dncnn_dilated_forward.1} parent=11 // pred_check
        %p171 = pneg %p121
      $region26: #{dncnn_dilated_forward.1} parent=11 // pred_check_branch
        %173 = sbr.rel (%p171) target = $region28
      $region27: #{dncnn_dilated_forward.1} parent=11 // pred_region
        _
      $region28: #{dncnn_dilated_forward.1} parent=11 // pred_fallthru
        _
    $region12: #{dncnn_dilated_forward.1} parent=5 // pred_fallthru
      _
    %p174 = scmp.lt.s32.totalorder %s11, 2
    // Predicated region
    $region29: #{dncnn_dilated_forward.1} parent=5 // pred_check
      %p175 = pneg %p174
    $region30: #{dncnn_dilated_forward.1} parent=5 // pred_check_branch
      %177 = sbr.rel (%p175) target = $region32
    $region31: #{dncnn_dilated_forward.1} parent=5 // pred_region
      // Predicated region
      $region33: #{dncnn_dilated_forward.1} parent=31 // pred_check
        %p178 = pneg %p31
      $region34: #{dncnn_dilated_forward.1} parent=31 // pred_check_branch
        %180 = sbr.rel (%p178) target = $region36
      $region35: #{dncnn_dilated_forward.1} parent=31 // pred_region
        %p181 = scmp.lt.s32.totalorder %s11, 1
        %s182 = scalar_select %p181, %s11, 1
        %s183 = smul.addr %s182, 5
        %s184 = smul.addr %s183, 2
        %s185 = scalar_lea.vmem %s0, %s184
      $region36: #{dncnn_dilated_forward.1} parent=31 // pred_fallthru
        _
    $region32: #{dncnn_dilated_forward.1} parent=5 // pred_fallthru
      _
    %p186 = scmp.le.s32.totalorder 1, %s11
    %p187 = scmp.lt.s32.totalorder %s11, 3
    %p188 = pnand %p186, %p187
    %p189 = pneg %p188
    // Predicated region
    $region37: #{dncnn_dilated_forward.1} parent=5 // pred_check
      _
    $region38: #{dncnn_dilated_forward.1} parent=5 // pred_check_branch
      %191 = sbr.rel (%p188) target = $region40
    $region39: #{dncnn_dilated_forward.1} parent=5 // pred_region
      %s192 = ssub.s32 %s11, 1
      %p193 = scmp.lt.s32.totalorder %s16, 1
      %s194 = scalar_select %p193, %s16, 1
      %s195 = smul.addr %s194, 5
      %s196 = smul.addr %s195, 2
      %s197 = scalar_lea.vmem %s0, %s196
      %p198 = pneg %p37
      %p199 = pneg %p34
      %p200 = pneg %p58
      %p201 = pneg %p55
      %p202 = pneg %p79
      %p203 = pneg %p76
      %p204 = pneg %p100
      %p205 = pneg %p97
      %p206 = pneg %p121
      %p207 = pneg %p118
      %p208 = pneg %p147
      %p209 = pneg %p144
      %p210 = scmp.lt.s32.totalorder %s16, 1
      %s211 = scalar_select %p210, %s16, 1
      %s212 = smul.addr %s211, 5
      %s213 = smul.addr %s212, 2
      %s214 = scalar_lea.vmem %s5, %s213
      %p215 = scmp.lt.s32.totalorder %s16, 1
      %s216 = scalar_select %p215, %s16, 1
      %s217 = smul.addr %s216, 5
      %s218 = smul.addr %s217, 2
      %s219 = scalar_lea.vmem %s0, %s218
      %p220 = scmp.lt.s32.totalorder %s16, 1
      %s221 = scalar_select %p220, %s16, 1
      %s222 = smul.addr %s221, 5
      %s223 = smul.addr %s222, 2
      %s224 = scalar_lea.vmem %s5, %s223
      %225 = vst [vmem:[#allocation2] sm:$0xff] 0.0
      %226 = vst [vmem:[#allocation2 + $0x8] sm:$0xff] 0.0
      %227 = vst [vmem:[#allocation2 + $0x10] sm:$0xff] 0.0
      %228 = vst [vmem:[#allocation2 + $0x18] sm:$0xff] 0.0
      %229 = vst [vmem:[#allocation2 + $0x20] sm:$0xff] 0.0
      %230 = vst [vmem:[#allocation2 + $0x28] sm:$0xff] 0.0
      %vm231 = vcmask 523264
      %232 = vst.msk [vmem:[#allocation2 + $0x30] sm:$0xff] %vm231, 0.0
      %233 = vst [vmem:[#allocation2 + $0x38] sm:$0xff] 0.0
      %234 = vst [vmem:[#allocation2 + $0x40] sm:$0xff] 0.0
      %235 = vst [vmem:[#allocation2 + $0x48] sm:$0xff] 0.0
      %236 = vst [vmem:[#allocation2 + $0x50] sm:$0xff] 0.0
      %237 = vst [vmem:[#allocation2 + $0x58] sm:$0xff] 0.0
      %238 = vst [vmem:[#allocation2 + $0x60] sm:$0xff] 0.0
      %239 = vst.msk [vmem:[#allocation2 + $0x68] sm:$0xff] %vm231, 0.0
      %240 = vst [vmem:[#allocation3] sm:$0xff] 0.0
      %241 = vst [vmem:[#allocation3 + $0x8] sm:$0xff] 0.0
      %242 = vst [vmem:[#allocation3 + $0x10] sm:$0xff] 0.0
      %243 = vst [vmem:[#allocation3 + $0x18] sm:$0xff] 0.0
      %244 = vst [vmem:[#allocation3 + $0x20] sm:$0xff] 0.0
      %245 = vst [vmem:[#allocation3 + $0x28] sm:$0xff] 0.0
      %246 = vst.msk [vmem:[#allocation3 + $0x30] sm:$0xff] %vm231, 0.0
      %247 = vst [vmem:[#allocation3 + $0x38] sm:$0xff] 0.0
      %248 = vst [vmem:[#allocation3 + $0x40] sm:$0xff] 0.0
      %249 = vst [vmem:[#allocation3 + $0x48] sm:$0xff] 0.0
      %250 = vst [vmem:[#allocation3 + $0x50] sm:$0xff] 0.0
      %251 = vst [vmem:[#allocation3 + $0x58] sm:$0xff] 0.0
      %252 = vst [vmem:[#allocation3 + $0x60] sm:$0xff] 0.0
      %253 = vst.msk [vmem:[#allocation3 + $0x68] sm:$0xff] %vm231, 0.0
      %v254 = vld [vmem:[%s219] sm:$0xff]
      %v255 = vld [vmem:[%s219 + $0x8] sm:$0x3]
      %v258 = vcombine.high %v254, %v254
      %v260 = vunpack.c.l.s4 1983009808
      %v261 = vunpack.c.0.s8 %v260
      %v262 = vlaneseq
      %v263 = vshrl.u32 %v262, 7
      %v264 = vsub.s32 %v261, %v263
      %v265 = vrot.slane %v254, %v264
      %v267 = vunpack.c.l.s4 1983009808
      %v268 = vunpack.c.0.s8 %v267
      %v269 = vlaneseq
      %v270 = vshrl.u32 %v269, 7
      %v271 = vsub.s32 %v268, %v270
      %v272 = vrot.slane %v258, %v271
      %v273 = vcombine.high %v265, %v265
      %v274 = vcombine.high %v272, %v272
      %v276 = vunpack.c.l.s4 1983009808
      %v277 = vunpack.c.0.s8 %v276
      %v278 = vlaneseq
      %v279 = vshrl.u32 %v278, 7
      %v280 = vsub.s32 %v277, %v279
      %v281 = vrot.slane %v255, %v280
      %287 = vst [vmem:[#allocation2 + $0x8] sm:$0x3] %v265
      %288 = vst [vmem:[#allocation2 + $0x10] sm:$0x3] %v273
      %289 = vst [vmem:[#allocation2 + $0x18] sm:$0x3] %v272
      %290 = vst [vmem:[#allocation2 + $0x20] sm:$0x3] %v274
      %vm291 = vcmask 517120
      %292 = vst.msk [vmem:[#allocation2 + $0x28] sm:$0x3] %vm291, %v281
      %v293 = vld [vmem:[%s4] sm:$0xff]
      %v294 = vld [vmem:[%s4 + $0x8] sm:$0xff]
      %v295 = vld [vmem:[%s4 + $0x10] sm:$0xff]
      %v296 = vld [vmem:[%s4 + $0x18] sm:$0xff]
      %v297 = vld [vmem:[%s4 + $0x20] sm:$0xff]
      %v298 = vld [vmem:[%s4 + $0x28] sm:$0xff]
      %v299 = vld [vmem:[%s4 + $0x30] sm:$0xff]
      %v300 = vld [vmem:[%s4 + $0x38] sm:$0xff]
      %v301 = vld [vmem:[%s4 + $0x40] sm:$0xff]
      %v302 = vld [vmem:[%s4 + $0x48] sm:$0xff]
      %vm303 = vcmp.ne.f32.partialorder %v293, 0.0
      %vm304 = vcmp.ne.f32.partialorder %v294, 0.0
      %vm305 = vcmp.ne.f32.partialorder %v295, 0.0
      %vm306 = vcmp.ne.f32.partialorder %v296, 0.0
      %vm307 = vcmp.ne.f32.partialorder %v297, 0.0
      %vm308 = vcmp.ne.f32.partialorder %v298, 0.0
      %vm309 = vcmp.ne.f32.partialorder %v299, 0.0
      %vm310 = vcmp.ne.f32.partialorder %v300, 0.0
      %vm311 = vcmp.ne.f32.partialorder %v301, 0.0
      %vm312 = vcmp.ne.f32.partialorder %v302, 0.0
      %v313 = vld [vmem:[#allocation2] sm:$0xff]
      %v314 = vld [vmem:[#allocation2 + $0x8] sm:$0xff]
      %v315 = vld [vmem:[#allocation2 + $0x10] sm:$0xff]
      %v316 = vld [vmem:[#allocation2 + $0x18] sm:$0xff]
      %v317 = vld [vmem:[#allocation2 + $0x20] sm:$0xff]
      %v318 = vld [vmem:[#allocation2 + $0x28] sm:$0xff]
      %v319 = vld [vmem:[#allocation2 + $0x38] sm:$0xff]
      %v320 = vld [vmem:[#allocation2 + $0x40] sm:$0xff]
      %v321 = vld [vmem:[#allocation2 + $0x48] sm:$0xff]
      %v322 = vld [vmem:[#allocation2 + $0x50] sm:$0xff]
      %v323 = vld [vmem:[#allocation2 + $0x58] sm:$0xff]
      %v324 = vld [vmem:[#allocation2 + $0x60] sm:$0xff]
      %337 = vrot.lane.b32.xlu0 %v313, 25
      %v338 = vpop.permute.xlu0 %337
      %339 = vrot.lane.b32.xlu0 %v314, 25
      %v340 = vpop.permute.xlu0 %339
      %341 = vrot.lane.b32.xlu0 %v315, 25
      %v342 = vpop.permute.xlu0 %341
      %343 = vrot.lane.b32.xlu0 %v316, 25
      %v344 = vpop.permute.xlu0 %343
      %345 = vrot.lane.b32.xlu0 %v317, 25
      %v346 = vpop.permute.xlu0 %345
      %347 = vrot.lane.b32.xlu0 %v318, 25
      %v348 = vpop.permute.xlu0 %347
      %349 = vrot.lane.b32.xlu0 %v319, 25
      %v350 = vpop.permute.xlu0 %349
      %351 = vrot.lane.b32.xlu0 %v320, 25
      %v352 = vpop.permute.xlu0 %351
      %353 = vrot.lane.b32.xlu0 %v321, 25
      %v354 = vpop.permute.xlu0 %353
      %355 = vrot.lane.b32.xlu0 %v322, 25
      %v356 = vpop.permute.xlu0 %355
      %357 = vrot.lane.b32.xlu0 %v323, 25
      %v358 = vpop.permute.xlu0 %357
      %359 = vrot.lane.b32.xlu0 %v324, 25
      %v360 = vpop.permute.xlu0 %359
      %vm361 = vcmask 203776
      %v362 = vsel %vm361, %v338, %v340
      %v363 = vsel %vm361, %v340, %v342
      %v364 = vsel %vm361, %v342, %v344
      %v365 = vsel %vm361, %v344, %v346
      %v366 = vsel %vm361, %v346, %v348
      %v367 = vsel %vm361, %v350, %v352
      %v368 = vsel %vm361, %v352, %v354
      %v369 = vsel %vm361, %v354, %v356
      %v370 = vsel %vm361, %v356, %v358
      %v371 = vsel %vm361, %v358, %v360
      %382 = vst [vmem:[#allocation4] sm:$0xff] %v362
      %383 = vst [vmem:[#allocation4 + $0x8] sm:$0xff] %v363
      %384 = vst [vmem:[#allocation4 + $0x10] sm:$0xff] %v364
      %385 = vst [vmem:[#allocation4 + $0x18] sm:$0xff] %v365
      %386 = vst.msk [vmem:[#allocation4 + $0x20] sm:$0xff] %vm231, %v366
      %387 = vst [vmem:[#allocation4 + $0x28] sm:$0xff] %v367
      %388 = vst [vmem:[#allocation4 + $0x30] sm:$0xff] %v368
      %389 = vst [vmem:[#allocation4 + $0x38] sm:$0xff] %v369
      %390 = vst [vmem:[#allocation4 + $0x40] sm:$0xff] %v370
      %391 = vst.msk [vmem:[#allocation4 + $0x48] sm:$0xff] %vm231, %v371
      %v392 = vld [vmem:[#allocation2] sm:$0xff]
      %v393 = vld [vmem:[#allocation2 + $0x8] sm:$0xff]
      %v394 = vld [vmem:[#allocation2 + $0x10] sm:$0xff]
      %v395 = vld [vmem:[#allocation2 + $0x18] sm:$0xff]
      %v396 = vld [vmem:[#allocation2 + $0x20] sm:$0xff]
      %v397 = vld [vmem:[#allocation2 + $0x28] sm:$0xff]
      %v398 = vld [vmem:[#allocation2 + $0x38] sm:$0xff]
      %v399 = vld [vmem:[#allocation2 + $0x40] sm:$0xff]
      %v400 = vld [vmem:[#allocation2 + $0x48] sm:$0xff]
      %v401 = vld [vmem:[#allocation2 + $0x50] sm:$0xff]
      %v402 = vld [vmem:[#allocation2 + $0x58] sm:$0xff]
      %v403 = vld [vmem:[#allocation2 + $0x60] sm:$0xff]
      %416 = vrot.lane.b32.xlu0 %v392, 24
      %v417 = vpop.permute.xlu0 %416
      %418 = vrot.lane.b32.xlu0 %v393, 24
      %v419 = vpop.permute.xlu0 %418
      %420 = vrot.lane.b32.xlu0 %v394, 24
      %v421 = vpop.permute.xlu0 %420
      %422 = vrot.lane.b32.xlu0 %v395, 24
      %v423 = vpop.permute.xlu0 %422
      %424 = vrot.lane.b32.xlu0 %v396, 24
      %v425 = vpop.permute.xlu0 %424
      %426 = vrot.lane.b32.xlu0 %v397, 24
      %v427 = vpop.permute.xlu0 %426
      %428 = vrot.lane.b32.xlu0 %v398, 24
      %v429 = vpop.permute.xlu0 %428
      %430 = vrot.lane.b32.xlu0 %v399, 24
      %v431 = vpop.permute.xlu0 %430
      %432 = vrot.lane.b32.xlu0 %v400, 24
      %v433 = vpop.permute.xlu0 %432
      %434 = vrot.lane.b32.xlu0 %v401, 24
      %v435 = vpop.permute.xlu0 %434
      %436 = vrot.lane.b32.xlu0 %v402, 24
      %v437 = vpop.permute.xlu0 %436
      %438 = vrot.lane.b32.xlu0 %v403, 24
      %v439 = vpop.permute.xlu0 %438
      %vm440 = vcmask 195584
      %v441 = vsel %vm440, %v417, %v419
      %v442 = vsel %vm440, %v419, %v421
      %v443 = vsel %vm440, %v421, %v423
      %v444 = vsel %vm440, %v423, %v425
      %v445 = vsel %vm440, %v425, %v427
      %v446 = vsel %vm440, %v429, %v431
      %v447 = vsel %vm440, %v431, %v433
      %v448 = vsel %vm440, %v433, %v435
      %v449 = vsel %vm440, %v435, %v437
      %v450 = vsel %vm440, %v437, %v439
      %461 = vst [vmem:[#allocation4 + $0x50] sm:$0xff] %v441
      %462 = vst [vmem:[#allocation4 + $0x58] sm:$0xff] %v442
      %463 = vst [vmem:[#allocation4 + $0x60] sm:$0xff] %v443
      %464 = vst [vmem:[#allocation4 + $0x68] sm:$0xff] %v444
      %465 = vst.msk [vmem:[#allocation4 + $0x70] sm:$0xff] %vm231, %v445
      %466 = vst [vmem:[#allocation4 + $0x78] sm:$0xff] %v446
      %467 = vst [vmem:[#allocation4 + $0x80] sm:$0xff] %v447
      %468 = vst [vmem:[#allocation4 + $0x88] sm:$0xff] %v448
      %469 = vst [vmem:[#allocation4 + $0x90] sm:$0xff] %v449
      %470 = vst.msk [vmem:[#allocation4 + $0x98] sm:$0xff] %vm231, %v450
      %v471 = vld [vmem:[#allocation2] sm:$0xff]
      %v472 = vld [vmem:[#allocation2 + $0x8] sm:$0xff]
      %v473 = vld [vmem:[#allocation2 + $0x10] sm:$0xff]
      %v474 = vld [vmem:[#allocation2 + $0x18] sm:$0xff]
      %v475 = vld [vmem:[#allocation2 + $0x20] sm:$0xff]
      %v476 = vld [vmem:[#allocation2 + $0x28] sm:$0xff]
      %v477 = vld [vmem:[#allocation2 + $0x38] sm:$0xff]
      %v478 = vld [vmem:[#allocation2 + $0x40] sm:$0xff]
      %v479 = vld [vmem:[#allocation2 + $0x48] sm:$0xff]
      %v480 = vld [vmem:[#allocation2 + $0x50] sm:$0xff]
      %v481 = vld [vmem:[#allocation2 + $0x58] sm:$0xff]
      %v482 = vld [vmem:[#allocation2 + $0x60] sm:$0xff]
      %495 = vrot.lane.b32.xlu0 %v471, 23
      %v496 = vpop.permute.xlu0 %495
      %497 = vrot.lane.b32.xlu0 %v472, 23
      %v498 = vpop.permute.xlu0 %497
      %499 = vrot.lane.b32.xlu0 %v473, 23
      %v500 = vpop.permute.xlu0 %499
      %501 = vrot.lane.b32.xlu0 %v474, 23
      %v502 = vpop.permute.xlu0 %501
      %503 = vrot.lane.b32.xlu0 %v475, 23
      %v504 = vpop.permute.xlu0 %503
      %505 = vrot.lane.b32.xlu0 %v476, 23
      %v506 = vpop.permute.xlu0 %505
      %507 = vrot.lane.b32.xlu0 %v477, 23
      %v508 = vpop.permute.xlu0 %507
      %509 = vrot.lane.b32.xlu0 %v478, 23
      %v510 = vpop.permute.xlu0 %509
      %511 = vrot.lane.b32.xlu0 %v479, 23
      %v512 = vpop.permute.xlu0 %511
      %513 = vrot.lane.b32.xlu0 %v480, 23
      %v514 = vpop.permute.xlu0 %513
      %515 = vrot.lane.b32.xlu0 %v481, 23
      %v516 = vpop.permute.xlu0 %515
      %517 = vrot.lane.b32.xlu0 %v482, 23
      %v518 = vpop.permute.xlu0 %517
      %vm519 = vcmask 187392
      %v520 = vsel %vm519, %v496, %v498
      %v521 = vsel %vm519, %v498, %v500
      %v522 = vsel %vm519, %v500, %v502
      %v523 = vsel %vm519, %v502, %v504
      %v524 = vsel %vm519, %v504, %v506
      %v525 = vsel %vm519, %v508, %v510
      %v526 = vsel %vm519, %v510, %v512
      %v527 = vsel %vm519, %v512, %v514
      %v528 = vsel %vm519, %v514, %v516
      %v529 = vsel %vm519, %v516, %v518
      %540 = vst [vmem:[#allocation4 + $0xa0] sm:$0xff] %v520
      %541 = vst [vmem:[#allocation4 + $0xa8] sm:$0xff] %v521
      %542 = vst [vmem:[#allocation4 + $0xb0] sm:$0xff] %v522
      %543 = vst [vmem:[#allocation4 + $0xb8] sm:$0xff] %v523
      %544 = vst.msk [vmem:[#allocation4 + $0xc0] sm:$0xff] %vm231, %v524
      %545 = vst [vmem:[#allocation4 + $0xc8] sm:$0xff] %v525
      %546 = vst [vmem:[#allocation4 + $0xd0] sm:$0xff] %v526
      %547 = vst [vmem:[#allocation4 + $0xd8] sm:$0xff] %v527
      %548 = vst [vmem:[#allocation4 + $0xe0] sm:$0xff] %v528
      %549 = vst.msk [vmem:[#allocation4 + $0xe8] sm:$0xff] %vm231, %v529
      %v550 = vld [vmem:[#allocation2] sm:$0xff]
      %v551 = vld [vmem:[#allocation2 + $0x8] sm:$0xff]
      %v552 = vld [vmem:[#allocation2 + $0x10] sm:$0xff]
      %v553 = vld [vmem:[#allocation2 + $0x18] sm:$0xff]
      %v554 = vld [vmem:[#allocation2 + $0x20] sm:$0xff]
      %v555 = vld [vmem:[#allocation2 + $0x28] sm:$0xff]
      %v556 = vld [vmem:[#allocation2 + $0x38] sm:$0xff]
      %v557 = vld [vmem:[#allocation2 + $0x40] sm:$0xff]
      %v558 = vld [vmem:[#allocation2 + $0x48] sm:$0xff]
      %v559 = vld [vmem:[#allocation2 + $0x50] sm:$0xff]
      %v560 = vld [vmem:[#allocation2 + $0x58] sm:$0xff]
      %v561 = vld [vmem:[#allocation2 + $0x60] sm:$0xff]
      %574 = vrot.lane.b32.xlu0 %v550, 1
      %v575 = vpop.permute.xlu0 %574
      %576 = vrot.lane.b32.xlu0 %v551, 1
      %v577 = vpop.permute.xlu0 %576
      %578 = vrot.lane.b32.xlu0 %v552, 1
      %v579 = vpop.permute.xlu0 %578
      %580 = vrot.lane.b32.xlu0 %v553, 1
      %v581 = vpop.permute.xlu0 %580
      %582 = vrot.lane.b32.xlu0 %v554, 1
      %v583 = vpop.permute.xlu0 %582
      %584 = vrot.lane.b32.xlu0 %v555, 1
      %v585 = vpop.permute.xlu0 %584
      %586 = vrot.lane.b32.xlu0 %v556, 1
      %v587 = vpop.permute.xlu0 %586
      %588 = vrot.lane.b32.xlu0 %v557, 1
      %v589 = vpop.permute.xlu0 %588
      %590 = vrot.lane.b32.xlu0 %v558, 1
      %v591 = vpop.permute.xlu0 %590
      %592 = vrot.lane.b32.xlu0 %v559, 1
      %v593 = vpop.permute.xlu0 %592
      %594 = vrot.lane.b32.xlu0 %v560, 1
      %v595 = vpop.permute.xlu0 %594
      %596 = vrot.lane.b32.xlu0 %v561, 1
      %v597 = vpop.permute.xlu0 %596
      %vm598 = vcmask 7168
      %v599 = vsel %vm598, %v575, %v577
      %v600 = vsel %vm598, %v577, %v579
      %v601 = vsel %vm598, %v579, %v581
      %v602 = vsel %vm598, %v581, %v583
      %v603 = vsel %vm598, %v583, %v585
      %v604 = vsel %vm598, %v587, %v589
      %v605 = vsel %vm598, %v589, %v591
      %v606 = vsel %vm598, %v591, %v593
      %v607 = vsel %vm598, %v593, %v595
      %v608 = vsel %vm598, %v595, %v597
      %619 = vst [vmem:[#allocation4 + $0xf0] sm:$0xff] %v599
      %620 = vst [vmem:[#allocation4 + $0xf8] sm:$0xff] %v600
      %621 = vst [vmem:[#allocation4 + $0x100] sm:$0xff] %v601
      %622 = vst [vmem:[#allocation4 + $0x108] sm:$0xff] %v602
      %623 = vst.msk [vmem:[#allocation4 + $0x110] sm:$0xff] %vm231, %v603
      %624 = vst [vmem:[#allocation4 + $0x118] sm:$0xff] %v604
      %625 = vst [vmem:[#allocation4 + $0x120] sm:$0xff] %v605
      %626 = vst [vmem:[#allocation4 + $0x128] sm:$0xff] %v606
      %627 = vst [vmem:[#allocation4 + $0x130] sm:$0xff] %v607
      %628 = vst.msk [vmem:[#allocation4 + $0x138] sm:$0xff] %vm231, %v608
      %v629 = vld [vmem:[#allocation2 + $0x8] sm:$0xff]
      %v630 = vld [vmem:[#allocation2 + $0x10] sm:$0xff]
      %v631 = vld [vmem:[#allocation2 + $0x18] sm:$0xff]
      %v632 = vld [vmem:[#allocation2 + $0x20] sm:$0xff]
      %v633 = vld [vmem:[#allocation2 + $0x28] sm:$0xff]
      %v634 = vld [vmem:[#allocation2 + $0x40] sm:$0xff]
      %v635 = vld [vmem:[#allocation2 + $0x48] sm:$0xff]
      %v636 = vld [vmem:[#allocation2 + $0x50] sm:$0xff]
      %v637 = vld [vmem:[#allocation2 + $0x58] sm:$0xff]
      %v638 = vld [vmem:[#allocation2 + $0x60] sm:$0xff]
      %639 = vst [vmem:[#allocation4 + $0x140] sm:$0xff] %v629
      %640 = vst [vmem:[#allocation4 + $0x148] sm:$0xff] %v630
      %641 = vst [vmem:[#allocation4 + $0x150] sm:$0xff] %v631
      %642 = vst [vmem:[#allocation4 + $0x158] sm:$0xff] %v632
      %643 = vst.msk [vmem:[#allocation4 + $0x160] sm:$0xff] %vm231, %v633
      %644 = vst [vmem:[#allocation4 + $0x168] sm:$0xff] %v634
      %645 = vst [vmem:[#allocation4 + $0x170] sm:$0xff] %v635
      %646 = vst [vmem:[#allocation4 + $0x178] sm:$0xff] %v636
      %647 = vst [vmem:[#allocation4 + $0x180] sm:$0xff] %v637
      %648 = vst.msk [vmem:[#allocation4 + $0x188] sm:$0xff] %vm231, %v638
      %v649 = vld [vmem:[#allocation2 + $0x8] sm:$0xff]
      %v650 = vld [vmem:[#allocation2 + $0x10] sm:$0xff]
      %v651 = vld [vmem:[#allocation2 + $0x18] sm:$0xff]
      %v652 = vld [vmem:[#allocation2 + $0x20] sm:$0xff]
      %v653 = vld [vmem:[#allocation2 + $0x28] sm:$0xff]
      %v654 = vld [vmem:[#allocation2 + $0x40] sm:$0xff]
      %v655 = vld [vmem:[#allocation2 + $0x48] sm:$0xff]
      %v656 = vld [vmem:[#allocation2 + $0x50] sm:$0xff]
      %v657 = vld [vmem:[#allocation2 + $0x58] sm:$0xff]
      %v658 = vld [vmem:[#allocation2 + $0x60] sm:$0xff]
      %669 = vrot.lane.b32.xlu0 %v649, 127
      %v670 = vpop.permute.xlu0 %669
      %671 = vrot.lane.b32.xlu0 %v650, 127
      %v672 = vpop.permute.xlu0 %671
      %673 = vrot.lane.b32.xlu0 %v651, 127
      %v674 = vpop.permute.xlu0 %673
      %675 = vrot.lane.b32.xlu0 %v652, 127
      %v676 = vpop.permute.xlu0 %675
      %677 = vrot.lane.b32.xlu0 %v653, 127
      %v678 = vpop.permute.xlu0 %677
      %679 = vrot.lane.b32.xlu0 %v654, 127
      %v680 = vpop.permute.xlu0 %679
      %681 = vrot.lane.b32.xlu0 %v655, 127
      %v682 = vpop.permute.xlu0 %681
      %683 = vrot.lane.b32.xlu0 %v656, 127
      %v684 = vpop.permute.xlu0 %683
      %685 = vrot.lane.b32.xlu0 %v657, 127
      %v686 = vpop.permute.xlu0 %685
      %687 = vrot.lane.b32.xlu0 %v658, 127
      %v688 = vpop.permute.xlu0 %687
      %vm689 = vcmask 1039360
      %v690 = vsel %vm689, %v670, %v672
      %v691 = vsel %vm689, %v672, %v674
      %v692 = vsel %vm689, %v674, %v676
      %v693 = vsel %vm689, %v676, %v678
      %v694 = vsel %vm689, %v680, %v682
      %v695 = vsel %vm689, %v682, %v684
      %v696 = vsel %vm689, %v684, %v686
      %v697 = vsel %vm689, %v686, %v688
      %708 = vst [vmem:[#allocation4 + $0x190] sm:$0xff] %v690
      %709 = vst [vmem:[#allocation4 + $0x198] sm:$0xff] %v691
      %710 = vst [vmem:[#allocation4 + $0x1a0] sm:$0xff] %v692
      %711 = vst [vmem:[#allocation4 + $0x1a8] sm:$0xff] %v693
      %712 = vst.msk [vmem:[#allocation4 + $0x1b0] sm:$0xff] %vm231, %v678
      %713 = vst [vmem:[#allocation4 + $0x1b8] sm:$0xff] %v694
      %714 = vst [vmem:[#allocation4 + $0x1c0] sm:$0xff] %v695
      %715 = vst [vmem:[#allocation4 + $0x1c8] sm:$0xff] %v696
      %716 = vst [vmem:[#allocation4 + $0x1d0] sm:$0xff] %v697
      %717 = vst.msk [vmem:[#allocation4 + $0x1d8] sm:$0xff] %vm231, %v688
      %v718 = vld [vmem:[#allocation2 + $0x8] sm:$0xff]
      %v719 = vld [vmem:[#allocation2 + $0x10] sm:$0xff]
      %v720 = vld [vmem:[#allocation2 + $0x18] sm:$0xff]
      %v721 = vld [vmem:[#allocation2 + $0x20] sm:$0xff]
      %v722 = vld [vmem:[#allocation2 + $0x28] sm:$0xff]
      %v723 = vld [vmem:[#allocation2 + $0x40] sm:$0xff]
      %v724 = vld [vmem:[#allocation2 + $0x48] sm:$0xff]
      %v725 = vld [vmem:[#allocation2 + $0x50] sm:$0xff]
      %v726 = vld [vmem:[#allocation2 + $0x58] sm:$0xff]
      %v727 = vld [vmem:[#allocation2 + $0x60] sm:$0xff]
      %738 = vrot.lane.b32.xlu0 %v718, 105
      %v739 = vpop.permute.xlu0 %738
      %740 = vrot.lane.b32.xlu0 %v719, 105
      %v741 = vpop.permute.xlu0 %740
      %742 = vrot.lane.b32.xlu0 %v720, 105
      %v743 = vpop.permute.xlu0 %742
      %744 = vrot.lane.b32.xlu0 %v721, 105
      %v745 = vpop.permute.xlu0 %744
      %746 = vrot.lane.b32.xlu0 %v722, 105
      %v747 = vpop.permute.xlu0 %746
      %748 = vrot.lane.b32.xlu0 %v723, 105
      %v749 = vpop.permute.xlu0 %748
      %750 = vrot.lane.b32.xlu0 %v724, 105
      %v751 = vpop.permute.xlu0 %750
      %752 = vrot.lane.b32.xlu0 %v725, 105
      %v753 = vpop.permute.xlu0 %752
      %754 = vrot.lane.b32.xlu0 %v726, 105
      %v755 = vpop.permute.xlu0 %754
      %756 = vrot.lane.b32.xlu0 %v727, 105
      %v757 = vpop.permute.xlu0 %756
      %vm758 = vcmask 859136
      %v759 = vsel %vm758, %v739, %v741
      %v760 = vsel %vm758, %v741, %v743
      %v761 = vsel %vm758, %v743, %v745
      %v762 = vsel %vm758, %v745, %v747
      %v763 = vsel %vm758, %v749, %v751
      %v764 = vsel %vm758, %v751, %v753
      %v765 = vsel %vm758, %v753, %v755
      %v766 = vsel %vm758, %v755, %v757
      %777 = vst [vmem:[#allocation4 + $0x1e0] sm:$0xff] %v759
      %778 = vst [vmem:[#allocation4 + $0x1e8] sm:$0xff] %v760
      %779 = vst [vmem:[#allocation4 + $0x1f0] sm:$0xff] %v761
      %780 = vst [vmem:[#allocation4 + $0x1f8] sm:$0xff] %v762
      %781 = vst.msk [vmem:[#allocation4 + $0x200] sm:$0xff] %vm231, %v747
      %782 = vst [vmem:[#allocation4 + $0x208] sm:$0xff] %v763
      %783 = vst [vmem:[#allocation4 + $0x210] sm:$0xff] %v764
      %784 = vst [vmem:[#allocation4 + $0x218] sm:$0xff] %v765
      %785 = vst [vmem:[#allocation4 + $0x220] sm:$0xff] %v766
      %786 = vst.msk [vmem:[#allocation4 + $0x228] sm:$0xff] %vm231, %v757
      %v787 = vld [vmem:[#allocation2 + $0x8] sm:$0xff]
      %v788 = vld [vmem:[#allocation2 + $0x10] sm:$0xff]
      %v789 = vld [vmem:[#allocation2 + $0x18] sm:$0xff]
      %v790 = vld [vmem:[#allocation2 + $0x20] sm:$0xff]
      %v791 = vld [vmem:[#allocation2 + $0x28] sm:$0xff]
      %v792 = vld [vmem:[#allocation2 + $0x40] sm:$0xff]
      %v793 = vld [vmem:[#allocation2 + $0x48] sm:$0xff]
      %v794 = vld [vmem:[#allocation2 + $0x50] sm:$0xff]
      %v795 = vld [vmem:[#allocation2 + $0x58] sm:$0xff]
      %v796 = vld [vmem:[#allocation2 + $0x60] sm:$0xff]
      %807 = vrot.lane.b32.xlu0 %v787, 104
      %v808 = vpop.permute.xlu0 %807
      %809 = vrot.lane.b32.xlu0 %v788, 104
      %v810 = vpop.permute.xlu0 %809
      %811 = vrot.lane.b32.xlu0 %v789, 104
      %v812 = vpop.permute.xlu0 %811
      %813 = vrot.lane.b32.xlu0 %v790, 104
      %v814 = vpop.permute.xlu0 %813
      %815 = vrot.lane.b32.xlu0 %v791, 104
      %v816 = vpop.permute.xlu0 %815
      %817 = vrot.lane.b32.xlu0 %v792, 104
      %v818 = vpop.permute.xlu0 %817
      %819 = vrot.lane.b32.xlu0 %v793, 104
      %v820 = vpop.permute.xlu0 %819
      %821 = vrot.lane.b32.xlu0 %v794, 104
      %v822 = vpop.permute.xlu0 %821
      %823 = vrot.lane.b32.xlu0 %v795, 104
      %v824 = vpop.permute.xlu0 %823
      %825 = vrot.lane.b32.xlu0 %v796, 104
      %v826 = vpop.permute.xlu0 %825
      %vm827 = vcmask 850944
      %v828 = vsel %vm827, %v808, %v810
      %v829 = vsel %vm827, %v810, %v812
      %v830 = vsel %vm827, %v812, %v814
      %v831 = vsel %vm827, %v814, %v816
      %v832 = vsel %vm827, %v818, %v820
      %v833 = vsel %vm827, %v820, %v822
      %v834 = vsel %vm827, %v822, %v824
      %v835 = vsel %vm827, %v824, %v826
      %846 = vst [vmem:[#allocation4 + $0x230] sm:$0xff] %v828
      %847 = vst [vmem:[#allocation4 + $0x238] sm:$0xff] %v829
      %848 = vst [vmem:[#allocation4 + $0x240] sm:$0xff] %v830
      %849 = vst [vmem:[#allocation4 + $0x248] sm:$0xff] %v831
      %850 = vst.msk [vmem:[#allocation4 + $0x250] sm:$0xff] %vm231, %v816
      %851 = vst [vmem:[#allocation4 + $0x258] sm:$0xff] %v832
      %852 = vst [vmem:[#allocation4 + $0x260] sm:$0xff] %v833
      %853 = vst [vmem:[#allocation4 + $0x268] sm:$0xff] %v834
      %854 = vst [vmem:[#allocation4 + $0x270] sm:$0xff] %v835
      %855 = vst.msk [vmem:[#allocation4 + $0x278] sm:$0xff] %vm231, %v826
      %v856 = vld [vmem:[#allocation2 + $0x8] sm:$0xff]
      %v857 = vld [vmem:[#allocation2 + $0x10] sm:$0xff]
      %v858 = vld [vmem:[#allocation2 + $0x18] sm:$0xff]
      %v859 = vld [vmem:[#allocation2 + $0x20] sm:$0xff]
      %v860 = vld [vmem:[#allocation2 + $0x28] sm:$0xff]
      %v861 = vld [vmem:[#allocation2 + $0x40] sm:$0xff]
      %v862 = vld [vmem:[#allocation2 + $0x48] sm:$0xff]
      %v863 = vld [vmem:[#allocation2 + $0x50] sm:$0xff]
      %v864 = vld [vmem:[#allocation2 + $0x58] sm:$0xff]
      %v865 = vld [vmem:[#allocation2 + $0x60] sm:$0xff]
      %876 = vrot.lane.b32.xlu0 %v856, 103
      %v877 = vpop.permute.xlu0 %876
      %878 = vrot.lane.b32.xlu0 %v857, 103
      %v879 = vpop.permute.xlu0 %878
      %880 = vrot.lane.b32.xlu0 %v858, 103
      %v881 = vpop.permute.xlu0 %880
      %882 = vrot.lane.b32.xlu0 %v859, 103
      %v883 = vpop.permute.xlu0 %882
      %884 = vrot.lane.b32.xlu0 %v860, 103
      %v885 = vpop.permute.xlu0 %884
      %886 = vrot.lane.b32.xlu0 %v861, 103
      %v887 = vpop.permute.xlu0 %886
      %888 = vrot.lane.b32.xlu0 %v862, 103
      %v889 = vpop.permute.xlu0 %888
      %890 = vrot.lane.b32.xlu0 %v863, 103
      %v891 = vpop.permute.xlu0 %890
      %892 = vrot.lane.b32.xlu0 %v864, 103
      %v893 = vpop.permute.xlu0 %892
      %894 = vrot.lane.b32.xlu0 %v865, 103
      %v895 = vpop.permute.xlu0 %894
      %vm896 = vcmask 842752
      %v897 = vsel %vm896, %v877, %v879
      %v898 = vsel %vm896, %v879, %v881
      %v899 = vsel %vm896, %v881, %v883
      %v900 = vsel %vm896, %v883, %v885
      %v901 = vsel %vm896, %v887, %v889
      %v902 = vsel %vm896, %v889, %v891
      %v903 = vsel %vm896, %v891, %v893
      %v904 = vsel %vm896, %v893, %v895
      %915 = vst [vmem:[#allocation4 + $0x280] sm:$0xff] %v897
      %916 = vst [vmem:[#allocation4 + $0x288] sm:$0xff] %v898
      %917 = vst [vmem:[#allocation4 + $0x290] sm:$0xff] %v899
      %918 = vst [vmem:[#allocation4 + $0x298] sm:$0xff] %v900
      %919 = vst.msk [vmem:[#allocation4 + $0x2a0] sm:$0xff] %vm231, %v885
      %920 = vst [vmem:[#allocation4 + $0x2a8] sm:$0xff] %v901
      %921 = vst [vmem:[#allocation4 + $0x2b0] sm:$0xff] %v902
      %922 = vst [vmem:[#allocation4 + $0x2b8] sm:$0xff] %v903
      %923 = vst [vmem:[#allocation4 + $0x2c0] sm:$0xff] %v904
      %924 = vst.msk [vmem:[#allocation4 + $0x2c8] sm:$0xff] %vm231, %v895
      %v925 = vld [vmem:[%s1] sm:$0xff]
      %v926 = vld [vmem:[%s1 + $0x8] sm:$0xff]
      %v927 = vld [vmem:[%s1 + $0x10] sm:$0xff]
      %v928 = vld [vmem:[%s1 + $0x18] sm:$0xff]
      %v929 = vld [vmem:[#allocation4] sm:$0xff]
      %v930 = vld [vmem:[#allocation4 + $0x8] sm:$0xff]
      %v931 = vld [vmem:[#allocation4 + $0x10] sm:$0xff]
      %v932 = vld [vmem:[#allocation4 + $0x18] sm:$0xff]
      %v933 = vld [vmem:[#allocation4 + $0x20] sm:$0xff]
      %v934 = vld [vmem:[#allocation4 + $0x28] sm:$0xff]
      %v935 = vld [vmem:[#allocation4 + $0x30] sm:$0xff]
      %v936 = vld [vmem:[#allocation4 + $0x38] sm:$0xff]
      %v937 = vld [vmem:[#allocation4 + $0x40] sm:$0xff]
      %v938 = vld [vmem:[#allocation4 + $0x48] sm:$0xff]
      %v939 = vld [vmem:[#allocation4 + $0x50] sm:$0xff]
      %v940 = vld [vmem:[#allocation4 + $0x58] sm:$0xff]
      %v941 = vld [vmem:[#allocation4 + $0x60] sm:$0xff]
      %v942 = vld [vmem:[#allocation4 + $0x68] sm:$0xff]
      %v943 = vld [vmem:[#allocation4 + $0x70] sm:$0xff]
      %v944 = vld [vmem:[#allocation4 + $0x78] sm:$0xff]
      %v945 = vld [vmem:[#allocation4 + $0x80] sm:$0xff]
      %v946 = vld [vmem:[#allocation4 + $0x88] sm:$0xff]
      %v947 = vld [vmem:[#allocation4 + $0x90] sm:$0xff]
      %v948 = vld [vmem:[#allocation4 + $0x98] sm:$0xff]
      %v949 = vld [vmem:[#allocation4 + $0xa0] sm:$0xff]
      %v950 = vld [vmem:[#allocation4 + $0xa8] sm:$0xff]
      %v951 = vld [vmem:[#allocation4 + $0xb0] sm:$0xff]
      %v952 = vld [vmem:[#allocation4 + $0xb8] sm:$0xff]
      %v953 = vld [vmem:[#allocation4 + $0xc0] sm:$0xff]
      %v954 = vld [vmem:[#allocation4 + $0xc8] sm:$0xff]
      %v955 = vld [vmem:[#allocation4 + $0xd0] sm:$0xff]
      %v956 = vld [vmem:[#allocation4 + $0xd8] sm:$0xff]
      %v957 = vld [vmem:[#allocation4 + $0xe0] sm:$0xff]
      %v958 = vld [vmem:[#allocation4 + $0xe8] sm:$0xff]
      %v959 = vld [vmem:[#allocation4 + $0xf0] sm:$0xff]
      %v960 = vld [vmem:[#allocation4 + $0xf8] sm:$0xff]
      %v961 = vld [vmem:[#allocation4 + $0x100] sm:$0xff]
      %v962 = vld [vmem:[#allocation4 + $0x108] sm:$0xff]
      %v963 = vld [vmem:[#allocation4 + $0x110] sm:$0xff]
      %v964 = vld [vmem:[#allocation4 + $0x118] sm:$0xff]
      %v965 = vld [vmem:[#allocation4 + $0x120] sm:$0xff]
      %v966 = vld [vmem:[#allocation4 + $0x128] sm:$0xff]
      %v967 = vld [vmem:[#allocation4 + $0x130] sm:$0xff]
      %v968 = vld [vmem:[#allocation4 + $0x138] sm:$0xff]
      %v969 = vld [vmem:[#allocation4 + $0x140] sm:$0xff]
      %v970 = vld [vmem:[#allocation4 + $0x148] sm:$0xff]
      %v971 = vld [vmem:[#allocation4 + $0x150] sm:$0xff]
      %v972 = vld [vmem:[#allocation4 + $0x158] sm:$0xff]
      %v973 = vld [vmem:[#allocation4 + $0x160] sm:$0xff]
      %v974 = vld [vmem:[#allocation4 + $0x168] sm:$0xff]
      %v975 = vld [vmem:[#allocation4 + $0x170] sm:$0xff]
      %v976 = vld [vmem:[#allocation4 + $0x178] sm:$0xff]
      %v977 = vld [vmem:[#allocation4 + $0x180] sm:$0xff]
      %v978 = vld [vmem:[#allocation4 + $0x188] sm:$0xff]
      %v979 = vld [vmem:[#allocation4 + $0x190] sm:$0xff]
      %v980 = vld [vmem:[#allocation4 + $0x198] sm:$0xff]
      %v981 = vld [vmem:[#allocation4 + $0x1a0] sm:$0xff]
      %v982 = vld [vmem:[#allocation4 + $0x1a8] sm:$0xff]
      %v983 = vld [vmem:[#allocation4 + $0x1b0] sm:$0xff]
      %v984 = vld [vmem:[#allocation4 + $0x1b8] sm:$0xff]
      %v985 = vld [vmem:[#allocation4 + $0x1c0] sm:$0xff]
      %v986 = vld [vmem:[#allocation4 + $0x1c8] sm:$0xff]
      %v987 = vld [vmem:[#allocation4 + $0x1d0] sm:$0xff]
      %v988 = vld [vmem:[#allocation4 + $0x1d8] sm:$0xff]
      %v989 = vld [vmem:[#allocation4 + $0x1e0] sm:$0xff]
      %v990 = vld [vmem:[#allocation4 + $0x1e8] sm:$0xff]
      %v991 = vld [vmem:[#allocation4 + $0x1f0] sm:$0xff]
      %v992 = vld [vmem:[#allocation4 + $0x1f8] sm:$0xff]
      %v993 = vld [vmem:[#allocation4 + $0x200] sm:$0xff]
      %v994 = vld [vmem:[#allocation4 + $0x208] sm:$0xff]
      %v995 = vld [vmem:[#allocation4 + $0x210] sm:$0xff]
      %v996 = vld [vmem:[#allocation4 + $0x218] sm:$0xff]
      %v997 = vld [vmem:[#allocation4 + $0x220] sm:$0xff]
      %v998 = vld [vmem:[#allocation4 + $0x228] sm:$0xff]
      %v999 = vld [vmem:[#allocation4 + $0x230] sm:$0xff]
      %v1000 = vld [vmem:[#allocation4 + $0x238] sm:$0xff]
      %v1001 = vld [vmem:[#allocation4 + $0x240] sm:$0xff]
      %v1002 = vld [vmem:[#allocation4 + $0x248] sm:$0xff]
      %v1003 = vld [vmem:[#allocation4 + $0x250] sm:$0xff]
      %v1004 = vld [vmem:[#allocation4 + $0x258] sm:$0xff]
      %v1005 = vld [vmem:[#allocation4 + $0x260] sm:$0xff]
      %v1006 = vld [vmem:[#allocation4 + $0x268] sm:$0xff]
      %v1007 = vld [vmem:[#allocation4 + $0x270] sm:$0xff]
      %v1008 = vld [vmem:[#allocation4 + $0x278] sm:$0xff]
      %v1009 = vld [vmem:[#allocation4 + $0x280] sm:$0xff]
      %v1010 = vld [vmem:[#allocation4 + $0x288] sm:$0xff]
      %v1011 = vld [vmem:[#allocation4 + $0x290] sm:$0xff]
      %v1012 = vld [vmem:[#allocation4 + $0x298] sm:$0xff]
      %v1013 = vld [vmem:[#allocation4 + $0x2a0] sm:$0xff]
      %v1014 = vld [vmem:[#allocation4 + $0x2a8] sm:$0xff]
      %v1015 = vld [vmem:[#allocation4 + $0x2b0] sm:$0xff]
      %v1016 = vld [vmem:[#allocation4 + $0x2b8] sm:$0xff]
      %v1017 = vld [vmem:[#allocation4 + $0x2c0] sm:$0xff]
      %v1018 = vld [vmem:[#allocation4 + $0x2c8] sm:$0xff]
      %vm1019 = vcmask 130048
      %v1021 = vsel %vm1019, %v926, 0
      %v1024 = vsel %vm1019, %v928, 0
      %1026 = vmatprep.subr.mxu0 %v930
      %1027 = vmatpush1.msra.mxu0 %v929
      %1028 = vmatprep.subr.mxu0 %v935
      %1029 = vmatpush1.msra.mxu0 %v934
      %1030 = vmatprep.subr.mxu0 %v940
      %1031 = vmatpush1.msra.mxu0 %v939
      %1032 = vmatprep.subr.mxu0 %v945
      %1033 = vmatpush1.msra.mxu0 %v944
      %1034 = vmatprep.subr.mxu0 %v950
      %1035 = vmatpush1.msra.mxu0 %v949
      %1036 = vmatprep.subr.mxu0 %v955
      %1037 = vmatpush1.msra.mxu0 %v954
      %1038 = vmatprep.subr.mxu0 %v960
      %1039 = vmatpush1.msra.mxu0 %v959
      %1040 = vmatprep.subr.mxu0 %v965
      %1041 = vmatpush1.msra.mxu0 %v964
      %1042 = vmatprep.subr.mxu0 %v970
      %1043 = vmatpush1.msra.mxu0 %v969
      %1044 = vmatprep.subr.mxu0 %v975
      %1045 = vmatpush1.msra.mxu0 %v974
      %1046 = vmatprep.subr.mxu0 %v980
      %1047 = vmatpush1.msra.mxu0 %v979
      %1048 = vmatprep.subr.mxu0 %v985
      %1049 = vmatpush1.msra.mxu0 %v984
      %1050 = vmatprep.subr.mxu0 %v990
      %1051 = vmatpush1.msra.mxu0 %v989
      %1052 = vmatprep.subr.mxu0 %v995
      %1053 = vmatpush1.msra.mxu0 %v994
      %1054 = vmatprep.subr.mxu0 %v1000
      %1055 = vmatpush1.msra.mxu0 %v999
      %1056 = vmatprep.subr.mxu0 %v1005
      %1057 = vmatpush1.msra.mxu0 %v1004
      %1058 = vmatprep.subr.mxu0 %v1010
      %1059 = vmatpush1.msra.mxu0 %v1009
      %1060 = vmatprep.subr.mxu0 %v1015
      %1061 = vmatpush1.msra.mxu0 %v1014
      %1062 = vmatprep.subr.mxu0 0.0
      %1063 = vmatpush1.msra.mxu0 0.0
      %1064 = vmatprep.subr.mxu0 0.0
      %1065 = vmatpush1.msra.mxu0 0.0
      %1066 = vmatprep.subr.mxu0 0.0
      %1067 = vmatpush1.msra.mxu0 0.0
      %1068 = vmatprep.subr.mxu0 0.0
      %1069 = vmatpush1.msra.mxu0 0.0
      %1070 = vmatprep.subr.mxu0 0.0
      %1071 = vmatpush1.msra.mxu0 0.0
      %1072 = vmatprep.subr.mxu0 0.0
      %1073 = vmatpush1.msra.mxu0 0.0
      %1074 = vmatprep.subr.mxu0 0.0
      %1075 = vmatpush1.msra.mxu0 0.0
      %1076 = vmatprep.subr.mxu0 0.0
      %1077 = vmatpush1.msra.mxu0 0.0
      %1078 = vmatprep.subr.mxu0 0.0
      %1079 = vmatpush1.msra.mxu0 0.0
      %1080 = vmatprep.subr.mxu0 0.0
      %1081 = vmatpush1.msra.mxu0 0.0
      %1082 = vmatprep.subr.mxu0 0.0
      %1083 = vmatpush1.msra.mxu0 0.0
      %1084 = vmatprep.subr.mxu0 0.0
      %1085 = vmatpush1.msra.mxu0 0.0
      %1086 = vmatprep.subr.mxu0 0.0
      %1087 = vmatpush1.msra.mxu0 0.0
      %1088 = vmatprep.subr.mxu0 0.0
      %1089 = vmatpush1.msra.mxu0 0.0
      %1090 = vmatprep.mubr.f32.mxu0 %v1021
      %1091 = vmatmul.mubr.f32.gmra.mrb[0].mxu0 %v925
      %v1092 = vpop.f32.mrb[0].mxu0
      %v1093 = vadd.f32 0.0, %v1092
      %v1094 = vpop.f32.mrb[0].mxu0
      %v1095 = vadd.f32 0.0, %v1094
      %1096 = vmatprep.mubr.f32.mxu0 %v1024
      %1097 = vmatmul.mubr.f32.gmra.mrb[0].mxu0 %v927
      %v1098 = vpop.f32.mrb[0].mxu0
      %v1099 = vadd.f32 0.0, %v1098
      %v1100 = vpop.f32.mrb[0].mxu0
      %v1101 = vadd.f32 0.0, %v1100
      %1102 = vdwg.mxu0
      %1103 = vmatprep.subr.mxu0 %v932
      %1104 = vmatpush1.msra.mxu0 %v931
      %1105 = vmatprep.subr.mxu0 %v937
      %1106 = vmatpush1.msra.mxu0 %v936
      %1107 = vmatprep.subr.mxu0 %v942
      %1108 = vmatpush1.msra.mxu0 %v941
      %1109 = vmatprep.subr.mxu0 %v947
      %1110 = vmatpush1.msra.mxu0 %v946
      %1111 = vmatprep.subr.mxu0 %v952
      %1112 = vmatpush1.msra.mxu0 %v951
      %1113 = vmatprep.subr.mxu0 %v957
      %1114 = vmatpush1.msra.mxu0 %v956
      %1115 = vmatprep.subr.mxu0 %v962
      %1116 = vmatpush1.msra.mxu0 %v961
      %1117 = vmatprep.subr.mxu0 %v967
      %1118 = vmatpush1.msra.mxu0 %v966
      %1119 = vmatprep.subr.mxu0 %v972
      %1120 = vmatpush1.msra.mxu0 %v971
      %1121 = vmatprep.subr.mxu0 %v977
      %1122 = vmatpush1.msra.mxu0 %v976
      %1123 = vmatprep.subr.mxu0 %v982
      %1124 = vmatpush1.msra.mxu0 %v981
      %1125 = vmatprep.subr.mxu0 %v987
      %1126 = vmatpush1.msra.mxu0 %v986
      %1127 = vmatprep.subr.mxu0 %v992
      %1128 = vmatpush1.msra.mxu0 %v991
      %1129 = vmatprep.subr.mxu0 %v997
      %1130 = vmatpush1.msra.mxu0 %v996
      %1131 = vmatprep.subr.mxu0 %v1002
      %1132 = vmatpush1.msra.mxu0 %v1001
      %1133 = vmatprep.subr.mxu0 %v1007
      %1134 = vmatpush1.msra.mxu0 %v1006
      %1135 = vmatprep.subr.mxu0 %v1012
      %1136 = vmatpush1.msra.mxu0 %v1011
      %1137 = vmatprep.subr.mxu0 %v1017
      %1138 = vmatpush1.msra.mxu0 %v1016
      %1139 = vmatprep.subr.mxu0 0.0
      %1140 = vmatpush1.msra.mxu0 0.0
      %1141 = vmatprep.subr.mxu0 0.0
      %1142 = vmatpush1.msra.mxu0 0.0
      %1143 = vmatprep.subr.mxu0 0.0
      %1144 = vmatpush1.msra.mxu0 0.0
      %1145 = vmatprep.subr.mxu0 0.0
      %1146 = vmatpush1.msra.mxu0 0.0
      %1147 = vmatprep.subr.mxu0 0.0
      %1148 = vmatpush1.msra.mxu0 0.0
      %1149 = vmatprep.subr.mxu0 0.0
      %1150 = vmatpush1.msra.mxu0 0.0
      %1151 = vmatprep.subr.mxu0 0.0
      %1152 = vmatpush1.msra.mxu0 0.0
      %1153 = vmatprep.subr.mxu0 0.0
      %1154 = vmatpush1.msra.mxu0 0.0
      %1155 = vmatprep.subr.mxu0 0.0
      %1156 = vmatpush1.msra.mxu0 0.0
      %1157 = vmatprep.subr.mxu0 0.0
      %1158 = vmatpush1.msra.mxu0 0.0
      %1159 = vmatprep.subr.mxu0 0.0
      %1160 = vmatpush1.msra.mxu0 0.0
      %1161 = vmatprep.subr.mxu0 0.0
      %1162 = vmatpush1.msra.mxu0 0.0
      %1163 = vmatprep.subr.mxu0 0.0
      %1164 = vmatpush1.msra.mxu0 0.0
      %1165 = vmatprep.subr.mxu0 0.0
      %1166 = vmatpush1.msra.mxu0 0.0
      %1167 = vmatprep.mubr.f32.mxu0 %v1021
      %1168 = vmatmul.mubr.f32.gmra.mrb[0].mxu0 %v925
      %v1169 = vpop.f32.mrb[0].mxu0
      %v1170 = vadd.f32 0.0, %v1169
      %v1171 = vpop.f32.mrb[0].mxu0
      %v1172 = vadd.f32 0.0, %v1171
      %1173 = vmatprep.mubr.f32.mxu0 %v1024
      %1174 = vmatmul.mubr.f32.gmra.mrb[0].mxu0 %v927
      %v1175 = vpop.f32.mrb[0].mxu0
      %v1176 = vadd.f32 0.0, %v1175
      %v1177 = vpop.f32.mrb[0].mxu0
      %v1178 = vadd.f32 0.0, %v1177
      %1179 = vdwg.mxu0
      %1180 = vmatprep.subr.mxu0 0.0
      %1181 = vmatpush1.msra.mxu0 %v933
      %1182 = vmatprep.subr.mxu0 0.0
      %1183 = vmatpush1.msra.mxu0 %v938
      %1184 = vmatprep.subr.mxu0 0.0
      %1185 = vmatpush1.msra.mxu0 %v943
      %1186 = vmatprep.subr.mxu0 0.0
      %1187 = vmatpush1.msra.mxu0 %v948
      %1188 = vmatprep.subr.mxu0 0.0
      %1189 = vmatpush1.msra.mxu0 %v953
      %1190 = vmatprep.subr.mxu0 0.0
      %1191 = vmatpush1.msra.mxu0 %v958
      %1192 = vmatprep.subr.mxu0 0.0
      %1193 = vmatpush1.msra.mxu0 %v963
      %1194 = vmatprep.subr.mxu0 0.0
      %1195 = vmatpush1.msra.mxu0 %v968
      %1196 = vmatprep.subr.mxu0 0.0
      %1197 = vmatpush1.msra.mxu0 %v973
      %1198 = vmatprep.subr.mxu0 0.0
      %1199 = vmatpush1.msra.mxu0 %v978
      %1200 = vmatprep.subr.mxu0 0.0
      %1201 = vmatpush1.msra.mxu0 %v983
      %1202 = vmatprep.subr.mxu0 0.0
      %1203 = vmatpush1.msra.mxu0 %v988
      %1204 = vmatprep.subr.mxu0 0.0
      %1205 = vmatpush1.msra.mxu0 %v993
      %1206 = vmatprep.subr.mxu0 0.0
      %1207 = vmatpush1.msra.mxu0 %v998
      %1208 = vmatprep.subr.mxu0 0.0
      %1209 = vmatpush1.msra.mxu0 %v1003
      %1210 = vmatprep.subr.mxu0 0.0
      %1211 = vmatpush1.msra.mxu0 %v1008
      %1212 = vmatprep.subr.mxu0 0.0
      %1213 = vmatpush1.msra.mxu0 %v1013
      %1214 = vmatprep.subr.mxu0 0.0
      %1215 = vmatpush1.msra.mxu0 %v1018
      %1216 = vmatprep.subr.mxu0 0.0
      %1217 = vmatpush1.msra.mxu0 0.0
      %1218 = vmatprep.subr.mxu0 0.0
      %1219 = vmatpush1.msra.mxu0 0.0
      %1220 = vmatprep.subr.mxu0 0.0
      %1221 = vmatpush1.msra.mxu0 0.0
      %1222 = vmatprep.subr.mxu0 0.0
      %1223 = vmatpush1.msra.mxu0 0.0
      %1224 = vmatprep.subr.mxu0 0.0
      %1225 = vmatpush1.msra.mxu0 0.0
      %1226 = vmatprep.subr.mxu0 0.0
      %1227 = vmatpush1.msra.mxu0 0.0
      %1228 = vmatprep.subr.mxu0 0.0
      %1229 = vmatpush1.msra.mxu0 0.0
      %1230 = vmatprep.subr.mxu0 0.0
      %1231 = vmatpush1.msra.mxu0 0.0
      %1232 = vmatprep.subr.mxu0 0.0
      %1233 = vmatpush1.msra.mxu0 0.0
      %1234 = vmatprep.subr.mxu0 0.0
      %1235 = vmatpush1.msra.mxu0 0.0
      %1236 = vmatprep.subr.mxu0 0.0
      %1237 = vmatpush1.msra.mxu0 0.0
      %1238 = vmatprep.subr.mxu0 0.0
      %1239 = vmatpush1.msra.mxu0 0.0
      %1240 = vmatprep.subr.mxu0 0.0
      %1241 = vmatpush1.msra.mxu0 0.0
      %1242 = vmatprep.subr.mxu0 0.0
      %1243 = vmatpush1.msra.mxu0 0.0
      %1244 = vmatprep.mubr.f32.mxu0 %v1021
      %1245 = vmatmul.mubr.f32.gmra.mrb[0].mxu0 %v925
      %v1246 = vpop.f32.mrb[0].mxu0
      %v1247 = vadd.f32 0.0, %v1246
      %v1248 = vpop.f32.mrb[0].mxu0
      %1249 = vmatprep.mubr.f32.mxu0 %v1024
      %1250 = vmatmul.mubr.f32.gmra.mrb[0].mxu0 %v927
      %v1251 = vpop.f32.mrb[0].mxu0
      %v1252 = vadd.f32 0.0, %v1251
      %v1253 = vpop.f32.mrb[0].mxu0
      %1254 = vdwg.mxu0
      %v1255 = vld [vmem:[%s2] sm:$0xff]
      %v1256 = vld [vmem:[%s2 + $0x8] sm:$0xff]
      %1258 = vset.pattern.permute.xlu0 0
      %1259 = vperm.xlu0 %1258, %v1255
      %v1260 = vpop.permute.xlu0 %1259
      %1263 = vset.pattern.permute.xlu0 0
      %1264 = vperm.xlu0 %1263, %v1256
      %v1265 = vpop.permute.xlu0 %1264
      %v1267 = vmul.f32 %v1093, %v1260
      %v1268 = vmul.f32 %v1095, %v1260
      %v1269 = vmul.f32 %v1170, %v1260
      %v1270 = vmul.f32 %v1172, %v1260
      %v1271 = vmul.f32 %v1247, %v1260
      %v1272 = vmul.f32 %v1099, %v1265
      %v1273 = vmul.f32 %v1101, %v1265
      %v1274 = vmul.f32 %v1176, %v1265
      %v1275 = vmul.f32 %v1178, %v1265
      %v1276 = vmul.f32 %v1252, %v1265
      %v1277 = vld [vmem:[%s3] sm:$0xff]
      %v1278 = vld [vmem:[%s3 + $0x8] sm:$0xff]
      %1280 = vset.pattern.permute.xlu0 0
      %1281 = vperm.xlu0 %1280, %v1277
      %v1282 = vpop.permute.xlu0 %1281
      %1285 = vset.pattern.permute.xlu0 0
      %1286 = vperm.xlu0 %1285, %v1278
      %v1287 = vpop.permute.xlu0 %1286
      %v1289 = vadd.f32 %v1267, %v1282
      %v1290 = vadd.f32 %v1268, %v1282
      %v1291 = vadd.f32 %v1269, %v1282
      %v1292 = vadd.f32 %v1270, %v1282
      %v1293 = vadd.f32 %v1271, %v1282
      %v1294 = vadd.f32 %v1272, %v1287
      %v1295 = vadd.f32 %v1273, %v1287
      %v1296 = vadd.f32 %v1274, %v1287
      %v1297 = vadd.f32 %v1275, %v1287
      %v1298 = vadd.f32 %v1276, %v1287
      %v1299 = vmax.f32 %v1289, 0.0
      %v1300 = vmax.f32 %v1290, 0.0
      %v1301 = vmax.f32 %v1291, 0.0
      %v1302 = vmax.f32 %v1292, 0.0
      %v1303 = vmax.f32 %v1293, 0.0
      %v1304 = vmax.f32 %v1294, 0.0
      %v1305 = vmax.f32 %v1295, 0.0
      %v1306 = vmax.f32 %v1296, 0.0
      %v1307 = vmax.f32 %v1297, 0.0
      %v1308 = vmax.f32 %v1298, 0.0
      %v1309 = vsel %vm303, %v1299, 0.0
      %v1310 = vsel %vm304, %v1300, 0.0
      %v1311 = vsel %vm305, %v1301, 0.0
      %v1312 = vsel %vm306, %v1302, 0.0
      %v1313 = vsel %vm307, %v1303, 0.0
      %v1314 = vsel %vm308, %v1304, 0.0
      %v1315 = vsel %vm309, %v1305, 0.0
      %v1316 = vsel %vm310, %v1306, 0.0
      %v1317 = vsel %vm311, %v1307, 0.0
      %v1318 = vsel %vm312, %v1308, 0.0
      %1319 = vst [vmem:[#allocation3 + $0x8] sm:$0xff] %v1309
      %1320 = vst [vmem:[#allocation3 + $0x10] sm:$0xff] %v1310
      %1321 = vst [vmem:[#allocation3 + $0x18] sm:$0xff] %v1311
      %1322 = vst [vmem:[#allocation3 + $0x20] sm:$0xff] %v1312
      %1323 = vst.msk [vmem:[#allocation3 + $0x28] sm:$0xff] %vm231, %v1313
      %1324 = vst [vmem:[#allocation3 + $0x40] sm:$0xff] %v1314
      %1325 = vst [vmem:[#allocation3 + $0x48] sm:$0xff] %v1315
      %1326 = vst [vmem:[#allocation3 + $0x50] sm:$0xff] %v1316
      %1327 = vst [vmem:[#allocation3 + $0x58] sm:$0xff] %v1317
      %1328 = vst.msk [vmem:[#allocation3 + $0x60] sm:$0xff] %vm231, %v1318
      %v1329 = vld [vmem:[#allocation3] sm:$0xff]
      %v1330 = vld [vmem:[#allocation3 + $0x8] sm:$0xff]
      %v1331 = vld [vmem:[#allocation3 + $0x10] sm:$0xff]
      %v1332 = vld [vmem:[#allocation3 + $0x18] sm:$0xff]
      %v1333 = vld [vmem:[#allocation3 + $0x20] sm:$0xff]
      %v1334 = vld [vmem:[#allocation3 + $0x28] sm:$0xff]
      %v1335 = vld [vmem:[#allocation3 + $0x38] sm:$0xff]
      %v1336 = vld [vmem:[#allocation3 + $0x40] sm:$0xff]
      %v1337 = vld [vmem:[#allocation3 + $0x48] sm:$0xff]
      %v1338 = vld [vmem:[#allocation3 + $0x50] sm:$0xff]
      %v1339 = vld [vmem:[#allocation3 + $0x58] sm:$0xff]
      %v1340 = vld [vmem:[#allocation3 + $0x60] sm:$0xff]
      %1353 = vrot.lane.b32.xlu0 %v1329, 50
      %v1354 = vpop.permute.xlu0 %1353
      %1355 = vrot.lane.b32.xlu0 %v1330, 50
      %v1356 = vpop.permute.xlu0 %1355
      %1357 = vrot.lane.b32.xlu0 %v1331, 50
      %v1358 = vpop.permute.xlu0 %1357
      %1359 = vrot.lane.b32.xlu0 %v1332, 50
      %v1360 = vpop.permute.xlu0 %1359
      %1361 = vrot.lane.b32.xlu0 %v1333, 50
      %v1362 = vpop.permute.xlu0 %1361
      %1363 = vrot.lane.b32.xlu0 %v1334, 50
      %v1364 = vpop.permute.xlu0 %1363
      %1365 = vrot.lane.b32.xlu0 %v1335, 50
      %v1366 = vpop.permute.xlu0 %1365
      %1367 = vrot.lane.b32.xlu0 %v1336, 50
      %v1368 = vpop.permute.xlu0 %1367
      %1369 = vrot.lane.b32.xlu0 %v1337, 50
      %v1370 = vpop.permute.xlu0 %1369
      %1371 = vrot.lane.b32.xlu0 %v1338, 50
      %v1372 = vpop.permute.xlu0 %1371
      %1373 = vrot.lane.b32.xlu0 %v1339, 50
      %v1374 = vpop.permute.xlu0 %1373
      %1375 = vrot.lane.b32.xlu0 %v1340, 50
      %v1376 = vpop.permute.xlu0 %1375
      %vm1377 = vcmask 408576
      %v1378 = vsel %vm1377, %v1354, %v1356
      %v1379 = vsel %vm1377, %v1356, %v1358
      %v1380 = vsel %vm1377, %v1358, %v1360
      %v1381 = vsel %vm1377, %v1360, %v1362
      %v1382 = vsel %vm1377, %v1362, %v1364
      %v1383 = vsel %vm1377, %v1366, %v1368
      %v1384 = vsel %vm1377, %v1368, %v1370
      %v1385 = vsel %vm1377, %v1370, %v1372
      %v1386 = vsel %vm1377, %v1372, %v1374
      %v1387 = vsel %vm1377, %v1374, %v1376
      %1398 = vst [vmem:[#allocation4] sm:$0xff] %v1378
      %1399 = vst [vmem:[#allocation4 + $0x8] sm:$0xff] %v1379
      %1400 = vst [vmem:[#allocation4 + $0x10] sm:$0xff] %v1380
      %1401 = vst [vmem:[#allocation4 + $0x18] sm:$0xff] %v1381
      %1402 = vst.msk [vmem:[#allocation4 + $0x20] sm:$0xff] %vm231, %v1382
      %1403 = vst [vmem:[#allocation4 + $0x28] sm:$0xff] %v1383
      %1404 = vst [vmem:[#allocation4 + $0x30] sm:$0xff] %v1384
      %1405 = vst [vmem:[#allocation4 + $0x38] sm:$0xff] %v1385
      %1406 = vst [vmem:[#allocation4 + $0x40] sm:$0xff] %v1386
      %1407 = vst.msk [vmem:[#allocation4 + $0x48] sm:$0xff] %vm231, %v1387
      %v1408 = vld [vmem:[#allocation3] sm:$0xff]
      %v1409 = vld [vmem:[#allocation3 + $0x8] sm:$0xff]
      %v1410 = vld [vmem:[#allocation3 + $0x10] sm:$0xff]
      %v1411 = vld [vmem:[#allocation3 + $0x18] sm:$0xff]
      %v1412 = vld [vmem:[#allocation3 + $0x20] sm:$0xff]
      %v1413 = vld [vmem:[#allocation3 + $0x28] sm:$0xff]
      %v1414 = vld [vmem:[#allocation3 + $0x38] sm:$0xff]
      %v1415 = vld [vmem:[#allocation3 + $0x40] sm:$0xff]
      %v1416 = vld [vmem:[#allocation3 + $0x48] sm:$0xff]
      %v1417 = vld [vmem:[#allocation3 + $0x50] sm:$0xff]
      %v1418 = vld [vmem:[#allocation3 + $0x58] sm:$0xff]
      %v1419 = vld [vmem:[#allocation3 + $0x60] sm:$0xff]
      %1432 = vrot.lane.b32.xlu0 %v1408, 48
      %v1433 = vpop.permute.xlu0 %1432
      %1434 = vrot.lane.b32.xlu0 %v1409, 48
      %v1435 = vpop.permute.xlu0 %1434
      %1436 = vrot.lane.b32.xlu0 %v1410, 48
      %v1437 = vpop.permute.xlu0 %1436
      %1438 = vrot.lane.b32.xlu0 %v1411, 48
      %v1439 = vpop.permute.xlu0 %1438
      %1440 = vrot.lane.b32.xlu0 %v1412, 48
      %v1441 = vpop.permute.xlu0 %1440
      %1442 = vrot.lane.b32.xlu0 %v1413, 48
      %v1443 = vpop.permute.xlu0 %1442
      %1444 = vrot.lane.b32.xlu0 %v1414, 48
      %v1445 = vpop.permute.xlu0 %1444
      %1446 = vrot.lane.b32.xlu0 %v1415, 48
      %v1447 = vpop.permute.xlu0 %1446
      %1448 = vrot.lane.b32.xlu0 %v1416, 48
      %v1449 = vpop.permute.xlu0 %1448
      %1450 = vrot.lane.b32.xlu0 %v1417, 48
      %v1451 = vpop.permute.xlu0 %1450
      %1452 = vrot.lane.b32.xlu0 %v1418, 48
      %v1453 = vpop.permute.xlu0 %1452
      %1454 = vrot.lane.b32.xlu0 %v1419, 48
      %v1455 = vpop.permute.xlu0 %1454
      %vm1456 = vcmask 392192
      %v1457 = vsel %vm1456, %v1433, %v1435
      %v1458 = vsel %vm1456, %v1435, %v1437
      %v1459 = vsel %vm1456, %v1437, %v1439
      %v1460 = vsel %vm1456, %v1439, %v1441
      %v1461 = vsel %vm1456, %v1441, %v1443
      %v1462 = vsel %vm1456, %v1445, %v1447
      %v1463 = vsel %vm1456, %v1447, %v1449
      %v1464 = vsel %vm1456, %v1449, %v1451
      %v1465 = vsel %vm1456, %v1451, %v1453
      %v1466 = vsel %vm1456, %v1453, %v1455
      %1477 = vst [vmem:[#allocation4 + $0x50] sm:$0xff] %v1457
      %1478 = vst [vmem:[#allocation4 + $0x58] sm:$0xff] %v1458
      %1479 = vst [vmem:[#allocation4 + $0x60] sm:$0xff] %v1459
      %1480 = vst [vmem:[#allocation4 + $0x68] sm:$0xff] %v1460
      %1481 = vst.msk [vmem:[#allocation4 + $0x70] sm:$0xff] %vm231, %v1461
      %1482 = vst [vmem:[#allocation4 + $0x78] sm:$0xff] %v1462
      %1483 = vst [vmem:[#allocation4 + $0x80] sm:$0xff] %v1463
      %1484 = vst [vmem:[#allocation4 + $0x88] sm:$0xff] %v1464
      %1485 = vst [vmem:[#allocation4 + $0x90] sm:$0xff] %v1465
      %1486 = vst.msk [vmem:[#allocation4 + $0x98] sm:$0xff] %vm231, %v1466
      %v1487 = vld [vmem:[#allocation3] sm:$0xff]
      %v1488 = vld [vmem:[#allocation3 + $0x8] sm:$0xff]
      %v1489 = vld [vmem:[#allocation3 + $0x10] sm:$0xff]
      %v1490 = vld [vmem:[#allocation3 + $0x18] sm:$0xff]
      %v1491 = vld [vmem:[#allocation3 + $0x20] sm:$0xff]
      %v1492 = vld [vmem:[#allocation3 + $0x28] sm:$0xff]
      %v1493 = vld [vmem:[#allocation3 + $0x38] sm:$0xff]
      %v1494 = vld [vmem:[#allocation3 + $0x40] sm:$0xff]
      %v1495 = vld [vmem:[#allocation3 + $0x48] sm:$0xff]
      %v1496 = vld [vmem:[#allocation3 + $0x50] sm:$0xff]
      %v1497 = vld [vmem:[#allocation3 + $0x58] sm:$0xff]
      %v1498 = vld [vmem:[#allocation3 + $0x60] sm:$0xff]
      %1511 = vrot.lane.b32.xlu0 %v1487, 46
      %v1512 = vpop.permute.xlu0 %1511
      %1513 = vrot.lane.b32.xlu0 %v1488, 46
      %v1514 = vpop.permute.xlu0 %1513
      %1515 = vrot.lane.b32.xlu0 %v1489, 46
      %v1516 = vpop.permute.xlu0 %1515
      %1517 = vrot.lane.b32.xlu0 %v1490, 46
      %v1518 = vpop.permute.xlu0 %1517
      %1519 = vrot.lane.b32.xlu0 %v1491, 46
      %v1520 = vpop.permute.xlu0 %1519
      %1521 = vrot.lane.b32.xlu0 %v1492, 46
      %v1522 = vpop.permute.xlu0 %1521
      %1523 = vrot.lane.b32.xlu0 %v1493, 46
      %v1524 = vpop.permute.xlu0 %1523
      %1525 = vrot.lane.b32.xlu0 %v1494, 46
      %v1526 = vpop.permute.xlu0 %1525
      %1527 = vrot.lane.b32.xlu0 %v1495, 46
      %v1528 = vpop.permute.xlu0 %1527
      %1529 = vrot.lane.b32.xlu0 %v1496, 46
      %v1530 = vpop.permute.xlu0 %1529
      %1531 = vrot.lane.b32.xlu0 %v1497, 46
      %v1532 = vpop.permute.xlu0 %1531
      %1533 = vrot.lane.b32.xlu0 %v1498, 46
      %v1534 = vpop.permute.xlu0 %1533
      %vm1535 = vcmask 375808
      %v1536 = vsel %vm1535, %v1512, %v1514
      %v1537 = vsel %vm1535, %v1514, %v1516
      %v1538 = vsel %vm1535, %v1516, %v1518
      %v1539 = vsel %vm1535, %v1518, %v1520
      %v1540 = vsel %vm1535, %v1520, %v1522
      %v1541 = vsel %vm1535, %v1524, %v1526
      %v1542 = vsel %vm1535, %v1526, %v1528
      %v1543 = vsel %vm1535, %v1528, %v1530
      %v1544 = vsel %vm1535, %v1530, %v1532
      %v1545 = vsel %vm1535, %v1532, %v1534
      %1556 = vst [vmem:[#allocation4 + $0xa0] sm:$0xff] %v1536
      %1557 = vst [vmem:[#allocation4 + $0xa8] sm:$0xff] %v1537
      %1558 = vst [vmem:[#allocation4 + $0xb0] sm:$0xff] %v1538
      %1559 = vst [vmem:[#allocation4 + $0xb8] sm:$0xff] %v1539
      %1560 = vst.msk [vmem:[#allocation4 + $0xc0] sm:$0xff] %vm231, %v1540
      %1561 = vst [vmem:[#allocation4 + $0xc8] sm:$0xff] %v1541
      %1562 = vst [vmem:[#allocation4 + $0xd0] sm:$0xff] %v1542
      %1563 = vst [vmem:[#allocation4 + $0xd8] sm:$0xff] %v1543
      %1564 = vst [vmem:[#allocation4 + $0xe0] sm:$0xff] %v1544
      %1565 = vst.msk [vmem:[#allocation4 + $0xe8] sm:$0xff] %vm231, %v1545
      %v1566 = vld [vmem:[#allocation3] sm:$0xff]
      %v1567 = vld [vmem:[#allocation3 + $0x8] sm:$0xff]
      %v1568 = vld [vmem:[#allocation3 + $0x10] sm:$0xff]
      %v1569 = vld [vmem:[#allocation3 + $0x18] sm:$0xff]
      %v1570 = vld [vmem:[#allocation3 + $0x20] sm:$0xff]
      %v1571 = vld [vmem:[#allocation3 + $0x28] sm:$0xff]
      %v1572 = vld [vmem:[#allocation3 + $0x38] sm:$0xff]
      %v1573 = vld [vmem:[#allocation3 + $0x40] sm:$0xff]
      %v1574 = vld [vmem:[#allocation3 + $0x48] sm:$0xff]
      %v1575 = vld [vmem:[#allocation3 + $0x50] sm:$0xff]
      %v1576 = vld [vmem:[#allocation3 + $0x58] sm:$0xff]
      %v1577 = vld [vmem:[#allocation3 + $0x60] sm:$0xff]
      %1590 = vrot.lane.b32.xlu0 %v1566, 2
      %v1591 = vpop.permute.xlu0 %1590
      %1592 = vrot.lane.b32.xlu0 %v1567, 2
      %v1593 = vpop.permute.xlu0 %1592
      %1594 = vrot.lane.b32.xlu0 %v1568, 2
      %v1595 = vpop.permute.xlu0 %1594
      %1596 = vrot.lane.b32.xlu0 %v1569, 2
      %v1597 = vpop.permute.xlu0 %1596
      %1598 = vrot.lane.b32.xlu0 %v1570, 2
      %v1599 = vpop.permute.xlu0 %1598
      %1600 = vrot.lane.b32.xlu0 %v1571, 2
      %v1601 = vpop.permute.xlu0 %1600
      %1602 = vrot.lane.b32.xlu0 %v1572, 2
      %v1603 = vpop.permute.xlu0 %1602
      %1604 = vrot.lane.b32.xlu0 %v1573, 2
      %v1605 = vpop.permute.xlu0 %1604
      %1606 = vrot.lane.b32.xlu0 %v1574, 2
      %v1607 = vpop.permute.xlu0 %1606
      %1608 = vrot.lane.b32.xlu0 %v1575, 2
      %v1609 = vpop.permute.xlu0 %1608
      %1610 = vrot.lane.b32.xlu0 %v1576, 2
      %v1611 = vpop.permute.xlu0 %1610
      %1612 = vrot.lane.b32.xlu0 %v1577, 2
      %v1613 = vpop.permute.xlu0 %1612
      %vm1614 = vcmask 15360
      %v1615 = vsel %vm1614, %v1591, %v1593
      %v1616 = vsel %vm1614, %v1593, %v1595
      %v1617 = vsel %vm1614, %v1595, %v1597
      %v1618 = vsel %vm1614, %v1597, %v1599
      %v1619 = vsel %vm1614, %v1599, %v1601
      %v1620 = vsel %vm1614, %v1603, %v1605
      %v1621 = vsel %vm1614, %v1605, %v1607
      %v1622 = vsel %vm1614, %v1607, %v1609
      %v1623 = vsel %vm1614, %v1609, %v1611
      %v1624 = vsel %vm1614, %v1611, %v1613
      %1635 = vst [vmem:[#allocation4 + $0xf0] sm:$0xff] %v1615
      %1636 = vst [vmem:[#allocation4 + $0xf8] sm:$0xff] %v1616
      %1637 = vst [vmem:[#allocation4 + $0x100] sm:$0xff] %v1617
      %1638 = vst [vmem:[#allocation4 + $0x108] sm:$0xff] %v1618
      %1639 = vst.msk [vmem:[#allocation4 + $0x110] sm:$0xff] %vm231, %v1619
      %1640 = vst [vmem:[#allocation4 + $0x118] sm:$0xff] %v1620
      %1641 = vst [vmem:[#allocation4 + $0x120] sm:$0xff] %v1621
      %1642 = vst [vmem:[#allocation4 + $0x128] sm:$0xff] %v1622
      %1643 = vst [vmem:[#allocation4 + $0x130] sm:$0xff] %v1623
      %1644 = vst.msk [vmem:[#allocation4 + $0x138] sm:$0xff] %vm231, %v1624
      %v1645 = vld [vmem:[#allocation3 + $0x8] sm:$0xff]
      %v1646 = vld [vmem:[#allocation3 + $0x10] sm:$0xff]
      %v1647 = vld [vmem:[#allocation3 + $0x18] sm:$0xff]
      %v1648 = vld [vmem:[#allocation3 + $0x20] sm:$0xff]
      %v1649 = vld [vmem:[#allocation3 + $0x28] sm:$0xff]
      %v1650 = vld [vmem:[#allocation3 + $0x40] sm:$0xff]
      %v1651 = vld [vmem:[#allocation3 + $0x48] sm:$0xff]
      %v1652 = vld [vmem:[#allocation3 + $0x50] sm:$0xff]
      %v1653 = vld [vmem:[#allocation3 + $0x58] sm:$0xff]
      %v1654 = vld [vmem:[#allocation3 + $0x60] sm:$0xff]
      %1655 = vst [vmem:[#allocation4 + $0x140] sm:$0xff] %v1645
      %1656 = vst [vmem:[#allocation4 + $0x148] sm:$0xff] %v1646
      %1657 = vst [vmem:[#allocation4 + $0x150] sm:$0xff] %v1647
      %1658 = vst [vmem:[#allocation4 + $0x158] sm:$0xff] %v1648
      %1659 = vst.msk [vmem:[#allocation4 + $0x160] sm:$0xff] %vm231, %v1649
      %1660 = vst [vmem:[#allocation4 + $0x168] sm:$0xff] %v1650
      %1661 = vst [vmem:[#allocation4 + $0x170] sm:$0xff] %v1651
      %1662 = vst [vmem:[#allocation4 + $0x178] sm:$0xff] %v1652
      %1663 = vst [vmem:[#allocation4 + $0x180] sm:$0xff] %v1653
      %1664 = vst.msk [vmem:[#allocation4 + $0x188] sm:$0xff] %vm231, %v1654
      %v1665 = vld [vmem:[#allocation3 + $0x8] sm:$0xff]
      %v1666 = vld [vmem:[#allocation3 + $0x10] sm:$0xff]
      %v1667 = vld [vmem:[#allocation3 + $0x18] sm:$0xff]
      %v1668 = vld [vmem:[#allocation3 + $0x20] sm:$0xff]
      %v1669 = vld [vmem:[#allocation3 + $0x28] sm:$0xff]
      %v1670 = vld [vmem:[#allocation3 + $0x40] sm:$0xff]
      %v1671 = vld [vmem:[#allocation3 + $0x48] sm:$0xff]
      %v1672 = vld [vmem:[#allocation3 + $0x50] sm:$0xff]
      %v1673 = vld [vmem:[#allocation3 + $0x58] sm:$0xff]
      %v1674 = vld [vmem:[#allocation3 + $0x60] sm:$0xff]
      %1685 = vrot.lane.b32.xlu0 %v1665, 126
      %v1686 = vpop.permute.xlu0 %1685
      %1687 = vrot.lane.b32.xlu0 %v1666, 126
      %v1688 = vpop.permute.xlu0 %1687
      %1689 = vrot.lane.b32.xlu0 %v1667, 126
      %v1690 = vpop.permute.xlu0 %1689
      %1691 = vrot.lane.b32.xlu0 %v1668, 126
      %v1692 = vpop.permute.xlu0 %1691
      %1693 = vrot.lane.b32.xlu0 %v1669, 126
      %v1694 = vpop.permute.xlu0 %1693
      %1695 = vrot.lane.b32.xlu0 %v1670, 126
      %v1696 = vpop.permute.xlu0 %1695
      %1697 = vrot.lane.b32.xlu0 %v1671, 126
      %v1698 = vpop.permute.xlu0 %1697
      %1699 = vrot.lane.b32.xlu0 %v1672, 126
      %v1700 = vpop.permute.xlu0 %1699
      %1701 = vrot.lane.b32.xlu0 %v1673, 126
      %v1702 = vpop.permute.xlu0 %1701
      %1703 = vrot.lane.b32.xlu0 %v1674, 126
      %v1704 = vpop.permute.xlu0 %1703
      %vm1705 = vcmask 1031168
      %v1706 = vsel %vm1705, %v1686, %v1688
      %v1707 = vsel %vm1705, %v1688, %v1690
      %v1708 = vsel %vm1705, %v1690, %v1692
      %v1709 = vsel %vm1705, %v1692, %v1694
      %v1710 = vsel %vm1705, %v1696, %v1698
      %v1711 = vsel %vm1705, %v1698, %v1700
      %v1712 = vsel %vm1705, %v1700, %v1702
      %v1713 = vsel %vm1705, %v1702, %v1704
      %1724 = vst [vmem:[#allocation4 + $0x190] sm:$0xff] %v1706
      %1725 = vst [vmem:[#allocation4 + $0x198] sm:$0xff] %v1707
      %1726 = vst [vmem:[#allocation4 + $0x1a0] sm:$0xff] %v1708
      %1727 = vst [vmem:[#allocation4 + $0x1a8] sm:$0xff] %v1709
      %1728 = vst.msk [vmem:[#allocation4 + $0x1b0] sm:$0xff] %vm231, %v1694
      %1729 = vst [vmem:[#allocation4 + $0x1b8] sm:$0xff] %v1710
      %1730 = vst [vmem:[#allocation4 + $0x1c0] sm:$0xff] %v1711
      %1731 = vst [vmem:[#allocation4 + $0x1c8] sm:$0xff] %v1712
      %1732 = vst [vmem:[#allocation4 + $0x1d0] sm:$0xff] %v1713
      %1733 = vst.msk [vmem:[#allocation4 + $0x1d8] sm:$0xff] %vm231, %v1704
      %v1734 = vld [vmem:[#allocation3 + $0x8] sm:$0xff]
      %v1735 = vld [vmem:[#allocation3 + $0x10] sm:$0xff]
      %v1736 = vld [vmem:[#allocation3 + $0x18] sm:$0xff]
      %v1737 = vld [vmem:[#allocation3 + $0x20] sm:$0xff]
      %v1738 = vld [vmem:[#allocation3 + $0x28] sm:$0xff]
      %v1739 = vld [vmem:[#allocation3 + $0x40] sm:$0xff]
      %v1740 = vld [vmem:[#allocation3 + $0x48] sm:$0xff]
      %v1741 = vld [vmem:[#allocation3 + $0x50] sm:$0xff]
      %v1742 = vld [vmem:[#allocation3 + $0x58] sm:$0xff]
      %v1743 = vld [vmem:[#allocation3 + $0x60] sm:$0xff]
      %1754 = vrot.lane.b32.xlu0 %v1734, 82
      %v1755 = vpop.permute.xlu0 %1754
      %1756 = vrot.lane.b32.xlu0 %v1735, 82
      %v1757 = vpop.permute.xlu0 %1756
      %1758 = vrot.lane.b32.xlu0 %v1736, 82
      %v1759 = vpop.permute.xlu0 %1758
      %1760 = vrot.lane.b32.xlu0 %v1737, 82
      %v1761 = vpop.permute.xlu0 %1760
      %1762 = vrot.lane.b32.xlu0 %v1738, 82
      %v1763 = vpop.permute.xlu0 %1762
      %1764 = vrot.lane.b32.xlu0 %v1739, 82
      %v1765 = vpop.permute.xlu0 %1764
      %1766 = vrot.lane.b32.xlu0 %v1740, 82
      %v1767 = vpop.permute.xlu0 %1766
      %1768 = vrot.lane.b32.xlu0 %v1741, 82
      %v1769 = vpop.permute.xlu0 %1768
      %1770 = vrot.lane.b32.xlu0 %v1742, 82
      %v1771 = vpop.permute.xlu0 %1770
      %1772 = vrot.lane.b32.xlu0 %v1743, 82
      %v1773 = vpop.permute.xlu0 %1772
      %vm1774 = vcmask 670720
      %v1775 = vsel %vm1774, %v1755, %v1757
      %v1776 = vsel %vm1774, %v1757, %v1759
      %v1777 = vsel %vm1774, %v1759, %v1761
      %v1778 = vsel %vm1774, %v1761, %v1763
      %v1779 = vsel %vm1774, %v1765, %v1767
      %v1780 = vsel %vm1774, %v1767, %v1769
      %v1781 = vsel %vm1774, %v1769, %v1771
      %v1782 = vsel %vm1774, %v1771, %v1773
      %1793 = vst [vmem:[#allocation4 + $0x1e0] sm:$0xff] %v1775
      %1794 = vst [vmem:[#allocation4 + $0x1e8] sm:$0xff] %v1776
      %1795 = vst [vmem:[#allocation4 + $0x1f0] sm:$0xff] %v1777
      %1796 = vst [vmem:[#allocation4 + $0x1f8] sm:$0xff] %v1778
      %1797 = vst.msk [vmem:[#allocation4 + $0x200] sm:$0xff] %vm231, %v1763
      %1798 = vst [vmem:[#allocation4 + $0x208] sm:$0xff] %v1779
      %1799 = vst [vmem:[#allocation4 + $0x210] sm:$0xff] %v1780
      %1800 = vst [vmem:[#allocation4 + $0x218] sm:$0xff] %v1781
      %1801 = vst [vmem:[#allocation4 + $0x220] sm:$0xff] %v1782
      %1802 = vst.msk [vmem:[#allocation4 + $0x228] sm:$0xff] %vm231, %v1773
      %v1803 = vld [vmem:[#allocation3 + $0x8] sm:$0xff]
      %v1804 = vld [vmem:[#allocation3 + $0x10] sm:$0xff]
      %v1805 = vld [vmem:[#allocation3 + $0x18] sm:$0xff]
      %v1806 = vld [vmem:[#allocation3 + $0x20] sm:$0xff]
      %v1807 = vld [vmem:[#allocation3 + $0x28] sm:$0xff]
      %v1808 = vld [vmem:[#allocation3 + $0x40] sm:$0xff]
      %v1809 = vld [vmem:[#allocation3 + $0x48] sm:$0xff]
      %v1810 = vld [vmem:[#allocation3 + $0x50] sm:$0xff]
      %v1811 = vld [vmem:[#allocation3 + $0x58] sm:$0xff]
      %v1812 = vld [vmem:[#allocation3 + $0x60] sm:$0xff]
      %1823 = vrot.lane.b32.xlu0 %v1803, 80
      %v1824 = vpop.permute.xlu0 %1823
      %1825 = vrot.lane.b32.xlu0 %v1804, 80
      %v1826 = vpop.permute.xlu0 %1825
      %1827 = vrot.lane.b32.xlu0 %v1805, 80
      %v1828 = vpop.permute.xlu0 %1827
      %1829 = vrot.lane.b32.xlu0 %v1806, 80
      %v1830 = vpop.permute.xlu0 %1829
      %1831 = vrot.lane.b32.xlu0 %v1807, 80
      %v1832 = vpop.permute.xlu0 %1831
      %1833 = vrot.lane.b32.xlu0 %v1808, 80
      %v1834 = vpop.permute.xlu0 %1833
      %1835 = vrot.lane.b32.xlu0 %v1809, 80
      %v1836 = vpop.permute.xlu0 %1835
      %1837 = vrot.lane.b32.xlu0 %v1810, 80
      %v1838 = vpop.permute.xlu0 %1837
      %1839 = vrot.lane.b32.xlu0 %v1811, 80
      %v1840 = vpop.permute.xlu0 %1839
      %1841 = vrot.lane.b32.xlu0 %v1812, 80
      %v1842 = vpop.permute.xlu0 %1841
      %vm1843 = vcmask 654336
      %v1844 = vsel %vm1843, %v1824, %v1826
      %v1845 = vsel %vm1843, %v1826, %v1828
      %v1846 = vsel %vm1843, %v1828, %v1830
      %v1847 = vsel %vm1843, %v1830, %v1832
      %v1848 = vsel %vm1843, %v1834, %v1836
      %v1849 = vsel %vm1843, %v1836, %v1838
      %v1850 = vsel %vm1843, %v1838, %v1840
      %v1851 = vsel %vm1843, %v1840, %v1842
      %1862 = vst [vmem:[#allocation4 + $0x230] sm:$0xff] %v1844
      %1863 = vst [vmem:[#allocation4 + $0x238] sm:$0xff] %v1845
      %1864 = vst [vmem:[#allocation4 + $0x240] sm:$0xff] %v1846
      %1865 = vst [vmem:[#allocation4 + $0x248] sm:$0xff] %v1847
      %1866 = vst.msk [vmem:[#allocation4 + $0x250] sm:$0xff] %vm231, %v1832
      %1867 = vst [vmem:[#allocation4 + $0x258] sm:$0xff] %v1848
      %1868 = vst [vmem:[#allocation4 + $0x260] sm:$0xff] %v1849
      %1869 = vst [vmem:[#allocation4 + $0x268] sm:$0xff] %v1850
      %1870 = vst [vmem:[#allocation4 + $0x270] sm:$0xff] %v1851
      %1871 = vst.msk [vmem:[#allocation4 + $0x278] sm:$0xff] %vm231, %v1842
      %v1872 = vld [vmem:[#allocation3 + $0x8] sm:$0xff]
      %v1873 = vld [vmem:[#allocation3 + $0x10] sm:$0xff]
      %v1874 = vld [vmem:[#allocation3 + $0x18] sm:$0xff]
      %v1875 = vld [vmem:[#allocation3 + $0x20] sm:$0xff]
      %v1876 = vld [vmem:[#allocation3 + $0x28] sm:$0xff]
      %v1877 = vld [vmem:[#allocation3 + $0x40] sm:$0xff]
      %v1878 = vld [vmem:[#allocation3 + $0x48] sm:$0xff]
      %v1879 = vld [vmem:[#allocation3 + $0x50] sm:$0xff]
      %v1880 = vld [vmem:[#allocation3 + $0x58] sm:$0xff]
      %v1881 = vld [vmem:[#allocation3 + $0x60] sm:$0xff]
      %1892 = vrot.lane.b32.xlu0 %v1872, 78
      %v1893 = vpop.permute.xlu0 %1892
      %1894 = vrot.lane.b32.xlu0 %v1873, 78
      %v1895 = vpop.permute.xlu0 %1894
      %1896 = vrot.lane.b32.xlu0 %v1874, 78
      %v1897 = vpop.permute.xlu0 %1896
      %1898 = vrot.lane.b32.xlu0 %v1875, 78
      %v1899 = vpop.permute.xlu0 %1898
      %1900 = vrot.lane.b32.xlu0 %v1876, 78
      %v1901 = vpop.permute.xlu0 %1900
      %1902 = vrot.lane.b32.xlu0 %v1877, 78
      %v1903 = vpop.permute.xlu0 %1902
      %1904 = vrot.lane.b32.xlu0 %v1878, 78
      %v1905 = vpop.permute.xlu0 %1904
      %1906 = vrot.lane.b32.xlu0 %v1879, 78
      %v1907 = vpop.permute.xlu0 %1906
      %1908 = vrot.lane.b32.xlu0 %v1880, 78
      %v1909 = vpop.permute.xlu0 %1908
      %1910 = vrot.lane.b32.xlu0 %v1881, 78
      %v1911 = vpop.permute.xlu0 %1910
      %vm1912 = vcmask 637952
      %v1913 = vsel %vm1912, %v1893, %v1895
      %v1914 = vsel %vm1912, %v1895, %v1897
      %v1915 = vsel %vm1912, %v1897, %v1899
      %v1916 = vsel %vm1912, %v1899, %v1901
      %v1917 = vsel %vm1912, %v1903, %v1905
      %v1918 = vsel %vm1912, %v1905, %v1907
      %v1919 = vsel %vm1912, %v1907, %v1909
      %v1920 = vsel %vm1912, %v1909, %v1911
      %1931 = vst [vmem:[#allocation4 + $0x280] sm:$0xff] %v1913
      %1932 = vst [vmem:[#allocation4 + $0x288] sm:$0xff] %v1914
      %1933 = vst [vmem:[#allocation4 + $0x290] sm:$0xff] %v1915
      %1934 = vst [vmem:[#allocation4 + $0x298] sm:$0xff] %v1916
      %1935 = vst.msk [vmem:[#allocation4 + $0x2a0] sm:$0xff] %vm231, %v1901
      %1936 = vst [vmem:[#allocation4 + $0x2a8] sm:$0xff] %v1917
      %1937 = vst [vmem:[#allocation4 + $0x2b0] sm:$0xff] %v1918
      %1938 = vst [vmem:[#allocation4 + $0x2b8] sm:$0xff] %v1919
      %1939 = vst [vmem:[#allocation4 + $0x2c0] sm:$0xff] %v1920
      %1940 = vst.msk [vmem:[#allocation4 + $0x2c8] sm:$0xff] %vm231, %v1911
      %s1941 = scalar_lea.vmem %s1, 32
      %v1942 = vld [vmem:[%s1941] sm:$0xff]
      %v1943 = vld [vmem:[%s1941 + $0x8] sm:$0xff]
      %v1944 = vld [vmem:[%s1941 + $0x10] sm:$0xff]
      %v1945 = vld [vmem:[%s1941 + $0x18] sm:$0xff]
      %v1946 = vld [vmem:[#allocation4] sm:$0xff]
      %v1947 = vld [vmem:[#allocation4 + $0x8] sm:$0xff]
      %v1948 = vld [vmem:[#allocation4 + $0x10] sm:$0xff]
      %v1949 = vld [vmem:[#allocation4 + $0x18] sm:$0xff]
      %v1950 = vld [vmem:[#allocation4 + $0x20] sm:$0xff]
      %v1951 = vld [vmem:[#allocation4 + $0x28] sm:$0xff]
      %v1952 = vld [vmem:[#allocation4 + $0x30] sm:$0xff]
      %v1953 = vld [vmem:[#allocation4 + $0x38] sm:$0xff]
      %v1954 = vld [vmem:[#allocation4 + $0x40] sm:$0xff]
      %v1955 = vld [vmem:[#allocation4 + $0x48] sm:$0xff]
      %v1956 = vld [vmem:[#allocation4 + $0x50] sm:$0xff]
      %v1957 = vld [vmem:[#allocation4 + $0x58] sm:$0xff]
      %v1958 = vld [vmem:[#allocation4 + $0x60] sm:$0xff]
      %v1959 = vld [vmem:[#allocation4 + $0x68] sm:$0xff]
      %v1960 = vld [vmem:[#allocation4 + $0x70] sm:$0xff]
      %v1961 = vld [vmem:[#allocation4 + $0x78] sm:$0xff]
      %v1962 = vld [vmem:[#allocation4 + $0x80] sm:$0xff]
      %v1963 = vld [vmem:[#allocation4 + $0x88] sm:$0xff]
      %v1964 = vld [vmem:[#allocation4 + $0x90] sm:$0xff]
      %v1965 = vld [vmem:[#allocation4 + $0x98] sm:$0xff]
      %v1966 = vld [vmem:[#allocation4 + $0xa0] sm:$0xff]
      %v1967 = vld [vmem:[#allocation4 + $0xa8] sm:$0xff]
      %v1968 = vld [vmem:[#allocation4 + $0xb0] sm:$0xff]
      %v1969 = vld [vmem:[#allocation4 + $0xb8] sm:$0xff]
      %v1970 = vld [vmem:[#allocation4 + $0xc0] sm:$0xff]
      %v1971 = vld [vmem:[#allocation4 + $0xc8] sm:$0xff]
      %v1972 = vld [vmem:[#allocation4 + $0xd0] sm:$0xff]
      %v1973 = vld [vmem:[#allocation4 + $0xd8] sm:$0xff]
      %v1974 = vld [vmem:[#allocation4 + $0xe0] sm:$0xff]
      %v1975 = vld [vmem:[#allocation4 + $0xe8] sm:$0xff]
      %v1976 = vld [vmem:[#allocation4 + $0xf0] sm:$0xff]
      %v1977 = vld [vmem:[#allocation4 + $0xf8] sm:$0xff]
      %v1978 = vld [vmem:[#allocation4 + $0x100] sm:$0xff]
      %v1979 = vld [vmem:[#allocation4 + $0x108] sm:$0xff]
      %v1980 = vld [vmem:[#allocation4 + $0x110] sm:$0xff]
      %v1981 = vld [vmem:[#allocation4 + $0x118] sm:$0xff]
      %v1982 = vld [vmem:[#allocation4 + $0x120] sm:$0xff]
      %v1983 = vld [vmem:[#allocation4 + $0x128] sm:$0xff]
      %v1984 = vld [vmem:[#allocation4 + $0x130] sm:$0xff]
      %v1985 = vld [vmem:[#allocation4 + $0x138] sm:$0xff]
      %v1986 = vld [vmem:[#allocation4 + $0x140] sm:$0xff]
      %v1987 = vld [vmem:[#allocation4 + $0x148] sm:$0xff]
      %v1988 = vld [vmem:[#allocation4 + $0x150] sm:$0xff]
      %v1989 = vld [vmem:[#allocation4 + $0x158] sm:$0xff]
      %v1990 = vld [vmem:[#allocation4 + $0x160] sm:$0xff]
      %v1991 = vld [vmem:[#allocation4 + $0x168] sm:$0xff]
      %v1992 = vld [vmem:[#allocation4 + $0x170] sm:$0xff]
      %v1993 = vld [vmem:[#allocation4 + $0x178] sm:$0xff]
      %v1994 = vld [vmem:[#allocation4 + $0x180] sm:$0xff]
      %v1995 = vld [vmem:[#allocation4 + $0x188] sm:$0xff]
      %v1996 = vld [vmem:[#allocation4 + $0x190] sm:$0xff]
      %v1997 = vld [vmem:[#allocation4 + $0x198] sm:$0xff]
      %v1998 = vld [vmem:[#allocation4 + $0x1a0] sm:$0xff]
      %v1999 = vld [vmem:[#allocation4 + $0x1a8] sm:$0xff]
      %v2000 = vld [vmem:[#allocation4 + $0x1b0] sm:$0xff]
      %v2001 = vld [vmem:[#allocation4 + $0x1b8] sm:$0xff]
      %v2002 = vld [vmem:[#allocation4 + $0x1c0] sm:$0xff]
      %v2003 = vld [vmem:[#allocation4 + $0x1c8] sm:$0xff]
      %v2004 = vld [vmem:[#allocation4 + $0x1d0] sm:$0xff]
      %v2005 = vld [vmem:[#allocation4 + $0x1d8] sm:$0xff]
      %v2006 = vld [vmem:[#allocation4 + $0x1e0] sm:$0xff]
      %v2007 = vld [vmem:[#allocation4 + $0x1e8] sm:$0xff]
      %v2008 = vld [vmem:[#allocation4 + $0x1f0] sm:$0xff]
      %v2009 = vld [vmem:[#allocation4 + $0x1f8] sm:$0xff]
      %v2010 = vld [vmem:[#allocation4 + $0x200] sm:$0xff]
      %v2011 = vld [vmem:[#allocation4 + $0x208] sm:$0xff]
      %v2012 = vld [vmem:[#allocation4 + $0x210] sm:$0xff]
      %v2013 = vld [vmem:[#allocation4 + $0x218] sm:$0xff]
      %v2014 = vld [vmem:[#allocation4 + $0x220] sm:$0xff]
      %v2015 = vld [vmem:[#allocation4 + $0x228] sm:$0xff]
      %v2016 = vld [vmem:[#allocation4 + $0x230] sm:$0xff]
      %v2017 = vld [vmem:[#allocation4 + $0x238] sm:$0xff]
      %v2018 = vld [vmem:[#allocation4 + $0x240] sm:$0xff]
      %v2019 = vld [vmem:[#allocation4 + $0x248] sm:$0xff]
      %v2020 = vld [vmem:[#allocation4 + $0x250] sm:$0xff]
      %v2021 = vld [vmem:[#allocation4 + $0x258] sm:$0xff]
      %v2022 = vld [vmem:[#allocation4 + $0x260] sm:$0xff]
      %v2023 = vld [vmem:[#allocation4 + $0x268] sm:$0xff]
      %v2024 = vld [vmem:[#allocation4 + $0x270] sm:$0xff]
      %v2025 = vld [vmem:[#allocation4 + $0x278] sm:$0xff]
      %v2026 = vld [vmem:[#allocation4 + $0x280] sm:$0xff]
      %v2027 = vld [vmem:[#allocation4 + $0x288] sm:$0xff]
      %v2028 = vld [vmem:[#allocation4 + $0x290] sm:$0xff]
      %v2029 = vld [vmem:[#allocation4 + $0x298] sm:$0xff]
      %v2030 = vld [vmem:[#allocation4 + $0x2a0] sm:$0xff]
      %v2031 = vld [vmem:[#allocation4 + $0x2a8] sm:$0xff]
      %v2032 = vld [vmem:[#allocation4 + $0x2b0] sm:$0xff]
      %v2033 = vld [vmem:[#allocation4 + $0x2b8] sm:$0xff]
      %v2034 = vld [vmem:[#allocation4 + $0x2c0] sm:$0xff]
      %v2035 = vld [vmem:[#allocation4 + $0x2c8] sm:$0xff]
      %v2037 = vsel %vm1019, %v1943, 0
      %v2040 = vsel %vm1019, %v1945, 0
      %2042 = vmatprep.subr.mxu0 %v1947
      %2043 = vmatpush1.msra.mxu0 %v1946
      %2044 = vmatprep.subr.mxu0 %v1952
      %2045 = vmatpush1.msra.mxu0 %v1951
      %2046 = vmatprep.subr.mxu0 %v1957
      %2047 = vmatpush1.msra.mxu0 %v1956
      %2048 = vmatprep.subr.mxu0 %v1962
      %2049 = vmatpush1.msra.mxu0 %v1961
      %2050 = vmatprep.subr.mxu0 %v1967
      %2051 = vmatpush1.msra.mxu0 %v1966
      %2052 = vmatprep.subr.mxu0 %v1972
      %2053 = vmatpush1.msra.mxu0 %v1971
      %2054 = vmatprep.subr.mxu0 %v1977
      %2055 = vmatpush1.msra.mxu0 %v1976
      %2056 = vmatprep.subr.mxu0 %v1982
      %2057 = vmatpush1.msra.mxu0 %v1981
      %2058 = vmatprep.subr.mxu0 %v1987
      %2059 = vmatpush1.msra.mxu0 %v1986
      %2060 = vmatprep.subr.mxu0 %v1992
      %2061 = vmatpush1.msra.mxu0 %v1991
      %2062 = vmatprep.subr.mxu0 %v1997
      %2063 = vmatpush1.msra.mxu0 %v1996
      %2064 = vmatprep.subr.mxu0 %v2002
      %2065 = vmatpush1.msra.mxu0 %v2001
      %2066 = vmatprep.subr.mxu0 %v2007
      %2067 = vmatpush1.msra.mxu0 %v2006
      %2068 = vmatprep.subr.mxu0 %v2012
      %2069 = vmatpush1.msra.mxu0 %v2011
      %2070 = vmatprep.subr.mxu0 %v2017
      %2071 = vmatpush1.msra.mxu0 %v2016
      %2072 = vmatprep.subr.mxu0 %v2022
      %2073 = vmatpush1.msra.mxu0 %v2021
      %2074 = vmatprep.subr.mxu0 %v2027
      %2075 = vmatpush1.msra.mxu0 %v2026
      %2076 = vmatprep.subr.mxu0 %v2032
      %2077 = vmatpush1.msra.mxu0 %v2031
      %2078 = vmatprep.subr.mxu0 0.0
      %2079 = vmatpush1.msra.mxu0 0.0
      %2080 = vmatprep.subr.mxu0 0.0
      %2081 = vmatpush1.msra.mxu0 0.0
      %2082 = vmatprep.subr.mxu0 0.0
      %2083 = vmatpush1.msra.mxu0 0.0
      %2084 = vmatprep.subr.mxu0 0.0
      %2085 = vmatpush1.msra.mxu0 0.0
      %2086 = vmatprep.subr.mxu0 0.0
      %2087 = vmatpush1.msra.mxu0 0.0
      %2088 = vmatprep.subr.mxu0 0.0
      %2089 = vmatpush1.msra.mxu0 0.0
      %2090 = vmatprep.subr.mxu0 0.0
      %2091 = vmatpush1.msra.mxu0 0.0
      %2092 = vmatprep.subr.mxu0 0.0
      %2093 = vmatpush1.msra.mxu0 0.0
      %2094 = vmatprep.subr.mxu0 0.0
      %2095 = vmatpush1.msra.mxu0 0.0
      %2096 = vmatprep.subr.mxu0 0.0
      %2097 = vmatpush1.msra.mxu0 0.0
      %2098 = vmatprep.subr.mxu0 0.0
      %2099 = vmatpush1.msra.mxu0 0.0
      %2100 = vmatprep.subr.mxu0 0.0
      %2101 = vmatpush1.msra.mxu0 0.0
      %2102 = vmatprep.subr.mxu0 0.0
      %2103 = vmatpush1.msra.mxu0 0.0
      %2104 = vmatprep.subr.mxu0 0.0
      %2105 = vmatpush1.msra.mxu0 0.0
      %2106 = vmatprep.mubr.f32.mxu0 %v2037
      %2107 = vmatmul.mubr.f32.gmra.mrb[0].mxu0 %v1942
      %v2108 = vpop.f32.mrb[0].mxu0
      %v2109 = vadd.f32 0.0, %v2108
      %v2110 = vpop.f32.mrb[0].mxu0
      %v2111 = vadd.f32 0.0, %v2110
      %2112 = vmatprep.mubr.f32.mxu0 %v2040
      %2113 = vmatmul.mubr.f32.gmra.mrb[0].mxu0 %v1944
      %v2114 = vpop.f32.mrb[0].mxu0
      %v2115 = vadd.f32 0.0, %v2114
      %v2116 = vpop.f32.mrb[0].mxu0
      %v2117 = vadd.f32 0.0, %v2116
      %2118 = vdwg.mxu0
      %2119 = vmatprep.subr.mxu0 %v1949
      %2120 = vmatpush1.msra.mxu0 %v1948
      %2121 = vmatprep.subr.mxu0 %v1954
      %2122 = vmatpush1.msra.mxu0 %v1953
      %2123 = vmatprep.subr.mxu0 %v1959
      %2124 = vmatpush1.msra.mxu0 %v1958
      %2125 = vmatprep.subr.mxu0 %v1964
      %2126 = vmatpush1.msra.mxu0 %v1963
      %2127 = vmatprep.subr.mxu0 %v1969
      %2128 = vmatpush1.msra.mxu0 %v1968
      %2129 = vmatprep.subr.mxu0 %v1974
      %2130 = vmatpush1.msra.mxu0 %v1973
      %2131 = vmatprep.subr.mxu0 %v1979
      %2132 = vmatpush1.msra.mxu0 %v1978
      %2133 = vmatprep.subr.mxu0 %v1984
      %2134 = vmatpush1.msra.mxu0 %v1983
      %2135 = vmatprep.subr.mxu0 %v1989
      %2136 = vmatpush1.msra.mxu0 %v1988
      %2137 = vmatprep.subr.mxu0 %v1994
      %2138 = vmatpush1.msra.mxu0 %v1993
      %2139 = vmatprep.subr.mxu0 %v1999
      %2140 = vmatpush1.msra.mxu0 %v1998
      %2141 = vmatprep.subr.mxu0 %v2004
      %2142 = vmatpush1.msra.mxu0 %v2003
      %2143 = vmatprep.subr.mxu0 %v2009
      %2144 = vmatpush1.msra.mxu0 %v2008
      %2145 = vmatprep.subr.mxu0 %v2014
      %2146 = vmatpush1.msra.mxu0 %v2013
      %2147 = vmatprep.subr.mxu0 %v2019
      %2148 = vmatpush1.msra.mxu0 %v2018
      %2149 = vmatprep.subr.mxu0 %v2024
      %2150 = vmatpush1.msra.mxu0 %v2023
      %2151 = vmatprep.subr.mxu0 %v2029
      %2152 = vmatpush1.msra.mxu0 %v2028
      %2153 = vmatprep.subr.mxu0 %v2034
      %2154 = vmatpush1.msra.mxu0 %v2033
      %2155 = vmatprep.subr.mxu0 0.0
      %2156 = vmatpush1.msra.mxu0 0.0
      %2157 = vmatprep.subr.mxu0 0.0
      %2158 = vmatpush1.msra.mxu0 0.0
      %2159 = vmatprep.subr.mxu0 0.0
      %2160 = vmatpush1.msra.mxu0 0.0
      %2161 = vmatprep.subr.mxu0 0.0
      %2162 = vmatpush1.msra.mxu0 0.0
      %2163 = vmatprep.subr.mxu0 0.0
      %2164 = vmatpush1.msra.mxu0 0.0
      %2165 = vmatprep.subr.mxu0 0.0
      %2166 = vmatpush1.msra.mxu0 0.0
      %2167 = vmatprep.subr.mxu0 0.0
      %2168 = vmatpush1.msra.mxu0 0.0
      %2169 = vmatprep.subr.mxu0 0.0
      %2170 = vmatpush1.msra.mxu0 0.0
      %2171 = vmatprep.subr.mxu0 0.0
      %2172 = vmatpush1.msra.mxu0 0.0
      %2173 = vmatprep.subr.mxu0 0.0
      %2174 = vmatpush1.msra.mxu0 0.0
      %2175 = vmatprep.subr.mxu0 0.0
      %2176 = vmatpush1.msra.mxu0 0.0
      %2177 = vmatprep.subr.mxu0 0.0
      %2178 = vmatpush1.msra.mxu0 0.0
      %2179 = vmatprep.subr.mxu0 0.0
      %2180 = vmatpush1.msra.mxu0 0.0
      %2181 = vmatprep.subr.mxu0 0.0
      %2182 = vmatpush1.msra.mxu0 0.0
      %2183 = vmatprep.mubr.f32.mxu0 %v2037
      %2184 = vmatmul.mubr.f32.gmra.mrb[0].mxu0 %v1942
      %v2185 = vpop.f32.mrb[0].mxu0
      %v2186 = vadd.f32 0.0, %v2185
      %v2187 = vpop.f32.mrb[0].mxu0
      %v2188 = vadd.f32 0.0, %v2187
      %2189 = vmatprep.mubr.f32.mxu0 %v2040
      %2190 = vmatmul.mubr.f32.gmra.mrb[0].mxu0 %v1944
      %v2191 = vpop.f32.mrb[0].mxu0
      %v2192 = vadd.f32 0.0, %v2191
      %v2193 = vpop.f32.mrb[0].mxu0
      %v2194 = vadd.f32 0.0, %v2193
      %2195 = vdwg.mxu0
      %2196 = vmatprep.subr.mxu0 0.0
      %2197 = vmatpush1.msra.mxu0 %v1950
      %2198 = vmatprep.subr.mxu0 0.0
      %2199 = vmatpush1.msra.mxu0 %v1955
      %2200 = vmatprep.subr.mxu0 0.0
      %2201 = vmatpush1.msra.mxu0 %v1960
      %2202 = vmatprep.subr.mxu0 0.0
      %2203 = vmatpush1.msra.mxu0 %v1965
      %2204 = vmatprep.subr.mxu0 0.0
      %2205 = vmatpush1.msra.mxu0 %v1970
      %2206 = vmatprep.subr.mxu0 0.0
      %2207 = vmatpush1.msra.mxu0 %v1975
      %2208 = vmatprep.subr.mxu0 0.0
      %2209 = vmatpush1.msra.mxu0 %v1980
      %2210 = vmatprep.subr.mxu0 0.0
      %2211 = vmatpush1.msra.mxu0 %v1985
      %2212 = vmatprep.subr.mxu0 0.0
      %2213 = vmatpush1.msra.mxu0 %v1990
      %2214 = vmatprep.subr.mxu0 0.0
      %2215 = vmatpush1.msra.mxu0 %v1995
      %2216 = vmatprep.subr.mxu0 0.0
      %2217 = vmatpush1.msra.mxu0 %v2000
      %2218 = vmatprep.subr.mxu0 0.0
      %2219 = vmatpush1.msra.mxu0 %v2005
      %2220 = vmatprep.subr.mxu0 0.0
      %2221 = vmatpush1.msra.mxu0 %v2010
      %2222 = vmatprep.subr.mxu0 0.0
      %2223 = vmatpush1.msra.mxu0 %v2015
      %2224 = vmatprep.subr.mxu0 0.0
      %2225 = vmatpush1.msra.mxu0 %v2020
      %2226 = vmatprep.subr.mxu0 0.0
      %2227 = vmatpush1.msra.mxu0 %v2025
      %2228 = vmatprep.subr.mxu0 0.0
      %2229 = vmatpush1.msra.mxu0 %v2030
      %2230 = vmatprep.subr.mxu0 0.0
      %2231 = vmatpush1.msra.mxu0 %v2035
      %2232 = vmatprep.subr.mxu0 0.0
      %2233 = vmatpush1.msra.mxu0 0.0
      %2234 = vmatprep.subr.mxu0 0.0
      %2235 = vmatpush1.msra.mxu0 0.0
      %2236 = vmatprep.subr.mxu0 0.0
      %2237 = vmatpush1.msra.mxu0 0.0
      %2238 = vmatprep.subr.mxu0 0.0
      %2239 = vmatpush1.msra.mxu0 0.0
      %2240 = vmatprep.subr.mxu0 0.0
      %2241 = vmatpush1.msra.mxu0 0.0
      %2242 = vmatprep.subr.mxu0 0.0
      %2243 = vmatpush1.msra.mxu0 0.0
      %2244 = vmatprep.subr.mxu0 0.0
      %2245 = vmatpush1.msra.mxu0 0.0
      %2246 = vmatprep.subr.mxu0 0.0
      %2247 = vmatpush1.msra.mxu0 0.0
      %2248 = vmatprep.subr.mxu0 0.0
      %2249 = vmatpush1.msra.mxu0 0.0
      %2250 = vmatprep.subr.mxu0 0.0
      %2251 = vmatpush1.msra.mxu0 0.0
      %2252 = vmatprep.subr.mxu0 0.0
      %2253 = vmatpush1.msra.mxu0 0.0
      %2254 = vmatprep.subr.mxu0 0.0
      %2255 = vmatpush1.msra.mxu0 0.0
      %2256 = vmatprep.subr.mxu0 0.0
      %2257 = vmatpush1.msra.mxu0 0.0
      %2258 = vmatprep.subr.mxu0 0.0
      %2259 = vmatpush1.msra.mxu0 0.0
      %2260 = vmatprep.mubr.f32.mxu0 %v2037
      %2261 = vmatmul.mubr.f32.gmra.mrb[0].mxu0 %v1942
      %v2262 = vpop.f32.mrb[0].mxu0
      %v2263 = vadd.f32 0.0, %v2262
      %v2264 = vpop.f32.mrb[0].mxu0
      %2265 = vmatprep.mubr.f32.mxu0 %v2040
      %2266 = vmatmul.mubr.f32.gmra.mrb[0].mxu0 %v1944
      %v2267 = vpop.f32.mrb[0].mxu0
      %v2268 = vadd.f32 0.0, %v2267
      %v2269 = vpop.f32.mrb[0].mxu0
      %2270 = vdwg.mxu0
      %s2271 = scalar_lea.vmem %s2, 16
      %v2272 = vld [vmem:[%s2271] sm:$0xff]
      %v2273 = vld [vmem:[%s2271 + $0x8] sm:$0xff]
      %2275 = vset.pattern.permute.xlu0 0
      %2276 = vperm.xlu0 %2275, %v2272
      %v2277 = vpop.permute.xlu0 %2276
      %2280 = vset.pattern.permute.xlu0 0
      %2281 = vperm.xlu0 %2280, %v2273
      %v2282 = vpop.permute.xlu0 %2281
      %v2284 = vmul.f32 %v2109, %v2277
      %v2285 = vmul.f32 %v2111, %v2277
      %v2286 = vmul.f32 %v2186, %v2277
      %v2287 = vmul.f32 %v2188, %v2277
      %v2288 = vmul.f32 %v2263, %v2277
      %v2289 = vmul.f32 %v2115, %v2282
      %v2290 = vmul.f32 %v2117, %v2282
      %v2291 = vmul.f32 %v2192, %v2282
      %v2292 = vmul.f32 %v2194, %v2282
      %v2293 = vmul.f32 %v2268, %v2282
      %s2294 = scalar_lea.vmem %s3, 16
      %v2295 = vld [vmem:[%s2294] sm:$0xff]
      %v2296 = vld [vmem:[%s2294 + $0x8] sm:$0xff]
      %2298 = vset.pattern.permute.xlu0 0
      %2299 = vperm.xlu0 %2298, %v2295
      %v2300 = vpop.permute.xlu0 %2299
      %2303 = vset.pattern.permute.xlu0 0
      %2304 = vperm.xlu0 %2303, %v2296
      %v2305 = vpop.permute.xlu0 %2304
      %v2307 = vadd.f32 %v2284, %v2300
      %v2308 = vadd.f32 %v2285, %v2300
      %v2309 = vadd.f32 %v2286, %v2300
      %v2310 = vadd.f32 %v2287, %v2300
      %v2311 = vadd.f32 %v2288, %v2300
      %v2312 = vadd.f32 %v2289, %v2305
      %v2313 = vadd.f32 %v2290, %v2305
      %v2314 = vadd.f32 %v2291, %v2305
      %v2315 = vadd.f32 %v2292, %v2305
      %v2316 = vadd.f32 %v2293, %v2305
      %v2317 = vmax.f32 %v2307, 0.0
      %v2318 = vmax.f32 %v2308, 0.0
      %v2319 = vmax.f32 %v2309, 0.0
      %v2320 = vmax.f32 %v2310, 0.0
      %v2321 = vmax.f32 %v2311, 0.0
      %v2322 = vmax.f32 %v2312, 0.0
      %v2323 = vmax.f32 %v2313, 0.0
      %v2324 = vmax.f32 %v2314, 0.0
      %v2325 = vmax.f32 %v2315, 0.0
      %v2326 = vmax.f32 %v2316, 0.0
      %v2327 = vsel %vm303, %v2317, 0.0
      %v2328 = vsel %vm304, %v2318, 0.0
      %v2329 = vsel %vm305, %v2319, 0.0
      %v2330 = vsel %vm306, %v2320, 0.0
      %v2331 = vsel %vm307, %v2321, 0.0
      %v2332 = vsel %vm308, %v2322, 0.0
      %v2333 = vsel %vm309, %v2323, 0.0
      %v2334 = vsel %vm310, %v2324, 0.0
      %v2335 = vsel %vm311, %v2325, 0.0
      %v2336 = vsel %vm312, %v2326, 0.0
      %2337 = vst [vmem:[#allocation2 + $0x8] sm:$0xff] %v2327
      %2338 = vst [vmem:[#allocation2 + $0x10] sm:$0xff] %v2328
      %2339 = vst [vmem:[#allocation2 + $0x18] sm:$0xff] %v2329
      %2340 = vst [vmem:[#allocation2 + $0x20] sm:$0xff] %v2330
      %2341 = vst.msk [vmem:[#allocation2 + $0x28] sm:$0xff] %vm231, %v2331
      %2342 = vst [vmem:[#allocation2 + $0x40] sm:$0xff] %v2332
      %2343 = vst [vmem:[#allocation2 + $0x48] sm:$0xff] %v2333
      %2344 = vst [vmem:[#allocation2 + $0x50] sm:$0xff] %v2334
      %2345 = vst [vmem:[#allocation2 + $0x58] sm:$0xff] %v2335
      %2346 = vst.msk [vmem:[#allocation2 + $0x60] sm:$0xff] %vm231, %v2336
      %v2347 = vld [vmem:[#allocation2] sm:$0xff]
      %v2348 = vld [vmem:[#allocation2 + $0x8] sm:$0xff]
      %v2349 = vld [vmem:[#allocation2 + $0x10] sm:$0xff]
      %v2350 = vld [vmem:[#allocation2 + $0x18] sm:$0xff]
      %v2351 = vld [vmem:[#allocation2 + $0x20] sm:$0xff]
      %v2352 = vld [vmem:[#allocation2 + $0x38] sm:$0xff]
      %v2353 = vld [vmem:[#allocation2 + $0x40] sm:$0xff]
      %v2354 = vld [vmem:[#allocation2 + $0x48] sm:$0xff]
      %v2355 = vld [vmem:[#allocation2 + $0x50] sm:$0xff]
      %v2356 = vld [vmem:[#allocation2 + $0x58] sm:$0xff]
      %2367 = vrot.lane.b32.xlu0 %v2347, 75
      %v2368 = vpop.permute.xlu0 %2367
      %2369 = vrot.lane.b32.xlu0 %v2348, 75
      %v2370 = vpop.permute.xlu0 %2369
      %2371 = vrot.lane.b32.xlu0 %v2349, 75
      %v2372 = vpop.permute.xlu0 %2371
      %2373 = vrot.lane.b32.xlu0 %v2350, 75
      %v2374 = vpop.permute.xlu0 %2373
      %2375 = vrot.lane.b32.xlu0 %v2351, 75
      %v2376 = vpop.permute.xlu0 %2375
      %2377 = vrot.lane.b32.xlu0 %v2352, 75
      %v2378 = vpop.permute.xlu0 %2377
      %2379 = vrot.lane.b32.xlu0 %v2353, 75
      %v2380 = vpop.permute.xlu0 %2379
      %2381 = vrot.lane.b32.xlu0 %v2354, 75
      %v2382 = vpop.permute.xlu0 %2381
      %2383 = vrot.lane.b32.xlu0 %v2355, 75
      %v2384 = vpop.permute.xlu0 %2383
      %2385 = vrot.lane.b32.xlu0 %v2356, 75
      %v2386 = vpop.permute.xlu0 %2385
      %vm2387 = vcmask 613376
      %v2388 = vsel %vm2387, %v2368, %v2370
      %v2389 = vsel %vm2387, %v2370, %v2372
      %v2390 = vsel %vm2387, %v2372, %v2374
      %v2391 = vsel %vm2387, %v2374, %v2376
      %v2392 = vsel %vm2387, %v2378, %v2380
      %v2393 = vsel %vm2387, %v2380, %v2382
      %v2394 = vsel %vm2387, %v2382, %v2384
      %v2395 = vsel %vm2387, %v2384, %v2386
      %2406 = vst [vmem:[#allocation4] sm:$0xff] %v2388
      %2407 = vst [vmem:[#allocation4 + $0x8] sm:$0xff] %v2389
      %2408 = vst [vmem:[#allocation4 + $0x10] sm:$0xff] %v2390
      %2409 = vst [vmem:[#allocation4 + $0x18] sm:$0xff] %v2391
      %2410 = vst.msk [vmem:[#allocation4 + $0x20] sm:$0xff] %vm231, %v2376
      %2411 = vst [vmem:[#allocation4 + $0x28] sm:$0xff] %v2392
      %2412 = vst [vmem:[#allocation4 + $0x30] sm:$0xff] %v2393
      %2413 = vst [vmem:[#allocation4 + $0x38] sm:$0xff] %v2394
      %2414 = vst [vmem:[#allocation4 + $0x40] sm:$0xff] %v2395
      %2415 = vst.msk [vmem:[#allocation4 + $0x48] sm:$0xff] %vm231, %v2386
      %v2416 = vld [vmem:[#allocation2] sm:$0xff]
      %v2417 = vld [vmem:[#allocation2 + $0x8] sm:$0xff]
      %v2418 = vld [vmem:[#allocation2 + $0x10] sm:$0xff]
      %v2419 = vld [vmem:[#allocation2 + $0x18] sm:$0xff]
      %v2420 = vld [vmem:[#allocation2 + $0x20] sm:$0xff]
      %v2421 = vld [vmem:[#allocation2 + $0x38] sm:$0xff]
      %v2422 = vld [vmem:[#allocation2 + $0x40] sm:$0xff]
      %v2423 = vld [vmem:[#allocation2 + $0x48] sm:$0xff]
      %v2424 = vld [vmem:[#allocation2 + $0x50] sm:$0xff]
      %v2425 = vld [vmem:[#allocation2 + $0x58] sm:$0xff]
      %2436 = vrot.lane.b32.xlu0 %v2416, 72
      %v2437 = vpop.permute.xlu0 %2436
      %2438 = vrot.lane.b32.xlu0 %v2417, 72
      %v2439 = vpop.permute.xlu0 %2438
      %2440 = vrot.lane.b32.xlu0 %v2418, 72
      %v2441 = vpop.permute.xlu0 %2440
      %2442 = vrot.lane.b32.xlu0 %v2419, 72
      %v2443 = vpop.permute.xlu0 %2442
      %2444 = vrot.lane.b32.xlu0 %v2420, 72
      %v2445 = vpop.permute.xlu0 %2444
      %2446 = vrot.lane.b32.xlu0 %v2421, 72
      %v2447 = vpop.permute.xlu0 %2446
      %2448 = vrot.lane.b32.xlu0 %v2422, 72
      %v2449 = vpop.permute.xlu0 %2448
      %2450 = vrot.lane.b32.xlu0 %v2423, 72
      %v2451 = vpop.permute.xlu0 %2450
      %2452 = vrot.lane.b32.xlu0 %v2424, 72
      %v2453 = vpop.permute.xlu0 %2452
      %2454 = vrot.lane.b32.xlu0 %v2425, 72
      %v2455 = vpop.permute.xlu0 %2454
      %vm2456 = vcmask 588800
      %v2457 = vsel %vm2456, %v2437, %v2439
      %v2458 = vsel %vm2456, %v2439, %v2441
      %v2459 = vsel %vm2456, %v2441, %v2443
      %v2460 = vsel %vm2456, %v2443, %v2445
      %v2461 = vsel %vm2456, %v2447, %v2449
      %v2462 = vsel %vm2456, %v2449, %v2451
      %v2463 = vsel %vm2456, %v2451, %v2453
      %v2464 = vsel %vm2456, %v2453, %v2455
      %2475 = vst [vmem:[#allocation4 + $0x50] sm:$0xff] %v2457
      %2476 = vst [vmem:[#allocation4 + $0x58] sm:$0xff] %v2458
      %2477 = vst [vmem:[#allocation4 + $0x60] sm:$0xff] %v2459
      %2478 = vst [vmem:[#allocation4 + $0x68] sm:$0xff] %v2460
      %2479 = vst.msk [vmem:[#allocation4 + $0x70] sm:$0xff] %vm231, %v2445
      %2480 = vst [vmem:[#allocation4 + $0x78] sm:$0xff] %v2461
      %2481 = vst [vmem:[#allocation4 + $0x80] sm:$0xff] %v2462
      %2482 = vst [vmem:[#allocation4 + $0x88] sm:$0xff] %v2463
      %2483 = vst [vmem:[#allocation4 + $0x90] sm:$0xff] %v2464
      %2484 = vst.msk [vmem:[#allocation4 + $0x98] sm:$0xff] %vm231, %v2455
      %v2485 = vld [vmem:[#allocation2] sm:$0xff]
      %v2486 = vld [vmem:[#allocation2 + $0x8] sm:$0xff]
      %v2487 = vld [vmem:[#allocation2 + $0x10] sm:$0xff]
      %v2488 = vld [vmem:[#allocation2 + $0x18] sm:$0xff]
      %v2489 = vld [vmem:[#allocation2 + $0x20] sm:$0xff]
      %v2490 = vld [vmem:[#allocation2 + $0x38] sm:$0xff]
      %v2491 = vld [vmem:[#allocation2 + $0x40] sm:$0xff]
      %v2492 = vld [vmem:[#allocation2 + $0x48] sm:$0xff]
      %v2493 = vld [vmem:[#allocation2 + $0x50] sm:$0xff]
      %v2494 = vld [vmem:[#allocation2 + $0x58] sm:$0xff]
      %2505 = vrot.lane.b32.xlu0 %v2485, 69
      %v2506 = vpop.permute.xlu0 %2505
      %2507 = vrot.lane.b32.xlu0 %v2486, 69
      %v2508 = vpop.permute.xlu0 %2507
      %2509 = vrot.lane.b32.xlu0 %v2487, 69
      %v2510 = vpop.permute.xlu0 %2509
      %2511 = vrot.lane.b32.xlu0 %v2488, 69
      %v2512 = vpop.permute.xlu0 %2511
      %2513 = vrot.lane.b32.xlu0 %v2489, 69
      %v2514 = vpop.permute.xlu0 %2513
      %2515 = vrot.lane.b32.xlu0 %v2490, 69
      %v2516 = vpop.permute.xlu0 %2515
      %2517 = vrot.lane.b32.xlu0 %v2491, 69
      %v2518 = vpop.permute.xlu0 %2517
      %2519 = vrot.lane.b32.xlu0 %v2492, 69
      %v2520 = vpop.permute.xlu0 %2519
      %2521 = vrot.lane.b32.xlu0 %v2493, 69
      %v2522 = vpop.permute.xlu0 %2521
      %2523 = vrot.lane.b32.xlu0 %v2494, 69
      %v2524 = vpop.permute.xlu0 %2523
      %vm2525 = vcmask 564224
      %v2526 = vsel %vm2525, %v2506, %v2508
      %v2527 = vsel %vm2525, %v2508, %v2510
      %v2528 = vsel %vm2525, %v2510, %v2512
      %v2529 = vsel %vm2525, %v2512, %v2514
      %v2530 = vsel %vm2525, %v2516, %v2518
      %v2531 = vsel %vm2525, %v2518, %v2520
      %v2532 = vsel %vm2525, %v2520, %v2522
      %v2533 = vsel %vm2525, %v2522, %v2524
      %2544 = vst [vmem:[#allocation4 + $0xa0] sm:$0xff] %v2526
      %2545 = vst [vmem:[#allocation4 + $0xa8] sm:$0xff] %v2527
      %2546 = vst [vmem:[#allocation4 + $0xb0] sm:$0xff] %v2528
      %2547 = vst [vmem:[#allocation4 + $0xb8] sm:$0xff] %v2529
      %2548 = vst.msk [vmem:[#allocation4 + $0xc0] sm:$0xff] %vm231, %v2514
      %2549 = vst [vmem:[#allocation4 + $0xc8] sm:$0xff] %v2530
      %2550 = vst [vmem:[#allocation4 + $0xd0] sm:$0xff] %v2531
      %2551 = vst [vmem:[#allocation4 + $0xd8] sm:$0xff] %v2532
      %2552 = vst [vmem:[#allocation4 + $0xe0] sm:$0xff] %v2533
      %2553 = vst.msk [vmem:[#allocation4 + $0xe8] sm:$0xff] %vm231, %v2524
      %v2554 = vld [vmem:[#allocation2] sm:$0xff]
      %v2555 = vld [vmem:[#allocation2 + $0x8] sm:$0xff]
      %v2556 = vld [vmem:[#allocation2 + $0x10] sm:$0xff]
      %v2557 = vld [vmem:[#allocation2 + $0x18] sm:$0xff]
      %v2558 = vld [vmem:[#allocation2 + $0x20] sm:$0xff]
      %v2559 = vld [vmem:[#allocation2 + $0x28] sm:$0xff]
      %v2560 = vld [vmem:[#allocation2 + $0x38] sm:$0xff]
      %v2561 = vld [vmem:[#allocation2 + $0x40] sm:$0xff]
      %v2562 = vld [vmem:[#allocation2 + $0x48] sm:$0xff]
      %v2563 = vld [vmem:[#allocation2 + $0x50] sm:$0xff]
      %v2564 = vld [vmem:[#allocation2 + $0x58] sm:$0xff]
      %v2565 = vld [vmem:[#allocation2 + $0x60] sm:$0xff]
      %2578 = vrot.lane.b32.xlu0 %v2554, 3
      %v2579 = vpop.permute.xlu0 %2578
      %2580 = vrot.lane.b32.xlu0 %v2555, 3
      %v2581 = vpop.permute.xlu0 %2580
      %2582 = vrot.lane.b32.xlu0 %v2556, 3
      %v2583 = vpop.permute.xlu0 %2582
      %2584 = vrot.lane.b32.xlu0 %v2557, 3
      %v2585 = vpop.permute.xlu0 %2584
      %2586 = vrot.lane.b32.xlu0 %v2558, 3
      %v2587 = vpop.permute.xlu0 %2586
      %2588 = vrot.lane.b32.xlu0 %v2559, 3
      %v2589 = vpop.permute.xlu0 %2588
      %2590 = vrot.lane.b32.xlu0 %v2560, 3
      %v2591 = vpop.permute.xlu0 %2590
      %2592 = vrot.lane.b32.xlu0 %v2561, 3
      %v2593 = vpop.permute.xlu0 %2592
      %2594 = vrot.lane.b32.xlu0 %v2562, 3
      %v2595 = vpop.permute.xlu0 %2594
      %2596 = vrot.lane.b32.xlu0 %v2563, 3
      %v2597 = vpop.permute.xlu0 %2596
      %2598 = vrot.lane.b32.xlu0 %v2564, 3
      %v2599 = vpop.permute.xlu0 %2598
      %2600 = vrot.lane.b32.xlu0 %v2565, 3
      %v2601 = vpop.permute.xlu0 %2600
      %vm2602 = vcmask 23552
      %v2603 = vsel %vm2602, %v2579, %v2581
      %v2604 = vsel %vm2602, %v2581, %v2583
      %v2605 = vsel %vm2602, %v2583, %v2585
      %v2606 = vsel %vm2602, %v2585, %v2587
      %v2607 = vsel %vm2602, %v2587, %v2589
      %v2608 = vsel %vm2602, %v2591, %v2593
      %v2609 = vsel %vm2602, %v2593, %v2595
      %v2610 = vsel %vm2602, %v2595, %v2597
      %v2611 = vsel %vm2602, %v2597, %v2599
      %v2612 = vsel %vm2602, %v2599, %v2601
      %2623 = vst [vmem:[#allocation4 + $0xf0] sm:$0xff] %v2603
      %2624 = vst [vmem:[#allocation4 + $0xf8] sm:$0xff] %v2604
      %2625 = vst [vmem:[#allocation4 + $0x100] sm:$0xff] %v2605
      %2626 = vst [vmem:[#allocation4 + $0x108] sm:$0xff] %v2606
      %2627 = vst.msk [vmem:[#allocation4 + $0x110] sm:$0xff] %vm231, %v2607
      %2628 = vst [vmem:[#allocation4 + $0x118] sm:$0xff] %v2608
      %2629 = vst [vmem:[#allocation4 + $0x120] sm:$0xff] %v2609
      %2630 = vst [vmem:[#allocation4 + $0x128] sm:$0xff] %v2610
      %2631 = vst [vmem:[#allocation4 + $0x130] sm:$0xff] %v2611
      %2632 = vst.msk [vmem:[#allocation4 + $0x138] sm:$0xff] %vm231, %v2612
      %v2633 = vld [vmem:[#allocation2 + $0x8] sm:$0xff]
      %v2634 = vld [vmem:[#allocation2 + $0x10] sm:$0xff]
      %v2635 = vld [vmem:[#allocation2 + $0x18] sm:$0xff]
      %v2636 = vld [vmem:[#allocation2 + $0x20] sm:$0xff]
      %v2637 = vld [vmem:[#allocation2 + $0x28] sm:$0xff]
      %v2638 = vld [vmem:[#allocation2 + $0x40] sm:$0xff]
      %v2639 = vld [vmem:[#allocation2 + $0x48] sm:$0xff]
      %v2640 = vld [vmem:[#allocation2 + $0x50] sm:$0xff]
      %v2641 = vld [vmem:[#allocation2 + $0x58] sm:$0xff]
      %v2642 = vld [vmem:[#allocation2 + $0x60] sm:$0xff]
      %2643 = vst [vmem:[#allocation4 + $0x140] sm:$0xff] %v2633
      %2644 = vst [vmem:[#allocation4 + $0x148] sm:$0xff] %v2634
      %2645 = vst [vmem:[#allocation4 + $0x150] sm:$0xff] %v2635
      %2646 = vst [vmem:[#allocation4 + $0x158] sm:$0xff] %v2636
      %2647 = vst.msk [vmem:[#allocation4 + $0x160] sm:$0xff] %vm231, %v2637
      %2648 = vst [vmem:[#allocation4 + $0x168] sm:$0xff] %v2638
      %2649 = vst [vmem:[#allocation4 + $0x170] sm:$0xff] %v2639
      %2650 = vst [vmem:[#allocation4 + $0x178] sm:$0xff] %v2640
      %2651 = vst [vmem:[#allocation4 + $0x180] sm:$0xff] %v2641
      %2652 = vst.msk [vmem:[#allocation4 + $0x188] sm:$0xff] %vm231, %v2642
      %v2653 = vld [vmem:[#allocation2 + $0x8] sm:$0xff]
      %v2654 = vld [vmem:[#allocation2 + $0x10] sm:$0xff]
      %v2655 = vld [vmem:[#allocation2 + $0x18] sm:$0xff]
      %v2656 = vld [vmem:[#allocation2 + $0x20] sm:$0xff]
      %v2657 = vld [vmem:[#allocation2 + $0x28] sm:$0xff]
      %v2658 = vld [vmem:[#allocation2 + $0x40] sm:$0xff]
      %v2659 = vld [vmem:[#allocation2 + $0x48] sm:$0xff]
      %v2660 = vld [vmem:[#allocation2 + $0x50] sm:$0xff]
      %v2661 = vld [vmem:[#allocation2 + $0x58] sm:$0xff]
      %v2662 = vld [vmem:[#allocation2 + $0x60] sm:$0xff]
      %2673 = vrot.lane.b32.xlu0 %v2653, 125
      %v2674 = vpop.permute.xlu0 %2673
      %2675 = vrot.lane.b32.xlu0 %v2654, 125
      %v2676 = vpop.permute.xlu0 %2675
      %2677 = vrot.lane.b32.xlu0 %v2655, 125
      %v2678 = vpop.permute.xlu0 %2677
      %2679 = vrot.lane.b32.xlu0 %v2656, 125
      %v2680 = vpop.permute.xlu0 %2679
      %2681 = vrot.lane.b32.xlu0 %v2657, 125
      %v2682 = vpop.permute.xlu0 %2681
      %2683 = vrot.lane.b32.xlu0 %v2658, 125
      %v2684 = vpop.permute.xlu0 %2683
      %2685 = vrot.lane.b32.xlu0 %v2659, 125
      %v2686 = vpop.permute.xlu0 %2685
      %2687 = vrot.lane.b32.xlu0 %v2660, 125
      %v2688 = vpop.permute.xlu0 %2687
      %2689 = vrot.lane.b32.xlu0 %v2661, 125
      %v2690 = vpop.permute.xlu0 %2689
      %2691 = vrot.lane.b32.xlu0 %v2662, 125
      %v2692 = vpop.permute.xlu0 %2691
      %vm2693 = vcmask 1022976
      %v2694 = vsel %vm2693, %v2674, %v2676
      %v2695 = vsel %vm2693, %v2676, %v2678
      %v2696 = vsel %vm2693, %v2678, %v2680
      %v2697 = vsel %vm2693, %v2680, %v2682
      %v2698 = vsel %vm2693, %v2684, %v2686
      %v2699 = vsel %vm2693, %v2686, %v2688
      %v2700 = vsel %vm2693, %v2688, %v2690
      %v2701 = vsel %vm2693, %v2690, %v2692
      %2712 = vst [vmem:[#allocation4 + $0x190] sm:$0xff] %v2694
      %2713 = vst [vmem:[#allocation4 + $0x198] sm:$0xff] %v2695
      %2714 = vst [vmem:[#allocation4 + $0x1a0] sm:$0xff] %v2696
      %2715 = vst [vmem:[#allocation4 + $0x1a8] sm:$0xff] %v2697
      %2716 = vst.msk [vmem:[#allocation4 + $0x1b0] sm:$0xff] %vm231, %v2682
      %2717 = vst [vmem:[#allocation4 + $0x1b8] sm:$0xff] %v2698
      %2718 = vst [vmem:[#allocation4 + $0x1c0] sm:$0xff] %v2699
      %2719 = vst [vmem:[#allocation4 + $0x1c8] sm:$0xff] %v2700
      %2720 = vst [vmem:[#allocation4 + $0x1d0] sm:$0xff] %v2701
      %2721 = vst.msk [vmem:[#allocation4 + $0x1d8] sm:$0xff] %vm231, %v2692
      %v2722 = vld [vmem:[#allocation2 + $0x8] sm:$0xff]
      %v2723 = vld [vmem:[#allocation2 + $0x10] sm:$0xff]
      %v2724 = vld [vmem:[#allocation2 + $0x18] sm:$0xff]
      %v2725 = vld [vmem:[#allocation2 + $0x20] sm:$0xff]
      %v2726 = vld [vmem:[#allocation2 + $0x28] sm:$0xff]
      %v2727 = vld [vmem:[#allocation2 + $0x30] sm:$0xff]
      %v2728 = vld [vmem:[#allocation2 + $0x40] sm:$0xff]
      %v2729 = vld [vmem:[#allocation2 + $0x48] sm:$0xff]
      %v2730 = vld [vmem:[#allocation2 + $0x50] sm:$0xff]
      %v2731 = vld [vmem:[#allocation2 + $0x58] sm:$0xff]
      %v2732 = vld [vmem:[#allocation2 + $0x60] sm:$0xff]
      %v2733 = vld [vmem:[#allocation2 + $0x68] sm:$0xff]
      %2746 = vrot.lane.b32.xlu0 %v2722, 59
      %v2747 = vpop.permute.xlu0 %2746
      %2748 = vrot.lane.b32.xlu0 %v2723, 59
      %v2749 = vpop.permute.xlu0 %2748
      %2750 = vrot.lane.b32.xlu0 %v2724, 59
      %v2751 = vpop.permute.xlu0 %2750
      %2752 = vrot.lane.b32.xlu0 %v2725, 59
      %v2753 = vpop.permute.xlu0 %2752
      %2754 = vrot.lane.b32.xlu0 %v2726, 59
      %v2755 = vpop.permute.xlu0 %2754
      %2756 = vrot.lane.b32.xlu0 %v2727, 59
      %v2757 = vpop.permute.xlu0 %2756
      %2758 = vrot.lane.b32.xlu0 %v2728, 59
      %v2759 = vpop.permute.xlu0 %2758
      %2760 = vrot.lane.b32.xlu0 %v2729, 59
      %v2761 = vpop.permute.xlu0 %2760
      %2762 = vrot.lane.b32.xlu0 %v2730, 59
      %v2763 = vpop.permute.xlu0 %2762
      %2764 = vrot.lane.b32.xlu0 %v2731, 59
      %v2765 = vpop.permute.xlu0 %2764
      %2766 = vrot.lane.b32.xlu0 %v2732, 59
      %v2767 = vpop.permute.xlu0 %2766
      %2768 = vrot.lane.b32.xlu0 %v2733, 59
      %v2769 = vpop.permute.xlu0 %2768
      %vm2770 = vcmask 482304
      %v2771 = vsel %vm2770, %v2747, %v2749
      %v2772 = vsel %vm2770, %v2749, %v2751
      %v2773 = vsel %vm2770, %v2751, %v2753
      %v2774 = vsel %vm2770, %v2753, %v2755
      %v2775 = vsel %vm2770, %v2755, %v2757
      %v2776 = vsel %vm2770, %v2759, %v2761
      %v2777 = vsel %vm2770, %v2761, %v2763
      %v2778 = vsel %vm2770, %v2763, %v2765
      %v2779 = vsel %vm2770, %v2765, %v2767
      %v2780 = vsel %vm2770, %v2767, %v2769
      %2791 = vst [vmem:[#allocation4 + $0x1e0] sm:$0xff] %v2771
      %2792 = vst [vmem:[#allocation4 + $0x1e8] sm:$0xff] %v2772
      %2793 = vst [vmem:[#allocation4 + $0x1f0] sm:$0xff] %v2773
      %2794 = vst [vmem:[#allocation4 + $0x1f8] sm:$0xff] %v2774
      %2795 = vst.msk [vmem:[#allocation4 + $0x200] sm:$0xff] %vm231, %v2775
      %2796 = vst [vmem:[#allocation4 + $0x208] sm:$0xff] %v2776
      %2797 = vst [vmem:[#allocation4 + $0x210] sm:$0xff] %v2777
      %2798 = vst [vmem:[#allocation4 + $0x218] sm:$0xff] %v2778
      %2799 = vst [vmem:[#allocation4 + $0x220] sm:$0xff] %v2779
      %2800 = vst.msk [vmem:[#allocation4 + $0x228] sm:$0xff] %vm231, %v2780
      %v2801 = vld [vmem:[#allocation2 + $0x8] sm:$0xff]
      %v2802 = vld [vmem:[#allocation2 + $0x10] sm:$0xff]
      %v2803 = vld [vmem:[#allocation2 + $0x18] sm:$0xff]
      %v2804 = vld [vmem:[#allocation2 + $0x20] sm:$0xff]
      %v2805 = vld [vmem:[#allocation2 + $0x28] sm:$0xff]
      %v2806 = vld [vmem:[#allocation2 + $0x30] sm:$0xff]
      %v2807 = vld [vmem:[#allocation2 + $0x40] sm:$0xff]
      %v2808 = vld [vmem:[#allocation2 + $0x48] sm:$0xff]
      %v2809 = vld [vmem:[#allocation2 + $0x50] sm:$0xff]
      %v2810 = vld [vmem:[#allocation2 + $0x58] sm:$0xff]
      %v2811 = vld [vmem:[#allocation2 + $0x60] sm:$0xff]
      %v2812 = vld [vmem:[#allocation2 + $0x68] sm:$0xff]
      %2825 = vrot.lane.b32.xlu0 %v2801, 56
      %v2826 = vpop.permute.xlu0 %2825
      %2827 = vrot.lane.b32.xlu0 %v2802, 56
      %v2828 = vpop.permute.xlu0 %2827
      %2829 = vrot.lane.b32.xlu0 %v2803, 56
      %v2830 = vpop.permute.xlu0 %2829
      %2831 = vrot.lane.b32.xlu0 %v2804, 56
      %v2832 = vpop.permute.xlu0 %2831
      %2833 = vrot.lane.b32.xlu0 %v2805, 56
      %v2834 = vpop.permute.xlu0 %2833
      %2835 = vrot.lane.b32.xlu0 %v2806, 56
      %v2836 = vpop.permute.xlu0 %2835
      %2837 = vrot.lane.b32.xlu0 %v2807, 56
      %v2838 = vpop.permute.xlu0 %2837
      %2839 = vrot.lane.b32.xlu0 %v2808, 56
      %v2840 = vpop.permute.xlu0 %2839
      %2841 = vrot.lane.b32.xlu0 %v2809, 56
      %v2842 = vpop.permute.xlu0 %2841
      %2843 = vrot.lane.b32.xlu0 %v2810, 56
      %v2844 = vpop.permute.xlu0 %2843
      %2845 = vrot.lane.b32.xlu0 %v2811, 56
      %v2846 = vpop.permute.xlu0 %2845
      %2847 = vrot.lane.b32.xlu0 %v2812, 56
      %v2848 = vpop.permute.xlu0 %2847
      %vm2849 = vcmask 457728
      %v2850 = vsel %vm2849, %v2826, %v2828
      %v2851 = vsel %vm2849, %v2828, %v2830
      %v2852 = vsel %vm2849, %v2830, %v2832
      %v2853 = vsel %vm2849, %v2832, %v2834
      %v2854 = vsel %vm2849, %v2834, %v2836
      %v2855 = vsel %vm2849, %v2838, %v2840
      %v2856 = vsel %vm2849, %v2840, %v2842
      %v2857 = vsel %vm2849, %v2842, %v2844
      %v2858 = vsel %vm2849, %v2844, %v2846
      %v2859 = vsel %vm2849, %v2846, %v2848
      %2870 = vst [vmem:[#allocation4 + $0x230] sm:$0xff] %v2850
      %2871 = vst [vmem:[#allocation4 + $0x238] sm:$0xff] %v2851
      %2872 = vst [vmem:[#allocation4 + $0x240] sm:$0xff] %v2852
      %2873 = vst [vmem:[#allocation4 + $0x248] sm:$0xff] %v2853
      %2874 = vst.msk [vmem:[#allocation4 + $0x250] sm:$0xff] %vm231, %v2854
      %2875 = vst [vmem:[#allocation4 + $0x258] sm:$0xff] %v2855
      %2876 = vst [vmem:[#allocation4 + $0x260] sm:$0xff] %v2856
      %2877 = vst [vmem:[#allocation4 + $0x268] sm:$0xff] %v2857
      %2878 = vst [vmem:[#allocation4 + $0x270] sm:$0xff] %v2858
      %2879 = vst.msk [vmem:[#allocation4 + $0x278] sm:$0xff] %vm231, %v2859
      %v2880 = vld [vmem:[#allocation2 + $0x8] sm:$0xff]
      %v2881 = vld [vmem:[#allocation2 + $0x10] sm:$0xff]
      %v2882 = vld [vmem:[#allocation2 + $0x18] sm:$0xff]
      %v2883 = vld [vmem:[#allocation2 + $0x20] sm:$0xff]
      %v2884 = vld [vmem:[#allocation2 + $0x28] sm:$0xff]
      %v2885 = vld [vmem:[#allocation2 + $0x30] sm:$0xff]
      %v2886 = vld [vmem:[#allocation2 + $0x40] sm:$0xff]
      %v2887 = vld [vmem:[#allocation2 + $0x48] sm:$0xff]
      %v2888 = vld [vmem:[#allocation2 + $0x50] sm:$0xff]
      %v2889 = vld [vmem:[#allocation2 + $0x58] sm:$0xff]
      %v2890 = vld [vmem:[#allocation2 + $0x60] sm:$0xff]
      %v2891 = vld [vmem:[#allocation2 + $0x68] sm:$0xff]
      %2904 = vrot.lane.b32.xlu0 %v2880, 53
      %v2905 = vpop.permute.xlu0 %2904
      %2906 = vrot.lane.b32.xlu0 %v2881, 53
      %v2907 = vpop.permute.xlu0 %2906
      %2908 = vrot.lane.b32.xlu0 %v2882, 53
      %v2909 = vpop.permute.xlu0 %2908
      %2910 = vrot.lane.b32.xlu0 %v2883, 53
      %v2911 = vpop.permute.xlu0 %2910
      %2912 = vrot.lane.b32.xlu0 %v2884, 53
      %v2913 = vpop.permute.xlu0 %2912
      %2914 = vrot.lane.b32.xlu0 %v2885, 53
      %v2915 = vpop.permute.xlu0 %2914
      %2916 = vrot.lane.b32.xlu0 %v2886, 53
      %v2917 = vpop.permute.xlu0 %2916
      %2918 = vrot.lane.b32.xlu0 %v2887, 53
      %v2919 = vpop.permute.xlu0 %2918
      %2920 = vrot.lane.b32.xlu0 %v2888, 53
      %v2921 = vpop.permute.xlu0 %2920
      %2922 = vrot.lane.b32.xlu0 %v2889, 53
      %v2923 = vpop.permute.xlu0 %2922
      %2924 = vrot.lane.b32.xlu0 %v2890, 53
      %v2925 = vpop.permute.xlu0 %2924
      %2926 = vrot.lane.b32.xlu0 %v2891, 53
      %v2927 = vpop.permute.xlu0 %2926
      %vm2928 = vcmask 433152
      %v2929 = vsel %vm2928, %v2905, %v2907
      %v2930 = vsel %vm2928, %v2907, %v2909
      %v2931 = vsel %vm2928, %v2909, %v2911
      %v2932 = vsel %vm2928, %v2911, %v2913
      %v2933 = vsel %vm2928, %v2913, %v2915
      %v2934 = vsel %vm2928, %v2917, %v2919
      %v2935 = vsel %vm2928, %v2919, %v2921
      %v2936 = vsel %vm2928, %v2921, %v2923
      %v2937 = vsel %vm2928, %v2923, %v2925
      %v2938 = vsel %vm2928, %v2925, %v2927
      %2949 = vst [vmem:[#allocation4 + $0x280] sm:$0xff] %v2929
      %2950 = vst [vmem:[#allocation4 + $0x288] sm:$0xff] %v2930
      %2951 = vst [vmem:[#allocation4 + $0x290] sm:$0xff] %v2931
      %2952 = vst [vmem:[#allocation4 + $0x298] sm:$0xff] %v2932
      %2953 = vst.msk [vmem:[#allocation4 + $0x2a0] sm:$0xff] %vm231, %v2933
      %2954 = vst [vmem:[#allocation4 + $0x2a8] sm:$0xff] %v2934
      %2955 = vst [vmem:[#allocation4 + $0x2b0] sm:$0xff] %v2935
      %2956 = vst [vmem:[#allocation4 + $0x2b8] sm:$0xff] %v2936
      %2957 = vst [vmem:[#allocation4 + $0x2c0] sm:$0xff] %v2937
      %2958 = vst.msk [vmem:[#allocation4 + $0x2c8] sm:$0xff] %vm231, %v2938
      %s2959 = scalar_lea.vmem %s1, 64
      %v2960 = vld [vmem:[%s2959] sm:$0xff]
      %v2961 = vld [vmem:[%s2959 + $0x8] sm:$0xff]
      %v2962 = vld [vmem:[%s2959 + $0x10] sm:$0xff]
      %v2963 = vld [vmem:[%s2959 + $0x18] sm:$0xff]
      %v2964 = vld [vmem:[#allocation4] sm:$0xff]
      %v2965 = vld [vmem:[#allocation4 + $0x8] sm:$0xff]
      %v2966 = vld [vmem:[#allocation4 + $0x10] sm:$0xff]
      %v2967 = vld [vmem:[#allocation4 + $0x18] sm:$0xff]
      %v2968 = vld [vmem:[#allocation4 + $0x20] sm:$0xff]
      %v2969 = vld [vmem:[#allocation4 + $0x28] sm:$0xff]
      %v2970 = vld [vmem:[#allocation4 + $0x30] sm:$0xff]
      %v2971 = vld [vmem:[#allocation4 + $0x38] sm:$0xff]
      %v2972 = vld [vmem:[#allocation4 + $0x40] sm:$0xff]
      %v2973 = vld [vmem:[#allocation4 + $0x48] sm:$0xff]
      %v2974 = vld [vmem:[#allocation4 + $0x50] sm:$0xff]
      %v2975 = vld [vmem:[#allocation4 + $0x58] sm:$0xff]
      %v2976 = vld [vmem:[#allocation4 + $0x60] sm:$0xff]
      %v2977 = vld [vmem:[#allocation4 + $0x68] sm:$0xff]
      %v2978 = vld [vmem:[#allocation4 + $0x70] sm:$0xff]
      %v2979 = vld [vmem:[#allocation4 + $0x78] sm:$0xff]
      %v2980 = vld [vmem:[#allocation4 + $0x80] sm:$0xff]
      %v2981 = vld [vmem:[#allocation4 + $0x88] sm:$0xff]
      %v2982 = vld [vmem:[#allocation4 + $0x90] sm:$0xff]
      %v2983 = vld [vmem:[#allocation4 + $0x98] sm:$0xff]
      %v2984 = vld [vmem:[#allocation4 + $0xa0] sm:$0xff]
      %v2985 = vld [vmem:[#allocation4 + $0xa8] sm:$0xff]
      %v2986 = vld [vmem:[#allocation4 + $0xb0] sm:$0xff]
      %v2987 = vld [vmem:[#allocation4 + $0xb8] sm:$0xff]
      %v2988 = vld [vmem:[#allocation4 + $0xc0] sm:$0xff]
      %v2989 = vld [vmem:[#allocation4 + $0xc8] sm:$0xff]
      %v2990 = vld [vmem:[#allocation4 + $0xd0] sm:$0xff]
      %v2991 = vld [vmem:[#allocation4 + $0xd8] sm:$0xff]
      %v2992 = vld [vmem:[#allocation4 + $0xe0] sm:$0xff]
      %v2993 = vld [vmem:[#allocation4 + $0xe8] sm:$0xff]
      %v2994 = vld [vmem:[#allocation4 + $0xf0] sm:$0xff]
      %v2995 = vld [vmem:[#allocation4 + $0xf8] sm:$0xff]
      %v2996 = vld [vmem:[#allocation4 + $0x100] sm:$0xff]
      %v2997 = vld [vmem:[#allocation4 + $0x108] sm:$0xff]
      %v2998 = vld [vmem:[#allocation4 + $0x110] sm:$0xff]
      %v2999 = vld [vmem:[#allocation4 + $0x118] sm:$0xff]
      %v3000 = vld [vmem:[#allocation4 + $0x120] sm:$0xff]
      %v3001 = vld [vmem:[#allocation4 + $0x128] sm:$0xff]
      %v3002 = vld [vmem:[#allocation4 + $0x130] sm:$0xff]
      %v3003 = vld [vmem:[#allocation4 + $0x138] sm:$0xff]
      %v3004 = vld [vmem:[#allocation4 + $0x140] sm:$0xff]
      %v3005 = vld [vmem:[#allocation4 + $0x148] sm:$0xff]
      %v3006 = vld [vmem:[#allocation4 + $0x150] sm:$0xff]
      %v3007 = vld [vmem:[#allocation4 + $0x158] sm:$0xff]
      %v3008 = vld [vmem:[#allocation4 + $0x160] sm:$0xff]
      %v3009 = vld [vmem:[#allocation4 + $0x168] sm:$0xff]
      %v3010 = vld [vmem:[#allocation4 + $0x170] sm:$0xff]
      %v3011 = vld [vmem:[#allocation4 + $0x178] sm:$0xff]
      %v3012 = vld [vmem:[#allocation4 + $0x180] sm:$0xff]
      %v3013 = vld [vmem:[#allocation4 + $0x188] sm:$0xff]
      %v3014 = vld [vmem:[#allocation4 + $0x190] sm:$0xff]
      %v3015 = vld [vmem:[#allocation4 + $0x198] sm:$0xff]
      %v3016 = vld [vmem:[#allocation4 + $0x1a0] sm:$0xff]
      %v3017 = vld [vmem:[#allocation4 + $0x1a8] sm:$0xff]
      %v3018 = vld [vmem:[#allocation4 + $0x1b0] sm:$0xff]
      %v3019 = vld [vmem:[#allocation4 + $0x1b8] sm:$0xff]
      %v3020 = vld [vmem:[#allocation4 + $0x1c0] sm:$0xff]
      %v3021 = vld [vmem:[#allocation4 + $0x1c8] sm:$0xff]
      %v3022 = vld [vmem:[#allocation4 + $0x1d0] sm:$0xff]
      %v3023 = vld [vmem:[#allocation4 + $0x1d8] sm:$0xff]
      %v3024 = vld [vmem:[#allocation4 + $0x1e0] sm:$0xff]
      %v3025 = vld [vmem:[#allocation4 + $0x1e8] sm:$0xff]
      %v3026 = vld [vmem:[#allocation4 + $0x1f0] sm:$0xff]
      %v3027 = vld [vmem:[#allocation4 + $0x1f8] sm:$0xff]
      %v3028 = vld [vmem:[#allocation4 + $0x200] sm:$0xff]
      %v3029 = vld [vmem:[#allocation4 + $0x208] sm:$0xff]
      %v3030 = vld [vmem:[#allocation4 + $0x210] sm:$0xff]
      %v3031 = vld [vmem:[#allocation4 + $0x218] sm:$0xff]
      %v3032 = vld [vmem:[#allocation4 + $0x220] sm:$0xff]
      %v3033 = vld [vmem:[#allocation4 + $0x228] sm:$0xff]
      %v3034 = vld [vmem:[#allocation4 + $0x230] sm:$0xff]
      %v3035 = vld [vmem:[#allocation4 + $0x238] sm:$0xff]
      %v3036 = vld [vmem:[#allocation4 + $0x240] sm:$0xff]
      %v3037 = vld [vmem:[#allocation4 + $0x248] sm:$0xff]
      %v3038 = vld [vmem:[#allocation4 + $0x250] sm:$0xff]
      %v3039 = vld [vmem:[#allocation4 + $0x258] sm:$0xff]
      %v3040 = vld [vmem:[#allocation4 + $0x260] sm:$0xff]
      %v3041 = vld [vmem:[#allocation4 + $0x268] sm:$0xff]
      %v3042 = vld [vmem:[#allocation4 + $0x270] sm:$0xff]
      %v3043 = vld [vmem:[#allocation4 + $0x278] sm:$0xff]
      %v3044 = vld [vmem:[#allocation4 + $0x280] sm:$0xff]
      %v3045 = vld [vmem:[#allocation4 + $0x288] sm:$0xff]
      %v3046 = vld [vmem:[#allocation4 + $0x290] sm:$0xff]
      %v3047 = vld [vmem:[#allocation4 + $0x298] sm:$0xff]
      %v3048 = vld [vmem:[#allocation4 + $0x2a0] sm:$0xff]
      %v3049 = vld [vmem:[#allocation4 + $0x2a8] sm:$0xff]
      %v3050 = vld [vmem:[#allocation4 + $0x2b0] sm:$0xff]
      %v3051 = vld [vmem:[#allocation4 + $0x2b8] sm:$0xff]
      %v3052 = vld [vmem:[#allocation4 + $0x2c0] sm:$0xff]
      %v3053 = vld [vmem:[#allocation4 + $0x2c8] sm:$0xff]
      %v3055 = vsel %vm1019, %v2961, 0
      %v3058 = vsel %vm1019, %v2963, 0
      %3060 = vmatprep.subr.mxu0 %v2965
      %3061 = vmatpush1.msra.mxu0 %v2964
      %3062 = vmatprep.subr.mxu0 %v2970
      %3063 = vmatpush1.msra.mxu0 %v2969
      %3064 = vmatprep.subr.mxu0 %v2975
      %3065 = vmatpush1.msra.mxu0 %v2974
      %3066 = vmatprep.subr.mxu0 %v2980
      %3067 = vmatpush1.msra.mxu0 %v2979
      %3068 = vmatprep.subr.mxu0 %v2985
      %3069 = vmatpush1.msra.mxu0 %v2984
      %3070 = vmatprep.subr.mxu0 %v2990
      %3071 = vmatpush1.msra.mxu0 %v2989
      %3072 = vmatprep.subr.mxu0 %v2995
      %3073 = vmatpush1.msra.mxu0 %v2994
      %3074 = vmatprep.subr.mxu0 %v3000
      %3075 = vmatpush1.msra.mxu0 %v2999
      %3076 = vmatprep.subr.mxu0 %v3005
      %3077 = vmatpush1.msra.mxu0 %v3004
      %3078 = vmatprep.subr.mxu0 %v3010
      %3079 = vmatpush1.msra.mxu0 %v3009
      %3080 = vmatprep.subr.mxu0 %v3015
      %3081 = vmatpush1.msra.mxu0 %v3014
      %3082 = vmatprep.subr.mxu0 %v3020
      %3083 = vmatpush1.msra.mxu0 %v3019
      %3084 = vmatprep.subr.mxu0 %v3025
      %3085 = vmatpush1.msra.mxu0 %v3024
      %3086 = vmatprep.subr.mxu0 %v3030
      %3087 = vmatpush1.msra.mxu0 %v3029
      %3088 = vmatprep.subr.mxu0 %v3035
      %3089 = vmatpush1.msra.mxu0 %v3034
      %3090 = vmatprep.subr.mxu0 %v3040
      %3091 = vmatpush1.msra.mxu0 %v3039
      %3092 = vmatprep.subr.mxu0 %v3045
      %3093 = vmatpush1.msra.mxu0 %v3044
      %3094 = vmatprep.subr.mxu0 %v3050
      %3095 = vmatpush1.msra.mxu0 %v3049
      %3096 = vmatprep.subr.mxu0 0.0
      %3097 = vmatpush1.msra.mxu0 0.0
      %3098 = vmatprep.subr.mxu0 0.0
      %3099 = vmatpush1.msra.mxu0 0.0
      %3100 = vmatprep.subr.mxu0 0.0
      %3101 = vmatpush1.msra.mxu0 0.0
      %3102 = vmatprep.subr.mxu0 0.0
      %3103 = vmatpush1.msra.mxu0 0.0
      %3104 = vmatprep.subr.mxu0 0.0
      %3105 = vmatpush1.msra.mxu0 0.0
      %3106 = vmatprep.subr.mxu0 0.0
      %3107 = vmatpush1.msra.mxu0 0.0
      %3108 = vmatprep.subr.mxu0 0.0
      %3109 = vmatpush1.msra.mxu0 0.0
      %3110 = vmatprep.subr.mxu0 0.0
      %3111 = vmatpush1.msra.mxu0 0.0
      %3112 = vmatprep.subr.mxu0 0.0
      %3113 = vmatpush1.msra.mxu0 0.0
      %3114 = vmatprep.subr.mxu0 0.0
      %3115 = vmatpush1.msra.mxu0 0.0
      %3116 = vmatprep.subr.mxu0 0.0
      %3117 = vmatpush1.msra.mxu0 0.0
      %3118 = vmatprep.subr.mxu0 0.0
      %3119 = vmatpush1.msra.mxu0 0.0
      %3120 = vmatprep.subr.mxu0 0.0
      %3121 = vmatpush1.msra.mxu0 0.0
      %3122 = vmatprep.subr.mxu0 0.0
      %3123 = vmatpush1.msra.mxu0 0.0
      %3124 = vmatprep.mubr.f32.mxu0 %v3055
      %3125 = vmatmul.mubr.f32.gmra.mrb[0].mxu0 %v2960
      %v3126 = vpop.f32.mrb[0].mxu0
      %v3127 = vadd.f32 0.0, %v3126
      %v3128 = vpop.f32.mrb[0].mxu0
      %v3129 = vadd.f32 0.0, %v3128
      %3130 = vmatprep.mubr.f32.mxu0 %v3058
      %3131 = vmatmul.mubr.f32.gmra.mrb[0].mxu0 %v2962
      %v3132 = vpop.f32.mrb[0].mxu0
      %v3133 = vadd.f32 0.0, %v3132
      %v3134 = vpop.f32.mrb[0].mxu0
      %v3135 = vadd.f32 0.0, %v3134
      %3136 = vdwg.mxu0
      %3137 = vmatprep.subr.mxu0 %v2967
      %3138 = vmatpush1.msra.mxu0 %v2966
      %3139 = vmatprep.subr.mxu0 %v2972
      %3140 = vmatpush1.msra.mxu0 %v2971
      %3141 = vmatprep.subr.mxu0 %v2977
      %3142 = vmatpush1.msra.mxu0 %v2976
      %3143 = vmatprep.subr.mxu0 %v2982
      %3144 = vmatpush1.msra.mxu0 %v2981
      %3145 = vmatprep.subr.mxu0 %v2987
      %3146 = vmatpush1.msra.mxu0 %v2986
      %3147 = vmatprep.subr.mxu0 %v2992
      %3148 = vmatpush1.msra.mxu0 %v2991
      %3149 = vmatprep.subr.mxu0 %v2997
      %3150 = vmatpush1.msra.mxu0 %v2996
      %3151 = vmatprep.subr.mxu0 %v3002
      %3152 = vmatpush1.msra.mxu0 %v3001
      %3153 = vmatprep.subr.mxu0 %v3007
      %3154 = vmatpush1.msra.mxu0 %v3006
      %3155 = vmatprep.subr.mxu0 %v3012
      %3156 = vmatpush1.msra.mxu0 %v3011
      %3157 = vmatprep.subr.mxu0 %v3017
      %3158 = vmatpush1.msra.mxu0 %v3016
      %3159 = vmatprep.subr.mxu0 %v3022
      %3160 = vmatpush1.msra.mxu0 %v3021
      %3161 = vmatprep.subr.mxu0 %v3027
      %3162 = vmatpush1.msra.mxu0 %v3026
      %3163 = vmatprep.subr.mxu0 %v3032
      %3164 = vmatpush1.msra.mxu0 %v3031
      %3165 = vmatprep.subr.mxu0 %v3037
      %3166 = vmatpush1.msra.mxu0 %v3036
      %3167 = vmatprep.subr.mxu0 %v3042
      %3168 = vmatpush1.msra.mxu0 %v3041
      %3169 = vmatprep.subr.mxu0 %v3047
      %3170 = vmatpush1.msra.mxu0 %v3046
      %3171 = vmatprep.subr.mxu0 %v3052
      %3172 = vmatpush1.msra.mxu0 %v3051
      %3173 = vmatprep.subr.mxu0 0.0
      %3174 = vmatpush1.msra.mxu0 0.0
      %3175 = vmatprep.subr.mxu0 0.0
      %3176 = vmatpush1.msra.mxu0 0.0
      %3177 = vmatprep.subr.mxu0 0.0
      %3178 = vmatpush1.msra.mxu0 0.0
      %3179 = vmatprep.subr.mxu0 0.0
      %3180 = vmatpush1.msra.mxu0 0.0
      %3181 = vmatprep.subr.mxu0 0.0
      %3182 = vmatpush1.msra.mxu0 0.0
      %3183 = vmatprep.subr.mxu0 0.0
      %3184 = vmatpush1.msra.mxu0 0.0
      %3185 = vmatprep.subr.mxu0 0.0
      %3186 = vmatpush1.msra.mxu0 0.0
      %3187 = vmatprep.subr.mxu0 0.0
      %3188 = vmatpush1.msra.mxu0 0.0
      %3189 = vmatprep.subr.mxu0 0.0
      %3190 = vmatpush1.msra.mxu0 0.0
      %3191 = vmatprep.subr.mxu0 0.0
      %3192 = vmatpush1.msra.mxu0 0.0
      %3193 = vmatprep.subr.mxu0 0.0
      %3194 = vmatpush1.msra.mxu0 0.0
      %3195 = vmatprep.subr.mxu0 0.0
      %3196 = vmatpush1.msra.mxu0 0.0
      %3197 = vmatprep.subr.mxu0 0.0
      %3198 = vmatpush1.msra.mxu0 0.0
      %3199 = vmatprep.subr.mxu0 0.0
      %3200 = vmatpush1.msra.mxu0 0.0
      %3201 = vmatprep.mubr.f32.mxu0 %v3055
      %3202 = vmatmul.mubr.f32.gmra.mrb[0].mxu0 %v2960
      %v3203 = vpop.f32.mrb[0].mxu0
      %v3204 = vadd.f32 0.0, %v3203
      %v3205 = vpop.f32.mrb[0].mxu0
      %v3206 = vadd.f32 0.0, %v3205
      %3207 = vmatprep.mubr.f32.mxu0 %v3058
      %3208 = vmatmul.mubr.f32.gmra.mrb[0].mxu0 %v2962
      %v3209 = vpop.f32.mrb[0].mxu0
      %v3210 = vadd.f32 0.0, %v3209
      %v3211 = vpop.f32.mrb[0].mxu0
      %v3212 = vadd.f32 0.0, %v3211
      %3213 = vdwg.mxu0
      %3214 = vmatprep.subr.mxu0 0.0
      %3215 = vmatpush1.msra.mxu0 %v2968
      %3216 = vmatprep.subr.mxu0 0.0
      %3217 = vmatpush1.msra.mxu0 %v2973
      %3218 = vmatprep.subr.mxu0 0.0
      %3219 = vmatpush1.msra.mxu0 %v2978
      %3220 = vmatprep.subr.mxu0 0.0
      %3221 = vmatpush1.msra.mxu0 %v2983
      %3222 = vmatprep.subr.mxu0 0.0
      %3223 = vmatpush1.msra.mxu0 %v2988
      %3224 = vmatprep.subr.mxu0 0.0
      %3225 = vmatpush1.msra.mxu0 %v2993
      %3226 = vmatprep.subr.mxu0 0.0
      %3227 = vmatpush1.msra.mxu0 %v2998
      %3228 = vmatprep.subr.mxu0 0.0
      %3229 = vmatpush1.msra.mxu0 %v3003
      %3230 = vmatprep.subr.mxu0 0.0
      %3231 = vmatpush1.msra.mxu0 %v3008
      %3232 = vmatprep.subr.mxu0 0.0
      %3233 = vmatpush1.msra.mxu0 %v3013
      %3234 = vmatprep.subr.mxu0 0.0
      %3235 = vmatpush1.msra.mxu0 %v3018
      %3236 = vmatprep.subr.mxu0 0.0
      %3237 = vmatpush1.msra.mxu0 %v3023
      %3238 = vmatprep.subr.mxu0 0.0
      %3239 = vmatpush1.msra.mxu0 %v3028
      %3240 = vmatprep.subr.mxu0 0.0
      %3241 = vmatpush1.msra.mxu0 %v3033
      %3242 = vmatprep.subr.mxu0 0.0
      %3243 = vmatpush1.msra.mxu0 %v3038
      %3244 = vmatprep.subr.mxu0 0.0
      %3245 = vmatpush1.msra.mxu0 %v3043
      %3246 = vmatprep.subr.mxu0 0.0
      %3247 = vmatpush1.msra.mxu0 %v3048
      %3248 = vmatprep.subr.mxu0 0.0
      %3249 = vmatpush1.msra.mxu0 %v3053
      %3250 = vmatprep.subr.mxu0 0.0
      %3251 = vmatpush1.msra.mxu0 0.0
      %3252 = vmatprep.subr.mxu0 0.0
      %3253 = vmatpush1.msra.mxu0 0.0
      %3254 = vmatprep.subr.mxu0 0.0
      %3255 = vmatpush1.msra.mxu0 0.0
      %3256 = vmatprep.subr.mxu0 0.0
      %3257 = vmatpush1.msra.mxu0 0.0
      %3258 = vmatprep.subr.mxu0 0.0
      %3259 = vmatpush1.msra.mxu0 0.0
      %3260 = vmatprep.subr.mxu0 0.0
      %3261 = vmatpush1.msra.mxu0 0.0
      %3262 = vmatprep.subr.mxu0 0.0
      %3263 = vmatpush1.msra.mxu0 0.0
      %3264 = vmatprep.subr.mxu0 0.0
      %3265 = vmatpush1.msra.mxu0 0.0
      %3266 = vmatprep.subr.mxu0 0.0
      %3267 = vmatpush1.msra.mxu0 0.0
      %3268 = vmatprep.subr.mxu0 0.0
      %3269 = vmatpush1.msra.mxu0 0.0
      %3270 = vmatprep.subr.mxu0 0.0
      %3271 = vmatpush1.msra.mxu0 0.0
      %3272 = vmatprep.subr.mxu0 0.0
      %3273 = vmatpush1.msra.mxu0 0.0
      %3274 = vmatprep.subr.mxu0 0.0
      %3275 = vmatpush1.msra.mxu0 0.0
      %3276 = vmatprep.subr.mxu0 0.0
      %3277 = vmatpush1.msra.mxu0 0.0
      %3278 = vmatprep.mubr.f32.mxu0 %v3055
      %3279 = vmatmul.mubr.f32.gmra.mrb[0].mxu0 %v2960
      %v3280 = vpop.f32.mrb[0].mxu0
      %v3281 = vadd.f32 0.0, %v3280
      %v3282 = vpop.f32.mrb[0].mxu0
      %3283 = vmatprep.mubr.f32.mxu0 %v3058
      %3284 = vmatmul.mubr.f32.gmra.mrb[0].mxu0 %v2962
      %v3285 = vpop.f32.mrb[0].mxu0
      %v3286 = vadd.f32 0.0, %v3285
      %v3287 = vpop.f32.mrb[0].mxu0
      %3288 = vdwg.mxu0
      %s3289 = scalar_lea.vmem %s2, 32
      %v3290 = vld [vmem:[%s3289] sm:$0xff]
      %v3291 = vld [vmem:[%s3289 + $0x8] sm:$0xff]
      %3293 = vset.pattern.permute.xlu0 0
      %3294 = vperm.xlu0 %3293, %v3290
      %v3295 = vpop.permute.xlu0 %3294
      %3298 = vset.pattern.permute.xlu0 0
      %3299 = vperm.xlu0 %3298, %v3291
      %v3300 = vpop.permute.xlu0 %3299
      %v3302 = vmul.f32 %v3127, %v3295
      %v3303 = vmul.f32 %v3129, %v3295
      %v3304 = vmul.f32 %v3204, %v3295
      %v3305 = vmul.f32 %v3206, %v3295
      %v3306 = vmul.f32 %v3281, %v3295
      %v3307 = vmul.f32 %v3133, %v3300
      %v3308 = vmul.f32 %v3135, %v3300
      %v3309 = vmul.f32 %v3210, %v3300
      %v3310 = vmul.f32 %v3212, %v3300
      %v3311 = vmul.f32 %v3286, %v3300
      %s3312 = scalar_lea.vmem %s3, 32
      %v3313 = vld [vmem:[%s3312] sm:$0xff]
      %v3314 = vld [vmem:[%s3312 + $0x8] sm:$0xff]
      %3316 = vset.pattern.permute.xlu0 0
      %3317 = vperm.xlu0 %3316, %v3313
      %v3318 = vpop.permute.xlu0 %3317
      %3321 = vset.pattern.permute.xlu0 0
      %3322 = vperm.xlu0 %3321, %v3314
      %v3323 = vpop.permute.xlu0 %3322
      %v3325 = vadd.f32 %v3302, %v3318
      %v3326 = vadd.f32 %v3303, %v3318
      %v3327 = vadd.f32 %v3304, %v3318
      %v3328 = vadd.f32 %v3305, %v3318
      %v3329 = vadd.f32 %v3306, %v3318
      %v3330 = vadd.f32 %v3307, %v3323
      %v3331 = vadd.f32 %v3308, %v3323
      %v3332 = vadd.f32 %v3309, %v3323
      %v3333 = vadd.f32 %v3310, %v3323
      %v3334 = vadd.f32 %v3311, %v3323
      %v3335 = vmax.f32 %v3325, 0.0
      %v3336 = vmax.f32 %v3326, 0.0
      %v3337 = vmax.f32 %v3327, 0.0
      %v3338 = vmax.f32 %v3328, 0.0
      %v3339 = vmax.f32 %v3329, 0.0
      %v3340 = vmax.f32 %v3330, 0.0
      %v3341 = vmax.f32 %v3331, 0.0
      %v3342 = vmax.f32 %v3332, 0.0
      %v3343 = vmax.f32 %v3333, 0.0
      %v3344 = vmax.f32 %v3334, 0.0
      %v3345 = vsel %vm303, %v3335, 0.0
      %v3346 = vsel %vm304, %v3336, 0.0
      %v3347 = vsel %vm305, %v3337, 0.0
      %v3348 = vsel %vm306, %v3338, 0.0
      %v3349 = vsel %vm307, %v3339, 0.0
      %v3350 = vsel %vm308, %v3340, 0.0
      %v3351 = vsel %vm309, %v3341, 0.0
      %v3352 = vsel %vm310, %v3342, 0.0
      %v3353 = vsel %vm311, %v3343, 0.0
      %v3354 = vsel %vm312, %v3344, 0.0
      %3355 = vst [vmem:[#allocation3 + $0x8] sm:$0xff] %v3345
      %3356 = vst [vmem:[#allocation3 + $0x10] sm:$0xff] %v3346
      %3357 = vst [vmem:[#allocation3 + $0x18] sm:$0xff] %v3347
      %3358 = vst [vmem:[#allocation3 + $0x20] sm:$0xff] %v3348
      %3359 = vst.msk [vmem:[#allocation3 + $0x28] sm:$0xff] %vm231, %v3349
      %3360 = vst [vmem:[#allocation3 + $0x40] sm:$0xff] %v3350
      %3361 = vst [vmem:[#allocation3 + $0x48] sm:$0xff] %v3351
      %3362 = vst [vmem:[#allocation3 + $0x50] sm:$0xff] %v3352
      %3363 = vst [vmem:[#allocation3 + $0x58] sm:$0xff] %v3353
      %3364 = vst.msk [vmem:[#allocation3 + $0x60] sm:$0xff] %vm231, %v3354
      %v3365 = vld [vmem:[#allocation3] sm:$0xff]
      %v3366 = vld [vmem:[#allocation3 + $0x8] sm:$0xff]
      %v3367 = vld [vmem:[#allocation3 + $0x10] sm:$0xff]
      %v3368 = vld [vmem:[#allocation3 + $0x18] sm:$0xff]
      %v3369 = vld [vmem:[#allocation3 + $0x20] sm:$0xff]
      %v3370 = vld [vmem:[#allocation3 + $0x38] sm:$0xff]
      %v3371 = vld [vmem:[#allocation3 + $0x40] sm:$0xff]
      %v3372 = vld [vmem:[#allocation3 + $0x48] sm:$0xff]
      %v3373 = vld [vmem:[#allocation3 + $0x50] sm:$0xff]
      %v3374 = vld [vmem:[#allocation3 + $0x58] sm:$0xff]
      %3385 = vrot.lane.b32.xlu0 %v3365, 100
      %v3386 = vpop.permute.xlu0 %3385
      %3387 = vrot.lane.b32.xlu0 %v3366, 100
      %v3388 = vpop.permute.xlu0 %3387
      %3389 = vrot.lane.b32.xlu0 %v3367, 100
      %v3390 = vpop.permute.xlu0 %3389
      %3391 = vrot.lane.b32.xlu0 %v3368, 100
      %v3392 = vpop.permute.xlu0 %3391
      %3393 = vrot.lane.b32.xlu0 %v3369, 100
      %v3394 = vpop.permute.xlu0 %3393
      %3395 = vrot.lane.b32.xlu0 %v3370, 100
      %v3396 = vpop.permute.xlu0 %3395
      %3397 = vrot.lane.b32.xlu0 %v3371, 100
      %v3398 = vpop.permute.xlu0 %3397
      %3399 = vrot.lane.b32.xlu0 %v3372, 100
      %v3400 = vpop.permute.xlu0 %3399
      %3401 = vrot.lane.b32.xlu0 %v3373, 100
      %v3402 = vpop.permute.xlu0 %3401
      %3403 = vrot.lane.b32.xlu0 %v3374, 100
      %v3404 = vpop.permute.xlu0 %3403
      %vm3405 = vcmask 818176
      %v3406 = vsel %vm3405, %v3386, %v3388
      %v3407 = vsel %vm3405, %v3388, %v3390
      %v3408 = vsel %vm3405, %v3390, %v3392
      %v3409 = vsel %vm3405, %v3392, %v3394
      %v3410 = vsel %vm3405, %v3396, %v3398
      %v3411 = vsel %vm3405, %v3398, %v3400
      %v3412 = vsel %vm3405, %v3400, %v3402
      %v3413 = vsel %vm3405, %v3402, %v3404
      %3424 = vst [vmem:[#allocation4] sm:$0xff] %v3406
      %3425 = vst [vmem:[#allocation4 + $0x8] sm:$0xff] %v3407
      %3426 = vst [vmem:[#allocation4 + $0x10] sm:$0xff] %v3408
      %3427 = vst [vmem:[#allocation4 + $0x18] sm:$0xff] %v3409
      %3428 = vst.msk [vmem:[#allocation4 + $0x20] sm:$0xff] %vm231, %v3394
      %3429 = vst [vmem:[#allocation4 + $0x28] sm:$0xff] %v3410
      %3430 = vst [vmem:[#allocation4 + $0x30] sm:$0xff] %v3411
      %3431 = vst [vmem:[#allocation4 + $0x38] sm:$0xff] %v3412
      %3432 = vst [vmem:[#allocation4 + $0x40] sm:$0xff] %v3413
      %3433 = vst.msk [vmem:[#allocation4 + $0x48] sm:$0xff] %vm231, %v3404
      %v3434 = vld [vmem:[#allocation3] sm:$0xff]
      %v3435 = vld [vmem:[#allocation3 + $0x8] sm:$0xff]
      %v3436 = vld [vmem:[#allocation3 + $0x10] sm:$0xff]
      %v3437 = vld [vmem:[#allocation3 + $0x18] sm:$0xff]
      %v3438 = vld [vmem:[#allocation3 + $0x20] sm:$0xff]
      %v3439 = vld [vmem:[#allocation3 + $0x38] sm:$0xff]
      %v3440 = vld [vmem:[#allocation3 + $0x40] sm:$0xff]
      %v3441 = vld [vmem:[#allocation3 + $0x48] sm:$0xff]
      %v3442 = vld [vmem:[#allocation3 + $0x50] sm:$0xff]
      %v3443 = vld [vmem:[#allocation3 + $0x58] sm:$0xff]
      %3454 = vrot.lane.b32.xlu0 %v3434, 96
      %v3455 = vpop.permute.xlu0 %3454
      %3456 = vrot.lane.b32.xlu0 %v3435, 96
      %v3457 = vpop.permute.xlu0 %3456
      %3458 = vrot.lane.b32.xlu0 %v3436, 96
      %v3459 = vpop.permute.xlu0 %3458
      %3460 = vrot.lane.b32.xlu0 %v3437, 96
      %v3461 = vpop.permute.xlu0 %3460
      %3462 = vrot.lane.b32.xlu0 %v3438, 96
      %v3463 = vpop.permute.xlu0 %3462
      %3464 = vrot.lane.b32.xlu0 %v3439, 96
      %v3465 = vpop.permute.xlu0 %3464
      %3466 = vrot.lane.b32.xlu0 %v3440, 96
      %v3467 = vpop.permute.xlu0 %3466
      %3468 = vrot.lane.b32.xlu0 %v3441, 96
      %v3469 = vpop.permute.xlu0 %3468
      %3470 = vrot.lane.b32.xlu0 %v3442, 96
      %v3471 = vpop.permute.xlu0 %3470
      %3472 = vrot.lane.b32.xlu0 %v3443, 96
      %v3473 = vpop.permute.xlu0 %3472
      %vm3474 = vcmask 785408
      %v3475 = vsel %vm3474, %v3455, %v3457
      %v3476 = vsel %vm3474, %v3457, %v3459
      %v3477 = vsel %vm3474, %v3459, %v3461
      %v3478 = vsel %vm3474, %v3461, %v3463
      %v3479 = vsel %vm3474, %v3465, %v3467
      %v3480 = vsel %vm3474, %v3467, %v3469
      %v3481 = vsel %vm3474, %v3469, %v3471
      %v3482 = vsel %vm3474, %v3471, %v3473
      %3493 = vst [vmem:[#allocation4 + $0x50] sm:$0xff] %v3475
      %3494 = vst [vmem:[#allocation4 + $0x58] sm:$0xff] %v3476
      %3495 = vst [vmem:[#allocation4 + $0x60] sm:$0xff] %v3477
      %3496 = vst [vmem:[#allocation4 + $0x68] sm:$0xff] %v3478
      %3497 = vst.msk [vmem:[#allocation4 + $0x70] sm:$0xff] %vm231, %v3463
      %3498 = vst [vmem:[#allocation4 + $0x78] sm:$0xff] %v3479
      %3499 = vst [vmem:[#allocation4 + $0x80] sm:$0xff] %v3480
      %3500 = vst [vmem:[#allocation4 + $0x88] sm:$0xff] %v3481
      %3501 = vst [vmem:[#allocation4 + $0x90] sm:$0xff] %v3482
      %3502 = vst.msk [vmem:[#allocation4 + $0x98] sm:$0xff] %vm231, %v3473
      %v3503 = vld [vmem:[#allocation3] sm:$0xff]
      %v3504 = vld [vmem:[#allocation3 + $0x8] sm:$0xff]
      %v3505 = vld [vmem:[#allocation3 + $0x10] sm:$0xff]
      %v3506 = vld [vmem:[#allocation3 + $0x18] sm:$0xff]
      %v3507 = vld [vmem:[#allocation3 + $0x20] sm:$0xff]
      %v3508 = vld [vmem:[#allocation3 + $0x38] sm:$0xff]
      %v3509 = vld [vmem:[#allocation3 + $0x40] sm:$0xff]
      %v3510 = vld [vmem:[#allocation3 + $0x48] sm:$0xff]
      %v3511 = vld [vmem:[#allocation3 + $0x50] sm:$0xff]
      %v3512 = vld [vmem:[#allocation3 + $0x58] sm:$0xff]
      %3523 = vrot.lane.b32.xlu0 %v3503, 92
      %v3524 = vpop.permute.xlu0 %3523
      %3525 = vrot.lane.b32.xlu0 %v3504, 92
      %v3526 = vpop.permute.xlu0 %3525
      %3527 = vrot.lane.b32.xlu0 %v3505, 92
      %v3528 = vpop.permute.xlu0 %3527
      %3529 = vrot.lane.b32.xlu0 %v3506, 92
      %v3530 = vpop.permute.xlu0 %3529
      %3531 = vrot.lane.b32.xlu0 %v3507, 92
      %v3532 = vpop.permute.xlu0 %3531
      %3533 = vrot.lane.b32.xlu0 %v3508, 92
      %v3534 = vpop.permute.xlu0 %3533
      %3535 = vrot.lane.b32.xlu0 %v3509, 92
      %v3536 = vpop.permute.xlu0 %3535
      %3537 = vrot.lane.b32.xlu0 %v3510, 92
      %v3538 = vpop.permute.xlu0 %3537
      %3539 = vrot.lane.b32.xlu0 %v3511, 92
      %v3540 = vpop.permute.xlu0 %3539
      %3541 = vrot.lane.b32.xlu0 %v3512, 92
      %v3542 = vpop.permute.xlu0 %3541
      %vm3543 = vcmask 752640
      %v3544 = vsel %vm3543, %v3524, %v3526
      %v3545 = vsel %vm3543, %v3526, %v3528
      %v3546 = vsel %vm3543, %v3528, %v3530
      %v3547 = vsel %vm3543, %v3530, %v3532
      %v3548 = vsel %vm3543, %v3534, %v3536
      %v3549 = vsel %vm3543, %v3536, %v3538
      %v3550 = vsel %vm3543, %v3538, %v3540
      %v3551 = vsel %vm3543, %v3540, %v3542
      %3562 = vst [vmem:[#allocation4 + $0xa0] sm:$0xff] %v3544
      %3563 = vst [vmem:[#allocation4 + $0xa8] sm:$0xff] %v3545
      %3564 = vst [vmem:[#allocation4 + $0xb0] sm:$0xff] %v3546
      %3565 = vst [vmem:[#allocation4 + $0xb8] sm:$0xff] %v3547
      %3566 = vst.msk [vmem:[#allocation4 + $0xc0] sm:$0xff] %vm231, %v3532
      %3567 = vst [vmem:[#allocation4 + $0xc8] sm:$0xff] %v3548
      %3568 = vst [vmem:[#allocation4 + $0xd0] sm:$0xff] %v3549
      %3569 = vst [vmem:[#allocation4 + $0xd8] sm:$0xff] %v3550
      %3570 = vst [vmem:[#allocation4 + $0xe0] sm:$0xff] %v3551
      %3571 = vst.msk [vmem:[#allocation4 + $0xe8] sm:$0xff] %vm231, %v3542
      %v3572 = vld [vmem:[#allocation3] sm:$0xff]
      %v3573 = vld [vmem:[#allocation3 + $0x8] sm:$0xff]
      %v3574 = vld [vmem:[#allocation3 + $0x10] sm:$0xff]
      %v3575 = vld [vmem:[#allocation3 + $0x18] sm:$0xff]
      %v3576 = vld [vmem:[#allocation3 + $0x20] sm:$0xff]
      %v3577 = vld [vmem:[#allocation3 + $0x28] sm:$0xff]
      %v3578 = vld [vmem:[#allocation3 + $0x38] sm:$0xff]
      %v3579 = vld [vmem:[#allocation3 + $0x40] sm:$0xff]
      %v3580 = vld [vmem:[#allocation3 + $0x48] sm:$0xff]
      %v3581 = vld [vmem:[#allocation3 + $0x50] sm:$0xff]
      %v3582 = vld [vmem:[#allocation3 + $0x58] sm:$0xff]
      %v3583 = vld [vmem:[#allocation3 + $0x60] sm:$0xff]
      %3596 = vrot.lane.b32.xlu0 %v3572, 4
      %v3597 = vpop.permute.xlu0 %3596
      %3598 = vrot.lane.b32.xlu0 %v3573, 4
      %v3599 = vpop.permute.xlu0 %3598
      %3600 = vrot.lane.b32.xlu0 %v3574, 4
      %v3601 = vpop.permute.xlu0 %3600
      %3602 = vrot.lane.b32.xlu0 %v3575, 4
      %v3603 = vpop.permute.xlu0 %3602
      %3604 = vrot.lane.b32.xlu0 %v3576, 4
      %v3605 = vpop.permute.xlu0 %3604
      %3606 = vrot.lane.b32.xlu0 %v3577, 4
      %v3607 = vpop.permute.xlu0 %3606
      %3608 = vrot.lane.b32.xlu0 %v3578, 4
      %v3609 = vpop.permute.xlu0 %3608
      %3610 = vrot.lane.b32.xlu0 %v3579, 4
      %v3611 = vpop.permute.xlu0 %3610
      %3612 = vrot.lane.b32.xlu0 %v3580, 4
      %v3613 = vpop.permute.xlu0 %3612
      %3614 = vrot.lane.b32.xlu0 %v3581, 4
      %v3615 = vpop.permute.xlu0 %3614
      %3616 = vrot.lane.b32.xlu0 %v3582, 4
      %v3617 = vpop.permute.xlu0 %3616
      %3618 = vrot.lane.b32.xlu0 %v3583, 4
      %v3619 = vpop.permute.xlu0 %3618
      %vm3620 = vcmask 31744
      %v3621 = vsel %vm3620, %v3597, %v3599
      %v3622 = vsel %vm3620, %v3599, %v3601
      %v3623 = vsel %vm3620, %v3601, %v3603
      %v3624 = vsel %vm3620, %v3603, %v3605
      %v3625 = vsel %vm3620, %v3605, %v3607
      %v3626 = vsel %vm3620, %v3609, %v3611
      %v3627 = vsel %vm3620, %v3611, %v3613
      %v3628 = vsel %vm3620, %v3613, %v3615
      %v3629 = vsel %vm3620, %v3615, %v3617
      %v3630 = vsel %vm3620, %v3617, %v3619
      %3641 = vst [vmem:[#allocation4 + $0xf0] sm:$0xff] %v3621
      %3642 = vst [vmem:[#allocation4 + $0xf8] sm:$0xff] %v3622
      %3643 = vst [vmem:[#allocation4 + $0x100] sm:$0xff] %v3623
      %3644 = vst [vmem:[#allocation4 + $0x108] sm:$0xff] %v3624
      %3645 = vst.msk [vmem:[#allocation4 + $0x110] sm:$0xff] %vm231, %v3625
      %3646 = vst [vmem:[#allocation4 + $0x118] sm:$0xff] %v3626
      %3647 = vst [vmem:[#allocation4 + $0x120] sm:$0xff] %v3627
      %3648 = vst [vmem:[#allocation4 + $0x128] sm:$0xff] %v3628
      %3649 = vst [vmem:[#allocation4 + $0x130] sm:$0xff] %v3629
      %3650 = vst.msk [vmem:[#allocation4 + $0x138] sm:$0xff] %vm231, %v3630
      %v3651 = vld [vmem:[#allocation3 + $0x8] sm:$0xff]
      %v3652 = vld [vmem:[#allocation3 + $0x10] sm:$0xff]
      %v3653 = vld [vmem:[#allocation3 + $0x18] sm:$0xff]
      %v3654 = vld [vmem:[#allocation3 + $0x20] sm:$0xff]
      %v3655 = vld [vmem:[#allocation3 + $0x28] sm:$0xff]
      %v3656 = vld [vmem:[#allocation3 + $0x40] sm:$0xff]
      %v3657 = vld [vmem:[#allocation3 + $0x48] sm:$0xff]
      %v3658 = vld [vmem:[#allocation3 + $0x50] sm:$0xff]
      %v3659 = vld [vmem:[#allocation3 + $0x58] sm:$0xff]
      %v3660 = vld [vmem:[#allocation3 + $0x60] sm:$0xff]
      %3661 = vst [vmem:[#allocation4 + $0x140] sm:$0xff] %v3651
      %3662 = vst [vmem:[#allocation4 + $0x148] sm:$0xff] %v3652
      %3663 = vst [vmem:[#allocation4 + $0x150] sm:$0xff] %v3653
      %3664 = vst [vmem:[#allocation4 + $0x158] sm:$0xff] %v3654
      %3665 = vst.msk [vmem:[#allocation4 + $0x160] sm:$0xff] %vm231, %v3655
      %3666 = vst [vmem:[#allocation4 + $0x168] sm:$0xff] %v3656
      %3667 = vst [vmem:[#allocation4 + $0x170] sm:$0xff] %v3657
      %3668 = vst [vmem:[#allocation4 + $0x178] sm:$0xff] %v3658
      %3669 = vst [vmem:[#allocation4 + $0x180] sm:$0xff] %v3659
      %3670 = vst.msk [vmem:[#allocation4 + $0x188] sm:$0xff] %vm231, %v3660
      %v3671 = vld [vmem:[#allocation3 + $0x8] sm:$0xff]
      %v3672 = vld [vmem:[#allocation3 + $0x10] sm:$0xff]
      %v3673 = vld [vmem:[#allocation3 + $0x18] sm:$0xff]
      %v3674 = vld [vmem:[#allocation3 + $0x20] sm:$0xff]
      %v3675 = vld [vmem:[#allocation3 + $0x28] sm:$0xff]
      %v3676 = vld [vmem:[#allocation3 + $0x40] sm:$0xff]
      %v3677 = vld [vmem:[#allocation3 + $0x48] sm:$0xff]
      %v3678 = vld [vmem:[#allocation3 + $0x50] sm:$0xff]
      %v3679 = vld [vmem:[#allocation3 + $0x58] sm:$0xff]
      %v3680 = vld [vmem:[#allocation3 + $0x60] sm:$0xff]
      %3691 = vrot.lane.b32.xlu0 %v3671, 124
      %v3692 = vpop.permute.xlu0 %3691
      %3693 = vrot.lane.b32.xlu0 %v3672, 124
      %v3694 = vpop.permute.xlu0 %3693
      %3695 = vrot.lane.b32.xlu0 %v3673, 124
      %v3696 = vpop.permute.xlu0 %3695
      %3697 = vrot.lane.b32.xlu0 %v3674, 124
      %v3698 = vpop.permute.xlu0 %3697
      %3699 = vrot.lane.b32.xlu0 %v3675, 124
      %v3700 = vpop.permute.xlu0 %3699
      %3701 = vrot.lane.b32.xlu0 %v3676, 124
      %v3702 = vpop.permute.xlu0 %3701
      %3703 = vrot.lane.b32.xlu0 %v3677, 124
      %v3704 = vpop.permute.xlu0 %3703
      %3705 = vrot.lane.b32.xlu0 %v3678, 124
      %v3706 = vpop.permute.xlu0 %3705
      %3707 = vrot.lane.b32.xlu0 %v3679, 124
      %v3708 = vpop.permute.xlu0 %3707
      %3709 = vrot.lane.b32.xlu0 %v3680, 124
      %v3710 = vpop.permute.xlu0 %3709
      %vm3711 = vcmask 1014784
      %v3712 = vsel %vm3711, %v3692, %v3694
      %v3713 = vsel %vm3711, %v3694, %v3696
      %v3714 = vsel %vm3711, %v3696, %v3698
      %v3715 = vsel %vm3711, %v3698, %v3700
      %v3716 = vsel %vm3711, %v3702, %v3704
      %v3717 = vsel %vm3711, %v3704, %v3706
      %v3718 = vsel %vm3711, %v3706, %v3708
      %v3719 = vsel %vm3711, %v3708, %v3710
      %3730 = vst [vmem:[#allocation4 + $0x190] sm:$0xff] %v3712
      %3731 = vst [vmem:[#allocation4 + $0x198] sm:$0xff] %v3713
      %3732 = vst [vmem:[#allocation4 + $0x1a0] sm:$0xff] %v3714
      %3733 = vst [vmem:[#allocation4 + $0x1a8] sm:$0xff] %v3715
      %3734 = vst.msk [vmem:[#allocation4 + $0x1b0] sm:$0xff] %vm231, %v3700
      %3735 = vst [vmem:[#allocation4 + $0x1b8] sm:$0xff] %v3716
      %3736 = vst [vmem:[#allocation4 + $0x1c0] sm:$0xff] %v3717
      %3737 = vst [vmem:[#allocation4 + $0x1c8] sm:$0xff] %v3718
      %3738 = vst [vmem:[#allocation4 + $0x1d0] sm:$0xff] %v3719
      %3739 = vst.msk [vmem:[#allocation4 + $0x1d8] sm:$0xff] %vm231, %v3710
      %v3740 = vld [vmem:[#allocation3 + $0x8] sm:$0xff]
      %v3741 = vld [vmem:[#allocation3 + $0x10] sm:$0xff]
      %v3742 = vld [vmem:[#allocation3 + $0x18] sm:$0xff]
      %v3743 = vld [vmem:[#allocation3 + $0x20] sm:$0xff]
      %v3744 = vld [vmem:[#allocation3 + $0x28] sm:$0xff]
      %v3745 = vld [vmem:[#allocation3 + $0x30] sm:$0xff]
      %v3746 = vld [vmem:[#allocation3 + $0x40] sm:$0xff]
      %v3747 = vld [vmem:[#allocation3 + $0x48] sm:$0xff]
      %v3748 = vld [vmem:[#allocation3 + $0x50] sm:$0xff]
      %v3749 = vld [vmem:[#allocation3 + $0x58] sm:$0xff]
      %v3750 = vld [vmem:[#allocation3 + $0x60] sm:$0xff]
      %v3751 = vld [vmem:[#allocation3 + $0x68] sm:$0xff]
      %3764 = vrot.lane.b32.xlu0 %v3740, 36
      %v3765 = vpop.permute.xlu0 %3764
      %3766 = vrot.lane.b32.xlu0 %v3741, 36
      %v3767 = vpop.permute.xlu0 %3766
      %3768 = vrot.lane.b32.xlu0 %v3742, 36
      %v3769 = vpop.permute.xlu0 %3768
      %3770 = vrot.lane.b32.xlu0 %v3743, 36
      %v3771 = vpop.permute.xlu0 %3770
      %3772 = vrot.lane.b32.xlu0 %v3744, 36
      %v3773 = vpop.permute.xlu0 %3772
      %3774 = vrot.lane.b32.xlu0 %v3745, 36
      %v3775 = vpop.permute.xlu0 %3774
      %3776 = vrot.lane.b32.xlu0 %v3746, 36
      %v3777 = vpop.permute.xlu0 %3776
      %3778 = vrot.lane.b32.xlu0 %v3747, 36
      %v3779 = vpop.permute.xlu0 %3778
      %3780 = vrot.lane.b32.xlu0 %v3748, 36
      %v3781 = vpop.permute.xlu0 %3780
      %3782 = vrot.lane.b32.xlu0 %v3749, 36
      %v3783 = vpop.permute.xlu0 %3782
      %3784 = vrot.lane.b32.xlu0 %v3750, 36
      %v3785 = vpop.permute.xlu0 %3784
      %3786 = vrot.lane.b32.xlu0 %v3751, 36
      %v3787 = vpop.permute.xlu0 %3786
      %vm3788 = vcmask 293888
      %v3789 = vsel %vm3788, %v3765, %v3767
      %v3790 = vsel %vm3788, %v3767, %v3769
      %v3791 = vsel %vm3788, %v3769, %v3771
      %v3792 = vsel %vm3788, %v3771, %v3773
      %v3793 = vsel %vm3788, %v3773, %v3775
      %v3794 = vsel %vm3788, %v3777, %v3779
      %v3795 = vsel %vm3788, %v3779, %v3781
      %v3796 = vsel %vm3788, %v3781, %v3783
      %v3797 = vsel %vm3788, %v3783, %v3785
      %v3798 = vsel %vm3788, %v3785, %v3787
      %3809 = vst [vmem:[#allocation4 + $0x1e0] sm:$0xff] %v3789
      %3810 = vst [vmem:[#allocation4 + $0x1e8] sm:$0xff] %v3790
      %3811 = vst [vmem:[#allocation4 + $0x1f0] sm:$0xff] %v3791
      %3812 = vst [vmem:[#allocation4 + $0x1f8] sm:$0xff] %v3792
      %3813 = vst.msk [vmem:[#allocation4 + $0x200] sm:$0xff] %vm231, %v3793
      %3814 = vst [vmem:[#allocation4 + $0x208] sm:$0xff] %v3794
      %3815 = vst [vmem:[#allocation4 + $0x210] sm:$0xff] %v3795
      %3816 = vst [vmem:[#allocation4 + $0x218] sm:$0xff] %v3796
      %3817 = vst [vmem:[#allocation4 + $0x220] sm:$0xff] %v3797
      %3818 = vst.msk [vmem:[#allocation4 + $0x228] sm:$0xff] %vm231, %v3798
      %v3819 = vld [vmem:[#allocation3 + $0x8] sm:$0xff]
      %v3820 = vld [vmem:[#allocation3 + $0x10] sm:$0xff]
      %v3821 = vld [vmem:[#allocation3 + $0x18] sm:$0xff]
      %v3822 = vld [vmem:[#allocation3 + $0x20] sm:$0xff]
      %v3823 = vld [vmem:[#allocation3 + $0x28] sm:$0xff]
      %v3824 = vld [vmem:[#allocation3 + $0x30] sm:$0xff]
      %v3825 = vld [vmem:[#allocation3 + $0x40] sm:$0xff]
      %v3826 = vld [vmem:[#allocation3 + $0x48] sm:$0xff]
      %v3827 = vld [vmem:[#allocation3 + $0x50] sm:$0xff]
      %v3828 = vld [vmem:[#allocation3 + $0x58] sm:$0xff]
      %v3829 = vld [vmem:[#allocation3 + $0x60] sm:$0xff]
      %v3830 = vld [vmem:[#allocation3 + $0x68] sm:$0xff]
      %3843 = vrot.lane.b32.xlu0 %v3819, 32
      %v3844 = vpop.permute.xlu0 %3843
      %3845 = vrot.lane.b32.xlu0 %v3820, 32
      %v3846 = vpop.permute.xlu0 %3845
      %3847 = vrot.lane.b32.xlu0 %v3821, 32
      %v3848 = vpop.permute.xlu0 %3847
      %3849 = vrot.lane.b32.xlu0 %v3822, 32
      %v3850 = vpop.permute.xlu0 %3849
      %3851 = vrot.lane.b32.xlu0 %v3823, 32
      %v3852 = vpop.permute.xlu0 %3851
      %3853 = vrot.lane.b32.xlu0 %v3824, 32
      %v3854 = vpop.permute.xlu0 %3853
      %3855 = vrot.lane.b32.xlu0 %v3825, 32
      %v3856 = vpop.permute.xlu0 %3855
      %3857 = vrot.lane.b32.xlu0 %v3826, 32
      %v3858 = vpop.permute.xlu0 %3857
      %3859 = vrot.lane.b32.xlu0 %v3827, 32
      %v3860 = vpop.permute.xlu0 %3859
      %3861 = vrot.lane.b32.xlu0 %v3828, 32
      %v3862 = vpop.permute.xlu0 %3861
      %3863 = vrot.lane.b32.xlu0 %v3829, 32
      %v3864 = vpop.permute.xlu0 %3863
      %3865 = vrot.lane.b32.xlu0 %v3830, 32
      %v3866 = vpop.permute.xlu0 %3865
      %vm3867 = vcmask 261120
      %v3868 = vsel %vm3867, %v3844, %v3846
      %v3869 = vsel %vm3867, %v3846, %v3848
      %v3870 = vsel %vm3867, %v3848, %v3850
      %v3871 = vsel %vm3867, %v3850, %v3852
      %v3872 = vsel %vm3867, %v3852, %v3854
      %v3873 = vsel %vm3867, %v3856, %v3858
      %v3874 = vsel %vm3867, %v3858, %v3860
      %v3875 = vsel %vm3867, %v3860, %v3862
      %v3876 = vsel %vm3867, %v3862, %v3864
      %v3877 = vsel %vm3867, %v3864, %v3866
      %3888 = vst [vmem:[#allocation4 + $0x230] sm:$0xff] %v3868
      %3889 = vst [vmem:[#allocation4 + $0x238] sm:$0xff] %v3869
      %3890 = vst [vmem:[#allocation4 + $0x240] sm:$0xff] %v3870
      %3891 = vst [vmem:[#allocation4 + $0x248] sm:$0xff] %v3871
      %3892 = vst.msk [vmem:[#allocation4 + $0x250] sm:$0xff] %vm231, %v3872
      %3893 = vst [vmem:[#allocation4 + $0x258] sm:$0xff] %v3873
      %3894 = vst [vmem:[#allocation4 + $0x260] sm:$0xff] %v3874
      %3895 = vst [vmem:[#allocation4 + $0x268] sm:$0xff] %v3875
      %3896 = vst [vmem:[#allocation4 + $0x270] sm:$0xff] %v3876
      %3897 = vst.msk [vmem:[#allocation4 + $0x278] sm:$0xff] %vm231, %v3877
      %v3898 = vld [vmem:[#allocation3 + $0x8] sm:$0xff]
      %v3899 = vld [vmem:[#allocation3 + $0x10] sm:$0xff]
      %v3900 = vld [vmem:[#allocation3 + $0x18] sm:$0xff]
      %v3901 = vld [vmem:[#allocation3 + $0x20] sm:$0xff]
      %v3902 = vld [vmem:[#allocation3 + $0x28] sm:$0xff]
      %v3903 = vld [vmem:[#allocation3 + $0x30] sm:$0xff]
      %v3904 = vld [vmem:[#allocation3 + $0x40] sm:$0xff]
      %v3905 = vld [vmem:[#allocation3 + $0x48] sm:$0xff]
      %v3906 = vld [vmem:[#allocation3 + $0x50] sm:$0xff]
      %v3907 = vld [vmem:[#allocation3 + $0x58] sm:$0xff]
      %v3908 = vld [vmem:[#allocation3 + $0x60] sm:$0xff]
      %v3909 = vld [vmem:[#allocation3 + $0x68] sm:$0xff]
      %3922 = vrot.lane.b32.xlu0 %v3898, 28
      %v3923 = vpop.permute.xlu0 %3922
      %3924 = vrot.lane.b32.xlu0 %v3899, 28
      %v3925 = vpop.permute.xlu0 %3924
      %3926 = vrot.lane.b32.xlu0 %v3900, 28
      %v3927 = vpop.permute.xlu0 %3926
      %3928 = vrot.lane.b32.xlu0 %v3901, 28
      %v3929 = vpop.permute.xlu0 %3928
      %3930 = vrot.lane.b32.xlu0 %v3902, 28
      %v3931 = vpop.permute.xlu0 %3930
      %3932 = vrot.lane.b32.xlu0 %v3903, 28
      %v3933 = vpop.permute.xlu0 %3932
      %3934 = vrot.lane.b32.xlu0 %v3904, 28
      %v3935 = vpop.permute.xlu0 %3934
      %3936 = vrot.lane.b32.xlu0 %v3905, 28
      %v3937 = vpop.permute.xlu0 %3936
      %3938 = vrot.lane.b32.xlu0 %v3906, 28
      %v3939 = vpop.permute.xlu0 %3938
      %3940 = vrot.lane.b32.xlu0 %v3907, 28
      %v3941 = vpop.permute.xlu0 %3940
      %3942 = vrot.lane.b32.xlu0 %v3908, 28
      %v3943 = vpop.permute.xlu0 %3942
      %3944 = vrot.lane.b32.xlu0 %v3909, 28
      %v3945 = vpop.permute.xlu0 %3944
      %vm3946 = vcmask 228352
      %v3947 = vsel %vm3946, %v3923, %v3925
      %v3948 = vsel %vm3946, %v3925, %v3927
      %v3949 = vsel %vm3946, %v3927, %v3929
      %v3950 = vsel %vm3946, %v3929, %v3931
      %v3951 = vsel %vm3946, %v3931, %v3933
      %v3952 = vsel %vm3946, %v3935, %v3937
      %v3953 = vsel %vm3946, %v3937, %v3939
      %v3954 = vsel %vm3946, %v3939, %v3941
      %v3955 = vsel %vm3946, %v3941, %v3943
      %v3956 = vsel %vm3946, %v3943, %v3945
      %3967 = vst [vmem:[#allocation4 + $0x280] sm:$0xff] %v3947
      %3968 = vst [vmem:[#allocation4 + $0x288] sm:$0xff] %v3948
      %3969 = vst [vmem:[#allocation4 + $0x290] sm:$0xff] %v3949
      %3970 = vst [vmem:[#allocation4 + $0x298] sm:$0xff] %v3950
      %3971 = vst.msk [vmem:[#allocation4 + $0x2a0] sm:$0xff] %vm231, %v3951
      %3972 = vst [vmem:[#allocation4 + $0x2a8] sm:$0xff] %v3952
      %3973 = vst [vmem:[#allocation4 + $0x2b0] sm:$0xff] %v3953
      %3974 = vst [vmem:[#allocation4 + $0x2b8] sm:$0xff] %v3954
      %3975 = vst [vmem:[#allocation4 + $0x2c0] sm:$0xff] %v3955
      %3976 = vst.msk [vmem:[#allocation4 + $0x2c8] sm:$0xff] %vm231, %v3956
      %s3977 = scalar_lea.vmem %s1, 96
      %v3978 = vld [vmem:[%s3977] sm:$0xff]
      %v3979 = vld [vmem:[%s3977 + $0x8] sm:$0xff]
      %v3980 = vld [vmem:[%s3977 + $0x10] sm:$0xff]
      %v3981 = vld [vmem:[%s3977 + $0x18] sm:$0xff]
      %v3982 = vld [vmem:[#allocation4] sm:$0xff]
      %v3983 = vld [vmem:[#allocation4 + $0x8] sm:$0xff]
      %v3984 = vld [vmem:[#allocation4 + $0x10] sm:$0xff]
      %v3985 = vld [vmem:[#allocation4 + $0x18] sm:$0xff]
      %v3986 = vld [vmem:[#allocation4 + $0x20] sm:$0xff]
      %v3987 = vld [vmem:[#allocation4 + $0x28] sm:$0xff]
      %v3988 = vld [vmem:[#allocation4 + $0x30] sm:$0xff]
      %v3989 = vld [vmem:[#allocation4 + $0x38] sm:$0xff]
      %v3990 = vld [vmem:[#allocation4 + $0x40] sm:$0xff]
      %v3991 = vld [vmem:[#allocation4 + $0x48] sm:$0xff]
      %v3992 = vld [vmem:[#allocation4 + $0x50] sm:$0xff]
      %v3993 = vld [vmem:[#allocation4 + $0x58] sm:$0xff]
      %v3994 = vld [vmem:[#allocation4 + $0x60] sm:$0xff]
      %v3995 = vld [vmem:[#allocation4 + $0x68] sm:$0xff]
      %v3996 = vld [vmem:[#allocation4 + $0x70] sm:$0xff]
      %v3997 = vld [vmem:[#allocation4 + $0x78] sm:$0xff]
      %v3998 = vld [vmem:[#allocation4 + $0x80] sm:$0xff]
      %v3999 = vld [vmem:[#allocation4 + $0x88] sm:$0xff]
      %v4000 = vld [vmem:[#allocation4 + $0x90] sm:$0xff]
      %v4001 = vld [vmem:[#allocation4 + $0x98] sm:$0xff]
      %v4002 = vld [vmem:[#allocation4 + $0xa0] sm:$0xff]
      %v4003 = vld [vmem:[#allocation4 + $0xa8] sm:$0xff]
      %v4004 = vld [vmem:[#allocation4 + $0xb0] sm:$0xff]
      %v4005 = vld [vmem:[#allocation4 + $0xb8] sm:$0xff]
      %v4006 = vld [vmem:[#allocation4 + $0xc0] sm:$0xff]
      %v4007 = vld [vmem:[#allocation4 + $0xc8] sm:$0xff]
      %v4008 = vld [vmem:[#allocation4 + $0xd0] sm:$0xff]
      %v4009 = vld [vmem:[#allocation4 + $0xd8] sm:$0xff]
      %v4010 = vld [vmem:[#allocation4 + $0xe0] sm:$0xff]
      %v4011 = vld [vmem:[#allocation4 + $0xe8] sm:$0xff]
      %v4012 = vld [vmem:[#allocation4 + $0xf0] sm:$0xff]
      %v4013 = vld [vmem:[#allocation4 + $0xf8] sm:$0xff]
      %v4014 = vld [vmem:[#allocation4 + $0x100] sm:$0xff]
      %v4015 = vld [vmem:[#allocation4 + $0x108] sm:$0xff]
      %v4016 = vld [vmem:[#allocation4 + $0x110] sm:$0xff]
      %v4017 = vld [vmem:[#allocation4 + $0x118] sm:$0xff]
      %v4018 = vld [vmem:[#allocation4 + $0x120] sm:$0xff]
      %v4019 = vld [vmem:[#allocation4 + $0x128] sm:$0xff]
      %v4020 = vld [vmem:[#allocation4 + $0x130] sm:$0xff]
      %v4021 = vld [vmem:[#allocation4 + $0x138] sm:$0xff]
      %v4022 = vld [vmem:[#allocation4 + $0x140] sm:$0xff]
      %v4023 = vld [vmem:[#allocation4 + $0x148] sm:$0xff]
      %v4024 = vld [vmem:[#allocation4 + $0x150] sm:$0xff]
      %v4025 = vld [vmem:[#allocation4 + $0x158] sm:$0xff]
      %v4026 = vld [vmem:[#allocation4 + $0x160] sm:$0xff]
      %v4027 = vld [vmem:[#allocation4 + $0x168] sm:$0xff]
      %v4028 = vld [vmem:[#allocation4 + $0x170] sm:$0xff]
      %v4029 = vld [vmem:[#allocation4 + $0x178] sm:$0xff]
      %v4030 = vld [vmem:[#allocation4 + $0x180] sm:$0xff]
      %v4031 = vld [vmem:[#allocation4 + $0x188] sm:$0xff]
      %v4032 = vld [vmem:[#allocation4 + $0x190] sm:$0xff]
      %v4033 = vld [vmem:[#allocation4 + $0x198] sm:$0xff]
      %v4034 = vld [vmem:[#allocation4 + $0x1a0] sm:$0xff]
      %v4035 = vld [vmem:[#allocation4 + $0x1a8] sm:$0xff]
      %v4036 = vld [vmem:[#allocation4 + $0x1b0] sm:$0xff]
      %v4037 = vld [vmem:[#allocation4 + $0x1b8] sm:$0xff]
      %v4038 = vld [vmem:[#allocation4 + $0x1c0] sm:$0xff]
      %v4039 = vld [vmem:[#allocation4 + $0x1c8] sm:$0xff]
      %v4040 = vld [vmem:[#allocation4 + $0x1d0] sm:$0xff]
      %v4041 = vld [vmem:[#allocation4 + $0x1d8] sm:$0xff]
      %v4042 = vld [vmem:[#allocation4 + $0x1e0] sm:$0xff]
      %v4043 = vld [vmem:[#allocation4 + $0x1e8] sm:$0xff]
      %v4044 = vld [vmem:[#allocation4 + $0x1f0] sm:$0xff]
      %v4045 = vld [vmem:[#allocation4 + $0x1f8] sm:$0xff]
      %v4046 = vld [vmem:[#allocation4 + $0x200] sm:$0xff]
      %v4047 = vld [vmem:[#allocation4 + $0x208] sm:$0xff]
      %v4048 = vld [vmem:[#allocation4 + $0x210] sm:$0xff]
      %v4049 = vld [vmem:[#allocation4 + $0x218] sm:$0xff]
      %v4050 = vld [vmem:[#allocation4 + $0x220] sm:$0xff]
      %v4051 = vld [vmem:[#allocation4 + $0x228] sm:$0xff]
      %v4052 = vld [vmem:[#allocation4 + $0x230] sm:$0xff]
      %v4053 = vld [vmem:[#allocation4 + $0x238] sm:$0xff]
      %v4054 = vld [vmem:[#allocation4 + $0x240] sm:$0xff]
      %v4055 = vld [vmem:[#allocation4 + $0x248] sm:$0xff]
      %v4056 = vld [vmem:[#allocation4 + $0x250] sm:$0xff]
      %v4057 = vld [vmem:[#allocation4 + $0x258] sm:$0xff]
      %v4058 = vld [vmem:[#allocation4 + $0x260] sm:$0xff]
      %v4059 = vld [vmem:[#allocation4 + $0x268] sm:$0xff]
      %v4060 = vld [vmem:[#allocation4 + $0x270] sm:$0xff]
      %v4061 = vld [vmem:[#allocation4 + $0x278] sm:$0xff]
      %v4062 = vld [vmem:[#allocation4 + $0x280] sm:$0xff]
      %v4063 = vld [vmem:[#allocation4 + $0x288] sm:$0xff]
      %v4064 = vld [vmem:[#allocation4 + $0x290] sm:$0xff]
      %v4065 = vld [vmem:[#allocation4 + $0x298] sm:$0xff]
      %v4066 = vld [vmem:[#allocation4 + $0x2a0] sm:$0xff]
      %v4067 = vld [vmem:[#allocation4 + $0x2a8] sm:$0xff]
      %v4068 = vld [vmem:[#allocation4 + $0x2b0] sm:$0xff]
      %v4069 = vld [vmem:[#allocation4 + $0x2b8] sm:$0xff]
      %v4070 = vld [vmem:[#allocation4 + $0x2c0] sm:$0xff]
      %v4071 = vld [vmem:[#allocation4 + $0x2c8] sm:$0xff]
      %v4073 = vsel %vm1019, %v3979, 0
      %v4076 = vsel %vm1019, %v3981, 0
      %4078 = vmatprep.subr.mxu0 %v3983
      %4079 = vmatpush1.msra.mxu0 %v3982
      %4080 = vmatprep.subr.mxu0 %v3988
      %4081 = vmatpush1.msra.mxu0 %v3987
      %4082 = vmatprep.subr.mxu0 %v3993
      %4083 = vmatpush1.msra.mxu0 %v3992
      %4084 = vmatprep.subr.mxu0 %v3998
      %4085 = vmatpush1.msra.mxu0 %v3997
      %4086 = vmatprep.subr.mxu0 %v4003
      %4087 = vmatpush1.msra.mxu0 %v4002
      %4088 = vmatprep.subr.mxu0 %v4008
      %4089 = vmatpush1.msra.mxu0 %v4007
      %4090 = vmatprep.subr.mxu0 %v4013
      %4091 = vmatpush1.msra.mxu0 %v4012
      %4092 = vmatprep.subr.mxu0 %v4018
      %4093 = vmatpush1.msra.mxu0 %v4017
      %4094 = vmatprep.subr.mxu0 %v4023
      %4095 = vmatpush1.msra.mxu0 %v4022
      %4096 = vmatprep.subr.mxu0 %v4028
      %4097 = vmatpush1.msra.mxu0 %v4027
      %4098 = vmatprep.subr.mxu0 %v4033
      %4099 = vmatpush1.msra.mxu0 %v4032
      %4100 = vmatprep.subr.mxu0 %v4038
      %4101 = vmatpush1.msra.mxu0 %v4037
      %4102 = vmatprep.subr.mxu0 %v4043
      %4103 = vmatpush1.msra.mxu0 %v4042
      %4104 = vmatprep.subr.mxu0 %v4048
      %4105 = vmatpush1.msra.mxu0 %v4047
      %4106 = vmatprep.subr.mxu0 %v4053
      %4107 = vmatpush1.msra.mxu0 %v4052
      %4108 = vmatprep.subr.mxu0 %v4058
      %4109 = vmatpush1.msra.mxu0 %v4057
      %4110 = vmatprep.subr.mxu0 %v4063
      %4111 = vmatpush1.msra.mxu0 %v4062
      %4112 = vmatprep.subr.mxu0 %v4068
      %4113 = vmatpush1.msra.mxu0 %v4067
      %4114 = vmatprep.subr.mxu0 0.0
      %4115 = vmatpush1.msra.mxu0 0.0
      %4116 = vmatprep.subr.mxu0 0.0
      %4117 = vmatpush1.msra.mxu0 0.0
      %4118 = vmatprep.subr.mxu0 0.0
      %4119 = vmatpush1.msra.mxu0 0.0
      %4120 = vmatprep.subr.mxu0 0.0
      %4121 = vmatpush1.msra.mxu0 0.0
      %4122 = vmatprep.subr.mxu0 0.0
      %4123 = vmatpush1.msra.mxu0 0.0
      %4124 = vmatprep.subr.mxu0 0.0
      %4125 = vmatpush1.msra.mxu0 0.0
      %4126 = vmatprep.subr.mxu0 0.0
      %4127 = vmatpush1.msra.mxu0 0.0
      %4128 = vmatprep.subr.mxu0 0.0
      %4129 = vmatpush1.msra.mxu0 0.0
      %4130 = vmatprep.subr.mxu0 0.0
      %4131 = vmatpush1.msra.mxu0 0.0
      %4132 = vmatprep.subr.mxu0 0.0
      %4133 = vmatpush1.msra.mxu0 0.0
      %4134 = vmatprep.subr.mxu0 0.0
      %4135 = vmatpush1.msra.mxu0 0.0
      %4136 = vmatprep.subr.mxu0 0.0
      %4137 = vmatpush1.msra.mxu0 0.0
      %4138 = vmatprep.subr.mxu0 0.0
      %4139 = vmatpush1.msra.mxu0 0.0
      %4140 = vmatprep.subr.mxu0 0.0
      %4141 = vmatpush1.msra.mxu0 0.0
      %4142 = vmatprep.mubr.f32.mxu0 %v4073
      %4143 = vmatmul.mubr.f32.gmra.mrb[0].mxu0 %v3978
      %v4144 = vpop.f32.mrb[0].mxu0
      %v4145 = vadd.f32 0.0, %v4144
      %v4146 = vpop.f32.mrb[0].mxu0
      %v4147 = vadd.f32 0.0, %v4146
      %4148 = vmatprep.mubr.f32.mxu0 %v4076
      %4149 = vmatmul.mubr.f32.gmra.mrb[0].mxu0 %v3980
      %v4150 = vpop.f32.mrb[0].mxu0
      %v4151 = vadd.f32 0.0, %v4150
      %v4152 = vpop.f32.mrb[0].mxu0
      %v4153 = vadd.f32 0.0, %v4152
      %4154 = vdwg.mxu0
      %4155 = vmatprep.subr.mxu0 %v3985
      %4156 = vmatpush1.msra.mxu0 %v3984
      %4157 = vmatprep.subr.mxu0 %v3990
      %4158 = vmatpush1.msra.mxu0 %v3989
      %4159 = vmatprep.subr.mxu0 %v3995
      %4160 = vmatpush1.msra.mxu0 %v3994
      %4161 = vmatprep.subr.mxu0 %v4000
      %4162 = vmatpush1.msra.mxu0 %v3999
      %4163 = vmatprep.subr.mxu0 %v4005
      %4164 = vmatpush1.msra.mxu0 %v4004
      %4165 = vmatprep.subr.mxu0 %v4010
      %4166 = vmatpush1.msra.mxu0 %v4009
      %4167 = vmatprep.subr.mxu0 %v4015
      %4168 = vmatpush1.msra.mxu0 %v4014
      %4169 = vmatprep.subr.mxu0 %v4020
      %4170 = vmatpush1.msra.mxu0 %v4019
      %4171 = vmatprep.subr.mxu0 %v4025
      %4172 = vmatpush1.msra.mxu0 %v4024
      %4173 = vmatprep.subr.mxu0 %v4030
      %4174 = vmatpush1.msra.mxu0 %v4029
      %4175 = vmatprep.subr.mxu0 %v4035
      %4176 = vmatpush1.msra.mxu0 %v4034
      %4177 = vmatprep.subr.mxu0 %v4040
      %4178 = vmatpush1.msra.mxu0 %v4039
      %4179 = vmatprep.subr.mxu0 %v4045
      %4180 = vmatpush1.msra.mxu0 %v4044
      %4181 = vmatprep.subr.mxu0 %v4050
      %4182 = vmatpush1.msra.mxu0 %v4049
      %4183 = vmatprep.subr.mxu0 %v4055
      %4184 = vmatpush1.msra.mxu0 %v4054
      %4185 = vmatprep.subr.mxu0 %v4060
      %4186 = vmatpush1.msra.mxu0 %v4059
      %4187 = vmatprep.subr.mxu0 %v4065
      %4188 = vmatpush1.msra.mxu0 %v4064
      %4189 = vmatprep.subr.mxu0 %v4070
      %4190 = vmatpush1.msra.mxu0 %v4069
      %4191 = vmatprep.subr.mxu0 0.0
      %4192 = vmatpush1.msra.mxu0 0.0
      %4193 = vmatprep.subr.mxu0 0.0
      %4194 = vmatpush1.msra.mxu0 0.0
      %4195 = vmatprep.subr.mxu0 0.0
      %4196 = vmatpush1.msra.mxu0 0.0
      %4197 = vmatprep.subr.mxu0 0.0
      %4198 = vmatpush1.msra.mxu0 0.0
      %4199 = vmatprep.subr.mxu0 0.0
      %4200 = vmatpush1.msra.mxu0 0.0
      %4201 = vmatprep.subr.mxu0 0.0
      %4202 = vmatpush1.msra.mxu0 0.0
      %4203 = vmatprep.subr.mxu0 0.0
      %4204 = vmatpush1.msra.mxu0 0.0
      %4205 = vmatprep.subr.mxu0 0.0
      %4206 = vmatpush1.msra.mxu0 0.0
      %4207 = vmatprep.subr.mxu0 0.0
      %4208 = vmatpush1.msra.mxu0 0.0
      %4209 = vmatprep.subr.mxu0 0.0
      %4210 = vmatpush1.msra.mxu0 0.0
      %4211 = vmatprep.subr.mxu0 0.0
      %4212 = vmatpush1.msra.mxu0 0.0
      %4213 = vmatprep.subr.mxu0 0.0
      %4214 = vmatpush1.msra.mxu0 0.0
      %4215 = vmatprep.subr.mxu0 0.0
      %4216 = vmatpush1.msra.mxu0 0.0
      %4217 = vmatprep.subr.mxu0 0.0
      %4218 = vmatpush1.msra.mxu0 0.0
      %4219 = vmatprep.mubr.f32.mxu0 %v4073
      %4220 = vmatmul.mubr.f32.gmra.mrb[0].mxu0 %v3978
      %v4221 = vpop.f32.mrb[0].mxu0
      %v4222 = vadd.f32 0.0, %v4221
      %v4223 = vpop.f32.mrb[0].mxu0
      %v4224 = vadd.f32 0.0, %v4223
      %4225 = vmatprep.mubr.f32.mxu0 %v4076
      %4226 = vmatmul.mubr.f32.gmra.mrb[0].mxu0 %v3980
      %v4227 = vpop.f32.mrb[0].mxu0
      %v4228 = vadd.f32 0.0, %v4227
      %v4229 = vpop.f32.mrb[0].mxu0
      %v4230 = vadd.f32 0.0, %v4229
      %4231 = vdwg.mxu0
      %4232 = vmatprep.subr.mxu0 0.0
      %4233 = vmatpush1.msra.mxu0 %v3986
      %4234 = vmatprep.subr.mxu0 0.0
      %4235 = vmatpush1.msra.mxu0 %v3991
      %4236 = vmatprep.subr.mxu0 0.0
      %4237 = vmatpush1.msra.mxu0 %v3996
      %4238 = vmatprep.subr.mxu0 0.0
      %4239 = vmatpush1.msra.mxu0 %v4001
      %4240 = vmatprep.subr.mxu0 0.0
      %4241 = vmatpush1.msra.mxu0 %v4006
      %4242 = vmatprep.subr.mxu0 0.0
      %4243 = vmatpush1.msra.mxu0 %v4011
      %4244 = vmatprep.subr.mxu0 0.0
      %4245 = vmatpush1.msra.mxu0 %v4016
      %4246 = vmatprep.subr.mxu0 0.0
      %4247 = vmatpush1.msra.mxu0 %v4021
      %4248 = vmatprep.subr.mxu0 0.0
      %4249 = vmatpush1.msra.mxu0 %v4026
      %4250 = vmatprep.subr.mxu0 0.0
      %4251 = vmatpush1.msra.mxu0 %v4031
      %4252 = vmatprep.subr.mxu0 0.0
      %4253 = vmatpush1.msra.mxu0 %v4036
      %4254 = vmatprep.subr.mxu0 0.0
      %4255 = vmatpush1.msra.mxu0 %v4041
      %4256 = vmatprep.subr.mxu0 0.0
      %4257 = vmatpush1.msra.mxu0 %v4046
      %4258 = vmatprep.subr.mxu0 0.0
      %4259 = vmatpush1.msra.mxu0 %v4051
      %4260 = vmatprep.subr.mxu0 0.0
      %4261 = vmatpush1.msra.mxu0 %v4056
      %4262 = vmatprep.subr.mxu0 0.0
      %4263 = vmatpush1.msra.mxu0 %v4061
      %4264 = vmatprep.subr.mxu0 0.0
      %4265 = vmatpush1.msra.mxu0 %v4066
      %4266 = vmatprep.subr.mxu0 0.0
      %4267 = vmatpush1.msra.mxu0 %v4071
      %4268 = vmatprep.subr.mxu0 0.0
      %4269 = vmatpush1.msra.mxu0 0.0
      %4270 = vmatprep.subr.mxu0 0.0
      %4271 = vmatpush1.msra.mxu0 0.0
      %4272 = vmatprep.subr.mxu0 0.0
      %4273 = vmatpush1.msra.mxu0 0.0
      %4274 = vmatprep.subr.mxu0 0.0
      %4275 = vmatpush1.msra.mxu0 0.0
      %4276 = vmatprep.subr.mxu0 0.0
      %4277 = vmatpush1.msra.mxu0 0.0
      %4278 = vmatprep.subr.mxu0 0.0
      %4279 = vmatpush1.msra.mxu0 0.0
      %4280 = vmatprep.subr.mxu0 0.0
      %4281 = vmatpush1.msra.mxu0 0.0
      %4282 = vmatprep.subr.mxu0 0.0
      %4283 = vmatpush1.msra.mxu0 0.0
      %4284 = vmatprep.subr.mxu0 0.0
      %4285 = vmatpush1.msra.mxu0 0.0
      %4286 = vmatprep.subr.mxu0 0.0
      %4287 = vmatpush1.msra.mxu0 0.0
      %4288 = vmatprep.subr.mxu0 0.0
      %4289 = vmatpush1.msra.mxu0 0.0
      %4290 = vmatprep.subr.mxu0 0.0
      %4291 = vmatpush1.msra.mxu0 0.0
      %4292 = vmatprep.subr.mxu0 0.0
      %4293 = vmatpush1.msra.mxu0 0.0
      %4294 = vmatprep.subr.mxu0 0.0
      %4295 = vmatpush1.msra.mxu0 0.0
      %4296 = vmatprep.mubr.f32.mxu0 %v4073
      %4297 = vmatmul.mubr.f32.gmra.mrb[0].mxu0 %v3978
      %v4298 = vpop.f32.mrb[0].mxu0
      %v4299 = vadd.f32 0.0, %v4298
      %v4300 = vpop.f32.mrb[0].mxu0
      %4301 = vmatprep.mubr.f32.mxu0 %v4076
      %4302 = vmatmul.mubr.f32.gmra.mrb[0].mxu0 %v3980
      %v4303 = vpop.f32.mrb[0].mxu0
      %v4304 = vadd.f32 0.0, %v4303
      %v4305 = vpop.f32.mrb[0].mxu0
      %4306 = vdwg.mxu0
      %s4307 = scalar_lea.vmem %s2, 48
      %v4308 = vld [vmem:[%s4307] sm:$0xff]
      %v4309 = vld [vmem:[%s4307 + $0x8] sm:$0xff]
      %4311 = vset.pattern.permute.xlu0 0
      %4312 = vperm.xlu0 %4311, %v4308
      %v4313 = vpop.permute.xlu0 %4312
      %4316 = vset.pattern.permute.xlu0 0
      %4317 = vperm.xlu0 %4316, %v4309
      %v4318 = vpop.permute.xlu0 %4317
      %v4320 = vmul.f32 %v4145, %v4313
      %v4321 = vmul.f32 %v4147, %v4313
      %v4322 = vmul.f32 %v4222, %v4313
      %v4323 = vmul.f32 %v4224, %v4313
      %v4324 = vmul.f32 %v4299, %v4313
      %v4325 = vmul.f32 %v4151, %v4318
      %v4326 = vmul.f32 %v4153, %v4318
      %v4327 = vmul.f32 %v4228, %v4318
      %v4328 = vmul.f32 %v4230, %v4318
      %v4329 = vmul.f32 %v4304, %v4318
      %s4330 = scalar_lea.vmem %s3, 48
      %v4331 = vld [vmem:[%s4330] sm:$0xff]
      %v4332 = vld [vmem:[%s4330 + $0x8] sm:$0xff]
      %4334 = vset.pattern.permute.xlu0 0
      %4335 = vperm.xlu0 %4334, %v4331
      %v4336 = vpop.permute.xlu0 %4335
      %4339 = vset.pattern.permute.xlu0 0
      %4340 = vperm.xlu0 %4339, %v4332
      %v4341 = vpop.permute.xlu0 %4340
      %v4343 = vadd.f32 %v4320, %v4336
      %v4344 = vadd.f32 %v4321, %v4336
      %v4345 = vadd.f32 %v4322, %v4336
      %v4346 = vadd.f32 %v4323, %v4336
      %v4347 = vadd.f32 %v4324, %v4336
      %v4348 = vadd.f32 %v4325, %v4341
      %v4349 = vadd.f32 %v4326, %v4341
      %v4350 = vadd.f32 %v4327, %v4341
      %v4351 = vadd.f32 %v4328, %v4341
      %v4352 = vadd.f32 %v4329, %v4341
      %v4353 = vmax.f32 %v4343, 0.0
      %v4354 = vmax.f32 %v4344, 0.0
      %v4355 = vmax.f32 %v4345, 0.0
      %v4356 = vmax.f32 %v4346, 0.0
      %v4357 = vmax.f32 %v4347, 0.0
      %v4358 = vmax.f32 %v4348, 0.0
      %v4359 = vmax.f32 %v4349, 0.0
      %v4360 = vmax.f32 %v4350, 0.0
      %v4361 = vmax.f32 %v4351, 0.0
      %v4362 = vmax.f32 %v4352, 0.0
      %v4363 = vsel %vm303, %v4353, 0.0
      %v4364 = vsel %vm304, %v4354, 0.0
      %v4365 = vsel %vm305, %v4355, 0.0
      %v4366 = vsel %vm306, %v4356, 0.0
      %v4367 = vsel %vm307, %v4357, 0.0
      %v4368 = vsel %vm308, %v4358, 0.0
      %v4369 = vsel %vm309, %v4359, 0.0
      %v4370 = vsel %vm310, %v4360, 0.0
      %v4371 = vsel %vm311, %v4361, 0.0
      %v4372 = vsel %vm312, %v4362, 0.0
      %4373 = vst [vmem:[#allocation2 + $0x8] sm:$0xff] %v4363
      %4374 = vst [vmem:[#allocation2 + $0x10] sm:$0xff] %v4364
      %4375 = vst [vmem:[#allocation2 + $0x18] sm:$0xff] %v4365
      %4376 = vst [vmem:[#allocation2 + $0x20] sm:$0xff] %v4366
      %4377 = vst.msk [vmem:[#allocation2 + $0x28] sm:$0xff] %vm231, %v4367
      %4378 = vst [vmem:[#allocation2 + $0x40] sm:$0xff] %v4368
      %4379 = vst [vmem:[#allocation2 + $0x48] sm:$0xff] %v4369
      %4380 = vst [vmem:[#allocation2 + $0x50] sm:$0xff] %v4370
      %4381 = vst [vmem:[#allocation2 + $0x58] sm:$0xff] %v4371
      %4382 = vst.msk [vmem:[#allocation2 + $0x60] sm:$0xff] %vm231, %v4372
      %v4383 = vld [vmem:[#allocation2] sm:$0xff]
      %v4384 = vld [vmem:[#allocation2 + $0x8] sm:$0xff]
      %v4385 = vld [vmem:[#allocation2 + $0x10] sm:$0xff]
      %v4386 = vld [vmem:[#allocation2 + $0x18] sm:$0xff]
      %v4387 = vld [vmem:[#allocation2 + $0x20] sm:$0xff]
      %v4388 = vld [vmem:[#allocation2 + $0x38] sm:$0xff]
      %v4389 = vld [vmem:[#allocation2 + $0x40] sm:$0xff]
      %v4390 = vld [vmem:[#allocation2 + $0x48] sm:$0xff]
      %v4391 = vld [vmem:[#allocation2 + $0x50] sm:$0xff]
      %v4392 = vld [vmem:[#allocation2 + $0x58] sm:$0xff]
      %4403 = vrot.lane.b32.xlu0 %v4383, 75
      %v4404 = vpop.permute.xlu0 %4403
      %4405 = vrot.lane.b32.xlu0 %v4384, 75
      %v4406 = vpop.permute.xlu0 %4405
      %4407 = vrot.lane.b32.xlu0 %v4385, 75
      %v4408 = vpop.permute.xlu0 %4407
      %4409 = vrot.lane.b32.xlu0 %v4386, 75
      %v4410 = vpop.permute.xlu0 %4409
      %4411 = vrot.lane.b32.xlu0 %v4387, 75
      %v4412 = vpop.permute.xlu0 %4411
      %4413 = vrot.lane.b32.xlu0 %v4388, 75
      %v4414 = vpop.permute.xlu0 %4413
      %4415 = vrot.lane.b32.xlu0 %v4389, 75
      %v4416 = vpop.permute.xlu0 %4415
      %4417 = vrot.lane.b32.xlu0 %v4390, 75
      %v4418 = vpop.permute.xlu0 %4417
      %4419 = vrot.lane.b32.xlu0 %v4391, 75
      %v4420 = vpop.permute.xlu0 %4419
      %4421 = vrot.lane.b32.xlu0 %v4392, 75
      %v4422 = vpop.permute.xlu0 %4421
      %v4423 = vsel %vm2387, %v4404, %v4406
      %v4424 = vsel %vm2387, %v4406, %v4408
      %v4425 = vsel %vm2387, %v4408, %v4410
      %v4426 = vsel %vm2387, %v4410, %v4412
      %v4427 = vsel %vm2387, %v4414, %v4416
      %v4428 = vsel %vm2387, %v4416, %v4418
      %v4429 = vsel %vm2387, %v4418, %v4420
      %v4430 = vsel %vm2387, %v4420, %v4422
      %4441 = vst [vmem:[#allocation4] sm:$0xff] %v4423
      %4442 = vst [vmem:[#allocation4 + $0x8] sm:$0xff] %v4424
      %4443 = vst [vmem:[#allocation4 + $0x10] sm:$0xff] %v4425
      %4444 = vst [vmem:[#allocation4 + $0x18] sm:$0xff] %v4426
      %4445 = vst.msk [vmem:[#allocation4 + $0x20] sm:$0xff] %vm231, %v4412
      %4446 = vst [vmem:[#allocation4 + $0x28] sm:$0xff] %v4427
      %4447 = vst [vmem:[#allocation4 + $0x30] sm:$0xff] %v4428
      %4448 = vst [vmem:[#allocation4 + $0x38] sm:$0xff] %v4429
      %4449 = vst [vmem:[#allocation4 + $0x40] sm:$0xff] %v4430
      %4450 = vst.msk [vmem:[#allocation4 + $0x48] sm:$0xff] %vm231, %v4422
      %v4451 = vld [vmem:[#allocation2] sm:$0xff]
      %v4452 = vld [vmem:[#allocation2 + $0x8] sm:$0xff]
      %v4453 = vld [vmem:[#allocation2 + $0x10] sm:$0xff]
      %v4454 = vld [vmem:[#allocation2 + $0x18] sm:$0xff]
      %v4455 = vld [vmem:[#allocation2 + $0x20] sm:$0xff]
      %v4456 = vld [vmem:[#allocation2 + $0x38] sm:$0xff]
      %v4457 = vld [vmem:[#allocation2 + $0x40] sm:$0xff]
      %v4458 = vld [vmem:[#allocation2 + $0x48] sm:$0xff]
      %v4459 = vld [vmem:[#allocation2 + $0x50] sm:$0xff]
      %v4460 = vld [vmem:[#allocation2 + $0x58] sm:$0xff]
      %4471 = vrot.lane.b32.xlu0 %v4451, 72
      %v4472 = vpop.permute.xlu0 %4471
      %4473 = vrot.lane.b32.xlu0 %v4452, 72
      %v4474 = vpop.permute.xlu0 %4473
      %4475 = vrot.lane.b32.xlu0 %v4453, 72
      %v4476 = vpop.permute.xlu0 %4475
      %4477 = vrot.lane.b32.xlu0 %v4454, 72
      %v4478 = vpop.permute.xlu0 %4477
      %4479 = vrot.lane.b32.xlu0 %v4455, 72
      %v4480 = vpop.permute.xlu0 %4479
      %4481 = vrot.lane.b32.xlu0 %v4456, 72
      %v4482 = vpop.permute.xlu0 %4481
      %4483 = vrot.lane.b32.xlu0 %v4457, 72
      %v4484 = vpop.permute.xlu0 %4483
      %4485 = vrot.lane.b32.xlu0 %v4458, 72
      %v4486 = vpop.permute.xlu0 %4485
      %4487 = vrot.lane.b32.xlu0 %v4459, 72
      %v4488 = vpop.permute.xlu0 %4487
      %4489 = vrot.lane.b32.xlu0 %v4460, 72
      %v4490 = vpop.permute.xlu0 %4489
      %v4491 = vsel %vm2456, %v4472, %v4474
      %v4492 = vsel %vm2456, %v4474, %v4476
      %v4493 = vsel %vm2456, %v4476, %v4478
      %v4494 = vsel %vm2456, %v4478, %v4480
      %v4495 = vsel %vm2456, %v4482, %v4484
      %v4496 = vsel %vm2456, %v4484, %v4486
      %v4497 = vsel %vm2456, %v4486, %v4488
      %v4498 = vsel %vm2456, %v4488, %v4490
      %4509 = vst [vmem:[#allocation4 + $0x50] sm:$0xff] %v4491
      %4510 = vst [vmem:[#allocation4 + $0x58] sm:$0xff] %v4492
      %4511 = vst [vmem:[#allocation4 + $0x60] sm:$0xff] %v4493
      %4512 = vst [vmem:[#allocation4 + $0x68] sm:$0xff] %v4494
      %4513 = vst.msk [vmem:[#allocation4 + $0x70] sm:$0xff] %vm231, %v4480
      %4514 = vst [vmem:[#allocation4 + $0x78] sm:$0xff] %v4495
      %4515 = vst [vmem:[#allocation4 + $0x80] sm:$0xff] %v4496
      %4516 = vst [vmem:[#allocation4 + $0x88] sm:$0xff] %v4497
      %4517 = vst [vmem:[#allocation4 + $0x90] sm:$0xff] %v4498
      %4518 = vst.msk [vmem:[#allocation4 + $0x98] sm:$0xff] %vm231, %v4490
      %v4519 = vld [vmem:[#allocation2] sm:$0xff]
      %v4520 = vld [vmem:[#allocation2 + $0x8] sm:$0xff]
      %v4521 = vld [vmem:[#allocation2 + $0x10] sm:$0xff]
      %v4522 = vld [vmem:[#allocation2 + $0x18] sm:$0xff]
      %v4523 = vld [vmem:[#allocation2 + $0x20] sm:$0xff]
      %v4524 = vld [vmem:[#allocation2 + $0x38] sm:$0xff]
      %v4525 = vld [vmem:[#allocation2 + $0x40] sm:$0xff]
      %v4526 = vld [vmem:[#allocation2 + $0x48] sm:$0xff]
      %v4527 = vld [vmem:[#allocation2 + $0x50] sm:$0xff]
      %v4528 = vld [vmem:[#allocation2 + $0x58] sm:$0xff]
      %4539 = vrot.lane.b32.xlu0 %v4519, 69
      %v4540 = vpop.permute.xlu0 %4539
      %4541 = vrot.lane.b32.xlu0 %v4520, 69
      %v4542 = vpop.permute.xlu0 %4541
      %4543 = vrot.lane.b32.xlu0 %v4521, 69
      %v4544 = vpop.permute.xlu0 %4543
      %4545 = vrot.lane.b32.xlu0 %v4522, 69
      %v4546 = vpop.permute.xlu0 %4545
      %4547 = vrot.lane.b32.xlu0 %v4523, 69
      %v4548 = vpop.permute.xlu0 %4547
      %4549 = vrot.lane.b32.xlu0 %v4524, 69
      %v4550 = vpop.permute.xlu0 %4549
      %4551 = vrot.lane.b32.xlu0 %v4525, 69
      %v4552 = vpop.permute.xlu0 %4551
      %4553 = vrot.lane.b32.xlu0 %v4526, 69
      %v4554 = vpop.permute.xlu0 %4553
      %4555 = vrot.lane.b32.xlu0 %v4527, 69
      %v4556 = vpop.permute.xlu0 %4555
      %4557 = vrot.lane.b32.xlu0 %v4528, 69
      %v4558 = vpop.permute.xlu0 %4557
      %v4559 = vsel %vm2525, %v4540, %v4542
      %v4560 = vsel %vm2525, %v4542, %v4544
      %v4561 = vsel %vm2525, %v4544, %v4546
      %v4562 = vsel %vm2525, %v4546, %v4548
      %v4563 = vsel %vm2525, %v4550, %v4552
      %v4564 = vsel %vm2525, %v4552, %v4554
      %v4565 = vsel %vm2525, %v4554, %v4556
      %v4566 = vsel %vm2525, %v4556, %v4558
      %4577 = vst [vmem:[#allocation4 + $0xa0] sm:$0xff] %v4559
      %4578 = vst [vmem:[#allocation4 + $0xa8] sm:$0xff] %v4560
      %4579 = vst [vmem:[#allocation4 + $0xb0] sm:$0xff] %v4561
      %4580 = vst [vmem:[#allocation4 + $0xb8] sm:$0xff] %v4562
      %4581 = vst.msk [vmem:[#allocation4 + $0xc0] sm:$0xff] %vm231, %v4548
      %4582 = vst [vmem:[#allocation4 + $0xc8] sm:$0xff] %v4563
      %4583 = vst [vmem:[#allocation4 + $0xd0] sm:$0xff] %v4564
      %4584 = vst [vmem:[#allocation4 + $0xd8] sm:$0xff] %v4565
      %4585 = vst [vmem:[#allocation4 + $0xe0] sm:$0xff] %v4566
      %4586 = vst.msk [vmem:[#allocation4 + $0xe8] sm:$0xff] %vm231, %v4558
      %v4587 = vld [vmem:[#allocation2] sm:$0xff]
      %v4588 = vld [vmem:[#allocation2 + $0x8] sm:$0xff]
      %v4589 = vld [vmem:[#allocation2 + $0x10] sm:$0xff]
      %v4590 = vld [vmem:[#allocation2 + $0x18] sm:$0xff]
      %v4591 = vld [vmem:[#allocation2 + $0x20] sm:$0xff]
      %v4592 = vld [vmem:[#allocation2 + $0x28] sm:$0xff]
      %v4593 = vld [vmem:[#allocation2 + $0x38] sm:$0xff]
      %v4594 = vld [vmem:[#allocation2 + $0x40] sm:$0xff]
      %v4595 = vld [vmem:[#allocation2 + $0x48] sm:$0xff]
      %v4596 = vld [vmem:[#allocation2 + $0x50] sm:$0xff]
      %v4597 = vld [vmem:[#allocation2 + $0x58] sm:$0xff]
      %v4598 = vld [vmem:[#allocation2 + $0x60] sm:$0xff]
      %4611 = vrot.lane.b32.xlu0 %v4587, 3
      %v4612 = vpop.permute.xlu0 %4611
      %4613 = vrot.lane.b32.xlu0 %v4588, 3
      %v4614 = vpop.permute.xlu0 %4613
      %4615 = vrot.lane.b32.xlu0 %v4589, 3
      %v4616 = vpop.permute.xlu0 %4615
      %4617 = vrot.lane.b32.xlu0 %v4590, 3
      %v4618 = vpop.permute.xlu0 %4617
      %4619 = vrot.lane.b32.xlu0 %v4591, 3
      %v4620 = vpop.permute.xlu0 %4619
      %4621 = vrot.lane.b32.xlu0 %v4592, 3
      %v4622 = vpop.permute.xlu0 %4621
      %4623 = vrot.lane.b32.xlu0 %v4593, 3
      %v4624 = vpop.permute.xlu0 %4623
      %4625 = vrot.lane.b32.xlu0 %v4594, 3
      %v4626 = vpop.permute.xlu0 %4625
      %4627 = vrot.lane.b32.xlu0 %v4595, 3
      %v4628 = vpop.permute.xlu0 %4627
      %4629 = vrot.lane.b32.xlu0 %v4596, 3
      %v4630 = vpop.permute.xlu0 %4629
      %4631 = vrot.lane.b32.xlu0 %v4597, 3
      %v4632 = vpop.permute.xlu0 %4631
      %4633 = vrot.lane.b32.xlu0 %v4598, 3
      %v4634 = vpop.permute.xlu0 %4633
      %v4635 = vsel %vm2602, %v4612, %v4614
      %v4636 = vsel %vm2602, %v4614, %v4616
      %v4637 = vsel %vm2602, %v4616, %v4618
      %v4638 = vsel %vm2602, %v4618, %v4620
      %v4639 = vsel %vm2602, %v4620, %v4622
      %v4640 = vsel %vm2602, %v4624, %v4626
      %v4641 = vsel %vm2602, %v4626, %v4628
      %v4642 = vsel %vm2602, %v4628, %v4630
      %v4643 = vsel %vm2602, %v4630, %v4632
      %v4644 = vsel %vm2602, %v4632, %v4634
      %4655 = vst [vmem:[#allocation4 + $0xf0] sm:$0xff] %v4635
      %4656 = vst [vmem:[#allocation4 + $0xf8] sm:$0xff] %v4636
      %4657 = vst [vmem:[#allocation4 + $0x100] sm:$0xff] %v4637
      %4658 = vst [vmem:[#allocation4 + $0x108] sm:$0xff] %v4638
      %4659 = vst.msk [vmem:[#allocation4 + $0x110] sm:$0xff] %vm231, %v4639
      %4660 = vst [vmem:[#allocation4 + $0x118] sm:$0xff] %v4640
      %4661 = vst [vmem:[#allocation4 + $0x120] sm:$0xff] %v4641
      %4662 = vst [vmem:[#allocation4 + $0x128] sm:$0xff] %v4642
      %4663 = vst [vmem:[#allocation4 + $0x130] sm:$0xff] %v4643
      %4664 = vst.msk [vmem:[#allocation4 + $0x138] sm:$0xff] %vm231, %v4644
      %v4665 = vld [vmem:[#allocation2 + $0x8] sm:$0xff]
      %v4666 = vld [vmem:[#allocation2 + $0x10] sm:$0xff]
      %v4667 = vld [vmem:[#allocation2 + $0x18] sm:$0xff]
      %v4668 = vld [vmem:[#allocation2 + $0x20] sm:$0xff]
      %v4669 = vld [vmem:[#allocation2 + $0x28] sm:$0xff]
      %v4670 = vld [vmem:[#allocation2 + $0x40] sm:$0xff]
      %v4671 = vld [vmem:[#allocation2 + $0x48] sm:$0xff]
      %v4672 = vld [vmem:[#allocation2 + $0x50] sm:$0xff]
      %v4673 = vld [vmem:[#allocation2 + $0x58] sm:$0xff]
      %v4674 = vld [vmem:[#allocation2 + $0x60] sm:$0xff]
      %4675 = vst [vmem:[#allocation4 + $0x140] sm:$0xff] %v4665
      %4676 = vst [vmem:[#allocation4 + $0x148] sm:$0xff] %v4666
      %4677 = vst [vmem:[#allocation4 + $0x150] sm:$0xff] %v4667
      %4678 = vst [vmem:[#allocation4 + $0x158] sm:$0xff] %v4668
      %4679 = vst.msk [vmem:[#allocation4 + $0x160] sm:$0xff] %vm231, %v4669
      %4680 = vst [vmem:[#allocation4 + $0x168] sm:$0xff] %v4670
      %4681 = vst [vmem:[#allocation4 + $0x170] sm:$0xff] %v4671
      %4682 = vst [vmem:[#allocation4 + $0x178] sm:$0xff] %v4672
      %4683 = vst [vmem:[#allocation4 + $0x180] sm:$0xff] %v4673
      %4684 = vst.msk [vmem:[#allocation4 + $0x188] sm:$0xff] %vm231, %v4674
      %v4685 = vld [vmem:[#allocation2 + $0x8] sm:$0xff]
      %v4686 = vld [vmem:[#allocation2 + $0x10] sm:$0xff]
      %v4687 = vld [vmem:[#allocation2 + $0x18] sm:$0xff]
      %v4688 = vld [vmem:[#allocation2 + $0x20] sm:$0xff]
      %v4689 = vld [vmem:[#allocation2 + $0x28] sm:$0xff]
      %v4690 = vld [vmem:[#allocation2 + $0x40] sm:$0xff]
      %v4691 = vld [vmem:[#allocation2 + $0x48] sm:$0xff]
      %v4692 = vld [vmem:[#allocation2 + $0x50] sm:$0xff]
      %v4693 = vld [vmem:[#allocation2 + $0x58] sm:$0xff]
      %v4694 = vld [vmem:[#allocation2 + $0x60] sm:$0xff]
      %4705 = vrot.lane.b32.xlu0 %v4685, 125
      %v4706 = vpop.permute.xlu0 %4705
      %4707 = vrot.lane.b32.xlu0 %v4686, 125
      %v4708 = vpop.permute.xlu0 %4707
      %4709 = vrot.lane.b32.xlu0 %v4687, 125
      %v4710 = vpop.permute.xlu0 %4709
      %4711 = vrot.lane.b32.xlu0 %v4688, 125
      %v4712 = vpop.permute.xlu0 %4711
      %4713 = vrot.lane.b32.xlu0 %v4689, 125
      %v4714 = vpop.permute.xlu0 %4713
      %4715 = vrot.lane.b32.xlu0 %v4690, 125
      %v4716 = vpop.permute.xlu0 %4715
      %4717 = vrot.lane.b32.xlu0 %v4691, 125
      %v4718 = vpop.permute.xlu0 %4717
      %4719 = vrot.lane.b32.xlu0 %v4692, 125
      %v4720 = vpop.permute.xlu0 %4719
      %4721 = vrot.lane.b32.xlu0 %v4693, 125
      %v4722 = vpop.permute.xlu0 %4721
      %4723 = vrot.lane.b32.xlu0 %v4694, 125
      %v4724 = vpop.permute.xlu0 %4723
      %v4725 = vsel %vm2693, %v4706, %v4708
      %v4726 = vsel %vm2693, %v4708, %v4710
      %v4727 = vsel %vm2693, %v4710, %v4712
      %v4728 = vsel %vm2693, %v4712, %v4714
      %v4729 = vsel %vm2693, %v4716, %v4718
      %v4730 = vsel %vm2693, %v4718, %v4720
      %v4731 = vsel %vm2693, %v4720, %v4722
      %v4732 = vsel %vm2693, %v4722, %v4724
      %4743 = vst [vmem:[#allocation4 + $0x190] sm:$0xff] %v4725
      %4744 = vst [vmem:[#allocation4 + $0x198] sm:$0xff] %v4726
      %4745 = vst [vmem:[#allocation4 + $0x1a0] sm:$0xff] %v4727
      %4746 = vst [vmem:[#allocation4 + $0x1a8] sm:$0xff] %v4728
      %4747 = vst.msk [vmem:[#allocation4 + $0x1b0] sm:$0xff] %vm231, %v4714
      %4748 = vst [vmem:[#allocation4 + $0x1b8] sm:$0xff] %v4729
      %4749 = vst [vmem:[#allocation4 + $0x1c0] sm:$0xff] %v4730
      %4750 = vst [vmem:[#allocation4 + $0x1c8] sm:$0xff] %v4731
      %4751 = vst [vmem:[#allocation4 + $0x1d0] sm:$0xff] %v4732
      %4752 = vst.msk [vmem:[#allocation4 + $0x1d8] sm:$0xff] %vm231, %v4724
      %v4753 = vld [vmem:[#allocation2 + $0x8] sm:$0xff]
      %v4754 = vld [vmem:[#allocation2 + $0x10] sm:$0xff]
      %v4755 = vld [vmem:[#allocation2 + $0x18] sm:$0xff]
      %v4756 = vld [vmem:[#allocation2 + $0x20] sm:$0xff]
      %v4757 = vld [vmem:[#allocation2 + $0x28] sm:$0xff]
      %v4758 = vld [vmem:[#allocation2 + $0x30] sm:$0xff]
      %v4759 = vld [vmem:[#allocation2 + $0x40] sm:$0xff]
      %v4760 = vld [vmem:[#allocation2 + $0x48] sm:$0xff]
      %v4761 = vld [vmem:[#allocation2 + $0x50] sm:$0xff]
      %v4762 = vld [vmem:[#allocation2 + $0x58] sm:$0xff]
      %v4763 = vld [vmem:[#allocation2 + $0x60] sm:$0xff]
      %v4764 = vld [vmem:[#allocation2 + $0x68] sm:$0xff]
      %4777 = vrot.lane.b32.xlu0 %v4753, 59
      %v4778 = vpop.permute.xlu0 %4777
      %4779 = vrot.lane.b32.xlu0 %v4754, 59
      %v4780 = vpop.permute.xlu0 %4779
      %4781 = vrot.lane.b32.xlu0 %v4755, 59
      %v4782 = vpop.permute.xlu0 %4781
      %4783 = vrot.lane.b32.xlu0 %v4756, 59
      %v4784 = vpop.permute.xlu0 %4783
      %4785 = vrot.lane.b32.xlu0 %v4757, 59
      %v4786 = vpop.permute.xlu0 %4785
      %4787 = vrot.lane.b32.xlu0 %v4758, 59
      %v4788 = vpop.permute.xlu0 %4787
      %4789 = vrot.lane.b32.xlu0 %v4759, 59
      %v4790 = vpop.permute.xlu0 %4789
      %4791 = vrot.lane.b32.xlu0 %v4760, 59
      %v4792 = vpop.permute.xlu0 %4791
      %4793 = vrot.lane.b32.xlu0 %v4761, 59
      %v4794 = vpop.permute.xlu0 %4793
      %4795 = vrot.lane.b32.xlu0 %v4762, 59
      %v4796 = vpop.permute.xlu0 %4795
      %4797 = vrot.lane.b32.xlu0 %v4763, 59
      %v4798 = vpop.permute.xlu0 %4797
      %4799 = vrot.lane.b32.xlu0 %v4764, 59
      %v4800 = vpop.permute.xlu0 %4799
      %v4801 = vsel %vm2770, %v4778, %v4780
      %v4802 = vsel %vm2770, %v4780, %v4782
      %v4803 = vsel %vm2770, %v4782, %v4784
      %v4804 = vsel %vm2770, %v4784, %v4786
      %v4805 = vsel %vm2770, %v4786, %v4788
      %v4806 = vsel %vm2770, %v4790, %v4792
      %v4807 = vsel %vm2770, %v4792, %v4794
      %v4808 = vsel %vm2770, %v4794, %v4796
      %v4809 = vsel %vm2770, %v4796, %v4798
      %v4810 = vsel %vm2770, %v4798, %v4800
      %4821 = vst [vmem:[#allocation4 + $0x1e0] sm:$0xff] %v4801
      %4822 = vst [vmem:[#allocation4 + $0x1e8] sm:$0xff] %v4802
      %4823 = vst [vmem:[#allocation4 + $0x1f0] sm:$0xff] %v4803
      %4824 = vst [vmem:[#allocation4 + $0x1f8] sm:$0xff] %v4804
      %4825 = vst.msk [vmem:[#allocation4 + $0x200] sm:$0xff] %vm231, %v4805
      %4826 = vst [vmem:[#allocation4 + $0x208] sm:$0xff] %v4806
      %4827 = vst [vmem:[#allocation4 + $0x210] sm:$0xff] %v4807
      %4828 = vst [vmem:[#allocation4 + $0x218] sm:$0xff] %v4808
      %4829 = vst [vmem:[#allocation4 + $0x220] sm:$0xff] %v4809
      %4830 = vst.msk [vmem:[#allocation4 + $0x228] sm:$0xff] %vm231, %v4810
      %v4831 = vld [vmem:[#allocation2 + $0x8] sm:$0xff]
      %v4832 = vld [vmem:[#allocation2 + $0x10] sm:$0xff]
      %v4833 = vld [vmem:[#allocation2 + $0x18] sm:$0xff]
      %v4834 = vld [vmem:[#allocation2 + $0x20] sm:$0xff]
      %v4835 = vld [vmem:[#allocation2 + $0x28] sm:$0xff]
      %v4836 = vld [vmem:[#allocation2 + $0x30] sm:$0xff]
      %v4837 = vld [vmem:[#allocation2 + $0x40] sm:$0xff]
      %v4838 = vld [vmem:[#allocation2 + $0x48] sm:$0xff]
      %v4839 = vld [vmem:[#allocation2 + $0x50] sm:$0xff]
      %v4840 = vld [vmem:[#allocation2 + $0x58] sm:$0xff]
      %v4841 = vld [vmem:[#allocation2 + $0x60] sm:$0xff]
      %v4842 = vld [vmem:[#allocation2 + $0x68] sm:$0xff]
      %4855 = vrot.lane.b32.xlu0 %v4831, 56
      %v4856 = vpop.permute.xlu0 %4855
      %4857 = vrot.lane.b32.xlu0 %v4832, 56
      %v4858 = vpop.permute.xlu0 %4857
      %4859 = vrot.lane.b32.xlu0 %v4833, 56
      %v4860 = vpop.permute.xlu0 %4859
      %4861 = vrot.lane.b32.xlu0 %v4834, 56
      %v4862 = vpop.permute.xlu0 %4861
      %4863 = vrot.lane.b32.xlu0 %v4835, 56
      %v4864 = vpop.permute.xlu0 %4863
      %4865 = vrot.lane.b32.xlu0 %v4836, 56
      %v4866 = vpop.permute.xlu0 %4865
      %4867 = vrot.lane.b32.xlu0 %v4837, 56
      %v4868 = vpop.permute.xlu0 %4867
      %4869 = vrot.lane.b32.xlu0 %v4838, 56
      %v4870 = vpop.permute.xlu0 %4869
      %4871 = vrot.lane.b32.xlu0 %v4839, 56
      %v4872 = vpop.permute.xlu0 %4871
      %4873 = vrot.lane.b32.xlu0 %v4840, 56
      %v4874 = vpop.permute.xlu0 %4873
      %4875 = vrot.lane.b32.xlu0 %v4841, 56
      %v4876 = vpop.permute.xlu0 %4875
      %4877 = vrot.lane.b32.xlu0 %v4842, 56
      %v4878 = vpop.permute.xlu0 %4877
      %v4879 = vsel %vm2849, %v4856, %v4858
      %v4880 = vsel %vm2849, %v4858, %v4860
      %v4881 = vsel %vm2849, %v4860, %v4862
      %v4882 = vsel %vm2849, %v4862, %v4864
      %v4883 = vsel %vm2849, %v4864, %v4866
      %v4884 = vsel %vm2849, %v4868, %v4870
      %v4885 = vsel %vm2849, %v4870, %v4872
      %v4886 = vsel %vm2849, %v4872, %v4874
      %v4887 = vsel %vm2849, %v4874, %v4876
      %v4888 = vsel %vm2849, %v4876, %v4878
      %4899 = vst [vmem:[#allocation4 + $0x230] sm:$0xff] %v4879
      %4900 = vst [vmem:[#allocation4 + $0x238] sm:$0xff] %v4880
      %4901 = vst [vmem:[#allocation4 + $0x240] sm:$0xff] %v4881
      %4902 = vst [vmem:[#allocation4 + $0x248] sm:$0xff] %v4882
      %4903 = vst.msk [vmem:[#allocation4 + $0x250] sm:$0xff] %vm231, %v4883
      %4904 = vst [vmem:[#allocation4 + $0x258] sm:$0xff] %v4884
      %4905 = vst [vmem:[#allocation4 + $0x260] sm:$0xff] %v4885
      %4906 = vst [vmem:[#allocation4 + $0x268] sm:$0xff] %v4886
      %4907 = vst [vmem:[#allocation4 + $0x270] sm:$0xff] %v4887
      %4908 = vst.msk [vmem:[#allocation4 + $0x278] sm:$0xff] %vm231, %v4888
      %v4909 = vld [vmem:[#allocation2 + $0x8] sm:$0xff]
      %v4910 = vld [vmem:[#allocation2 + $0x10] sm:$0xff]
      %v4911 = vld [vmem:[#allocation2 + $0x18] sm:$0xff]
      %v4912 = vld [vmem:[#allocation2 + $0x20] sm:$0xff]
      %v4913 = vld [vmem:[#allocation2 + $0x28] sm:$0xff]
      %v4914 = vld [vmem:[#allocation2 + $0x30] sm:$0xff]
      %v4915 = vld [vmem:[#allocation2 + $0x40] sm:$0xff]
      %v4916 = vld [vmem:[#allocation2 + $0x48] sm:$0xff]
      %v4917 = vld [vmem:[#allocation2 + $0x50] sm:$0xff]
      %v4918 = vld [vmem:[#allocation2 + $0x58] sm:$0xff]
      %v4919 = vld [vmem:[#allocation2 + $0x60] sm:$0xff]
      %v4920 = vld [vmem:[#allocation2 + $0x68] sm:$0xff]
      %4933 = vrot.lane.b32.xlu0 %v4909, 53
      %v4934 = vpop.permute.xlu0 %4933
      %4935 = vrot.lane.b32.xlu0 %v4910, 53
      %v4936 = vpop.permute.xlu0 %4935
      %4937 = vrot.lane.b32.xlu0 %v4911, 53
      %v4938 = vpop.permute.xlu0 %4937
      %4939 = vrot.lane.b32.xlu0 %v4912, 53
      %v4940 = vpop.permute.xlu0 %4939
      %4941 = vrot.lane.b32.xlu0 %v4913, 53
      %v4942 = vpop.permute.xlu0 %4941
      %4943 = vrot.lane.b32.xlu0 %v4914, 53
      %v4944 = vpop.permute.xlu0 %4943
      %4945 = vrot.lane.b32.xlu0 %v4915, 53
      %v4946 = vpop.permute.xlu0 %4945
      %4947 = vrot.lane.b32.xlu0 %v4916, 53
      %v4948 = vpop.permute.xlu0 %4947
      %4949 = vrot.lane.b32.xlu0 %v4917, 53
      %v4950 = vpop.permute.xlu0 %4949
      %4951 = vrot.lane.b32.xlu0 %v4918, 53
      %v4952 = vpop.permute.xlu0 %4951
      %4953 = vrot.lane.b32.xlu0 %v4919, 53
      %v4954 = vpop.permute.xlu0 %4953
      %4955 = vrot.lane.b32.xlu0 %v4920, 53
      %v4956 = vpop.permute.xlu0 %4955
      %v4957 = vsel %vm2928, %v4934, %v4936
      %v4958 = vsel %vm2928, %v4936, %v4938
      %v4959 = vsel %vm2928, %v4938, %v4940
      %v4960 = vsel %vm2928, %v4940, %v4942
      %v4961 = vsel %vm2928, %v4942, %v4944
      %v4962 = vsel %vm2928, %v4946, %v4948
      %v4963 = vsel %vm2928, %v4948, %v4950
      %v4964 = vsel %vm2928, %v4950, %v4952
      %v4965 = vsel %vm2928, %v4952, %v4954
      %v4966 = vsel %vm2928, %v4954, %v4956
      %4977 = vst [vmem:[#allocation4 + $0x280] sm:$0xff] %v4957
      %4978 = vst [vmem:[#allocation4 + $0x288] sm:$0xff] %v4958
      %4979 = vst [vmem:[#allocation4 + $0x290] sm:$0xff] %v4959
      %4980 = vst [vmem:[#allocation4 + $0x298] sm:$0xff] %v4960
      %4981 = vst.msk [vmem:[#allocation4 + $0x2a0] sm:$0xff] %vm231, %v4961
      %4982 = vst [vmem:[#allocation4 + $0x2a8] sm:$0xff] %v4962
      %4983 = vst [vmem:[#allocation4 + $0x2b0] sm:$0xff] %v4963
      %4984 = vst [vmem:[#allocation4 + $0x2b8] sm:$0xff] %v4964
      %4985 = vst [vmem:[#allocation4 + $0x2c0] sm:$0xff] %v4965
      %4986 = vst.msk [vmem:[#allocation4 + $0x2c8] sm:$0xff] %vm231, %v4966
      %s4987 = scalar_lea.vmem %s1, 128
      %v4988 = vld [vmem:[%s4987] sm:$0xff]
      %v4989 = vld [vmem:[%s4987 + $0x8] sm:$0xff]
      %v4990 = vld [vmem:[%s4987 + $0x10] sm:$0xff]
      %v4991 = vld [vmem:[%s4987 + $0x18] sm:$0xff]
      %v4992 = vld [vmem:[#allocation4] sm:$0xff]
      %v4993 = vld [vmem:[#allocation4 + $0x8] sm:$0xff]
      %v4994 = vld [vmem:[#allocation4 + $0x10] sm:$0xff]
      %v4995 = vld [vmem:[#allocation4 + $0x18] sm:$0xff]
      %v4996 = vld [vmem:[#allocation4 + $0x20] sm:$0xff]
      %v4997 = vld [vmem:[#allocation4 + $0x28] sm:$0xff]
      %v4998 = vld [vmem:[#allocation4 + $0x30] sm:$0xff]
      %v4999 = vld [vmem:[#allocation4 + $0x38] sm:$0xff]
      %v5000 = vld [vmem:[#allocation4 + $0x40] sm:$0xff]
      %v5001 = vld [vmem:[#allocation4 + $0x48] sm:$0xff]
      %v5002 = vld [vmem:[#allocation4 + $0x50] sm:$0xff]
      %v5003 = vld [vmem:[#allocation4 + $0x58] sm:$0xff]
      %v5004 = vld [vmem:[#allocation4 + $0x60] sm:$0xff]
      %v5005 = vld [vmem:[#allocation4 + $0x68] sm:$0xff]
      %v5006 = vld [vmem:[#allocation4 + $0x70] sm:$0xff]
      %v5007 = vld [vmem:[#allocation4 + $0x78] sm:$0xff]
      %v5008 = vld [vmem:[#allocation4 + $0x80] sm:$0xff]
      %v5009 = vld [vmem:[#allocation4 + $0x88] sm:$0xff]
      %v5010 = vld [vmem:[#allocation4 + $0x90] sm:$0xff]
      %v5011 = vld [vmem:[#allocation4 + $0x98] sm:$0xff]
      %v5012 = vld [vmem:[#allocation4 + $0xa0] sm:$0xff]
      %v5013 = vld [vmem:[#allocation4 + $0xa8] sm:$0xff]
      %v5014 = vld [vmem:[#allocation4 + $0xb0] sm:$0xff]
      %v5015 = vld [vmem:[#allocation4 + $0xb8] sm:$0xff]
      %v5016 = vld [vmem:[#allocation4 + $0xc0] sm:$0xff]
      %v5017 = vld [vmem:[#allocation4 + $0xc8] sm:$0xff]
      %v5018 = vld [vmem:[#allocation4 + $0xd0] sm:$0xff]
      %v5019 = vld [vmem:[#allocation4 + $0xd8] sm:$0xff]
      %v5020 = vld [vmem:[#allocation4 + $0xe0] sm:$0xff]
      %v5021 = vld [vmem:[#allocation4 + $0xe8] sm:$0xff]
      %v5022 = vld [vmem:[#allocation4 + $0xf0] sm:$0xff]
      %v5023 = vld [vmem:[#allocation4 + $0xf8] sm:$0xff]
      %v5024 = vld [vmem:[#allocation4 + $0x100] sm:$0xff]
      %v5025 = vld [vmem:[#allocation4 + $0x108] sm:$0xff]
      %v5026 = vld [vmem:[#allocation4 + $0x110] sm:$0xff]
      %v5027 = vld [vmem:[#allocation4 + $0x118] sm:$0xff]
      %v5028 = vld [vmem:[#allocation4 + $0x120] sm:$0xff]
      %v5029 = vld [vmem:[#allocation4 + $0x128] sm:$0xff]
      %v5030 = vld [vmem:[#allocation4 + $0x130] sm:$0xff]
      %v5031 = vld [vmem:[#allocation4 + $0x138] sm:$0xff]
      %v5032 = vld [vmem:[#allocation4 + $0x140] sm:$0xff]
      %v5033 = vld [vmem:[#allocation4 + $0x148] sm:$0xff]
      %v5034 = vld [vmem:[#allocation4 + $0x150] sm:$0xff]
      %v5035 = vld [vmem:[#allocation4 + $0x158] sm:$0xff]
      %v5036 = vld [vmem:[#allocation4 + $0x160] sm:$0xff]
      %v5037 = vld [vmem:[#allocation4 + $0x168] sm:$0xff]
      %v5038 = vld [vmem:[#allocation4 + $0x170] sm:$0xff]
      %v5039 = vld [vmem:[#allocation4 + $0x178] sm:$0xff]
      %v5040 = vld [vmem:[#allocation4 + $0x180] sm:$0xff]
      %v5041 = vld [vmem:[#allocation4 + $0x188] sm:$0xff]
      %v5042 = vld [vmem:[#allocation4 + $0x190] sm:$0xff]
      %v5043 = vld [vmem:[#allocation4 + $0x198] sm:$0xff]
      %v5044 = vld [vmem:[#allocation4 + $0x1a0] sm:$0xff]
      %v5045 = vld [vmem:[#allocation4 + $0x1a8] sm:$0xff]
      %v5046 = vld [vmem:[#allocation4 + $0x1b0] sm:$0xff]
      %v5047 = vld [vmem:[#allocation4 + $0x1b8] sm:$0xff]
      %v5048 = vld [vmem:[#allocation4 + $0x1c0] sm:$0xff]
      %v5049 = vld [vmem:[#allocation4 + $0x1c8] sm:$0xff]
      %v5050 = vld [vmem:[#allocation4 + $0x1d0] sm:$0xff]
      %v5051 = vld [vmem:[#allocation4 + $0x1d8] sm:$0xff]
      %v5052 = vld [vmem:[#allocation4 + $0x1e0] sm:$0xff]
      %v5053 = vld [vmem:[#allocation4 + $0x1e8] sm:$0xff]
      %v5054 = vld [vmem:[#allocation4 + $0x1f0] sm:$0xff]
      %v5055 = vld [vmem:[#allocation4 + $0x1f8] sm:$0xff]
      %v5056 = vld [vmem:[#allocation4 + $0x200] sm:$0xff]
      %v5057 = vld [vmem:[#allocation4 + $0x208] sm:$0xff]
      %v5058 = vld [vmem:[#allocation4 + $0x210] sm:$0xff]
      %v5059 = vld [vmem:[#allocation4 + $0x218] sm:$0xff]
      %v5060 = vld [vmem:[#allocation4 + $0x220] sm:$0xff]
      %v5061 = vld [vmem:[#allocation4 + $0x228] sm:$0xff]
      %v5062 = vld [vmem:[#allocation4 + $0x230] sm:$0xff]
      %v5063 = vld [vmem:[#allocation4 + $0x238] sm:$0xff]
      %v5064 = vld [vmem:[#allocation4 + $0x240] sm:$0xff]
      %v5065 = vld [vmem:[#allocation4 + $0x248] sm:$0xff]
      %v5066 = vld [vmem:[#allocation4 + $0x250] sm:$0xff]
      %v5067 = vld [vmem:[#allocation4 + $0x258] sm:$0xff]
      %v5068 = vld [vmem:[#allocation4 + $0x260] sm:$0xff]
      %v5069 = vld [vmem:[#allocation4 + $0x268] sm:$0xff]
      %v5070 = vld [vmem:[#allocation4 + $0x270] sm:$0xff]
      %v5071 = vld [vmem:[#allocation4 + $0x278] sm:$0xff]
      %v5072 = vld [vmem:[#allocation4 + $0x280] sm:$0xff]
      %v5073 = vld [vmem:[#allocation4 + $0x288] sm:$0xff]
      %v5074 = vld [vmem:[#allocation4 + $0x290] sm:$0xff]
      %v5075 = vld [vmem:[#allocation4 + $0x298] sm:$0xff]
      %v5076 = vld [vmem:[#allocation4 + $0x2a0] sm:$0xff]
      %v5077 = vld [vmem:[#allocation4 + $0x2a8] sm:$0xff]
      %v5078 = vld [vmem:[#allocation4 + $0x2b0] sm:$0xff]
      %v5079 = vld [vmem:[#allocation4 + $0x2b8] sm:$0xff]
      %v5080 = vld [vmem:[#allocation4 + $0x2c0] sm:$0xff]
      %v5081 = vld [vmem:[#allocation4 + $0x2c8] sm:$0xff]
      %v5083 = vsel %vm1019, %v4989, 0
      %v5086 = vsel %vm1019, %v4991, 0
      %5088 = vmatprep.subr.mxu0 %v4993
      %5089 = vmatpush1.msra.mxu0 %v4992
      %5090 = vmatprep.subr.mxu0 %v4998
      %5091 = vmatpush1.msra.mxu0 %v4997
      %5092 = vmatprep.subr.mxu0 %v5003
      %5093 = vmatpush1.msra.mxu0 %v5002
      %5094 = vmatprep.subr.mxu0 %v5008
      %5095 = vmatpush1.msra.mxu0 %v5007
      %5096 = vmatprep.subr.mxu0 %v5013
      %5097 = vmatpush1.msra.mxu0 %v5012
      %5098 = vmatprep.subr.mxu0 %v5018
      %5099 = vmatpush1.msra.mxu0 %v5017
      %5100 = vmatprep.subr.mxu0 %v5023
      %5101 = vmatpush1.msra.mxu0 %v5022
      %5102 = vmatprep.subr.mxu0 %v5028
      %5103 = vmatpush1.msra.mxu0 %v5027
      %5104 = vmatprep.subr.mxu0 %v5033
      %5105 = vmatpush1.msra.mxu0 %v5032
      %5106 = vmatprep.subr.mxu0 %v5038
      %5107 = vmatpush1.msra.mxu0 %v5037
      %5108 = vmatprep.subr.mxu0 %v5043
      %5109 = vmatpush1.msra.mxu0 %v5042
      %5110 = vmatprep.subr.mxu0 %v5048
      %5111 = vmatpush1.msra.mxu0 %v5047
      %5112 = vmatprep.subr.mxu0 %v5053
      %5113 = vmatpush1.msra.mxu0 %v5052
      %5114 = vmatprep.subr.mxu0 %v5058
      %5115 = vmatpush1.msra.mxu0 %v5057
      %5116 = vmatprep.subr.mxu0 %v5063
      %5117 = vmatpush1.msra.mxu0 %v5062
      %5118 = vmatprep.subr.mxu0 %v5068
      %5119 = vmatpush1.msra.mxu0 %v5067
      %5120 = vmatprep.subr.mxu0 %v5073
      %5121 = vmatpush1.msra.mxu0 %v5072
      %5122 = vmatprep.subr.mxu0 %v5078
      %5123 = vmatpush1.msra.mxu0 %v5077
      %5124 = vmatprep.subr.mxu0 0.0
      %5125 = vmatpush1.msra.mxu0 0.0
      %5126 = vmatprep.subr.mxu0 0.0
      %5127 = vmatpush1.msra.mxu0 0.0
      %5128 = vmatprep.subr.mxu0 0.0
      %5129 = vmatpush1.msra.mxu0 0.0
      %5130 = vmatprep.subr.mxu0 0.0
      %5131 = vmatpush1.msra.mxu0 0.0
      %5132 = vmatprep.subr.mxu0 0.0
      %5133 = vmatpush1.msra.mxu0 0.0
      %5134 = vmatprep.subr.mxu0 0.0
      %5135 = vmatpush1.msra.mxu0 0.0
      %5136 = vmatprep.subr.mxu0 0.0
      %5137 = vmatpush1.msra.mxu0 0.0
      %5138 = vmatprep.subr.mxu0 0.0
      %5139 = vmatpush1.msra.mxu0 0.0
      %5140 = vmatprep.subr.mxu0 0.0
      %5141 = vmatpush1.msra.mxu0 0.0
      %5142 = vmatprep.subr.mxu0 0.0
      %5143 = vmatpush1.msra.mxu0 0.0
      %5144 = vmatprep.subr.mxu0 0.0
      %5145 = vmatpush1.msra.mxu0 0.0
      %5146 = vmatprep.subr.mxu0 0.0
      %5147 = vmatpush1.msra.mxu0 0.0
      %5148 = vmatprep.subr.mxu0 0.0
      %5149 = vmatpush1.msra.mxu0 0.0
      %5150 = vmatprep.subr.mxu0 0.0
      %5151 = vmatpush1.msra.mxu0 0.0
      %5152 = vmatprep.mubr.f32.mxu0 %v5083
      %5153 = vmatmul.mubr.f32.gmra.mrb[0].mxu0 %v4988
      %v5154 = vpop.f32.mrb[0].mxu0
      %v5155 = vadd.f32 0.0, %v5154
      %v5156 = vpop.f32.mrb[0].mxu0
      %v5157 = vadd.f32 0.0, %v5156
      %5158 = vmatprep.mubr.f32.mxu0 %v5086
      %5159 = vmatmul.mubr.f32.gmra.mrb[0].mxu0 %v4990
      %v5160 = vpop.f32.mrb[0].mxu0
      %v5161 = vadd.f32 0.0, %v5160
      %v5162 = vpop.f32.mrb[0].mxu0
      %v5163 = vadd.f32 0.0, %v5162
      %5164 = vdwg.mxu0
      %5165 = vmatprep.subr.mxu0 %v4995
      %5166 = vmatpush1.msra.mxu0 %v4994
      %5167 = vmatprep.subr.mxu0 %v5000
      %5168 = vmatpush1.msra.mxu0 %v4999
      %5169 = vmatprep.subr.mxu0 %v5005
      %5170 = vmatpush1.msra.mxu0 %v5004
      %5171 = vmatprep.subr.mxu0 %v5010
      %5172 = vmatpush1.msra.mxu0 %v5009
      %5173 = vmatprep.subr.mxu0 %v5015
      %5174 = vmatpush1.msra.mxu0 %v5014
      %5175 = vmatprep.subr.mxu0 %v5020
      %5176 = vmatpush1.msra.mxu0 %v5019
      %5177 = vmatprep.subr.mxu0 %v5025
      %5178 = vmatpush1.msra.mxu0 %v5024
      %5179 = vmatprep.subr.mxu0 %v5030
      %5180 = vmatpush1.msra.mxu0 %v5029
      %5181 = vmatprep.subr.mxu0 %v5035
      %5182 = vmatpush1.msra.mxu0 %v5034
      %5183 = vmatprep.subr.mxu0 %v5040
      %5184 = vmatpush1.msra.mxu0 %v5039
      %5185 = vmatprep.subr.mxu0 %v5045
      %5186 = vmatpush1.msra.mxu0 %v5044
      %5187 = vmatprep.subr.mxu0 %v5050
      %5188 = vmatpush1.msra.mxu0 %v5049
      %5189 = vmatprep.subr.mxu0 %v5055
      %5190 = vmatpush1.msra.mxu0 %v5054
      %5191 = vmatprep.subr.mxu0 %v5060
      %5192 = vmatpush1.msra.mxu0 %v5059
      %5193 = vmatprep.subr.mxu0 %v5065
      %5194 = vmatpush1.msra.mxu0 %v5064
      %5195 = vmatprep.subr.mxu0 %v5070
      %5196 = vmatpush1.msra.mxu0 %v5069
      %5197 = vmatprep.subr.mxu0 %v5075
      %5198 = vmatpush1.msra.mxu0 %v5074
      %5199 = vmatprep.subr.mxu0 %v5080
      %5200 = vmatpush1.msra.mxu0 %v5079
      %5201 = vmatprep.subr.mxu0 0.0
      %5202 = vmatpush1.msra.mxu0 0.0
      %5203 = vmatprep.subr.mxu0 0.0
      %5204 = vmatpush1.msra.mxu0 0.0
      %5205 = vmatprep.subr.mxu0 0.0
      %5206 = vmatpush1.msra.mxu0 0.0
      %5207 = vmatprep.subr.mxu0 0.0
      %5208 = vmatpush1.msra.mxu0 0.0
      %5209 = vmatprep.subr.mxu0 0.0
      %5210 = vmatpush1.msra.mxu0 0.0
      %5211 = vmatprep.subr.mxu0 0.0
      %5212 = vmatpush1.msra.mxu0 0.0
      %5213 = vmatprep.subr.mxu0 0.0
      %5214 = vmatpush1.msra.mxu0 0.0
      %5215 = vmatprep.subr.mxu0 0.0
      %5216 = vmatpush1.msra.mxu0 0.0
      %5217 = vmatprep.subr.mxu0 0.0
      %5218 = vmatpush1.msra.mxu0 0.0
      %5219 = vmatprep.subr.mxu0 0.0
      %5220 = vmatpush1.msra.mxu0 0.0
      %5221 = vmatprep.subr.mxu0 0.0
      %5222 = vmatpush1.msra.mxu0 0.0
      %5223 = vmatprep.subr.mxu0 0.0
      %5224 = vmatpush1.msra.mxu0 0.0
      %5225 = vmatprep.subr.mxu0 0.0
      %5226 = vmatpush1.msra.mxu0 0.0
      %5227 = vmatprep.subr.mxu0 0.0
      %5228 = vmatpush1.msra.mxu0 0.0
      %5229 = vmatprep.mubr.f32.mxu0 %v5083
      %5230 = vmatmul.mubr.f32.gmra.mrb[0].mxu0 %v4988
      %v5231 = vpop.f32.mrb[0].mxu0
      %v5232 = vadd.f32 0.0, %v5231
      %v5233 = vpop.f32.mrb[0].mxu0
      %v5234 = vadd.f32 0.0, %v5233
      %5235 = vmatprep.mubr.f32.mxu0 %v5086
      %5236 = vmatmul.mubr.f32.gmra.mrb[0].mxu0 %v4990
      %v5237 = vpop.f32.mrb[0].mxu0
      %v5238 = vadd.f32 0.0, %v5237
      %v5239 = vpop.f32.mrb[0].mxu0
      %v5240 = vadd.f32 0.0, %v5239
      %5241 = vdwg.mxu0
      %5242 = vmatprep.subr.mxu0 0.0
      %5243 = vmatpush1.msra.mxu0 %v4996
      %5244 = vmatprep.subr.mxu0 0.0
      %5245 = vmatpush1.msra.mxu0 %v5001
      %5246 = vmatprep.subr.mxu0 0.0
      %5247 = vmatpush1.msra.mxu0 %v5006
      %5248 = vmatprep.subr.mxu0 0.0
      %5249 = vmatpush1.msra.mxu0 %v5011
      %5250 = vmatprep.subr.mxu0 0.0
      %5251 = vmatpush1.msra.mxu0 %v5016
      %5252 = vmatprep.subr.mxu0 0.0
      %5253 = vmatpush1.msra.mxu0 %v5021
      %5254 = vmatprep.subr.mxu0 0.0
      %5255 = vmatpush1.msra.mxu0 %v5026
      %5256 = vmatprep.subr.mxu0 0.0
      %5257 = vmatpush1.msra.mxu0 %v5031
      %5258 = vmatprep.subr.mxu0 0.0
      %5259 = vmatpush1.msra.mxu0 %v5036
      %5260 = vmatprep.subr.mxu0 0.0
      %5261 = vmatpush1.msra.mxu0 %v5041
      %5262 = vmatprep.subr.mxu0 0.0
      %5263 = vmatpush1.msra.mxu0 %v5046
      %5264 = vmatprep.subr.mxu0 0.0
      %5265 = vmatpush1.msra.mxu0 %v5051
      %5266 = vmatprep.subr.mxu0 0.0
      %5267 = vmatpush1.msra.mxu0 %v5056
      %5268 = vmatprep.subr.mxu0 0.0
      %5269 = vmatpush1.msra.mxu0 %v5061
      %5270 = vmatprep.subr.mxu0 0.0
      %5271 = vmatpush1.msra.mxu0 %v5066
      %5272 = vmatprep.subr.mxu0 0.0
      %5273 = vmatpush1.msra.mxu0 %v5071
      %5274 = vmatprep.subr.mxu0 0.0
      %5275 = vmatpush1.msra.mxu0 %v5076
      %5276 = vmatprep.subr.mxu0 0.0
      %5277 = vmatpush1.msra.mxu0 %v5081
      %5278 = vmatprep.subr.mxu0 0.0
      %5279 = vmatpush1.msra.mxu0 0.0
      %5280 = vmatprep.subr.mxu0 0.0
      %5281 = vmatpush1.msra.mxu0 0.0
      %5282 = vmatprep.subr.mxu0 0.0
      %5283 = vmatpush1.msra.mxu0 0.0
      %5284 = vmatprep.subr.mxu0 0.0
      %5285 = vmatpush1.msra.mxu0 0.0
      %5286 = vmatprep.subr.mxu0 0.0
      %5287 = vmatpush1.msra.mxu0 0.0
      %5288 = vmatprep.subr.mxu0 0.0
      %5289 = vmatpush1.msra.mxu0 0.0
      %5290 = vmatprep.subr.mxu0 0.0
      %5291 = vmatpush1.msra.mxu0 0.0
      %5292 = vmatprep.subr.mxu0 0.0
      %5293 = vmatpush1.msra.mxu0 0.0
      %5294 = vmatprep.subr.mxu0 0.0
      %5295 = vmatpush1.msra.mxu0 0.0
      %5296 = vmatprep.subr.mxu0 0.0
      %5297 = vmatpush1.msra.mxu0 0.0
      %5298 = vmatprep.subr.mxu0 0.0
      %5299 = vmatpush1.msra.mxu0 0.0
      %5300 = vmatprep.subr.mxu0 0.0
      %5301 = vmatpush1.msra.mxu0 0.0
      %5302 = vmatprep.subr.mxu0 0.0
      %5303 = vmatpush1.msra.mxu0 0.0
      %5304 = vmatprep.subr.mxu0 0.0
      %5305 = vmatpush1.msra.mxu0 0.0
      %5306 = vmatprep.mubr.f32.mxu0 %v5083
      %5307 = vmatmul.mubr.f32.gmra.mrb[0].mxu0 %v4988
      %v5308 = vpop.f32.mrb[0].mxu0
      %v5309 = vadd.f32 0.0, %v5308
      %v5310 = vpop.f32.mrb[0].mxu0
      %5311 = vmatprep.mubr.f32.mxu0 %v5086
      %5312 = vmatmul.mubr.f32.gmra.mrb[0].mxu0 %v4990
      %v5313 = vpop.f32.mrb[0].mxu0
      %v5314 = vadd.f32 0.0, %v5313
      %v5315 = vpop.f32.mrb[0].mxu0
      %5316 = vdwg.mxu0
      %s5317 = scalar_lea.vmem %s2, 64
      %v5318 = vld [vmem:[%s5317] sm:$0xff]
      %v5319 = vld [vmem:[%s5317 + $0x8] sm:$0xff]
      %5321 = vset.pattern.permute.xlu0 0
      %5322 = vperm.xlu0 %5321, %v5318
      %v5323 = vpop.permute.xlu0 %5322
      %5326 = vset.pattern.permute.xlu0 0
      %5327 = vperm.xlu0 %5326, %v5319
      %v5328 = vpop.permute.xlu0 %5327
      %v5330 = vmul.f32 %v5155, %v5323
      %v5331 = vmul.f32 %v5157, %v5323
      %v5332 = vmul.f32 %v5232, %v5323
      %v5333 = vmul.f32 %v5234, %v5323
      %v5334 = vmul.f32 %v5309, %v5323
      %v5335 = vmul.f32 %v5161, %v5328
      %v5336 = vmul.f32 %v5163, %v5328
      %v5337 = vmul.f32 %v5238, %v5328
      %v5338 = vmul.f32 %v5240, %v5328
      %v5339 = vmul.f32 %v5314, %v5328
      %s5340 = scalar_lea.vmem %s3, 64
      %v5341 = vld [vmem:[%s5340] sm:$0xff]
      %v5342 = vld [vmem:[%s5340 + $0x8] sm:$0xff]
      %5344 = vset.pattern.permute.xlu0 0
      %5345 = vperm.xlu0 %5344, %v5341
      %v5346 = vpop.permute.xlu0 %5345
      %5349 = vset.pattern.permute.xlu0 0
      %5350 = vperm.xlu0 %5349, %v5342
      %v5351 = vpop.permute.xlu0 %5350
      %v5353 = vadd.f32 %v5330, %v5346
      %v5354 = vadd.f32 %v5331, %v5346
      %v5355 = vadd.f32 %v5332, %v5346
      %v5356 = vadd.f32 %v5333, %v5346
      %v5357 = vadd.f32 %v5334, %v5346
      %v5358 = vadd.f32 %v5335, %v5351
      %v5359 = vadd.f32 %v5336, %v5351
      %v5360 = vadd.f32 %v5337, %v5351
      %v5361 = vadd.f32 %v5338, %v5351
      %v5362 = vadd.f32 %v5339, %v5351
      %v5363 = vmax.f32 %v5353, 0.0
      %v5364 = vmax.f32 %v5354, 0.0
      %v5365 = vmax.f32 %v5355, 0.0
      %v5366 = vmax.f32 %v5356, 0.0
      %v5367 = vmax.f32 %v5357, 0.0
      %v5368 = vmax.f32 %v5358, 0.0
      %v5369 = vmax.f32 %v5359, 0.0
      %v5370 = vmax.f32 %v5360, 0.0
      %v5371 = vmax.f32 %v5361, 0.0
      %v5372 = vmax.f32 %v5362, 0.0
      %v5373 = vsel %vm303, %v5363, 0.0
      %v5374 = vsel %vm304, %v5364, 0.0
      %v5375 = vsel %vm305, %v5365, 0.0
      %v5376 = vsel %vm306, %v5366, 0.0
      %v5377 = vsel %vm307, %v5367, 0.0
      %v5378 = vsel %vm308, %v5368, 0.0
      %v5379 = vsel %vm309, %v5369, 0.0
      %v5380 = vsel %vm310, %v5370, 0.0
      %v5381 = vsel %vm311, %v5371, 0.0
      %v5382 = vsel %vm312, %v5372, 0.0
      %5383 = vst [vmem:[#allocation3 + $0x8] sm:$0xff] %v5373
      %5384 = vst [vmem:[#allocation3 + $0x10] sm:$0xff] %v5374
      %5385 = vst [vmem:[#allocation3 + $0x18] sm:$0xff] %v5375
      %5386 = vst [vmem:[#allocation3 + $0x20] sm:$0xff] %v5376
      %5387 = vst.msk [vmem:[#allocation3 + $0x28] sm:$0xff] %vm231, %v5377
      %5388 = vst [vmem:[#allocation3 + $0x40] sm:$0xff] %v5378
      %5389 = vst [vmem:[#allocation3 + $0x48] sm:$0xff] %v5379
      %5390 = vst [vmem:[#allocation3 + $0x50] sm:$0xff] %v5380
      %5391 = vst [vmem:[#allocation3 + $0x58] sm:$0xff] %v5381
      %5392 = vst.msk [vmem:[#allocation3 + $0x60] sm:$0xff] %vm231, %v5382
      %v5393 = vld [vmem:[#allocation3] sm:$0xff]
      %v5394 = vld [vmem:[#allocation3 + $0x8] sm:$0xff]
      %v5395 = vld [vmem:[#allocation3 + $0x10] sm:$0xff]
      %v5396 = vld [vmem:[#allocation3 + $0x18] sm:$0xff]
      %v5397 = vld [vmem:[#allocation3 + $0x20] sm:$0xff]
      %v5398 = vld [vmem:[#allocation3 + $0x28] sm:$0xff]
      %v5399 = vld [vmem:[#allocation3 + $0x38] sm:$0xff]
      %v5400 = vld [vmem:[#allocation3 + $0x40] sm:$0xff]
      %v5401 = vld [vmem:[#allocation3 + $0x48] sm:$0xff]
      %v5402 = vld [vmem:[#allocation3 + $0x50] sm:$0xff]
      %v5403 = vld [vmem:[#allocation3 + $0x58] sm:$0xff]
      %v5404 = vld [vmem:[#allocation3 + $0x60] sm:$0xff]
      %5417 = vrot.lane.b32.xlu0 %v5393, 50
      %v5418 = vpop.permute.xlu0 %5417
      %5419 = vrot.lane.b32.xlu0 %v5394, 50
      %v5420 = vpop.permute.xlu0 %5419
      %5421 = vrot.lane.b32.xlu0 %v5395, 50
      %v5422 = vpop.permute.xlu0 %5421
      %5423 = vrot.lane.b32.xlu0 %v5396, 50
      %v5424 = vpop.permute.xlu0 %5423
      %5425 = vrot.lane.b32.xlu0 %v5397, 50
      %v5426 = vpop.permute.xlu0 %5425
      %5427 = vrot.lane.b32.xlu0 %v5398, 50
      %v5428 = vpop.permute.xlu0 %5427
      %5429 = vrot.lane.b32.xlu0 %v5399, 50
      %v5430 = vpop.permute.xlu0 %5429
      %5431 = vrot.lane.b32.xlu0 %v5400, 50
      %v5432 = vpop.permute.xlu0 %5431
      %5433 = vrot.lane.b32.xlu0 %v5401, 50
      %v5434 = vpop.permute.xlu0 %5433
      %5435 = vrot.lane.b32.xlu0 %v5402, 50
      %v5436 = vpop.permute.xlu0 %5435
      %5437 = vrot.lane.b32.xlu0 %v5403, 50
      %v5438 = vpop.permute.xlu0 %5437
      %5439 = vrot.lane.b32.xlu0 %v5404, 50
      %v5440 = vpop.permute.xlu0 %5439
      %v5441 = vsel %vm1377, %v5418, %v5420
      %v5442 = vsel %vm1377, %v5420, %v5422
      %v5443 = vsel %vm1377, %v5422, %v5424
      %v5444 = vsel %vm1377, %v5424, %v5426
      %v5445 = vsel %vm1377, %v5426, %v5428
      %v5446 = vsel %vm1377, %v5430, %v5432
      %v5447 = vsel %vm1377, %v5432, %v5434
      %v5448 = vsel %vm1377, %v5434, %v5436
      %v5449 = vsel %vm1377, %v5436, %v5438
      %v5450 = vsel %vm1377, %v5438, %v5440
      %5461 = vst [vmem:[#allocation4] sm:$0xff] %v5441
      %5462 = vst [vmem:[#allocation4 + $0x8] sm:$0xff] %v5442
      %5463 = vst [vmem:[#allocation4 + $0x10] sm:$0xff] %v5443
      %5464 = vst [vmem:[#allocation4 + $0x18] sm:$0xff] %v5444
      %5465 = vst.msk [vmem:[#allocation4 + $0x20] sm:$0xff] %vm231, %v5445
      %5466 = vst [vmem:[#allocation4 + $0x28] sm:$0xff] %v5446
      %5467 = vst [vmem:[#allocation4 + $0x30] sm:$0xff] %v5447
      %5468 = vst [vmem:[#allocation4 + $0x38] sm:$0xff] %v5448
      %5469 = vst [vmem:[#allocation4 + $0x40] sm:$0xff] %v5449
      %5470 = vst.msk [vmem:[#allocation4 + $0x48] sm:$0xff] %vm231, %v5450
      %v5471 = vld [vmem:[#allocation3] sm:$0xff]
      %v5472 = vld [vmem:[#allocation3 + $0x8] sm:$0xff]
      %v5473 = vld [vmem:[#allocation3 + $0x10] sm:$0xff]
      %v5474 = vld [vmem:[#allocation3 + $0x18] sm:$0xff]
      %v5475 = vld [vmem:[#allocation3 + $0x20] sm:$0xff]
      %v5476 = vld [vmem:[#allocation3 + $0x28] sm:$0xff]
      %v5477 = vld [vmem:[#allocation3 + $0x38] sm:$0xff]
      %v5478 = vld [vmem:[#allocation3 + $0x40] sm:$0xff]
      %v5479 = vld [vmem:[#allocation3 + $0x48] sm:$0xff]
      %v5480 = vld [vmem:[#allocation3 + $0x50] sm:$0xff]
      %v5481 = vld [vmem:[#allocation3 + $0x58] sm:$0xff]
      %v5482 = vld [vmem:[#allocation3 + $0x60] sm:$0xff]
      %5495 = vrot.lane.b32.xlu0 %v5471, 48
      %v5496 = vpop.permute.xlu0 %5495
      %5497 = vrot.lane.b32.xlu0 %v5472, 48
      %v5498 = vpop.permute.xlu0 %5497
      %5499 = vrot.lane.b32.xlu0 %v5473, 48
      %v5500 = vpop.permute.xlu0 %5499
      %5501 = vrot.lane.b32.xlu0 %v5474, 48
      %v5502 = vpop.permute.xlu0 %5501
      %5503 = vrot.lane.b32.xlu0 %v5475, 48
      %v5504 = vpop.permute.xlu0 %5503
      %5505 = vrot.lane.b32.xlu0 %v5476, 48
      %v5506 = vpop.permute.xlu0 %5505
      %5507 = vrot.lane.b32.xlu0 %v5477, 48
      %v5508 = vpop.permute.xlu0 %5507
      %5509 = vrot.lane.b32.xlu0 %v5478, 48
      %v5510 = vpop.permute.xlu0 %5509
      %5511 = vrot.lane.b32.xlu0 %v5479, 48
      %v5512 = vpop.permute.xlu0 %5511
      %5513 = vrot.lane.b32.xlu0 %v5480, 48
      %v5514 = vpop.permute.xlu0 %5513
      %5515 = vrot.lane.b32.xlu0 %v5481, 48
      %v5516 = vpop.permute.xlu0 %5515
      %5517 = vrot.lane.b32.xlu0 %v5482, 48
      %v5518 = vpop.permute.xlu0 %5517
      %v5519 = vsel %vm1456, %v5496, %v5498
      %v5520 = vsel %vm1456, %v5498, %v5500
      %v5521 = vsel %vm1456, %v5500, %v5502
      %v5522 = vsel %vm1456, %v5502, %v5504
      %v5523 = vsel %vm1456, %v5504, %v5506
      %v5524 = vsel %vm1456, %v5508, %v5510
      %v5525 = vsel %vm1456, %v5510, %v5512
      %v5526 = vsel %vm1456, %v5512, %v5514
      %v5527 = vsel %vm1456, %v5514, %v5516
      %v5528 = vsel %vm1456, %v5516, %v5518
      %5539 = vst [vmem:[#allocation4 + $0x50] sm:$0xff] %v5519
      %5540 = vst [vmem:[#allocation4 + $0x58] sm:$0xff] %v5520
      %5541 = vst [vmem:[#allocation4 + $0x60] sm:$0xff] %v5521
      %5542 = vst [vmem:[#allocation4 + $0x68] sm:$0xff] %v5522
      %5543 = vst.msk [vmem:[#allocation4 + $0x70] sm:$0xff] %vm231, %v5523
      %5544 = vst [vmem:[#allocation4 + $0x78] sm:$0xff] %v5524
      %5545 = vst [vmem:[#allocation4 + $0x80] sm:$0xff] %v5525
      %5546 = vst [vmem:[#allocation4 + $0x88] sm:$0xff] %v5526
      %5547 = vst [vmem:[#allocation4 + $0x90] sm:$0xff] %v5527
      %5548 = vst.msk [vmem:[#allocation4 + $0x98] sm:$0xff] %vm231, %v5528
      %v5549 = vld [vmem:[#allocation3] sm:$0xff]
      %v5550 = vld [vmem:[#allocation3 + $0x8] sm:$0xff]
      %v5551 = vld [vmem:[#allocation3 + $0x10] sm:$0xff]
      %v5552 = vld [vmem:[#allocation3 + $0x18] sm:$0xff]
      %v5553 = vld [vmem:[#allocation3 + $0x20] sm:$0xff]
      %v5554 = vld [vmem:[#allocation3 + $0x28] sm:$0xff]
      %v5555 = vld [vmem:[#allocation3 + $0x38] sm:$0xff]
      %v5556 = vld [vmem:[#allocation3 + $0x40] sm:$0xff]
      %v5557 = vld [vmem:[#allocation3 + $0x48] sm:$0xff]
      %v5558 = vld [vmem:[#allocation3 + $0x50] sm:$0xff]
      %v5559 = vld [vmem:[#allocation3 + $0x58] sm:$0xff]
      %v5560 = vld [vmem:[#allocation3 + $0x60] sm:$0xff]
      %5573 = vrot.lane.b32.xlu0 %v5549, 46
      %v5574 = vpop.permute.xlu0 %5573
      %5575 = vrot.lane.b32.xlu0 %v5550, 46
      %v5576 = vpop.permute.xlu0 %5575
      %5577 = vrot.lane.b32.xlu0 %v5551, 46
      %v5578 = vpop.permute.xlu0 %5577
      %5579 = vrot.lane.b32.xlu0 %v5552, 46
      %v5580 = vpop.permute.xlu0 %5579
      %5581 = vrot.lane.b32.xlu0 %v5553, 46
      %v5582 = vpop.permute.xlu0 %5581
      %5583 = vrot.lane.b32.xlu0 %v5554, 46
      %v5584 = vpop.permute.xlu0 %5583
      %5585 = vrot.lane.b32.xlu0 %v5555, 46
      %v5586 = vpop.permute.xlu0 %5585
      %5587 = vrot.lane.b32.xlu0 %v5556, 46
      %v5588 = vpop.permute.xlu0 %5587
      %5589 = vrot.lane.b32.xlu0 %v5557, 46
      %v5590 = vpop.permute.xlu0 %5589
      %5591 = vrot.lane.b32.xlu0 %v5558, 46
      %v5592 = vpop.permute.xlu0 %5591
      %5593 = vrot.lane.b32.xlu0 %v5559, 46
      %v5594 = vpop.permute.xlu0 %5593
      %5595 = vrot.lane.b32.xlu0 %v5560, 46
      %v5596 = vpop.permute.xlu0 %5595
      %v5597 = vsel %vm1535, %v5574, %v5576
      %v5598 = vsel %vm1535, %v5576, %v5578
      %v5599 = vsel %vm1535, %v5578, %v5580
      %v5600 = vsel %vm1535, %v5580, %v5582
      %v5601 = vsel %vm1535, %v5582, %v5584
      %v5602 = vsel %vm1535, %v5586, %v5588
      %v5603 = vsel %vm1535, %v5588, %v5590
      %v5604 = vsel %vm1535, %v5590, %v5592
      %v5605 = vsel %vm1535, %v5592, %v5594
      %v5606 = vsel %vm1535, %v5594, %v5596
      %5617 = vst [vmem:[#allocation4 + $0xa0] sm:$0xff] %v5597
      %5618 = vst [vmem:[#allocation4 + $0xa8] sm:$0xff] %v5598
      %5619 = vst [vmem:[#allocation4 + $0xb0] sm:$0xff] %v5599
      %5620 = vst [vmem:[#allocation4 + $0xb8] sm:$0xff] %v5600
      %5621 = vst.msk [vmem:[#allocation4 + $0xc0] sm:$0xff] %vm231, %v5601
      %5622 = vst [vmem:[#allocation4 + $0xc8] sm:$0xff] %v5602
      %5623 = vst [vmem:[#allocation4 + $0xd0] sm:$0xff] %v5603
      %5624 = vst [vmem:[#allocation4 + $0xd8] sm:$0xff] %v5604
      %5625 = vst [vmem:[#allocation4 + $0xe0] sm:$0xff] %v5605
      %5626 = vst.msk [vmem:[#allocation4 + $0xe8] sm:$0xff] %vm231, %v5606
      %v5627 = vld [vmem:[#allocation3] sm:$0xff]
      %v5628 = vld [vmem:[#allocation3 + $0x8] sm:$0xff]
      %v5629 = vld [vmem:[#allocation3 + $0x10] sm:$0xff]
      %v5630 = vld [vmem:[#allocation3 + $0x18] sm:$0xff]
      %v5631 = vld [vmem:[#allocation3 + $0x20] sm:$0xff]
      %v5632 = vld [vmem:[#allocation3 + $0x28] sm:$0xff]
      %v5633 = vld [vmem:[#allocation3 + $0x38] sm:$0xff]
      %v5634 = vld [vmem:[#allocation3 + $0x40] sm:$0xff]
      %v5635 = vld [vmem:[#allocation3 + $0x48] sm:$0xff]
      %v5636 = vld [vmem:[#allocation3 + $0x50] sm:$0xff]
      %v5637 = vld [vmem:[#allocation3 + $0x58] sm:$0xff]
      %v5638 = vld [vmem:[#allocation3 + $0x60] sm:$0xff]
      %5651 = vrot.lane.b32.xlu0 %v5627, 2
      %v5652 = vpop.permute.xlu0 %5651
      %5653 = vrot.lane.b32.xlu0 %v5628, 2
      %v5654 = vpop.permute.xlu0 %5653
      %5655 = vrot.lane.b32.xlu0 %v5629, 2
      %v5656 = vpop.permute.xlu0 %5655
      %5657 = vrot.lane.b32.xlu0 %v5630, 2
      %v5658 = vpop.permute.xlu0 %5657
      %5659 = vrot.lane.b32.xlu0 %v5631, 2
      %v5660 = vpop.permute.xlu0 %5659
      %5661 = vrot.lane.b32.xlu0 %v5632, 2
      %v5662 = vpop.permute.xlu0 %5661
      %5663 = vrot.lane.b32.xlu0 %v5633, 2
      %v5664 = vpop.permute.xlu0 %5663
      %5665 = vrot.lane.b32.xlu0 %v5634, 2
      %v5666 = vpop.permute.xlu0 %5665
      %5667 = vrot.lane.b32.xlu0 %v5635, 2
      %v5668 = vpop.permute.xlu0 %5667
      %5669 = vrot.lane.b32.xlu0 %v5636, 2
      %v5670 = vpop.permute.xlu0 %5669
      %5671 = vrot.lane.b32.xlu0 %v5637, 2
      %v5672 = vpop.permute.xlu0 %5671
      %5673 = vrot.lane.b32.xlu0 %v5638, 2
      %v5674 = vpop.permute.xlu0 %5673
      %v5675 = vsel %vm1614, %v5652, %v5654
      %v5676 = vsel %vm1614, %v5654, %v5656
      %v5677 = vsel %vm1614, %v5656, %v5658
      %v5678 = vsel %vm1614, %v5658, %v5660
      %v5679 = vsel %vm1614, %v5660, %v5662
      %v5680 = vsel %vm1614, %v5664, %v5666
      %v5681 = vsel %vm1614, %v5666, %v5668
      %v5682 = vsel %vm1614, %v5668, %v5670
      %v5683 = vsel %vm1614, %v5670, %v5672
      %v5684 = vsel %vm1614, %v5672, %v5674
      %5695 = vst [vmem:[#allocation4 + $0xf0] sm:$0xff] %v5675
      %5696 = vst [vmem:[#allocation4 + $0xf8] sm:$0xff] %v5676
      %5697 = vst [vmem:[#allocation4 + $0x100] sm:$0xff] %v5677
      %5698 = vst [vmem:[#allocation4 + $0x108] sm:$0xff] %v5678
      %5699 = vst.msk [vmem:[#allocation4 + $0x110] sm:$0xff] %vm231, %v5679
      %5700 = vst [vmem:[#allocation4 + $0x118] sm:$0xff] %v5680
      %5701 = vst [vmem:[#allocation4 + $0x120] sm:$0xff] %v5681
      %5702 = vst [vmem:[#allocation4 + $0x128] sm:$0xff] %v5682
      %5703 = vst [vmem:[#allocation4 + $0x130] sm:$0xff] %v5683
      %5704 = vst.msk [vmem:[#allocation4 + $0x138] sm:$0xff] %vm231, %v5684
      %v5705 = vld [vmem:[#allocation3 + $0x8] sm:$0xff]
      %v5706 = vld [vmem:[#allocation3 + $0x10] sm:$0xff]
      %v5707 = vld [vmem:[#allocation3 + $0x18] sm:$0xff]
      %v5708 = vld [vmem:[#allocation3 + $0x20] sm:$0xff]
      %v5709 = vld [vmem:[#allocation3 + $0x28] sm:$0xff]
      %v5710 = vld [vmem:[#allocation3 + $0x40] sm:$0xff]
      %v5711 = vld [vmem:[#allocation3 + $0x48] sm:$0xff]
      %v5712 = vld [vmem:[#allocation3 + $0x50] sm:$0xff]
      %v5713 = vld [vmem:[#allocation3 + $0x58] sm:$0xff]
      %v5714 = vld [vmem:[#allocation3 + $0x60] sm:$0xff]
      %5715 = vst [vmem:[#allocation4 + $0x140] sm:$0xff] %v5705
      %5716 = vst [vmem:[#allocation4 + $0x148] sm:$0xff] %v5706
      %5717 = vst [vmem:[#allocation4 + $0x150] sm:$0xff] %v5707
      %5718 = vst [vmem:[#allocation4 + $0x158] sm:$0xff] %v5708
      %5719 = vst.msk [vmem:[#allocation4 + $0x160] sm:$0xff] %vm231, %v5709
      %5720 = vst [vmem:[#allocation4 + $0x168] sm:$0xff] %v5710
      %5721 = vst [vmem:[#allocation4 + $0x170] sm:$0xff] %v5711
      %5722 = vst [vmem:[#allocation4 + $0x178] sm:$0xff] %v5712
      %5723 = vst [vmem:[#allocation4 + $0x180] sm:$0xff] %v5713
      %5724 = vst.msk [vmem:[#allocation4 + $0x188] sm:$0xff] %vm231, %v5714
      %v5725 = vld [vmem:[#allocation3 + $0x8] sm:$0xff]
      %v5726 = vld [vmem:[#allocation3 + $0x10] sm:$0xff]
      %v5727 = vld [vmem:[#allocation3 + $0x18] sm:$0xff]
      %v5728 = vld [vmem:[#allocation3 + $0x20] sm:$0xff]
      %v5729 = vld [vmem:[#allocation3 + $0x28] sm:$0xff]
      %v5730 = vld [vmem:[#allocation3 + $0x40] sm:$0xff]
      %v5731 = vld [vmem:[#allocation3 + $0x48] sm:$0xff]
      %v5732 = vld [vmem:[#allocation3 + $0x50] sm:$0xff]
      %v5733 = vld [vmem:[#allocation3 + $0x58] sm:$0xff]
      %v5734 = vld [vmem:[#allocation3 + $0x60] sm:$0xff]
      %5745 = vrot.lane.b32.xlu0 %v5725, 126
      %v5746 = vpop.permute.xlu0 %5745
      %5747 = vrot.lane.b32.xlu0 %v5726, 126
      %v5748 = vpop.permute.xlu0 %5747
      %5749 = vrot.lane.b32.xlu0 %v5727, 126
      %v5750 = vpop.permute.xlu0 %5749
      %5751 = vrot.lane.b32.xlu0 %v5728, 126
      %v5752 = vpop.permute.xlu0 %5751
      %5753 = vrot.lane.b32.xlu0 %v5729, 126
      %v5754 = vpop.permute.xlu0 %5753
      %5755 = vrot.lane.b32.xlu0 %v5730, 126
      %v5756 = vpop.permute.xlu0 %5755
      %5757 = vrot.lane.b32.xlu0 %v5731, 126
      %v5758 = vpop.permute.xlu0 %5757
      %5759 = vrot.lane.b32.xlu0 %v5732, 126
      %v5760 = vpop.permute.xlu0 %5759
      %5761 = vrot.lane.b32.xlu0 %v5733, 126
      %v5762 = vpop.permute.xlu0 %5761
      %5763 = vrot.lane.b32.xlu0 %v5734, 126
      %v5764 = vpop.permute.xlu0 %5763
      %v5765 = vsel %vm1705, %v5746, %v5748
      %v5766 = vsel %vm1705, %v5748, %v5750
      %v5767 = vsel %vm1705, %v5750, %v5752
      %v5768 = vsel %vm1705, %v5752, %v5754
      %v5769 = vsel %vm1705, %v5756, %v5758
      %v5770 = vsel %vm1705, %v5758, %v5760
      %v5771 = vsel %vm1705, %v5760, %v5762
      %v5772 = vsel %vm1705, %v5762, %v5764
      %5783 = vst [vmem:[#allocation4 + $0x190] sm:$0xff] %v5765
      %5784 = vst [vmem:[#allocation4 + $0x198] sm:$0xff] %v5766
      %5785 = vst [vmem:[#allocation4 + $0x1a0] sm:$0xff] %v5767
      %5786 = vst [vmem:[#allocation4 + $0x1a8] sm:$0xff] %v5768
      %5787 = vst.msk [vmem:[#allocation4 + $0x1b0] sm:$0xff] %vm231, %v5754
      %5788 = vst [vmem:[#allocation4 + $0x1b8] sm:$0xff] %v5769
      %5789 = vst [vmem:[#allocation4 + $0x1c0] sm:$0xff] %v5770
      %5790 = vst [vmem:[#allocation4 + $0x1c8] sm:$0xff] %v5771
      %5791 = vst [vmem:[#allocation4 + $0x1d0] sm:$0xff] %v5772
      %5792 = vst.msk [vmem:[#allocation4 + $0x1d8] sm:$0xff] %vm231, %v5764
      %v5793 = vld [vmem:[#allocation3 + $0x8] sm:$0xff]
      %v5794 = vld [vmem:[#allocation3 + $0x10] sm:$0xff]
      %v5795 = vld [vmem:[#allocation3 + $0x18] sm:$0xff]
      %v5796 = vld [vmem:[#allocation3 + $0x20] sm:$0xff]
      %v5797 = vld [vmem:[#allocation3 + $0x28] sm:$0xff]
      %v5798 = vld [vmem:[#allocation3 + $0x40] sm:$0xff]
      %v5799 = vld [vmem:[#allocation3 + $0x48] sm:$0xff]
      %v5800 = vld [vmem:[#allocation3 + $0x50] sm:$0xff]
      %v5801 = vld [vmem:[#allocation3 + $0x58] sm:$0xff]
      %v5802 = vld [vmem:[#allocation3 + $0x60] sm:$0xff]
      %5813 = vrot.lane.b32.xlu0 %v5793, 82
      %v5814 = vpop.permute.xlu0 %5813
      %5815 = vrot.lane.b32.xlu0 %v5794, 82
      %v5816 = vpop.permute.xlu0 %5815
      %5817 = vrot.lane.b32.xlu0 %v5795, 82
      %v5818 = vpop.permute.xlu0 %5817
      %5819 = vrot.lane.b32.xlu0 %v5796, 82
      %v5820 = vpop.permute.xlu0 %5819
      %5821 = vrot.lane.b32.xlu0 %v5797, 82
      %v5822 = vpop.permute.xlu0 %5821
      %5823 = vrot.lane.b32.xlu0 %v5798, 82
      %v5824 = vpop.permute.xlu0 %5823
      %5825 = vrot.lane.b32.xlu0 %v5799, 82
      %v5826 = vpop.permute.xlu0 %5825
      %5827 = vrot.lane.b32.xlu0 %v5800, 82
      %v5828 = vpop.permute.xlu0 %5827
      %5829 = vrot.lane.b32.xlu0 %v5801, 82
      %v5830 = vpop.permute.xlu0 %5829
      %5831 = vrot.lane.b32.xlu0 %v5802, 82
      %v5832 = vpop.permute.xlu0 %5831
      %v5833 = vsel %vm1774, %v5814, %v5816
      %v5834 = vsel %vm1774, %v5816, %v5818
      %v5835 = vsel %vm1774, %v5818, %v5820
      %v5836 = vsel %vm1774, %v5820, %v5822
      %v5837 = vsel %vm1774, %v5824, %v5826
      %v5838 = vsel %vm1774, %v5826, %v5828
      %v5839 = vsel %vm1774, %v5828, %v5830
      %v5840 = vsel %vm1774, %v5830, %v5832
      %5851 = vst [vmem:[#allocation4 + $0x1e0] sm:$0xff] %v5833
      %5852 = vst [vmem:[#allocation4 + $0x1e8] sm:$0xff] %v5834
      %5853 = vst [vmem:[#allocation4 + $0x1f0] sm:$0xff] %v5835
      %5854 = vst [vmem:[#allocation4 + $0x1f8] sm:$0xff] %v5836
      %5855 = vst.msk [vmem:[#allocation4 + $0x200] sm:$0xff] %vm231, %v5822
      %5856 = vst [vmem:[#allocation4 + $0x208] sm:$0xff] %v5837
      %5857 = vst [vmem:[#allocation4 + $0x210] sm:$0xff] %v5838
      %5858 = vst [vmem:[#allocation4 + $0x218] sm:$0xff] %v5839
      %5859 = vst [vmem:[#allocation4 + $0x220] sm:$0xff] %v5840
      %5860 = vst.msk [vmem:[#allocation4 + $0x228] sm:$0xff] %vm231, %v5832
      %v5861 = vld [vmem:[#allocation3 + $0x8] sm:$0xff]
      %v5862 = vld [vmem:[#allocation3 + $0x10] sm:$0xff]
      %v5863 = vld [vmem:[#allocation3 + $0x18] sm:$0xff]
      %v5864 = vld [vmem:[#allocation3 + $0x20] sm:$0xff]
      %v5865 = vld [vmem:[#allocation3 + $0x28] sm:$0xff]
      %v5866 = vld [vmem:[#allocation3 + $0x40] sm:$0xff]
      %v5867 = vld [vmem:[#allocation3 + $0x48] sm:$0xff]
      %v5868 = vld [vmem:[#allocation3 + $0x50] sm:$0xff]
      %v5869 = vld [vmem:[#allocation3 + $0x58] sm:$0xff]
      %v5870 = vld [vmem:[#allocation3 + $0x60] sm:$0xff]
      %5881 = vrot.lane.b32.xlu0 %v5861, 80
      %v5882 = vpop.permute.xlu0 %5881
      %5883 = vrot.lane.b32.xlu0 %v5862, 80
      %v5884 = vpop.permute.xlu0 %5883
      %5885 = vrot.lane.b32.xlu0 %v5863, 80
      %v5886 = vpop.permute.xlu0 %5885
      %5887 = vrot.lane.b32.xlu0 %v5864, 80
      %v5888 = vpop.permute.xlu0 %5887
      %5889 = vrot.lane.b32.xlu0 %v5865, 80
      %v5890 = vpop.permute.xlu0 %5889
      %5891 = vrot.lane.b32.xlu0 %v5866, 80
      %v5892 = vpop.permute.xlu0 %5891
      %5893 = vrot.lane.b32.xlu0 %v5867, 80
      %v5894 = vpop.permute.xlu0 %5893
      %5895 = vrot.lane.b32.xlu0 %v5868, 80
      %v5896 = vpop.permute.xlu0 %5895
      %5897 = vrot.lane.b32.xlu0 %v5869, 80
      %v5898 = vpop.permute.xlu0 %5897
      %5899 = vrot.lane.b32.xlu0 %v5870, 80
      %v5900 = vpop.permute.xlu0 %5899
      %v5901 = vsel %vm1843, %v5882, %v5884
      %v5902 = vsel %vm1843, %v5884, %v5886
      %v5903 = vsel %vm1843, %v5886, %v5888
      %v5904 = vsel %vm1843, %v5888, %v5890
      %v5905 = vsel %vm1843, %v5892, %v5894
      %v5906 = vsel %vm1843, %v5894, %v5896
      %v5907 = vsel %vm1843, %v5896, %v5898
      %v5908 = vsel %vm1843, %v5898, %v5900
      %5919 = vst [vmem:[#allocation4 + $0x230] sm:$0xff] %v5901
      %5920 = vst [vmem:[#allocation4 + $0x238] sm:$0xff] %v5902
      %5921 = vst [vmem:[#allocation4 + $0x240] sm:$0xff] %v5903
      %5922 = vst [vmem:[#allocation4 + $0x248] sm:$0xff] %v5904
      %5923 = vst.msk [vmem:[#allocation4 + $0x250] sm:$0xff] %vm231, %v5890
      %5924 = vst [vmem:[#allocation4 + $0x258] sm:$0xff] %v5905
      %5925 = vst [vmem:[#allocation4 + $0x260] sm:$0xff] %v5906
      %5926 = vst [vmem:[#allocation4 + $0x268] sm:$0xff] %v5907
      %5927 = vst [vmem:[#allocation4 + $0x270] sm:$0xff] %v5908
      %5928 = vst.msk [vmem:[#allocation4 + $0x278] sm:$0xff] %vm231, %v5900
      %v5929 = vld [vmem:[#allocation3 + $0x8] sm:$0xff]
      %v5930 = vld [vmem:[#allocation3 + $0x10] sm:$0xff]
      %v5931 = vld [vmem:[#allocation3 + $0x18] sm:$0xff]
      %v5932 = vld [vmem:[#allocation3 + $0x20] sm:$0xff]
      %v5933 = vld [vmem:[#allocation3 + $0x28] sm:$0xff]
      %v5934 = vld [vmem:[#allocation3 + $0x40] sm:$0xff]
      %v5935 = vld [vmem:[#allocation3 + $0x48] sm:$0xff]
      %v5936 = vld [vmem:[#allocation3 + $0x50] sm:$0xff]
      %v5937 = vld [vmem:[#allocation3 + $0x58] sm:$0xff]
      %v5938 = vld [vmem:[#allocation3 + $0x60] sm:$0xff]
      %5949 = vrot.lane.b32.xlu0 %v5929, 78
      %v5950 = vpop.permute.xlu0 %5949
      %5951 = vrot.lane.b32.xlu0 %v5930, 78
      %v5952 = vpop.permute.xlu0 %5951
      %5953 = vrot.lane.b32.xlu0 %v5931, 78
      %v5954 = vpop.permute.xlu0 %5953
      %5955 = vrot.lane.b32.xlu0 %v5932, 78
      %v5956 = vpop.permute.xlu0 %5955
      %5957 = vrot.lane.b32.xlu0 %v5933, 78
      %v5958 = vpop.permute.xlu0 %5957
      %5959 = vrot.lane.b32.xlu0 %v5934, 78
      %v5960 = vpop.permute.xlu0 %5959
      %5961 = vrot.lane.b32.xlu0 %v5935, 78
      %v5962 = vpop.permute.xlu0 %5961
      %5963 = vrot.lane.b32.xlu0 %v5936, 78
      %v5964 = vpop.permute.xlu0 %5963
      %5965 = vrot.lane.b32.xlu0 %v5937, 78
      %v5966 = vpop.permute.xlu0 %5965
      %5967 = vrot.lane.b32.xlu0 %v5938, 78
      %v5968 = vpop.permute.xlu0 %5967
      %v5969 = vsel %vm1912, %v5950, %v5952
      %v5970 = vsel %vm1912, %v5952, %v5954
      %v5971 = vsel %vm1912, %v5954, %v5956
      %v5972 = vsel %vm1912, %v5956, %v5958
      %v5973 = vsel %vm1912, %v5960, %v5962
      %v5974 = vsel %vm1912, %v5962, %v5964
      %v5975 = vsel %vm1912, %v5964, %v5966
      %v5976 = vsel %vm1912, %v5966, %v5968
      %5987 = vst [vmem:[#allocation4 + $0x280] sm:$0xff] %v5969
      %5988 = vst [vmem:[#allocation4 + $0x288] sm:$0xff] %v5970
      %5989 = vst [vmem:[#allocation4 + $0x290] sm:$0xff] %v5971
      %5990 = vst [vmem:[#allocation4 + $0x298] sm:$0xff] %v5972
      %5991 = vst.msk [vmem:[#allocation4 + $0x2a0] sm:$0xff] %vm231, %v5958
      %5992 = vst [vmem:[#allocation4 + $0x2a8] sm:$0xff] %v5973
      %5993 = vst [vmem:[#allocation4 + $0x2b0] sm:$0xff] %v5974
      %5994 = vst [vmem:[#allocation4 + $0x2b8] sm:$0xff] %v5975
      %5995 = vst [vmem:[#allocation4 + $0x2c0] sm:$0xff] %v5976
      %5996 = vst.msk [vmem:[#allocation4 + $0x2c8] sm:$0xff] %vm231, %v5968
      %s5997 = scalar_lea.vmem %s1, 160
      %v5998 = vld [vmem:[%s5997] sm:$0xff]
      %v5999 = vld [vmem:[%s5997 + $0x8] sm:$0xff]
      %v6000 = vld [vmem:[%s5997 + $0x10] sm:$0xff]
      %v6001 = vld [vmem:[%s5997 + $0x18] sm:$0xff]
      %v6002 = vld [vmem:[#allocation4] sm:$0xff]
      %v6003 = vld [vmem:[#allocation4 + $0x8] sm:$0xff]
      %v6004 = vld [vmem:[#allocation4 + $0x10] sm:$0xff]
      %v6005 = vld [vmem:[#allocation4 + $0x18] sm:$0xff]
      %v6006 = vld [vmem:[#allocation4 + $0x20] sm:$0xff]
      %v6007 = vld [vmem:[#allocation4 + $0x28] sm:$0xff]
      %v6008 = vld [vmem:[#allocation4 + $0x30] sm:$0xff]
      %v6009 = vld [vmem:[#allocation4 + $0x38] sm:$0xff]
      %v6010 = vld [vmem:[#allocation4 + $0x40] sm:$0xff]
      %v6011 = vld [vmem:[#allocation4 + $0x48] sm:$0xff]
      %v6012 = vld [vmem:[#allocation4 + $0x50] sm:$0xff]
      %v6013 = vld [vmem:[#allocation4 + $0x58] sm:$0xff]
      %v6014 = vld [vmem:[#allocation4 + $0x60] sm:$0xff]
      %v6015 = vld [vmem:[#allocation4 + $0x68] sm:$0xff]
      %v6016 = vld [vmem:[#allocation4 + $0x70] sm:$0xff]
      %v6017 = vld [vmem:[#allocation4 + $0x78] sm:$0xff]
      %v6018 = vld [vmem:[#allocation4 + $0x80] sm:$0xff]
      %v6019 = vld [vmem:[#allocation4 + $0x88] sm:$0xff]
      %v6020 = vld [vmem:[#allocation4 + $0x90] sm:$0xff]
      %v6021 = vld [vmem:[#allocation4 + $0x98] sm:$0xff]
      %v6022 = vld [vmem:[#allocation4 + $0xa0] sm:$0xff]
      %v6023 = vld [vmem:[#allocation4 + $0xa8] sm:$0xff]
      %v6024 = vld [vmem:[#allocation4 + $0xb0] sm:$0xff]
      %v6025 = vld [vmem:[#allocation4 + $0xb8] sm:$0xff]
      %v6026 = vld [vmem:[#allocation4 + $0xc0] sm:$0xff]
      %v6027 = vld [vmem:[#allocation4 + $0xc8] sm:$0xff]
      %v6028 = vld [vmem:[#allocation4 + $0xd0] sm:$0xff]
      %v6029 = vld [vmem:[#allocation4 + $0xd8] sm:$0xff]
      %v6030 = vld [vmem:[#allocation4 + $0xe0] sm:$0xff]
      %v6031 = vld [vmem:[#allocation4 + $0xe8] sm:$0xff]
      %v6032 = vld [vmem:[#allocation4 + $0xf0] sm:$0xff]
      %v6033 = vld [vmem:[#allocation4 + $0xf8] sm:$0xff]
      %v6034 = vld [vmem:[#allocation4 + $0x100] sm:$0xff]
      %v6035 = vld [vmem:[#allocation4 + $0x108] sm:$0xff]
      %v6036 = vld [vmem:[#allocation4 + $0x110] sm:$0xff]
      %v6037 = vld [vmem:[#allocation4 + $0x118] sm:$0xff]
      %v6038 = vld [vmem:[#allocation4 + $0x120] sm:$0xff]
      %v6039 = vld [vmem:[#allocation4 + $0x128] sm:$0xff]
      %v6040 = vld [vmem:[#allocation4 + $0x130] sm:$0xff]
      %v6041 = vld [vmem:[#allocation4 + $0x138] sm:$0xff]
      %v6042 = vld [vmem:[#allocation4 + $0x140] sm:$0xff]
      %v6043 = vld [vmem:[#allocation4 + $0x148] sm:$0xff]
      %v6044 = vld [vmem:[#allocation4 + $0x150] sm:$0xff]
      %v6045 = vld [vmem:[#allocation4 + $0x158] sm:$0xff]
      %v6046 = vld [vmem:[#allocation4 + $0x160] sm:$0xff]
      %v6047 = vld [vmem:[#allocation4 + $0x168] sm:$0xff]
      %v6048 = vld [vmem:[#allocation4 + $0x170] sm:$0xff]
      %v6049 = vld [vmem:[#allocation4 + $0x178] sm:$0xff]
      %v6050 = vld [vmem:[#allocation4 + $0x180] sm:$0xff]
      %v6051 = vld [vmem:[#allocation4 + $0x188] sm:$0xff]
      %v6052 = vld [vmem:[#allocation4 + $0x190] sm:$0xff]
      %v6053 = vld [vmem:[#allocation4 + $0x198] sm:$0xff]
      %v6054 = vld [vmem:[#allocation4 + $0x1a0] sm:$0xff]
      %v6055 = vld [vmem:[#allocation4 + $0x1a8] sm:$0xff]
      %v6056 = vld [vmem:[#allocation4 + $0x1b0] sm:$0xff]
      %v6057 = vld [vmem:[#allocation4 + $0x1b8] sm:$0xff]
      %v6058 = vld [vmem:[#allocation4 + $0x1c0] sm:$0xff]
      %v6059 = vld [vmem:[#allocation4 + $0x1c8] sm:$0xff]
      %v6060 = vld [vmem:[#allocation4 + $0x1d0] sm:$0xff]
      %v6061 = vld [vmem:[#allocation4 + $0x1d8] sm:$0xff]
      %v6062 = vld [vmem:[#allocation4 + $0x1e0] sm:$0xff]
      %v6063 = vld [vmem:[#allocation4 + $0x1e8] sm:$0xff]
      %v6064 = vld [vmem:[#allocation4 + $0x1f0] sm:$0xff]
      %v6065 = vld [vmem:[#allocation4 + $0x1f8] sm:$0xff]
      %v6066 = vld [vmem:[#allocation4 + $0x200] sm:$0xff]
      %v6067 = vld [vmem:[#allocation4 + $0x208] sm:$0xff]
      %v6068 = vld [vmem:[#allocation4 + $0x210] sm:$0xff]
      %v6069 = vld [vmem:[#allocation4 + $0x218] sm:$0xff]
      %v6070 = vld [vmem:[#allocation4 + $0x220] sm:$0xff]
      %v6071 = vld [vmem:[#allocation4 + $0x228] sm:$0xff]
      %v6072 = vld [vmem:[#allocation4 + $0x230] sm:$0xff]
      %v6073 = vld [vmem:[#allocation4 + $0x238] sm:$0xff]
      %v6074 = vld [vmem:[#allocation4 + $0x240] sm:$0xff]
      %v6075 = vld [vmem:[#allocation4 + $0x248] sm:$0xff]
      %v6076 = vld [vmem:[#allocation4 + $0x250] sm:$0xff]
      %v6077 = vld [vmem:[#allocation4 + $0x258] sm:$0xff]
      %v6078 = vld [vmem:[#allocation4 + $0x260] sm:$0xff]
      %v6079 = vld [vmem:[#allocation4 + $0x268] sm:$0xff]
      %v6080 = vld [vmem:[#allocation4 + $0x270] sm:$0xff]
      %v6081 = vld [vmem:[#allocation4 + $0x278] sm:$0xff]
      %v6082 = vld [vmem:[#allocation4 + $0x280] sm:$0xff]
      %v6083 = vld [vmem:[#allocation4 + $0x288] sm:$0xff]
      %v6084 = vld [vmem:[#allocation4 + $0x290] sm:$0xff]
      %v6085 = vld [vmem:[#allocation4 + $0x298] sm:$0xff]
      %v6086 = vld [vmem:[#allocation4 + $0x2a0] sm:$0xff]
      %v6087 = vld [vmem:[#allocation4 + $0x2a8] sm:$0xff]
      %v6088 = vld [vmem:[#allocation4 + $0x2b0] sm:$0xff]
      %v6089 = vld [vmem:[#allocation4 + $0x2b8] sm:$0xff]
      %v6090 = vld [vmem:[#allocation4 + $0x2c0] sm:$0xff]
      %v6091 = vld [vmem:[#allocation4 + $0x2c8] sm:$0xff]
      %v6093 = vsel %vm1019, %v5999, 0
      %v6096 = vsel %vm1019, %v6001, 0
      %6098 = vmatprep.subr.mxu0 %v6003
      %6099 = vmatpush1.msra.mxu0 %v6002
      %6100 = vmatprep.subr.mxu0 %v6008
      %6101 = vmatpush1.msra.mxu0 %v6007
      %6102 = vmatprep.subr.mxu0 %v6013
      %6103 = vmatpush1.msra.mxu0 %v6012
      %6104 = vmatprep.subr.mxu0 %v6018
      %6105 = vmatpush1.msra.mxu0 %v6017
      %6106 = vmatprep.subr.mxu0 %v6023
      %6107 = vmatpush1.msra.mxu0 %v6022
      %6108 = vmatprep.subr.mxu0 %v6028
      %6109 = vmatpush1.msra.mxu0 %v6027
      %6110 = vmatprep.subr.mxu0 %v6033
      %6111 = vmatpush1.msra.mxu0 %v6032
      %6112 = vmatprep.subr.mxu0 %v6038
      %6113 = vmatpush1.msra.mxu0 %v6037
      %6114 = vmatprep.subr.mxu0 %v6043
      %6115 = vmatpush1.msra.mxu0 %v6042
      %6116 = vmatprep.subr.mxu0 %v6048
      %6117 = vmatpush1.msra.mxu0 %v6047
      %6118 = vmatprep.subr.mxu0 %v6053
      %6119 = vmatpush1.msra.mxu0 %v6052
      %6120 = vmatprep.subr.mxu0 %v6058
      %6121 = vmatpush1.msra.mxu0 %v6057
      %6122 = vmatprep.subr.mxu0 %v6063
      %6123 = vmatpush1.msra.mxu0 %v6062
      %6124 = vmatprep.subr.mxu0 %v6068
      %6125 = vmatpush1.msra.mxu0 %v6067
      %6126 = vmatprep.subr.mxu0 %v6073
      %6127 = vmatpush1.msra.mxu0 %v6072
      %6128 = vmatprep.subr.mxu0 %v6078
      %6129 = vmatpush1.msra.mxu0 %v6077
      %6130 = vmatprep.subr.mxu0 %v6083
      %6131 = vmatpush1.msra.mxu0 %v6082
      %6132 = vmatprep.subr.mxu0 %v6088
      %6133 = vmatpush1.msra.mxu0 %v6087
      %6134 = vmatprep.subr.mxu0 0.0
      %6135 = vmatpush1.msra.mxu0 0.0
      %6136 = vmatprep.subr.mxu0 0.0
      %6137 = vmatpush1.msra.mxu0 0.0
      %6138 = vmatprep.subr.mxu0 0.0
      %6139 = vmatpush1.msra.mxu0 0.0
      %6140 = vmatprep.subr.mxu0 0.0
      %6141 = vmatpush1.msra.mxu0 0.0
      %6142 = vmatprep.subr.mxu0 0.0
      %6143 = vmatpush1.msra.mxu0 0.0
      %6144 = vmatprep.subr.mxu0 0.0
      %6145 = vmatpush1.msra.mxu0 0.0
      %6146 = vmatprep.subr.mxu0 0.0
      %6147 = vmatpush1.msra.mxu0 0.0
      %6148 = vmatprep.subr.mxu0 0.0
      %6149 = vmatpush1.msra.mxu0 0.0
      %6150 = vmatprep.subr.mxu0 0.0
      %6151 = vmatpush1.msra.mxu0 0.0
      %6152 = vmatprep.subr.mxu0 0.0
      %6153 = vmatpush1.msra.mxu0 0.0
      %6154 = vmatprep.subr.mxu0 0.0
      %6155 = vmatpush1.msra.mxu0 0.0
      %6156 = vmatprep.subr.mxu0 0.0
      %6157 = vmatpush1.msra.mxu0 0.0
      %6158 = vmatprep.subr.mxu0 0.0
      %6159 = vmatpush1.msra.mxu0 0.0
      %6160 = vmatprep.subr.mxu0 0.0
      %6161 = vmatpush1.msra.mxu0 0.0
      %6162 = vmatprep.mubr.f32.mxu0 %v6093
      %6163 = vmatmul.mubr.f32.gmra.mrb[0].mxu0 %v5998
      %v6164 = vpop.f32.mrb[0].mxu0
      %v6165 = vadd.f32 0.0, %v6164
      %v6166 = vpop.f32.mrb[0].mxu0
      %v6167 = vadd.f32 0.0, %v6166
      %6168 = vmatprep.mubr.f32.mxu0 %v6096
      %6169 = vmatmul.mubr.f32.gmra.mrb[0].mxu0 %v6000
      %v6170 = vpop.f32.mrb[0].mxu0
      %v6171 = vadd.f32 0.0, %v6170
      %v6172 = vpop.f32.mrb[0].mxu0
      %v6173 = vadd.f32 0.0, %v6172
      %6174 = vdwg.mxu0
      %6175 = vmatprep.subr.mxu0 %v6005
      %6176 = vmatpush1.msra.mxu0 %v6004
      %6177 = vmatprep.subr.mxu0 %v6010
      %6178 = vmatpush1.msra.mxu0 %v6009
      %6179 = vmatprep.subr.mxu0 %v6015
      %6180 = vmatpush1.msra.mxu0 %v6014
      %6181 = vmatprep.subr.mxu0 %v6020
      %6182 = vmatpush1.msra.mxu0 %v6019
      %6183 = vmatprep.subr.mxu0 %v6025
      %6184 = vmatpush1.msra.mxu0 %v6024
      %6185 = vmatprep.subr.mxu0 %v6030
      %6186 = vmatpush1.msra.mxu0 %v6029
      %6187 = vmatprep.subr.mxu0 %v6035
      %6188 = vmatpush1.msra.mxu0 %v6034
      %6189 = vmatprep.subr.mxu0 %v6040
      %6190 = vmatpush1.msra.mxu0 %v6039
      %6191 = vmatprep.subr.mxu0 %v6045
      %6192 = vmatpush1.msra.mxu0 %v6044
      %6193 = vmatprep.subr.mxu0 %v6050
      %6194 = vmatpush1.msra.mxu0 %v6049
      %6195 = vmatprep.subr.mxu0 %v6055
      %6196 = vmatpush1.msra.mxu0 %v6054
      %6197 = vmatprep.subr.mxu0 %v6060
      %6198 = vmatpush1.msra.mxu0 %v6059
      %6199 = vmatprep.subr.mxu0 %v6065
      %6200 = vmatpush1.msra.mxu0 %v6064
      %6201 = vmatprep.subr.mxu0 %v6070
      %6202 = vmatpush1.msra.mxu0 %v6069
      %6203 = vmatprep.subr.mxu0 %v6075
      %6204 = vmatpush1.msra.mxu0 %v6074
      %6205 = vmatprep.subr.mxu0 %v6080
      %6206 = vmatpush1.msra.mxu0 %v6079
      %6207 = vmatprep.subr.mxu0 %v6085
      %6208 = vmatpush1.msra.mxu0 %v6084
      %6209 = vmatprep.subr.mxu0 %v6090
      %6210 = vmatpush1.msra.mxu0 %v6089
      %6211 = vmatprep.subr.mxu0 0.0
      %6212 = vmatpush1.msra.mxu0 0.0
      %6213 = vmatprep.subr.mxu0 0.0
      %6214 = vmatpush1.msra.mxu0 0.0
      %6215 = vmatprep.subr.mxu0 0.0
      %6216 = vmatpush1.msra.mxu0 0.0
      %6217 = vmatprep.subr.mxu0 0.0
      %6218 = vmatpush1.msra.mxu0 0.0
      %6219 = vmatprep.subr.mxu0 0.0
      %6220 = vmatpush1.msra.mxu0 0.0
      %6221 = vmatprep.subr.mxu0 0.0
      %6222 = vmatpush1.msra.mxu0 0.0
      %6223 = vmatprep.subr.mxu0 0.0
      %6224 = vmatpush1.msra.mxu0 0.0
      %6225 = vmatprep.subr.mxu0 0.0
      %6226 = vmatpush1.msra.mxu0 0.0
      %6227 = vmatprep.subr.mxu0 0.0
      %6228 = vmatpush1.msra.mxu0 0.0
      %6229 = vmatprep.subr.mxu0 0.0
      %6230 = vmatpush1.msra.mxu0 0.0
      %6231 = vmatprep.subr.mxu0 0.0
      %6232 = vmatpush1.msra.mxu0 0.0
      %6233 = vmatprep.subr.mxu0 0.0
      %6234 = vmatpush1.msra.mxu0 0.0
      %6235 = vmatprep.subr.mxu0 0.0
      %6236 = vmatpush1.msra.mxu0 0.0
      %6237 = vmatprep.subr.mxu0 0.0
      %6238 = vmatpush1.msra.mxu0 0.0
      %6239 = vmatprep.mubr.f32.mxu0 %v6093
      %6240 = vmatmul.mubr.f32.gmra.mrb[0].mxu0 %v5998
      %v6241 = vpop.f32.mrb[0].mxu0
      %v6242 = vadd.f32 0.0, %v6241
      %v6243 = vpop.f32.mrb[0].mxu0
      %v6244 = vadd.f32 0.0, %v6243
      %6245 = vmatprep.mubr.f32.mxu0 %v6096
      %6246 = vmatmul.mubr.f32.gmra.mrb[0].mxu0 %v6000
      %v6247 = vpop.f32.mrb[0].mxu0
      %v6248 = vadd.f32 0.0, %v6247
      %v6249 = vpop.f32.mrb[0].mxu0
      %v6250 = vadd.f32 0.0, %v6249
      %6251 = vdwg.mxu0
      %6252 = vmatprep.subr.mxu0 0.0
      %6253 = vmatpush1.msra.mxu0 %v6006
      %6254 = vmatprep.subr.mxu0 0.0
      %6255 = vmatpush1.msra.mxu0 %v6011
      %6256 = vmatprep.subr.mxu0 0.0
      %6257 = vmatpush1.msra.mxu0 %v6016
      %6258 = vmatprep.subr.mxu0 0.0
      %6259 = vmatpush1.msra.mxu0 %v6021
      %6260 = vmatprep.subr.mxu0 0.0
      %6261 = vmatpush1.msra.mxu0 %v6026
      %6262 = vmatprep.subr.mxu0 0.0
      %6263 = vmatpush1.msra.mxu0 %v6031
      %6264 = vmatprep.subr.mxu0 0.0
      %6265 = vmatpush1.msra.mxu0 %v6036
      %6266 = vmatprep.subr.mxu0 0.0
      %6267 = vmatpush1.msra.mxu0 %v6041
      %6268 = vmatprep.subr.mxu0 0.0
      %6269 = vmatpush1.msra.mxu0 %v6046
      %6270 = vmatprep.subr.mxu0 0.0
      %6271 = vmatpush1.msra.mxu0 %v6051
      %6272 = vmatprep.subr.mxu0 0.0
      %6273 = vmatpush1.msra.mxu0 %v6056
      %6274 = vmatprep.subr.mxu0 0.0
      %6275 = vmatpush1.msra.mxu0 %v6061
      %6276 = vmatprep.subr.mxu0 0.0
      %6277 = vmatpush1.msra.mxu0 %v6066
      %6278 = vmatprep.subr.mxu0 0.0
      %6279 = vmatpush1.msra.mxu0 %v6071
      %6280 = vmatprep.subr.mxu0 0.0
      %6281 = vmatpush1.msra.mxu0 %v6076
      %6282 = vmatprep.subr.mxu0 0.0
      %6283 = vmatpush1.msra.mxu0 %v6081
      %6284 = vmatprep.subr.mxu0 0.0
      %6285 = vmatpush1.msra.mxu0 %v6086
      %6286 = vmatprep.subr.mxu0 0.0
      %6287 = vmatpush1.msra.mxu0 %v6091
      %6288 = vmatprep.subr.mxu0 0.0
      %6289 = vmatpush1.msra.mxu0 0.0
      %6290 = vmatprep.subr.mxu0 0.0
      %6291 = vmatpush1.msra.mxu0 0.0
      %6292 = vmatprep.subr.mxu0 0.0
      %6293 = vmatpush1.msra.mxu0 0.0
      %6294 = vmatprep.subr.mxu0 0.0
      %6295 = vmatpush1.msra.mxu0 0.0
      %6296 = vmatprep.subr.mxu0 0.0
      %6297 = vmatpush1.msra.mxu0 0.0
      %6298 = vmatprep.subr.mxu0 0.0
      %6299 = vmatpush1.msra.mxu0 0.0
      %6300 = vmatprep.subr.mxu0 0.0
      %6301 = vmatpush1.msra.mxu0 0.0
      %6302 = vmatprep.subr.mxu0 0.0
      %6303 = vmatpush1.msra.mxu0 0.0
      %6304 = vmatprep.subr.mxu0 0.0
      %6305 = vmatpush1.msra.mxu0 0.0
      %6306 = vmatprep.subr.mxu0 0.0
      %6307 = vmatpush1.msra.mxu0 0.0
      %6308 = vmatprep.subr.mxu0 0.0
      %6309 = vmatpush1.msra.mxu0 0.0
      %6310 = vmatprep.subr.mxu0 0.0
      %6311 = vmatpush1.msra.mxu0 0.0
      %6312 = vmatprep.subr.mxu0 0.0
      %6313 = vmatpush1.msra.mxu0 0.0
      %6314 = vmatprep.subr.mxu0 0.0
      %6315 = vmatpush1.msra.mxu0 0.0
      %6316 = vmatprep.mubr.f32.mxu0 %v6093
      %6317 = vmatmul.mubr.f32.gmra.mrb[0].mxu0 %v5998
      %v6318 = vpop.f32.mrb[0].mxu0
      %v6319 = vadd.f32 0.0, %v6318
      %v6320 = vpop.f32.mrb[0].mxu0
      %6321 = vmatprep.mubr.f32.mxu0 %v6096
      %6322 = vmatmul.mubr.f32.gmra.mrb[0].mxu0 %v6000
      %v6323 = vpop.f32.mrb[0].mxu0
      %v6324 = vadd.f32 0.0, %v6323
      %v6325 = vpop.f32.mrb[0].mxu0
      %6326 = vdwg.mxu0
      %s6327 = scalar_lea.vmem %s2, 80
      %v6328 = vld [vmem:[%s6327] sm:$0xff]
      %v6329 = vld [vmem:[%s6327 + $0x8] sm:$0xff]
      %6331 = vset.pattern.permute.xlu0 0
      %6332 = vperm.xlu0 %6331, %v6328
      %v6333 = vpop.permute.xlu0 %6332
      %6336 = vset.pattern.permute.xlu0 0
      %6337 = vperm.xlu0 %6336, %v6329
      %v6338 = vpop.permute.xlu0 %6337
      %v6340 = vmul.f32 %v6165, %v6333
      %v6341 = vmul.f32 %v6167, %v6333
      %v6342 = vmul.f32 %v6242, %v6333
      %v6343 = vmul.f32 %v6244, %v6333
      %v6344 = vmul.f32 %v6319, %v6333
      %v6345 = vmul.f32 %v6171, %v6338
      %v6346 = vmul.f32 %v6173, %v6338
      %v6347 = vmul.f32 %v6248, %v6338
      %v6348 = vmul.f32 %v6250, %v6338
      %v6349 = vmul.f32 %v6324, %v6338
      %s6350 = scalar_lea.vmem %s3, 80
      %v6351 = vld [vmem:[%s6350] sm:$0xff]
      %v6352 = vld [vmem:[%s6350 + $0x8] sm:$0xff]
      %6354 = vset.pattern.permute.xlu0 0
      %6355 = vperm.xlu0 %6354, %v6351
      %v6356 = vpop.permute.xlu0 %6355
      %6359 = vset.pattern.permute.xlu0 0
      %6360 = vperm.xlu0 %6359, %v6352
      %v6361 = vpop.permute.xlu0 %6360
      %v6363 = vadd.f32 %v6340, %v6356
      %v6364 = vadd.f32 %v6341, %v6356
      %v6365 = vadd.f32 %v6342, %v6356
      %v6366 = vadd.f32 %v6343, %v6356
      %v6367 = vadd.f32 %v6344, %v6356
      %v6368 = vadd.f32 %v6345, %v6361
      %v6369 = vadd.f32 %v6346, %v6361
      %v6370 = vadd.f32 %v6347, %v6361
      %v6371 = vadd.f32 %v6348, %v6361
      %v6372 = vadd.f32 %v6349, %v6361
      %v6373 = vmax.f32 %v6363, 0.0
      %v6374 = vmax.f32 %v6364, 0.0
      %v6375 = vmax.f32 %v6365, 0.0
      %v6376 = vmax.f32 %v6366, 0.0
      %v6377 = vmax.f32 %v6367, 0.0
      %v6378 = vmax.f32 %v6368, 0.0
      %v6379 = vmax.f32 %v6369, 0.0
      %v6380 = vmax.f32 %v6370, 0.0
      %v6381 = vmax.f32 %v6371, 0.0
      %v6382 = vmax.f32 %v6372, 0.0
      %v6383 = vsel %vm303, %v6373, 0.0
      %v6384 = vsel %vm304, %v6374, 0.0
      %v6385 = vsel %vm305, %v6375, 0.0
      %v6386 = vsel %vm306, %v6376, 0.0
      %v6387 = vsel %vm307, %v6377, 0.0
      %v6388 = vsel %vm308, %v6378, 0.0
      %v6389 = vsel %vm309, %v6379, 0.0
      %v6390 = vsel %vm310, %v6380, 0.0
      %v6391 = vsel %vm311, %v6381, 0.0
      %v6392 = vsel %vm312, %v6382, 0.0
      %6393 = vst [vmem:[#allocation2 + $0x8] sm:$0xff] %v6383
      %6394 = vst [vmem:[#allocation2 + $0x10] sm:$0xff] %v6384
      %6395 = vst [vmem:[#allocation2 + $0x18] sm:$0xff] %v6385
      %6396 = vst [vmem:[#allocation2 + $0x20] sm:$0xff] %v6386
      %6397 = vst.msk [vmem:[#allocation2 + $0x28] sm:$0xff] %vm231, %v6387
      %6398 = vst [vmem:[#allocation2 + $0x40] sm:$0xff] %v6388
      %6399 = vst [vmem:[#allocation2 + $0x48] sm:$0xff] %v6389
      %6400 = vst [vmem:[#allocation2 + $0x50] sm:$0xff] %v6390
      %6401 = vst [vmem:[#allocation2 + $0x58] sm:$0xff] %v6391
      %6402 = vst.msk [vmem:[#allocation2 + $0x60] sm:$0xff] %vm231, %v6392
      %v6403 = vld [vmem:[#allocation2] sm:$0xff]
      %v6404 = vld [vmem:[#allocation2 + $0x8] sm:$0xff]
      %v6405 = vld [vmem:[#allocation2 + $0x10] sm:$0xff]
      %v6406 = vld [vmem:[#allocation2 + $0x18] sm:$0xff]
      %v6407 = vld [vmem:[#allocation2 + $0x20] sm:$0xff]
      %v6408 = vld [vmem:[#allocation2 + $0x28] sm:$0xff]
      %v6409 = vld [vmem:[#allocation2 + $0x38] sm:$0xff]
      %v6410 = vld [vmem:[#allocation2 + $0x40] sm:$0xff]
      %v6411 = vld [vmem:[#allocation2 + $0x48] sm:$0xff]
      %v6412 = vld [vmem:[#allocation2 + $0x50] sm:$0xff]
      %v6413 = vld [vmem:[#allocation2 + $0x58] sm:$0xff]
      %v6414 = vld [vmem:[#allocation2 + $0x60] sm:$0xff]
      %6427 = vrot.lane.b32.xlu0 %v6403, 25
      %v6428 = vpop.permute.xlu0 %6427
      %6429 = vrot.lane.b32.xlu0 %v6404, 25
      %v6430 = vpop.permute.xlu0 %6429
      %6431 = vrot.lane.b32.xlu0 %v6405, 25
      %v6432 = vpop.permute.xlu0 %6431
      %6433 = vrot.lane.b32.xlu0 %v6406, 25
      %v6434 = vpop.permute.xlu0 %6433
      %6435 = vrot.lane.b32.xlu0 %v6407, 25
      %v6436 = vpop.permute.xlu0 %6435
      %6437 = vrot.lane.b32.xlu0 %v6408, 25
      %v6438 = vpop.permute.xlu0 %6437
      %6439 = vrot.lane.b32.xlu0 %v6409, 25
      %v6440 = vpop.permute.xlu0 %6439
      %6441 = vrot.lane.b32.xlu0 %v6410, 25
      %v6442 = vpop.permute.xlu0 %6441
      %6443 = vrot.lane.b32.xlu0 %v6411, 25
      %v6444 = vpop.permute.xlu0 %6443
      %6445 = vrot.lane.b32.xlu0 %v6412, 25
      %v6446 = vpop.permute.xlu0 %6445
      %6447 = vrot.lane.b32.xlu0 %v6413, 25
      %v6448 = vpop.permute.xlu0 %6447
      %6449 = vrot.lane.b32.xlu0 %v6414, 25
      %v6450 = vpop.permute.xlu0 %6449
      %v6451 = vsel %vm361, %v6428, %v6430
      %v6452 = vsel %vm361, %v6430, %v6432
      %v6453 = vsel %vm361, %v6432, %v6434
      %v6454 = vsel %vm361, %v6434, %v6436
      %v6455 = vsel %vm361, %v6436, %v6438
      %v6456 = vsel %vm361, %v6440, %v6442
      %v6457 = vsel %vm361, %v6442, %v6444
      %v6458 = vsel %vm361, %v6444, %v6446
      %v6459 = vsel %vm361, %v6446, %v6448
      %v6460 = vsel %vm361, %v6448, %v6450
      %6471 = vst [vmem:[#allocation4] sm:$0xff] %v6451
      %6472 = vst [vmem:[#allocation4 + $0x8] sm:$0xff] %v6452
      %6473 = vst [vmem:[#allocation4 + $0x10] sm:$0xff] %v6453
      %6474 = vst [vmem:[#allocation4 + $0x18] sm:$0xff] %v6454
      %6475 = vst.msk [vmem:[#allocation4 + $0x20] sm:$0xff] %vm231, %v6455
      %6476 = vst [vmem:[#allocation4 + $0x28] sm:$0xff] %v6456
      %6477 = vst [vmem:[#allocation4 + $0x30] sm:$0xff] %v6457
      %6478 = vst [vmem:[#allocation4 + $0x38] sm:$0xff] %v6458
      %6479 = vst [vmem:[#allocation4 + $0x40] sm:$0xff] %v6459
      %6480 = vst.msk [vmem:[#allocation4 + $0x48] sm:$0xff] %vm231, %v6460
      %v6481 = vld [vmem:[#allocation2] sm:$0xff]
      %v6482 = vld [vmem:[#allocation2 + $0x8] sm:$0xff]
      %v6483 = vld [vmem:[#allocation2 + $0x10] sm:$0xff]
      %v6484 = vld [vmem:[#allocation2 + $0x18] sm:$0xff]
      %v6485 = vld [vmem:[#allocation2 + $0x20] sm:$0xff]
      %v6486 = vld [vmem:[#allocation2 + $0x28] sm:$0xff]
      %v6487 = vld [vmem:[#allocation2 + $0x38] sm:$0xff]
      %v6488 = vld [vmem:[#allocation2 + $0x40] sm:$0xff]
      %v6489 = vld [vmem:[#allocation2 + $0x48] sm:$0xff]
      %v6490 = vld [vmem:[#allocation2 + $0x50] sm:$0xff]
      %v6491 = vld [vmem:[#allocation2 + $0x58] sm:$0xff]
      %v6492 = vld [vmem:[#allocation2 + $0x60] sm:$0xff]
      %6505 = vrot.lane.b32.xlu0 %v6481, 24
      %v6506 = vpop.permute.xlu0 %6505
      %6507 = vrot.lane.b32.xlu0 %v6482, 24
      %v6508 = vpop.permute.xlu0 %6507
      %6509 = vrot.lane.b32.xlu0 %v6483, 24
      %v6510 = vpop.permute.xlu0 %6509
      %6511 = vrot.lane.b32.xlu0 %v6484, 24
      %v6512 = vpop.permute.xlu0 %6511
      %6513 = vrot.lane.b32.xlu0 %v6485, 24
      %v6514 = vpop.permute.xlu0 %6513
      %6515 = vrot.lane.b32.xlu0 %v6486, 24
      %v6516 = vpop.permute.xlu0 %6515
      %6517 = vrot.lane.b32.xlu0 %v6487, 24
      %v6518 = vpop.permute.xlu0 %6517
      %6519 = vrot.lane.b32.xlu0 %v6488, 24
      %v6520 = vpop.permute.xlu0 %6519
      %6521 = vrot.lane.b32.xlu0 %v6489, 24
      %v6522 = vpop.permute.xlu0 %6521
      %6523 = vrot.lane.b32.xlu0 %v6490, 24
      %v6524 = vpop.permute.xlu0 %6523
      %6525 = vrot.lane.b32.xlu0 %v6491, 24
      %v6526 = vpop.permute.xlu0 %6525
      %6527 = vrot.lane.b32.xlu0 %v6492, 24
      %v6528 = vpop.permute.xlu0 %6527
      %v6529 = vsel %vm440, %v6506, %v6508
      %v6530 = vsel %vm440, %v6508, %v6510
      %v6531 = vsel %vm440, %v6510, %v6512
      %v6532 = vsel %vm440, %v6512, %v6514
      %v6533 = vsel %vm440, %v6514, %v6516
      %v6534 = vsel %vm440, %v6518, %v6520
      %v6535 = vsel %vm440, %v6520, %v6522
      %v6536 = vsel %vm440, %v6522, %v6524
      %v6537 = vsel %vm440, %v6524, %v6526
      %v6538 = vsel %vm440, %v6526, %v6528
      %6549 = vst [vmem:[#allocation4 + $0x50] sm:$0xff] %v6529
      %6550 = vst [vmem:[#allocation4 + $0x58] sm:$0xff] %v6530
      %6551 = vst [vmem:[#allocation4 + $0x60] sm:$0xff] %v6531
      %6552 = vst [vmem:[#allocation4 + $0x68] sm:$0xff] %v6532
      %6553 = vst.msk [vmem:[#allocation4 + $0x70] sm:$0xff] %vm231, %v6533
      %6554 = vst [vmem:[#allocation4 + $0x78] sm:$0xff] %v6534
      %6555 = vst [vmem:[#allocation4 + $0x80] sm:$0xff] %v6535
      %6556 = vst [vmem:[#allocation4 + $0x88] sm:$0xff] %v6536
      %6557 = vst [vmem:[#allocation4 + $0x90] sm:$0xff] %v6537
      %6558 = vst.msk [vmem:[#allocation4 + $0x98] sm:$0xff] %vm231, %v6538
      %v6559 = vld [vmem:[#allocation2] sm:$0xff]
      %v6560 = vld [vmem:[#allocation2 + $0x8] sm:$0xff]
      %v6561 = vld [vmem:[#allocation2 + $0x10] sm:$0xff]
      %v6562 = vld [vmem:[#allocation2 + $0x18] sm:$0xff]
      %v6563 = vld [vmem:[#allocation2 + $0x20] sm:$0xff]
      %v6564 = vld [vmem:[#allocation2 + $0x28] sm:$0xff]
      %v6565 = vld [vmem:[#allocation2 + $0x38] sm:$0xff]
      %v6566 = vld [vmem:[#allocation2 + $0x40] sm:$0xff]
      %v6567 = vld [vmem:[#allocation2 + $0x48] sm:$0xff]
      %v6568 = vld [vmem:[#allocation2 + $0x50] sm:$0xff]
      %v6569 = vld [vmem:[#allocation2 + $0x58] sm:$0xff]
      %v6570 = vld [vmem:[#allocation2 + $0x60] sm:$0xff]
      %6583 = vrot.lane.b32.xlu0 %v6559, 23
      %v6584 = vpop.permute.xlu0 %6583
      %6585 = vrot.lane.b32.xlu0 %v6560, 23
      %v6586 = vpop.permute.xlu0 %6585
      %6587 = vrot.lane.b32.xlu0 %v6561, 23
      %v6588 = vpop.permute.xlu0 %6587
      %6589 = vrot.lane.b32.xlu0 %v6562, 23
      %v6590 = vpop.permute.xlu0 %6589
      %6591 = vrot.lane.b32.xlu0 %v6563, 23
      %v6592 = vpop.permute.xlu0 %6591
      %6593 = vrot.lane.b32.xlu0 %v6564, 23
      %v6594 = vpop.permute.xlu0 %6593
      %6595 = vrot.lane.b32.xlu0 %v6565, 23
      %v6596 = vpop.permute.xlu0 %6595
      %6597 = vrot.lane.b32.xlu0 %v6566, 23
      %v6598 = vpop.permute.xlu0 %6597
      %6599 = vrot.lane.b32.xlu0 %v6567, 23
      %v6600 = vpop.permute.xlu0 %6599
      %6601 = vrot.lane.b32.xlu0 %v6568, 23
      %v6602 = vpop.permute.xlu0 %6601
      %6603 = vrot.lane.b32.xlu0 %v6569, 23
      %v6604 = vpop.permute.xlu0 %6603
      %6605 = vrot.lane.b32.xlu0 %v6570, 23
      %v6606 = vpop.permute.xlu0 %6605
      %v6607 = vsel %vm519, %v6584, %v6586
      %v6608 = vsel %vm519, %v6586, %v6588
      %v6609 = vsel %vm519, %v6588, %v6590
      %v6610 = vsel %vm519, %v6590, %v6592
      %v6611 = vsel %vm519, %v6592, %v6594
      %v6612 = vsel %vm519, %v6596, %v6598
      %v6613 = vsel %vm519, %v6598, %v6600
      %v6614 = vsel %vm519, %v6600, %v6602
      %v6615 = vsel %vm519, %v6602, %v6604
      %v6616 = vsel %vm519, %v6604, %v6606
      %6627 = vst [vmem:[#allocation4 + $0xa0] sm:$0xff] %v6607
      %6628 = vst [vmem:[#allocation4 + $0xa8] sm:$0xff] %v6608
      %6629 = vst [vmem:[#allocation4 + $0xb0] sm:$0xff] %v6609
      %6630 = vst [vmem:[#allocation4 + $0xb8] sm:$0xff] %v6610
      %6631 = vst.msk [vmem:[#allocation4 + $0xc0] sm:$0xff] %vm231, %v6611
      %6632 = vst [vmem:[#allocation4 + $0xc8] sm:$0xff] %v6612
      %6633 = vst [vmem:[#allocation4 + $0xd0] sm:$0xff] %v6613
      %6634 = vst [vmem:[#allocation4 + $0xd8] sm:$0xff] %v6614
      %6635 = vst [vmem:[#allocation4 + $0xe0] sm:$0xff] %v6615
      %6636 = vst.msk [vmem:[#allocation4 + $0xe8] sm:$0xff] %vm231, %v6616
      %v6637 = vld [vmem:[#allocation2] sm:$0xff]
      %v6638 = vld [vmem:[#allocation2 + $0x8] sm:$0xff]
      %v6639 = vld [vmem:[#allocation2 + $0x10] sm:$0xff]
      %v6640 = vld [vmem:[#allocation2 + $0x18] sm:$0xff]
      %v6641 = vld [vmem:[#allocation2 + $0x20] sm:$0xff]
      %v6642 = vld [vmem:[#allocation2 + $0x28] sm:$0xff]
      %v6643 = vld [vmem:[#allocation2 + $0x38] sm:$0xff]
      %v6644 = vld [vmem:[#allocation2 + $0x40] sm:$0xff]
      %v6645 = vld [vmem:[#allocation2 + $0x48] sm:$0xff]
      %v6646 = vld [vmem:[#allocation2 + $0x50] sm:$0xff]
      %v6647 = vld [vmem:[#allocation2 + $0x58] sm:$0xff]
      %v6648 = vld [vmem:[#allocation2 + $0x60] sm:$0xff]
      %6661 = vrot.lane.b32.xlu0 %v6637, 1
      %v6662 = vpop.permute.xlu0 %6661
      %6663 = vrot.lane.b32.xlu0 %v6638, 1
      %v6664 = vpop.permute.xlu0 %6663
      %6665 = vrot.lane.b32.xlu0 %v6639, 1
      %v6666 = vpop.permute.xlu0 %6665
      %6667 = vrot.lane.b32.xlu0 %v6640, 1
      %v6668 = vpop.permute.xlu0 %6667
      %6669 = vrot.lane.b32.xlu0 %v6641, 1
      %v6670 = vpop.permute.xlu0 %6669
      %6671 = vrot.lane.b32.xlu0 %v6642, 1
      %v6672 = vpop.permute.xlu0 %6671
      %6673 = vrot.lane.b32.xlu0 %v6643, 1
      %v6674 = vpop.permute.xlu0 %6673
      %6675 = vrot.lane.b32.xlu0 %v6644, 1
      %v6676 = vpop.permute.xlu0 %6675
      %6677 = vrot.lane.b32.xlu0 %v6645, 1
      %v6678 = vpop.permute.xlu0 %6677
      %6679 = vrot.lane.b32.xlu0 %v6646, 1
      %v6680 = vpop.permute.xlu0 %6679
      %6681 = vrot.lane.b32.xlu0 %v6647, 1
      %v6682 = vpop.permute.xlu0 %6681
      %6683 = vrot.lane.b32.xlu0 %v6648, 1
      %v6684 = vpop.permute.xlu0 %6683
      %v6685 = vsel %vm598, %v6662, %v6664
      %v6686 = vsel %vm598, %v6664, %v6666
      %v6687 = vsel %vm598, %v6666, %v6668
      %v6688 = vsel %vm598, %v6668, %v6670
      %v6689 = vsel %vm598, %v6670, %v6672
      %v6690 = vsel %vm598, %v6674, %v6676
      %v6691 = vsel %vm598, %v6676, %v6678
      %v6692 = vsel %vm598, %v6678, %v6680
      %v6693 = vsel %vm598, %v6680, %v6682
      %v6694 = vsel %vm598, %v6682, %v6684
      %6705 = vst [vmem:[#allocation4 + $0xf0] sm:$0xff] %v6685
      %6706 = vst [vmem:[#allocation4 + $0xf8] sm:$0xff] %v6686
      %6707 = vst [vmem:[#allocation4 + $0x100] sm:$0xff] %v6687
      %6708 = vst [vmem:[#allocation4 + $0x108] sm:$0xff] %v6688
      %6709 = vst.msk [vmem:[#allocation4 + $0x110] sm:$0xff] %vm231, %v6689
      %6710 = vst [vmem:[#allocation4 + $0x118] sm:$0xff] %v6690
      %6711 = vst [vmem:[#allocation4 + $0x120] sm:$0xff] %v6691
      %6712 = vst [vmem:[#allocation4 + $0x128] sm:$0xff] %v6692
      %6713 = vst [vmem:[#allocation4 + $0x130] sm:$0xff] %v6693
      %6714 = vst.msk [vmem:[#allocation4 + $0x138] sm:$0xff] %vm231, %v6694
      %v6715 = vld [vmem:[#allocation2 + $0x8] sm:$0xff]
      %v6716 = vld [vmem:[#allocation2 + $0x10] sm:$0xff]
      %v6717 = vld [vmem:[#allocation2 + $0x18] sm:$0xff]
      %v6718 = vld [vmem:[#allocation2 + $0x20] sm:$0xff]
      %v6719 = vld [vmem:[#allocation2 + $0x28] sm:$0xff]
      %v6720 = vld [vmem:[#allocation2 + $0x40] sm:$0xff]
      %v6721 = vld [vmem:[#allocation2 + $0x48] sm:$0xff]
      %v6722 = vld [vmem:[#allocation2 + $0x50] sm:$0xff]
      %v6723 = vld [vmem:[#allocation2 + $0x58] sm:$0xff]
      %v6724 = vld [vmem:[#allocation2 + $0x60] sm:$0xff]
      %6725 = vst [vmem:[#allocation4 + $0x140] sm:$0xff] %v6715
      %6726 = vst [vmem:[#allocation4 + $0x148] sm:$0xff] %v6716
      %6727 = vst [vmem:[#allocation4 + $0x150] sm:$0xff] %v6717
      %6728 = vst [vmem:[#allocation4 + $0x158] sm:$0xff] %v6718
      %6729 = vst.msk [vmem:[#allocation4 + $0x160] sm:$0xff] %vm231, %v6719
      %6730 = vst [vmem:[#allocation4 + $0x168] sm:$0xff] %v6720
      %6731 = vst [vmem:[#allocation4 + $0x170] sm:$0xff] %v6721
      %6732 = vst [vmem:[#allocation4 + $0x178] sm:$0xff] %v6722
      %6733 = vst [vmem:[#allocation4 + $0x180] sm:$0xff] %v6723
      %6734 = vst.msk [vmem:[#allocation4 + $0x188] sm:$0xff] %vm231, %v6724
      %v6735 = vld [vmem:[#allocation2 + $0x8] sm:$0xff]
      %v6736 = vld [vmem:[#allocation2 + $0x10] sm:$0xff]
      %v6737 = vld [vmem:[#allocation2 + $0x18] sm:$0xff]
      %v6738 = vld [vmem:[#allocation2 + $0x20] sm:$0xff]
      %v6739 = vld [vmem:[#allocation2 + $0x28] sm:$0xff]
      %v6740 = vld [vmem:[#allocation2 + $0x40] sm:$0xff]
      %v6741 = vld [vmem:[#allocation2 + $0x48] sm:$0xff]
      %v6742 = vld [vmem:[#allocation2 + $0x50] sm:$0xff]
      %v6743 = vld [vmem:[#allocation2 + $0x58] sm:$0xff]
      %v6744 = vld [vmem:[#allocation2 + $0x60] sm:$0xff]
      %6755 = vrot.lane.b32.xlu0 %v6735, 127
      %v6756 = vpop.permute.xlu0 %6755
      %6757 = vrot.lane.b32.xlu0 %v6736, 127
      %v6758 = vpop.permute.xlu0 %6757
      %6759 = vrot.lane.b32.xlu0 %v6737, 127
      %v6760 = vpop.permute.xlu0 %6759
      %6761 = vrot.lane.b32.xlu0 %v6738, 127
      %v6762 = vpop.permute.xlu0 %6761
      %6763 = vrot.lane.b32.xlu0 %v6739, 127
      %v6764 = vpop.permute.xlu0 %6763
      %6765 = vrot.lane.b32.xlu0 %v6740, 127
      %v6766 = vpop.permute.xlu0 %6765
      %6767 = vrot.lane.b32.xlu0 %v6741, 127
      %v6768 = vpop.permute.xlu0 %6767
      %6769 = vrot.lane.b32.xlu0 %v6742, 127
      %v6770 = vpop.permute.xlu0 %6769
      %6771 = vrot.lane.b32.xlu0 %v6743, 127
      %v6772 = vpop.permute.xlu0 %6771
      %6773 = vrot.lane.b32.xlu0 %v6744, 127
      %v6774 = vpop.permute.xlu0 %6773
      %v6775 = vsel %vm689, %v6756, %v6758
      %v6776 = vsel %vm689, %v6758, %v6760
      %v6777 = vsel %vm689, %v6760, %v6762
      %v6778 = vsel %vm689, %v6762, %v6764
      %v6779 = vsel %vm689, %v6766, %v6768
      %v6780 = vsel %vm689, %v6768, %v6770
      %v6781 = vsel %vm689, %v6770, %v6772
      %v6782 = vsel %vm689, %v6772, %v6774
      %6793 = vst [vmem:[#allocation4 + $0x190] sm:$0xff] %v6775
      %6794 = vst [vmem:[#allocation4 + $0x198] sm:$0xff] %v6776
      %6795 = vst [vmem:[#allocation4 + $0x1a0] sm:$0xff] %v6777
      %6796 = vst [vmem:[#allocation4 + $0x1a8] sm:$0xff] %v6778
      %6797 = vst.msk [vmem:[#allocation4 + $0x1b0] sm:$0xff] %vm231, %v6764
      %6798 = vst [vmem:[#allocation4 + $0x1b8] sm:$0xff] %v6779
      %6799 = vst [vmem:[#allocation4 + $0x1c0] sm:$0xff] %v6780
      %6800 = vst [vmem:[#allocation4 + $0x1c8] sm:$0xff] %v6781
      %6801 = vst [vmem:[#allocation4 + $0x1d0] sm:$0xff] %v6782
      %6802 = vst.msk [vmem:[#allocation4 + $0x1d8] sm:$0xff] %vm231, %v6774
      %v6803 = vld [vmem:[#allocation2 + $0x8] sm:$0xff]
      %v6804 = vld [vmem:[#allocation2 + $0x10] sm:$0xff]
      %v6805 = vld [vmem:[#allocation2 + $0x18] sm:$0xff]
      %v6806 = vld [vmem:[#allocation2 + $0x20] sm:$0xff]
      %v6807 = vld [vmem:[#allocation2 + $0x28] sm:$0xff]
      %v6808 = vld [vmem:[#allocation2 + $0x40] sm:$0xff]
      %v6809 = vld [vmem:[#allocation2 + $0x48] sm:$0xff]
      %v6810 = vld [vmem:[#allocation2 + $0x50] sm:$0xff]
      %v6811 = vld [vmem:[#allocation2 + $0x58] sm:$0xff]
      %v6812 = vld [vmem:[#allocation2 + $0x60] sm:$0xff]
      %6823 = vrot.lane.b32.xlu0 %v6803, 105
      %v6824 = vpop.permute.xlu0 %6823
      %6825 = vrot.lane.b32.xlu0 %v6804, 105
      %v6826 = vpop.permute.xlu0 %6825
      %6827 = vrot.lane.b32.xlu0 %v6805, 105
      %v6828 = vpop.permute.xlu0 %6827
      %6829 = vrot.lane.b32.xlu0 %v6806, 105
      %v6830 = vpop.permute.xlu0 %6829
      %6831 = vrot.lane.b32.xlu0 %v6807, 105
      %v6832 = vpop.permute.xlu0 %6831
      %6833 = vrot.lane.b32.xlu0 %v6808, 105
      %v6834 = vpop.permute.xlu0 %6833
      %6835 = vrot.lane.b32.xlu0 %v6809, 105
      %v6836 = vpop.permute.xlu0 %6835
      %6837 = vrot.lane.b32.xlu0 %v6810, 105
      %v6838 = vpop.permute.xlu0 %6837
      %6839 = vrot.lane.b32.xlu0 %v6811, 105
      %v6840 = vpop.permute.xlu0 %6839
      %6841 = vrot.lane.b32.xlu0 %v6812, 105
      %v6842 = vpop.permute.xlu0 %6841
      %v6843 = vsel %vm758, %v6824, %v6826
      %v6844 = vsel %vm758, %v6826, %v6828
      %v6845 = vsel %vm758, %v6828, %v6830
      %v6846 = vsel %vm758, %v6830, %v6832
      %v6847 = vsel %vm758, %v6834, %v6836
      %v6848 = vsel %vm758, %v6836, %v6838
      %v6849 = vsel %vm758, %v6838, %v6840
      %v6850 = vsel %vm758, %v6840, %v6842
      %6861 = vst [vmem:[#allocation4 + $0x1e0] sm:$0xff] %v6843
      %6862 = vst [vmem:[#allocation4 + $0x1e8] sm:$0xff] %v6844
      %6863 = vst [vmem:[#allocation4 + $0x1f0] sm:$0xff] %v6845
      %6864 = vst [vmem:[#allocation4 + $0x1f8] sm:$0xff] %v6846
      %6865 = vst.msk [vmem:[#allocation4 + $0x200] sm:$0xff] %vm231, %v6832
      %6866 = vst [vmem:[#allocation4 + $0x208] sm:$0xff] %v6847
      %6867 = vst [vmem:[#allocation4 + $0x210] sm:$0xff] %v6848
      %6868 = vst [vmem:[#allocation4 + $0x218] sm:$0xff] %v6849
      %6869 = vst [vmem:[#allocation4 + $0x220] sm:$0xff] %v6850
      %6870 = vst.msk [vmem:[#allocation4 + $0x228] sm:$0xff] %vm231, %v6842
      %v6871 = vld [vmem:[#allocation2 + $0x8] sm:$0xff]
      %v6872 = vld [vmem:[#allocation2 + $0x10] sm:$0xff]
      %v6873 = vld [vmem:[#allocation2 + $0x18] sm:$0xff]
      %v6874 = vld [vmem:[#allocation2 + $0x20] sm:$0xff]
      %v6875 = vld [vmem:[#allocation2 + $0x28] sm:$0xff]
      %v6876 = vld [vmem:[#allocation2 + $0x40] sm:$0xff]
      %v6877 = vld [vmem:[#allocation2 + $0x48] sm:$0xff]
      %v6878 = vld [vmem:[#allocation2 + $0x50] sm:$0xff]
      %v6879 = vld [vmem:[#allocation2 + $0x58] sm:$0xff]
      %v6880 = vld [vmem:[#allocation2 + $0x60] sm:$0xff]
      %6891 = vrot.lane.b32.xlu0 %v6871, 104
      %v6892 = vpop.permute.xlu0 %6891
      %6893 = vrot.lane.b32.xlu0 %v6872, 104
      %v6894 = vpop.permute.xlu0 %6893
      %6895 = vrot.lane.b32.xlu0 %v6873, 104
      %v6896 = vpop.permute.xlu0 %6895
      %6897 = vrot.lane.b32.xlu0 %v6874, 104
      %v6898 = vpop.permute.xlu0 %6897
      %6899 = vrot.lane.b32.xlu0 %v6875, 104
      %v6900 = vpop.permute.xlu0 %6899
      %6901 = vrot.lane.b32.xlu0 %v6876, 104
      %v6902 = vpop.permute.xlu0 %6901
      %6903 = vrot.lane.b32.xlu0 %v6877, 104
      %v6904 = vpop.permute.xlu0 %6903
      %6905 = vrot.lane.b32.xlu0 %v6878, 104
      %v6906 = vpop.permute.xlu0 %6905
      %6907 = vrot.lane.b32.xlu0 %v6879, 104
      %v6908 = vpop.permute.xlu0 %6907
      %6909 = vrot.lane.b32.xlu0 %v6880, 104
      %v6910 = vpop.permute.xlu0 %6909
      %v6911 = vsel %vm827, %v6892, %v6894
      %v6912 = vsel %vm827, %v6894, %v6896
      %v6913 = vsel %vm827, %v6896, %v6898
      %v6914 = vsel %vm827, %v6898, %v6900
      %v6915 = vsel %vm827, %v6902, %v6904
      %v6916 = vsel %vm827, %v6904, %v6906
      %v6917 = vsel %vm827, %v6906, %v6908
      %v6918 = vsel %vm827, %v6908, %v6910
      %6929 = vst [vmem:[#allocation4 + $0x230] sm:$0xff] %v6911
      %6930 = vst [vmem:[#allocation4 + $0x238] sm:$0xff] %v6912
      %6931 = vst [vmem:[#allocation4 + $0x240] sm:$0xff] %v6913
      %6932 = vst [vmem:[#allocation4 + $0x248] sm:$0xff] %v6914
      %6933 = vst.msk [vmem:[#allocation4 + $0x250] sm:$0xff] %vm231, %v6900
      %6934 = vst [vmem:[#allocation4 + $0x258] sm:$0xff] %v6915
      %6935 = vst [vmem:[#allocation4 + $0x260] sm:$0xff] %v6916
      %6936 = vst [vmem:[#allocation4 + $0x268] sm:$0xff] %v6917
      %6937 = vst [vmem:[#allocation4 + $0x270] sm:$0xff] %v6918
      %6938 = vst.msk [vmem:[#allocation4 + $0x278] sm:$0xff] %vm231, %v6910
      %v6939 = vld [vmem:[#allocation2 + $0x8] sm:$0xff]
      %v6940 = vld [vmem:[#allocation2 + $0x10] sm:$0xff]
      %v6941 = vld [vmem:[#allocation2 + $0x18] sm:$0xff]
      %v6942 = vld [vmem:[#allocation2 + $0x20] sm:$0xff]
      %v6943 = vld [vmem:[#allocation2 + $0x28] sm:$0xff]
      %v6944 = vld [vmem:[#allocation2 + $0x40] sm:$0xff]
      %v6945 = vld [vmem:[#allocation2 + $0x48] sm:$0xff]
      %v6946 = vld [vmem:[#allocation2 + $0x50] sm:$0xff]
      %v6947 = vld [vmem:[#allocation2 + $0x58] sm:$0xff]
      %v6948 = vld [vmem:[#allocation2 + $0x60] sm:$0xff]
      %6959 = vrot.lane.b32.xlu0 %v6939, 103
      %v6960 = vpop.permute.xlu0 %6959
      %6961 = vrot.lane.b32.xlu0 %v6940, 103
      %v6962 = vpop.permute.xlu0 %6961
      %6963 = vrot.lane.b32.xlu0 %v6941, 103
      %v6964 = vpop.permute.xlu0 %6963
      %6965 = vrot.lane.b32.xlu0 %v6942, 103
      %v6966 = vpop.permute.xlu0 %6965
      %6967 = vrot.lane.b32.xlu0 %v6943, 103
      %v6968 = vpop.permute.xlu0 %6967
      %6969 = vrot.lane.b32.xlu0 %v6944, 103
      %v6970 = vpop.permute.xlu0 %6969
      %6971 = vrot.lane.b32.xlu0 %v6945, 103
      %v6972 = vpop.permute.xlu0 %6971
      %6973 = vrot.lane.b32.xlu0 %v6946, 103
      %v6974 = vpop.permute.xlu0 %6973
      %6975 = vrot.lane.b32.xlu0 %v6947, 103
      %v6976 = vpop.permute.xlu0 %6975
      %6977 = vrot.lane.b32.xlu0 %v6948, 103
      %v6978 = vpop.permute.xlu0 %6977
      %v6979 = vsel %vm896, %v6960, %v6962
      %v6980 = vsel %vm896, %v6962, %v6964
      %v6981 = vsel %vm896, %v6964, %v6966
      %v6982 = vsel %vm896, %v6966, %v6968
      %v6983 = vsel %vm896, %v6970, %v6972
      %v6984 = vsel %vm896, %v6972, %v6974
      %v6985 = vsel %vm896, %v6974, %v6976
      %v6986 = vsel %vm896, %v6976, %v6978
      %6997 = vst [vmem:[#allocation4 + $0x280] sm:$0xff] %v6979
      %6998 = vst [vmem:[#allocation4 + $0x288] sm:$0xff] %v6980
      %6999 = vst [vmem:[#allocation4 + $0x290] sm:$0xff] %v6981
      %7000 = vst [vmem:[#allocation4 + $0x298] sm:$0xff] %v6982
      %7001 = vst.msk [vmem:[#allocation4 + $0x2a0] sm:$0xff] %vm231, %v6968
      %7002 = vst [vmem:[#allocation4 + $0x2a8] sm:$0xff] %v6983
      %7003 = vst [vmem:[#allocation4 + $0x2b0] sm:$0xff] %v6984
      %7004 = vst [vmem:[#allocation4 + $0x2b8] sm:$0xff] %v6985
      %7005 = vst [vmem:[#allocation4 + $0x2c0] sm:$0xff] %v6986
      %7006 = vst.msk [vmem:[#allocation4 + $0x2c8] sm:$0xff] %vm231, %v6978
      %s7007 = scalar_lea.vmem %s1, 192
      %v7008 = vld [vmem:[%s7007] sm:$0xff]
      %v7009 = vld [vmem:[%s7007 + $0x8] sm:$0xff]
      %v7010 = vld [vmem:[%s7007 + $0x10] sm:$0xff]
      %v7011 = vld [vmem:[%s7007 + $0x18] sm:$0xff]
      %v7012 = vld [vmem:[#allocation4] sm:$0xff]
      %v7013 = vld [vmem:[#allocation4 + $0x8] sm:$0xff]
      %v7014 = vld [vmem:[#allocation4 + $0x10] sm:$0xff]
      %v7015 = vld [vmem:[#allocation4 + $0x18] sm:$0xff]
      %v7016 = vld [vmem:[#allocation4 + $0x20] sm:$0xff]
      %v7017 = vld [vmem:[#allocation4 + $0x28] sm:$0xff]
      %v7018 = vld [vmem:[#allocation4 + $0x30] sm:$0xff]
      %v7019 = vld [vmem:[#allocation4 + $0x38] sm:$0xff]
      %v7020 = vld [vmem:[#allocation4 + $0x40] sm:$0xff]
      %v7021 = vld [vmem:[#allocation4 + $0x48] sm:$0xff]
      %v7022 = vld [vmem:[#allocation4 + $0x50] sm:$0xff]
      %v7023 = vld [vmem:[#allocation4 + $0x58] sm:$0xff]
      %v7024 = vld [vmem:[#allocation4 + $0x60] sm:$0xff]
      %v7025 = vld [vmem:[#allocation4 + $0x68] sm:$0xff]
      %v7026 = vld [vmem:[#allocation4 + $0x70] sm:$0xff]
      %v7027 = vld [vmem:[#allocation4 + $0x78] sm:$0xff]
      %v7028 = vld [vmem:[#allocation4 + $0x80] sm:$0xff]
      %v7029 = vld [vmem:[#allocation4 + $0x88] sm:$0xff]
      %v7030 = vld [vmem:[#allocation4 + $0x90] sm:$0xff]
      %v7031 = vld [vmem:[#allocation4 + $0x98] sm:$0xff]
      %v7032 = vld [vmem:[#allocation4 + $0xa0] sm:$0xff]
      %v7033 = vld [vmem:[#allocation4 + $0xa8] sm:$0xff]
      %v7034 = vld [vmem:[#allocation4 + $0xb0] sm:$0xff]
      %v7035 = vld [vmem:[#allocation4 + $0xb8] sm:$0xff]
      %v7036 = vld [vmem:[#allocation4 + $0xc0] sm:$0xff]
      %v7037 = vld [vmem:[#allocation4 + $0xc8] sm:$0xff]
      %v7038 = vld [vmem:[#allocation4 + $0xd0] sm:$0xff]
      %v7039 = vld [vmem:[#allocation4 + $0xd8] sm:$0xff]
      %v7040 = vld [vmem:[#allocation4 + $0xe0] sm:$0xff]
      %v7041 = vld [vmem:[#allocation4 + $0xe8] sm:$0xff]
      %v7042 = vld [vmem:[#allocation4 + $0xf0] sm:$0xff]
      %v7043 = vld [vmem:[#allocation4 + $0xf8] sm:$0xff]
      %v7044 = vld [vmem:[#allocation4 + $0x100] sm:$0xff]
      %v7045 = vld [vmem:[#allocation4 + $0x108] sm:$0xff]
      %v7046 = vld [vmem:[#allocation4 + $0x110] sm:$0xff]
      %v7047 = vld [vmem:[#allocation4 + $0x118] sm:$0xff]
      %v7048 = vld [vmem:[#allocation4 + $0x120] sm:$0xff]
      %v7049 = vld [vmem:[#allocation4 + $0x128] sm:$0xff]
      %v7050 = vld [vmem:[#allocation4 + $0x130] sm:$0xff]
      %v7051 = vld [vmem:[#allocation4 + $0x138] sm:$0xff]
      %v7052 = vld [vmem:[#allocation4 + $0x140] sm:$0xff]
      %v7053 = vld [vmem:[#allocation4 + $0x148] sm:$0xff]
      %v7054 = vld [vmem:[#allocation4 + $0x150] sm:$0xff]
      %v7055 = vld [vmem:[#allocation4 + $0x158] sm:$0xff]
      %v7056 = vld [vmem:[#allocation4 + $0x160] sm:$0xff]
      %v7057 = vld [vmem:[#allocation4 + $0x168] sm:$0xff]
      %v7058 = vld [vmem:[#allocation4 + $0x170] sm:$0xff]
      %v7059 = vld [vmem:[#allocation4 + $0x178] sm:$0xff]
      %v7060 = vld [vmem:[#allocation4 + $0x180] sm:$0xff]
      %v7061 = vld [vmem:[#allocation4 + $0x188] sm:$0xff]
      %v7062 = vld [vmem:[#allocation4 + $0x190] sm:$0xff]
      %v7063 = vld [vmem:[#allocation4 + $0x198] sm:$0xff]
      %v7064 = vld [vmem:[#allocation4 + $0x1a0] sm:$0xff]
      %v7065 = vld [vmem:[#allocation4 + $0x1a8] sm:$0xff]
      %v7066 = vld [vmem:[#allocation4 + $0x1b0] sm:$0xff]
      %v7067 = vld [vmem:[#allocation4 + $0x1b8] sm:$0xff]
      %v7068 = vld [vmem:[#allocation4 + $0x1c0] sm:$0xff]
      %v7069 = vld [vmem:[#allocation4 + $0x1c8] sm:$0xff]
      %v7070 = vld [vmem:[#allocation4 + $0x1d0] sm:$0xff]
      %v7071 = vld [vmem:[#allocation4 + $0x1d8] sm:$0xff]
      %v7072 = vld [vmem:[#allocation4 + $0x1e0] sm:$0xff]
      %v7073 = vld [vmem:[#allocation4 + $0x1e8] sm:$0xff]
      %v7074 = vld [vmem:[#allocation4 + $0x1f0] sm:$0xff]
      %v7075 = vld [vmem:[#allocation4 + $0x1f8] sm:$0xff]
      %v7076 = vld [vmem:[#allocation4 + $0x200] sm:$0xff]
      %v7077 = vld [vmem:[#allocation4 + $0x208] sm:$0xff]
      %v7078 = vld [vmem:[#allocation4 + $0x210] sm:$0xff]
      %v7079 = vld [vmem:[#allocation4 + $0x218] sm:$0xff]
      %v7080 = vld [vmem:[#allocation4 + $0x220] sm:$0xff]
      %v7081 = vld [vmem:[#allocation4 + $0x228] sm:$0xff]
      %v7082 = vld [vmem:[#allocation4 + $0x230] sm:$0xff]
      %v7083 = vld [vmem:[#allocation4 + $0x238] sm:$0xff]
      %v7084 = vld [vmem:[#allocation4 + $0x240] sm:$0xff]
      %v7085 = vld [vmem:[#allocation4 + $0x248] sm:$0xff]
      %v7086 = vld [vmem:[#allocation4 + $0x250] sm:$0xff]
      %v7087 = vld [vmem:[#allocation4 + $0x258] sm:$0xff]
      %v7088 = vld [vmem:[#allocation4 + $0x260] sm:$0xff]
      %v7089 = vld [vmem:[#allocation4 + $0x268] sm:$0xff]
      %v7090 = vld [vmem:[#allocation4 + $0x270] sm:$0xff]
      %v7091 = vld [vmem:[#allocation4 + $0x278] sm:$0xff]
      %v7092 = vld [vmem:[#allocation4 + $0x280] sm:$0xff]
      %v7093 = vld [vmem:[#allocation4 + $0x288] sm:$0xff]
      %v7094 = vld [vmem:[#allocation4 + $0x290] sm:$0xff]
      %v7095 = vld [vmem:[#allocation4 + $0x298] sm:$0xff]
      %v7096 = vld [vmem:[#allocation4 + $0x2a0] sm:$0xff]
      %v7097 = vld [vmem:[#allocation4 + $0x2a8] sm:$0xff]
      %v7098 = vld [vmem:[#allocation4 + $0x2b0] sm:$0xff]
      %v7099 = vld [vmem:[#allocation4 + $0x2b8] sm:$0xff]
      %v7100 = vld [vmem:[#allocation4 + $0x2c0] sm:$0xff]
      %v7101 = vld [vmem:[#allocation4 + $0x2c8] sm:$0xff]
      %v7103 = vsel %vm1019, %v7009, 0
      %v7106 = vsel %vm1019, %v7011, 0
      %7108 = vmatprep.subr.mxu0 %v7013
      %7109 = vmatpush1.msra.mxu0 %v7012
      %7110 = vmatprep.subr.mxu0 %v7018
      %7111 = vmatpush1.msra.mxu0 %v7017
      %7112 = vmatprep.subr.mxu0 %v7023
      %7113 = vmatpush1.msra.mxu0 %v7022
      %7114 = vmatprep.subr.mxu0 %v7028
      %7115 = vmatpush1.msra.mxu0 %v7027
      %7116 = vmatprep.subr.mxu0 %v7033
      %7117 = vmatpush1.msra.mxu0 %v7032
      %7118 = vmatprep.subr.mxu0 %v7038
      %7119 = vmatpush1.msra.mxu0 %v7037
      %7120 = vmatprep.subr.mxu0 %v7043
      %7121 = vmatpush1.msra.mxu0 %v7042
      %7122 = vmatprep.subr.mxu0 %v7048
      %7123 = vmatpush1.msra.mxu0 %v7047
      %7124 = vmatprep.subr.mxu0 %v7053
      %7125 = vmatpush1.msra.mxu0 %v7052
      %7126 = vmatprep.subr.mxu0 %v7058
      %7127 = vmatpush1.msra.mxu0 %v7057
      %7128 = vmatprep.subr.mxu0 %v7063
      %7129 = vmatpush1.msra.mxu0 %v7062
      %7130 = vmatprep.subr.mxu0 %v7068
      %7131 = vmatpush1.msra.mxu0 %v7067
      %7132 = vmatprep.subr.mxu0 %v7073
      %7133 = vmatpush1.msra.mxu0 %v7072
      %7134 = vmatprep.subr.mxu0 %v7078
      %7135 = vmatpush1.msra.mxu0 %v7077
      %7136 = vmatprep.subr.mxu0 %v7083
      %7137 = vmatpush1.msra.mxu0 %v7082
      %7138 = vmatprep.subr.mxu0 %v7088
      %7139 = vmatpush1.msra.mxu0 %v7087
      %7140 = vmatprep.subr.mxu0 %v7093
      %7141 = vmatpush1.msra.mxu0 %v7092
      %7142 = vmatprep.subr.mxu0 %v7098
      %7143 = vmatpush1.msra.mxu0 %v7097
      %7144 = vmatprep.subr.mxu0 0.0
      %7145 = vmatpush1.msra.mxu0 0.0
      %7146 = vmatprep.subr.mxu0 0.0
      %7147 = vmatpush1.msra.mxu0 0.0
      %7148 = vmatprep.subr.mxu0 0.0
      %7149 = vmatpush1.msra.mxu0 0.0
      %7150 = vmatprep.subr.mxu0 0.0
      %7151 = vmatpush1.msra.mxu0 0.0
      %7152 = vmatprep.subr.mxu0 0.0
      %7153 = vmatpush1.msra.mxu0 0.0
      %7154 = vmatprep.subr.mxu0 0.0
      %7155 = vmatpush1.msra.mxu0 0.0
      %7156 = vmatprep.subr.mxu0 0.0
      %7157 = vmatpush1.msra.mxu0 0.0
      %7158 = vmatprep.subr.mxu0 0.0
      %7159 = vmatpush1.msra.mxu0 0.0
      %7160 = vmatprep.subr.mxu0 0.0
      %7161 = vmatpush1.msra.mxu0 0.0
      %7162 = vmatprep.subr.mxu0 0.0
      %7163 = vmatpush1.msra.mxu0 0.0
      %7164 = vmatprep.subr.mxu0 0.0
      %7165 = vmatpush1.msra.mxu0 0.0
      %7166 = vmatprep.subr.mxu0 0.0
      %7167 = vmatpush1.msra.mxu0 0.0
      %7168 = vmatprep.subr.mxu0 0.0
      %7169 = vmatpush1.msra.mxu0 0.0
      %7170 = vmatprep.subr.mxu0 0.0
      %7171 = vmatpush1.msra.mxu0 0.0
      %7172 = vmatprep.mubr.f32.mxu0 %v7103
      %7173 = vmatmul.mubr.f32.gmra.mrb[0].mxu0 %v7008
      %v7174 = vpop.f32.mrb[0].mxu0
      %v7175 = vadd.f32 0.0, %v7174
      %v7176 = vpop.f32.mrb[0].mxu0
      %v7177 = vadd.f32 0.0, %v7176
      %7178 = vmatprep.mubr.f32.mxu0 %v7106
      %7179 = vmatmul.mubr.f32.gmra.mrb[0].mxu0 %v7010
      %v7180 = vpop.f32.mrb[0].mxu0
      %v7181 = vpop.f32.mrb[0].mxu0
      %7182 = vdwg.mxu0
      %7183 = vmatprep.subr.mxu0 %v7015
      %7184 = vmatpush1.msra.mxu0 %v7014
      %7185 = vmatprep.subr.mxu0 %v7020
      %7186 = vmatpush1.msra.mxu0 %v7019
      %7187 = vmatprep.subr.mxu0 %v7025
      %7188 = vmatpush1.msra.mxu0 %v7024
      %7189 = vmatprep.subr.mxu0 %v7030
      %7190 = vmatpush1.msra.mxu0 %v7029
      %7191 = vmatprep.subr.mxu0 %v7035
      %7192 = vmatpush1.msra.mxu0 %v7034
      %7193 = vmatprep.subr.mxu0 %v7040
      %7194 = vmatpush1.msra.mxu0 %v7039
      %7195 = vmatprep.subr.mxu0 %v7045
      %7196 = vmatpush1.msra.mxu0 %v7044
      %7197 = vmatprep.subr.mxu0 %v7050
      %7198 = vmatpush1.msra.mxu0 %v7049
      %7199 = vmatprep.subr.mxu0 %v7055
      %7200 = vmatpush1.msra.mxu0 %v7054
      %7201 = vmatprep.subr.mxu0 %v7060
      %7202 = vmatpush1.msra.mxu0 %v7059
      %7203 = vmatprep.subr.mxu0 %v7065
      %7204 = vmatpush1.msra.mxu0 %v7064
      %7205 = vmatprep.subr.mxu0 %v7070
      %7206 = vmatpush1.msra.mxu0 %v7069
      %7207 = vmatprep.subr.mxu0 %v7075
      %7208 = vmatpush1.msra.mxu0 %v7074
      %7209 = vmatprep.subr.mxu0 %v7080
      %7210 = vmatpush1.msra.mxu0 %v7079
      %7211 = vmatprep.subr.mxu0 %v7085
      %7212 = vmatpush1.msra.mxu0 %v7084
      %7213 = vmatprep.subr.mxu0 %v7090
      %7214 = vmatpush1.msra.mxu0 %v7089
      %7215 = vmatprep.subr.mxu0 %v7095
      %7216 = vmatpush1.msra.mxu0 %v7094
      %7217 = vmatprep.subr.mxu0 %v7100
      %7218 = vmatpush1.msra.mxu0 %v7099
      %7219 = vmatprep.subr.mxu0 0.0
      %7220 = vmatpush1.msra.mxu0 0.0
      %7221 = vmatprep.subr.mxu0 0.0
      %7222 = vmatpush1.msra.mxu0 0.0
      %7223 = vmatprep.subr.mxu0 0.0
      %7224 = vmatpush1.msra.mxu0 0.0
      %7225 = vmatprep.subr.mxu0 0.0
      %7226 = vmatpush1.msra.mxu0 0.0
      %7227 = vmatprep.subr.mxu0 0.0
      %7228 = vmatpush1.msra.mxu0 0.0
      %7229 = vmatprep.subr.mxu0 0.0
      %7230 = vmatpush1.msra.mxu0 0.0
      %7231 = vmatprep.subr.mxu0 0.0
      %7232 = vmatpush1.msra.mxu0 0.0
      %7233 = vmatprep.subr.mxu0 0.0
      %7234 = vmatpush1.msra.mxu0 0.0
      %7235 = vmatprep.subr.mxu0 0.0
      %7236 = vmatpush1.msra.mxu0 0.0
      %7237 = vmatprep.subr.mxu0 0.0
      %7238 = vmatpush1.msra.mxu0 0.0
      %7239 = vmatprep.subr.mxu0 0.0
      %7240 = vmatpush1.msra.mxu0 0.0
      %7241 = vmatprep.subr.mxu0 0.0
      %7242 = vmatpush1.msra.mxu0 0.0
      %7243 = vmatprep.subr.mxu0 0.0
      %7244 = vmatpush1.msra.mxu0 0.0
      %7245 = vmatprep.subr.mxu0 0.0
      %7246 = vmatpush1.msra.mxu0 0.0
      %7247 = vmatprep.mubr.f32.mxu0 %v7103
      %7248 = vmatmul.mubr.f32.gmra.mrb[0].mxu0 %v7008
      %v7249 = vpop.f32.mrb[0].mxu0
      %v7250 = vadd.f32 0.0, %v7249
      %v7251 = vpop.f32.mrb[0].mxu0
      %v7252 = vadd.f32 0.0, %v7251
      %7253 = vmatprep.mubr.f32.mxu0 %v7106
      %7254 = vmatmul.mubr.f32.gmra.mrb[0].mxu0 %v7010
      %v7255 = vpop.f32.mrb[0].mxu0
      %v7256 = vpop.f32.mrb[0].mxu0
      %7257 = vdwg.mxu0
      %7258 = vmatprep.subr.mxu0 0.0
      %7259 = vmatpush1.msra.mxu0 %v7016
      %7260 = vmatprep.subr.mxu0 0.0
      %7261 = vmatpush1.msra.mxu0 %v7021
      %7262 = vmatprep.subr.mxu0 0.0
      %7263 = vmatpush1.msra.mxu0 %v7026
      %7264 = vmatprep.subr.mxu0 0.0
      %7265 = vmatpush1.msra.mxu0 %v7031
      %7266 = vmatprep.subr.mxu0 0.0
      %7267 = vmatpush1.msra.mxu0 %v7036
      %7268 = vmatprep.subr.mxu0 0.0
      %7269 = vmatpush1.msra.mxu0 %v7041
      %7270 = vmatprep.subr.mxu0 0.0
      %7271 = vmatpush1.msra.mxu0 %v7046
      %7272 = vmatprep.subr.mxu0 0.0
      %7273 = vmatpush1.msra.mxu0 %v7051
      %7274 = vmatprep.subr.mxu0 0.0
      %7275 = vmatpush1.msra.mxu0 %v7056
      %7276 = vmatprep.subr.mxu0 0.0
      %7277 = vmatpush1.msra.mxu0 %v7061
      %7278 = vmatprep.subr.mxu0 0.0
      %7279 = vmatpush1.msra.mxu0 %v7066
      %7280 = vmatprep.subr.mxu0 0.0
      %7281 = vmatpush1.msra.mxu0 %v7071
      %7282 = vmatprep.subr.mxu0 0.0
      %7283 = vmatpush1.msra.mxu0 %v7076
      %7284 = vmatprep.subr.mxu0 0.0
      %7285 = vmatpush1.msra.mxu0 %v7081
      %7286 = vmatprep.subr.mxu0 0.0
      %7287 = vmatpush1.msra.mxu0 %v7086
      %7288 = vmatprep.subr.mxu0 0.0
      %7289 = vmatpush1.msra.mxu0 %v7091
      %7290 = vmatprep.subr.mxu0 0.0
      %7291 = vmatpush1.msra.mxu0 %v7096
      %7292 = vmatprep.subr.mxu0 0.0
      %7293 = vmatpush1.msra.mxu0 %v7101
      %7294 = vmatprep.subr.mxu0 0.0
      %7295 = vmatpush1.msra.mxu0 0.0
      %7296 = vmatprep.subr.mxu0 0.0
      %7297 = vmatpush1.msra.mxu0 0.0
      %7298 = vmatprep.subr.mxu0 0.0
      %7299 = vmatpush1.msra.mxu0 0.0
      %7300 = vmatprep.subr.mxu0 0.0
      %7301 = vmatpush1.msra.mxu0 0.0
      %7302 = vmatprep.subr.mxu0 0.0
      %7303 = vmatpush1.msra.mxu0 0.0
      %7304 = vmatprep.subr.mxu0 0.0
      %7305 = vmatpush1.msra.mxu0 0.0
      %7306 = vmatprep.subr.mxu0 0.0
      %7307 = vmatpush1.msra.mxu0 0.0
      %7308 = vmatprep.subr.mxu0 0.0
      %7309 = vmatpush1.msra.mxu0 0.0
      %7310 = vmatprep.subr.mxu0 0.0
      %7311 = vmatpush1.msra.mxu0 0.0
      %7312 = vmatprep.subr.mxu0 0.0
      %7313 = vmatpush1.msra.mxu0 0.0
      %7314 = vmatprep.subr.mxu0 0.0
      %7315 = vmatpush1.msra.mxu0 0.0
      %7316 = vmatprep.subr.mxu0 0.0
      %7317 = vmatpush1.msra.mxu0 0.0
      %7318 = vmatprep.subr.mxu0 0.0
      %7319 = vmatpush1.msra.mxu0 0.0
      %7320 = vmatprep.subr.mxu0 0.0
      %7321 = vmatpush1.msra.mxu0 0.0
      %7322 = vmatprep.mubr.f32.mxu0 %v7103
      %7323 = vmatmul.mubr.f32.gmra.mrb[0].mxu0 %v7008
      %v7324 = vpop.f32.mrb[0].mxu0
      %v7325 = vadd.f32 0.0, %v7324
      %v7326 = vpop.f32.mrb[0].mxu0
      %7327 = vmatprep.mubr.f32.mxu0 %v7106
      %7328 = vmatmul.mubr.f32.gmra.mrb[0].mxu0 %v7010
      %v7329 = vpop.f32.mrb[0].mxu0
      %v7330 = vpop.f32.mrb[0].mxu0
      %7331 = vdwg.mxu0
      %s7332 = scalar_lea.vmem %s2, 96
      %v7333 = vld [vmem:[%s7332] sm:$0xff]
      %7335 = vset.pattern.permute.xlu0 0
      %7336 = vperm.xlu0 %7335, %v7333
      %v7337 = vpop.permute.xlu0 %7336
      %v7339 = vmul.f32 %v7175, %v7337
      %v7340 = vmul.f32 %v7177, %v7337
      %v7341 = vmul.f32 %v7250, %v7337
      %v7342 = vmul.f32 %v7252, %v7337
      %v7343 = vmul.f32 %v7325, %v7337
      %s7344 = scalar_lea.vmem %s3, 96
      %v7345 = vld [vmem:[%s7344] sm:$0xff]
      %7347 = vset.pattern.permute.xlu0 0
      %7348 = vperm.xlu0 %7347, %v7345
      %v7349 = vpop.permute.xlu0 %7348
      %v7351 = vadd.f32 %v7339, %v7349
      %v7352 = vadd.f32 %v7340, %v7349
      %v7353 = vadd.f32 %v7341, %v7349
      %v7354 = vadd.f32 %v7342, %v7349
      %v7355 = vadd.f32 %v7343, %v7349
      %v7356 = vld [vmem:[%s219] sm:$0xff]
      %v7357 = vld [vmem:[%s219 + $0x8] sm:$0x3]
      %v7363 = vcombine.low %v7351, %v7352
      %v7364 = vcombine.low %v7353, %v7354
      %v7366 = vunpack.c.l.s4 1983009808
      %v7367 = vunpack.c.0.s8 %v7366
      %v7368 = vlaneseq
      %v7369 = vshrl.u32 %v7368, 7
      %v7370 = vsub.s32 %v7367, %v7369
      %v7371 = vrot.slane %v7363, %v7370
      %v7373 = vunpack.c.l.s4 1983009808
      %v7374 = vunpack.c.0.s8 %v7373
      %v7375 = vlaneseq
      %v7376 = vshrl.u32 %v7375, 7
      %v7377 = vsub.s32 %v7374, %v7376
      %v7378 = vrot.slane %v7364, %v7377
      %v7379 = vcombine.low %v7371, %v7378
      %v7381 = vunpack.c.l.s4 1983009808
      %v7382 = vunpack.c.0.s8 %v7381
      %v7383 = vlaneseq
      %v7384 = vshrl.u32 %v7383, 7
      %v7385 = vsub.s32 %v7382, %v7384
      %v7386 = vrot.slane %v7355, %v7385
      %v7389 = vadd.f32 %v7356, %v7379
      %v7390 = vadd.f32 %v7357, %v7386
      %7391 = vst [vmem:[%s224] sm:$0xff] %v7389
      %7392 = vst.msk [vmem:[%s224 + $0x8] sm:$0x3] %vm291, %v7390
      %p7393 = scmp.lt.s32.totalorder %s16, 1
      %s7394 = scalar_select %p7393, %s16, 1
      %s7395 = smul.addr %s7394, 5
      %s7396 = smul.addr %s7395, 2
      %s7397 = scalar_lea.vmem %s5, %s7396
      // Predicated region
      $region41: #{dncnn_dilated_forward.1} parent=39 // pred_check
        %p7398 = pneg %p144
      $region42: #{dncnn_dilated_forward.1} parent=39 // pred_check_branch
        %7400 = sbr.rel (%p7398) target = $region44
      $region43: #{dncnn_dilated_forward.1} parent=39 // pred_region
        _
      $region44: #{dncnn_dilated_forward.1} parent=39 // pred_fallthru
        _
    $region40: #{dncnn_dilated_forward.1} parent=5 // pred_fallthru
      _
    %p7401 = scmp.le.s32.totalorder 2, %s11
    // Predicated region
    $region45: #{dncnn_dilated_forward.1} parent=5 // pred_check
      %p7402 = pneg %p7401
    $region46: #{dncnn_dilated_forward.1} parent=5 // pred_check_branch
      %7404 = sbr.rel (%p7402) target = $region48
    $region47: #{dncnn_dilated_forward.1} parent=5 // pred_region
      %s7405 = ssub.s32 %s11, 2
      // Predicated region
      $region49: #{dncnn_dilated_forward.1} parent=47 // pred_check
        %p7406 = pneg %p150
      $region50: #{dncnn_dilated_forward.1} parent=47 // pred_check_branch
        %7408 = sbr.rel (%p7406) target = $region52
      $region51: #{dncnn_dilated_forward.1} parent=47 // pred_region
        %p7409 = scmp.lt.s32.totalorder %s17, 1
        %s7410 = scalar_select %p7409, %s17, 1
        %s7411 = smul.addr %s7410, 5
        %s7412 = smul.addr %s7411, 2
        %s7413 = scalar_lea.vmem %s5, %s7412
      $region52: #{dncnn_dilated_forward.1} parent=47 // pred_fallthru
        _
    $region48: #{dncnn_dilated_forward.1} parent=5 // pred_fallthru
      _
  $region6: #{dncnn_dilated_forward.1} parent=0 // loop_footer
    %s15 = sadd.s32 1, %s11
  $region7: #{dncnn_dilated_forward.1} parent=0 // loop_footer_branch
    %10 = sbr.rel target = $region3
  $region8: #{dncnn_dilated_forward.1} parent=0 // loop_exit
    _

</llo_original>
